<compile_context>
chip_gen: v6e
topology: v6e:2x2x1
jax: 0.10.0
libtpu: 0.0.40
codegen_flags: <defaults>
</compile_context>

<pallas_src>
import functools
import math

import jax
import jax.numpy as jnp
from jax.experimental import pallas as pl
from jax.experimental.pallas import tpu as pltpu


_LANE = 128
_SUBLANE = 8
_TM_CAP = 2048          # M-tile cap for the im2col fallback (budget still rules)
_TK_CAP = 1024          # K-tile cap for the im2col fallback


def _round_up(x, m):
    return ((x + m - 1) // m) * m


def _vmem_tile_bytes(rows, cols, itemsize):
    """VMEM bytes of a (rows, cols) tile under the (8, 128) register tiling."""
    return (_round_up(max(int(rows), 1), _SUBLANE)
            * _round_up(max(int(cols), 1), _LANE) * itemsize)


def _vmem_budget():
    """Generation-aware VMEM sizing -> (planning budget, vmem_limit_bytes).

    v5e/v6e expose 128 MiB of VMEM, v7x only 64 MiB; query the running chip so
    bigger parts get bigger tiles while v7x never over-requests."""
    phys = 64 * 1024 * 1024                      # conservative v7x floor
    try:
        phys = int(pltpu.get_tpu_info().vmem_capacity_bytes)
    except Exception:
        pass
    limit = min((phys * 3) // 4, 96 * 1024 * 1024)
    return int(limit * 0.8), int(limit)


# ---------------------------------------------------------------------------
# Kernel 1: one-shot SVD weight fusion  W^T = (C^T * |Sigma|) @ N^T
# ---------------------------------------------------------------------------
def _svd_weight_kernel(ct_ref, n_ref, sigma_ref, wt_ref):
    # ct_ref:    (kkc8, r)          f32  C^T, rows ordered (kh, kw, c), zero padded
    # n_ref:     (out_ch_pad, r)    f32  N, rows zero padded
    # sigma_ref: (1, r)             f32
    # wt_ref:    (kkc8, out_ch_pad)      compute dtype
    ct_scaled = ct_ref[...] * jnp.abs(sigma_ref[...])
    wt = jax.lax.dot_general(
        ct_scaled, n_ref[...],
        dimension_numbers=(((1,), (1,)), ((), ())),          # contract over r
        preferred_element_type=jnp.float32)
    wt_ref[...] = wt.astype(wt_ref.dtype)


def _fuse_svd_weight(N, C, Sigma, in_ch, k, out_ch_pad, compute_dtype):
    out_ch, r = N.shape
    ckk = in_ch * k * k
    # Module flattens the weight as (c, kh, kw); the conv kernels consume
    # features in (kh, kw, c) order, so permute C's column axis accordingly.
    ct = C.reshape(r, in_ch, k, k).transpose(2, 3, 1, 0).reshape(ckk, r)
    kkc8 = _round_up(ckk, _SUBLANE)
    ct = jnp.pad(ct.astype(jnp.float32), ((0, kkc8 - ckk), (0, 0)))
    n_pad = jnp.pad(N.astype(jnp.float32), ((0, out_ch_pad - out_ch), (0, 0)))
    sigma2d = Sigma.reshape(1, r).astype(jnp.float32)
    wt = pl.pallas_call(
        _svd_weight_kernel,
        out_shape=jax.ShapeDtypeStruct((kkc8, out_ch_pad), compute_dtype),
    )(ct, n_pad, sigma2d)
    return wt[:ckk]                    # (ckk, out_ch_pad), rows ordered (kh, kw, c)


# ---------------------------------------------------------------------------
# Kernel 2: fused-im2col conv.  One padded NHWC image per grid step; the k*k
# window shifts become constant row offsets into the flattened image.
# ---------------------------------------------------------------------------
def _fused_conv_kernel(x_ref, wt_ref, o_ref, acc_ref, *, k, wp_pad, a_rows):
    # x_ref:   (1, hwp, cin)             compute dtype  (flattened padded image)
    # wt_ref:  (k*k, cin, out_ch_pad)    compute dtype  (grid-invariant)
    # o_ref:   (1, out_ch, a_rows)       out dtype      (channel-major output)
    # acc_ref: (a_rows, out_ch_pad)      f32 scratch
    acc_ref[...] = jnp.zeros_like(acc_ref)
    for kh in range(k):
        for kw in range(k):
            s = kh * wp_pad + kw                      # constant row shift of the tap
            acc_ref[...] += jnp.dot(
                x_ref[0, s:s + a_rows, :], wt_ref[kh * k + kw],
                preferred_element_type=jnp.float32)
    out_ch = o_ref.shape[1]
    o_ref[0] = acc_ref[...].T[:out_ch, :].astype(o_ref.dtype)


def _conv_fused(x, wt, k, padding, out_ch, out_ch_pad,
                compute_dtype, out_dtype, vmem_limit):
    B, in_ch, H, W = x.shape
    OH = H + 2 * padding - k + 1
    OW = W + 2 * padding - k + 1
    hp, wp = H + 2 * padding, W + 2 * padding
    wp_pad = _round_up(wp, _SUBLANE)
    hwp = (hp + 1) * wp_pad            # +1 zero row gives slack for the last row shift
    a_rows = OH * wp_pad

    # Single fused pad+transpose pass: NCHW -> zero-padded NHWC, flattened spatially.
    xp = jnp.pad(x.transpose(0, 2, 3, 1).astype(compute_dtype),
                 ((0, 0), (padding, padding + 1),
                  (padding, padding + wp_pad - wp), (0, 0)))
    x_flat = xp.reshape(B, hwp, in_ch)

    wt3 = wt.reshape(k * k, in_ch, out_ch_pad)        # per-tap weight slices

    kernel = functools.partial(_fused_conv_kernel, k=k, wp_pad=wp_pad, a_rows=a_rows)
    out = pl.pallas_call(
        kernel,
        out_shape=jax.ShapeDtypeStruct((B, out_ch, a_rows), out_dtype),
        grid_spec=pltpu.PrefetchScalarGridSpec(
            num_scalar_prefetch=0,
            grid=(B,),
            in_specs=[
                pl.BlockSpec((1, hwp, in_ch), lambda b: (b, 0, 0)),
                # Grid-invariant W^T: constant index map -> fetched once, resident.
                pl.BlockSpec((k * k, in_ch, out_ch_pad), lambda b: (0, 0, 0)),
            ],
            out_specs=pl.BlockSpec((1, out_ch, a_rows), lambda b: (b, 0, 0)),
            scratch_shapes=[pltpu.VMEM((a_rows, out_ch_pad), jnp.float32)],
        ),
        compiler_params=pltpu.CompilerParams(
            dimension_semantics=("parallel",),
            vmem_limit_bytes=vmem_limit),
    )(x_flat, wt3)

    # (B, out_ch, OH*wp_pad) -> NCHW via a cheap reshape + width slice.
    return out.reshape(B, out_ch, OH, wp_pad)[:, :, :, :OW]


# ---------------------------------------------------------------------------
# Fallback kernel: streaming im2col GEMM with an "arbitrary" K reduction axis.
# Used only when one padded image + accumulator does not fit the VMEM budget.
# ---------------------------------------------------------------------------
def _im2col_gemm_kernel(p_ref, wt_ref, o_ref, acc_ref):
    # p_ref:  (tm, tk)  compute dtype     wt_ref: (tk, out_ch_pad)  compute dtype
    # o_ref:  (out_ch, tm)  out dtype     acc_ref: (tm, out_ch_pad) f32 scratch
    @pl.when(pl.program_id(1) == 0)
    def _init():
        acc_ref[...] = jnp.zeros_like(acc_ref)

    acc_ref[...] += jnp.dot(p_ref[...], wt_ref[...],
                            preferred_element_type=jnp.float32)

    @pl.when(pl.program_id(1) == pl.num_programs(1) - 1)
    def _finalize():
        out_ch = o_ref.shape[0]
        o_ref[...] = acc_ref[...].T[:out_ch, :].astype(o_ref.dtype)


def _conv_im2col(x, wt, k, padding, out_ch, out_ch_pad,
                 compute_dtype, out_dtype, budget, vmem_limit):
    B, in_ch, H, W = x.shape
    OH = H + 2 * padding - k + 1
    OW = W + 2 * padding - k + 1
    ckk = in_ch * k * k
    M = B * OH * OW
    in_bytes = jnp.dtype(compute_dtype).itemsize
    out_bytes = jnp.dtype(out_dtype).itemsize

    # --- K tiling: no blind pad to 128 when ckk is small (full-dim block is legal)
    if ckk <= _TK_CAP:
        tk, k_pad = ckk, ckk
    else:
        k_pad = _round_up(ckk, _LANE)
        tk = _LANE
        for cand in range(_TK_CAP, _LANE - 1, -_LANE):
            if k_pad % cand == 0:
                tk = cand
                break

    def _need(tm_, tk_):
        return (2 * _vmem_tile_bytes(tm_, tk_, in_bytes)          # patches (dbl buf)
                + 2 * _vmem_tile_bytes(tk_, out_ch_pad, in_bytes)  # W^T blocks
                + 2 * _vmem_tile_bytes(tm_, out_ch_pad, 4)         # acc + transpose tmp
                + 2 * _vmem_tile_bytes(out_ch, tm_, out_bytes))    # output (dbl buf)

    # --- M tiling: largest 128-multiple tile that actually fits the budget
    tm = min(_TM_CAP, _round_up(M, _LANE))
    while tm > _LANE and _need(tm, tk) > budget:
        tm -= _LANE
    if _need(tm, tk) > budget and ckk > _TK_CAP and tk > _LANE:
        tk = _LANE                                  # 128 always divides k_pad here
        tm = min(_TM_CAP, _round_up(M, _LANE))
        while tm > _LANE and _need(tm, tk) > budget:
            tm -= _LANE
    # If even minimum tiles overshoot (pathological channel counts) we proceed with
    # the physical limit rather than silently over-requesting; math stays correct.
    grid_k = k_pad // tk
    m_pad = _round_up(M, tm)
    grid_m = m_pad // tm

    # --- channel-last im2col; the K zero-pad is folded into the concat (no extra pass)
    xp = jnp.pad(x.transpose(0, 2, 3, 1).astype(compute_dtype),
                 ((0, 0), (padding, padding), (padding, padding), (0, 0)))
    parts = [xp[:, i:i + OH, j:j + OW, :] for i in range(k) for j in range(k)]
    if k_pad > ckk:
        parts.append(jnp.zeros((B, OH, OW, k_pad - ckk), compute_dtype))
    patches = jnp.concatenate(parts, axis=-1).reshape(M, k_pad)
    if m_pad > M:
        # TODO(synk): fold the M remainder pad into the im2col concat as well.
        patches = jnp.pad(patches, ((0, m_pad - M), (0, 0)))

    wt_rhs = jnp.pad(wt, ((0, k_pad - ckk), (0, 0)))

    out = pl.pallas_call(
        _im2col_gemm_kernel,
        out_shape=jax.ShapeDtypeStruct((out_ch, m_pad), out_dtype),
        grid_spec=pltpu.PrefetchScalarGridSpec(
            num_scalar_prefetch=0,
            grid=(grid_m, grid_k),
            in_specs=[
                pl.BlockSpec((tm, tk), lambda i, kk: (i, kk)),
                pl.BlockSpec((tk, out_ch_pad), lambda i, kk: (kk, 0)),
            ],
            out_specs=pl.BlockSpec((out_ch, tm), lambda i, kk: (0, i)),
            scratch_shapes=[pltpu.VMEM((tm, out_ch_pad), jnp.float32)],
        ),
        compiler_params=pltpu.CompilerParams(
            dimension_semantics=("parallel", "arbitrary"),
            vmem_limit_bytes=vmem_limit),
    )(patches, wt_rhs)

    # (out_ch, M) -> NCHW via a coarse (out_ch, B) axis swap over contiguous
    # OH*OW runs (far cheaper than an element-granular NHWC->NCHW transpose).
    return out[:, :M].reshape(out_ch, B, OH, OW).transpose(1, 0, 2, 3)


# ---------------------------------------------------------------------------
# Public wrapper
# ---------------------------------------------------------------------------
@functools.partial(jax.jit, static_argnums=(4, 5),
                   static_argnames=("compute_dtype", "out_dtype", "force_im2col"))
def svd_conv2d(x, N, C, Sigma, kernel_size, padding, *,
               compute_dtype=jnp.bfloat16, out_dtype=None, force_im2col=False):
    """SVD_Conv2d forward (decompose_type='channel', stride=1, training mode).

    x: (B, in_ch, H, W) NCHW.  Returns (B, out_ch, OH, OW) in out_dtype."""
    B, in_ch, H, W = x.shape
    out_ch, r = N.shape
    k = int(kernel_size)
    ckk = in_ch * k * k
    assert C.shape == (r, ckk)
    assert Sigma.shape == (r,)
    out_dtype = x.dtype if out_dtype is None else out_dtype
    out_ch_pad = _round_up(out_ch, _LANE)

    budget, vmem_limit = _vmem_budget()

    # Kernel 1: fuse the SVD factors into W^T exactly once (grid-invariant).
    wt = _fuse_svd_weight(N, C, Sigma, in_ch, k, out_ch_pad, compute_dtype)

    # Estimate the fused path's per-step VMEM footprint; fall back if too big.
    hp, wp = H + 2 * padding, W + 2 * padding
    wp_pad = _round_up(wp, _SUBLANE)
    hwp = (hp + 1) * wp_pad
    OH = H + 2 * padding - k + 1
    a_rows = OH * wp_pad
    in_bytes = jnp.dtype(compute_dtype).itemsize
    out_bytes = jnp.dtype(out_dtype).itemsize
    fused_need = (2 * _vmem_tile_bytes(hwp, in_ch, in_bytes)
                  + 2 * k * k * _vmem_tile_bytes(in_ch, out_ch_pad, in_bytes)
                  + 2 * _vmem_tile_bytes(a_rows, out_ch_pad, 4)
                  + 2 * _vmem_tile_bytes(out_ch, a_rows, out_bytes))

    if not force_im2col and fused_need <= budget:
        return _conv_fused(x, wt, k, padding, out_ch, out_ch_pad,
                           compute_dtype, out_dtype, vmem_limit)
    return _conv_im2col(x, wt, k, padding, out_ch, out_ch_pad,
                        compute_dtype, out_dtype, budget, vmem_limit)


def _reference(x, N, C, Sigma, kernel_size, padding):
    out_ch, _ = N.shape
    in_ch = x.shape[1]
    w = (N * jnp.abs(Sigma)[None, :]) @ C
    w = w.reshape(out_ch, in_ch, kernel_size, kernel_size)
    return jax.lax.conv_general_dilated(
        x, w, window_strides=(1, 1),
        padding=[(padding, padding), (padding, padding)],
        dimension_numbers=("NCHW", "OIHW", "NCHW"),
        precision=jax.lax.Precision.HIGHEST)


if __name__ == "__main__":
    # Small shapes consistent with the module (bias=False, stride=1).
    batch, in_ch, out_ch, k, spatial, pad = 2, 4, 8, 3, 16, 1
    r = min(out_ch, in_ch * k * k)
    ckk = in_ch * k * k

    key = jax.random.PRNGKey(0)
    k1, k2, k3, k4 = jax.random.split(key, 4)
    # kaiming_normal_ (fan_in on dim 1) for N and C, standard normal for Sigma.
    N = jax.random.normal(k1, (out_ch, r), jnp.float32) * math.sqrt(2.0 / r)
    C = jax.random.normal(k2, (r, ckk), jnp.float32) * math.sqrt(2.0 / ckk)
    Sigma = jax.random.normal(k3, (r,), jnp.float32)
    x = jax.random.normal(k4, (batch, in_ch, spatial, spatial), jnp.float32)

    y_ref = _reference(x, N, C, Sigma, k, pad)

    # Tolerances are smoke-test bounds sized for MXU bf16 operand rounding of a
    # 36-term dot with |y| ~ O(1); real indexing bugs produce O(1)+ errors.

    # f32 compute path (fused im2col kernel).
    y32 = jax.block_until_ready(
        svd_conv2d(x, N, C, Sigma, k, pad, compute_dtype=jnp.float32))
    assert y32.shape == (batch, out_ch, spatial, spatial)
    assert bool(jnp.allclose(y32, y_ref, atol=5e-2, rtol=5e-2))

    # Default bf16 MXU path (f32 accumulation, f32 writeback).
    ybf = jax.block_until_ready(svd_conv2d(x, N, C, Sigma, k, pad))
    assert ybf.shape == y_ref.shape
    assert bool(jnp.allclose(ybf, y_ref, atol=1e-1, rtol=5e-2))

    # bf16 writeback path (review: halves output HBM bytes when downstream tolerates).
    ybf16 = jax.block_until_ready(
        svd_conv2d(x, N, C, Sigma, k, pad, out_dtype=jnp.bfloat16))
    assert ybf16.dtype == jnp.bfloat16
    assert bool(jnp.allclose(ybf16.astype(jnp.float32), ybf, atol=5e-2, rtol=5e-2))

    # Robust fallback path (streaming im2col GEMM with K reduction axis).
    yfb = jax.block_until_ready(
        svd_conv2d(x, N, C, Sigma, k, pad,
                   compute_dtype=jnp.float32, force_im2col=True))
    assert yfb.shape == y_ref.shape
    assert bool(jnp.allclose(yfb, y_ref, atol=5e-2, rtol=5e-2))

    print("KERNEL_OK")
</pallas_src>

<mosaic_0001>
module attributes {stable_mosaic.version = 11 : i64} {
  func.func @_svd_weight_kernel(%arg0: memref<40x8xf32, #tpu.memory_space<vmem>>, %arg1: memref<128x8xf32, #tpu.memory_space<vmem>>, %arg2: memref<1x8xf32, #tpu.memory_space<vmem>>, %arg3: memref<40x128xf32, #tpu.memory_space<vmem>>) attributes {dimension_semantics = [], scalar_prefetch = 0 : i64, scratch_operands = 0 : i64, tpu.core_type = #tpu.core_type<tc>} {
    %c0 = arith.constant 0 : index
    %c0_0 = arith.constant 0 : index
    %0 = vector.load %arg0[%c0, %c0_0] : memref<40x8xf32, #tpu.memory_space<vmem>>, vector<40x8xf32>
    %c0_1 = arith.constant 0 : index
    %c0_2 = arith.constant 0 : index
    %1 = vector.load %arg2[%c0_1, %c0_2] : memref<1x8xf32, #tpu.memory_space<vmem>>, vector<1x8xf32>
    %2 = math.absf %1 : vector<1x8xf32>
    %3 = vector.broadcast %2 : vector<1x8xf32> to vector<40x8xf32>
    %4 = arith.mulf %0, %3 : vector<40x8xf32>
    %c0_3 = arith.constant 0 : index
    %c0_4 = arith.constant 0 : index
    %5 = vector.load %arg1[%c0_3, %c0_4] : memref<128x8xf32, #tpu.memory_space<vmem>>, vector<128x8xf32>
    %cst = arith.constant dense<0.000000e+00> : vector<40x128xf32>
    %6 = tpu.matmul %4, %5, %cst {dimension_numbers = #tpu.dot_dimension_numbers<[1], [1], [0], [0], [0, 0, 1, 0], [], []>} : vector<40x8xf32>, vector<128x8xf32>, vector<40x128xf32> -> vector<40x128xf32>
    %c0_5 = arith.constant 0 : index
    %c0_6 = arith.constant 0 : index
    %7 = vector.load %arg3[%c0_5, %c0_6] : memref<40x128xf32, #tpu.memory_space<vmem>>, vector<40x128xf32>
    tpu.vector_store %arg3[%c0_5, %c0_6], %6 {strides = array<i32>} : memref<40x128xf32, #tpu.memory_space<vmem>>, vector<40x128xf32>,
    return
  }
}

module attributes {stable_mosaic.version = 11 : i64} {
  func.func @_fused_conv_kernel(%arg0: i32, %arg1: memref<1x456x4xf32, #tpu.memory_space<vmem>>, %arg2: memref<9x4x128xf32, #tpu.memory_space<vmem>>, %arg3: memref<1x8x384xf32, #tpu.memory_space<vmem>>, %arg4: memref<384x128xf32, #tpu.memory_space<vmem>>) attributes {dimension_semantics = [#tpu.dimension_semantics<parallel>], iteration_bounds = array<i64: 2>, scalar_prefetch = 0 : i64, scratch_operands = 1 : i64, tpu.core_type = #tpu.core_type<tc>, window_params = [{transform_indices = @transform_0, window_bounds = array<i64: 1, 456, 4>}, {pipeline_mode = #tpu.pipeline_mode<synchronous>, transform_indices = @transform_1, window_bounds = array<i64: 9, 4, 128>}, {transform_indices = @transform_2, window_bounds = array<i64: 1, 8, 384>}]} {
    %cst = arith.constant 0.000000e+00 : f32
    %0 = vector.broadcast %cst : f32 to vector<384x128xf32>
    %c0 = arith.constant 0 : index
    %c0_0 = arith.constant 0 : index
    %1 = vector.load %arg4[%c0, %c0_0] : memref<384x128xf32, #tpu.memory_space<vmem>>, vector<384x128xf32>
    tpu.vector_store %arg4[%c0, %c0_0], %0 {strides = array<i32>} : memref<384x128xf32, #tpu.memory_space<vmem>>, vector<384x128xf32>,
    %c0_1 = arith.constant 0 : index
    %c0_2 = arith.constant 0 : index
    %2 = vector.load %arg4[%c0_1, %c0_2] : memref<384x128xf32, #tpu.memory_space<vmem>>, vector<384x128xf32>
    %c0_3 = arith.constant 0 : index
    %c0_4 = arith.constant 0 : index
    %c0_5 = arith.constant 0 : index
    %3 = vector.load %arg1[%c0_3, %c0_4, %c0_5] : memref<1x456x4xf32, #tpu.memory_space<vmem>>, vector<1x384x4xf32>
    %4 = vector.shape_cast %3 : vector<1x384x4xf32> to vector<384x4xf32>
    %c0_6 = arith.constant 0 : index
    %c0_7 = arith.constant 0 : index
    %c0_8 = arith.constant 0 : index
    %5 = vector.load %arg2[%c0_6, %c0_7, %c0_8] : memref<9x4x128xf32, #tpu.memory_space<vmem>>, vector<1x4x128xf32>
    %6 = vector.shape_cast %5 : vector<1x4x128xf32> to vector<4x128xf32>
    %cst_9 = arith.constant dense<0.000000e+00> : vector<384x128xf32>
    %7 = tpu.matmul %4, %6, %cst_9 {dimension_numbers = #tpu.dot_dimension_numbers<[1], [0], [0], [1], [0, 0, 1, 1], [], []>} : vector<384x4xf32>, vector<4x128xf32>, vector<384x128xf32> -> vector<384x128xf32>
    %8 = arith.addf %2, %7 : vector<384x128xf32>
    %c0_10 = arith.constant 0 : index
    %c0_11 = arith.constant 0 : index
    %9 = vector.load %arg4[%c0_10, %c0_11] : memref<384x128xf32, #tpu.memory_space<vmem>>, vector<384x128xf32>
    tpu.vector_store %arg4[%c0_10, %c0_11], %8 {strides = array<i32>} : memref<384x128xf32, #tpu.memory_space<vmem>>, vector<384x128xf32>,
    %c0_12 = arith.constant 0 : index
    %c0_13 = arith.constant 0 : index
    %10 = vector.load %arg4[%c0_12, %c0_13] : memref<384x128xf32, #tpu.memory_space<vmem>>, vector<384x128xf32>
    %c0_14 = arith.constant 0 : index
    %c1 = arith.constant 1 : index
    %c0_15 = arith.constant 0 : index
    %11 = vector.load %arg1[%c0_14, %c1, %c0_15] : memref<1x456x4xf32, #tpu.memory_space<vmem>>, vector<1x384x4xf32>
    %12 = vector.shape_cast %11 : vector<1x384x4xf32> to vector<384x4xf32>
    %c1_16 = arith.constant 1 : index
    %c0_17 = arith.constant 0 : index
    %c0_18 = arith.constant 0 : index
    %13 = vector.load %arg2[%c1_16, %c0_17, %c0_18] : memref<9x4x128xf32, #tpu.memory_space<vmem>>, vector<1x4x128xf32>
    %14 = vector.shape_cast %13 : vector<1x4x128xf32> to vector<4x128xf32>
    %cst_19 = arith.constant dense<0.000000e+00> : vector<384x128xf32>
    %15 = tpu.matmul %12, %14, %cst_19 {dimension_numbers = #tpu.dot_dimension_numbers<[1], [0], [0], [1], [0, 0, 1, 1], [], []>} : vector<384x4xf32>, vector<4x128xf32>, vector<384x128xf32> -> vector<384x128xf32>
    %16 = arith.addf %10, %15 : vector<384x128xf32>
    %c0_20 = arith.constant 0 : index
    %c0_21 = arith.constant 0 : index
    %17 = vector.load %arg4[%c0_20, %c0_21] : memref<384x128xf32, #tpu.memory_space<vmem>>, vector<384x128xf32>
    tpu.vector_store %arg4[%c0_20, %c0_21], %16 {strides = array<i32>} : memref<384x128xf32, #tpu.memory_space<vmem>>, vector<384x128xf32>,
    %c0_22 = arith.constant 0 : index
    %c0_23 = arith.constant 0 : index
    %18 = vector.load %arg4[%c0_22, %c0_23] : memref<384x128xf32, #tpu.memory_space<vmem>>, vector<384x128xf32>
    %c0_24 = arith.constant 0 : index
    %c2 = arith.constant 2 : index
    %c0_25 = arith.constant 0 : index
    %19 = vector.load %arg1[%c0_24, %c2, %c0_25] : memref<1x456x4xf32, #tpu.memory_space<vmem>>, vector<1x384x4xf32>
    %20 = vector.shape_cast %19 : vector<1x384x4xf32> to vector<384x4xf32>
    %c2_26 = arith.constant 2 : index
    %c0_27 = arith.constant 0 : index
    %c0_28 = arith.constant 0 : index
    %21 = vector.load %arg2[%c2_26, %c0_27, %c0_28] : memref<9x4x128xf32, #tpu.memory_space<vmem>>, vector<1x4x128xf32>
    %22 = vector.shape_cast %21 : vector<1x4x128xf32> to vector<4x128xf32>
    %cst_29 = arith.constant dense<0.000000e+00> : vector<384x128xf32>
    %23 = tpu.matmul %20, %22, %cst_29 {dimension_numbers = #tpu.dot_dimension_numbers<[1], [0], [0], [1], [0, 0, 1, 1], [], []>} : vector<384x4xf32>, vector<4x128xf32>, vector<384x128xf32> -> vector<384x128xf32>
    %24 = arith.addf %18, %23 : vector<384x128xf32>
    %c0_30 = arith.constant 0 : index
    %c0_31 = arith.constant 0 : index
    %25 = vector.load %arg4[%c0_30, %c0_31] : memref<384x128xf32, #tpu.memory_space<vmem>>, vector<384x128xf32>
    tpu.vector_store %arg4[%c0_30, %c0_31], %24 {strides = array<i32>} : memref<384x128xf32, #tpu.memory_space<vmem>>, vector<384x128xf32>,
    %c0_32 = arith.constant 0 : index
    %c0_33 = arith.constant 0 : index
    %26 = vector.load %arg4[%c0_32, %c0_33] : memref<384x128xf32, #tpu.memory_space<vmem>>, vector<384x128xf32>
    %c0_34 = arith.constant 0 : index
    %c24 = arith.constant 24 : index
    %c0_35 = arith.constant 0 : index
    %27 = vector.load %arg1[%c0_34, %c24, %c0_35] : memref<1x456x4xf32, #tpu.memory_space<vmem>>, vector<1x384x4xf32>
    %28 = vector.shape_cast %27 : vector<1x384x4xf32> to vector<384x4xf32>
    %c3 = arith.constant 3 : index
    %c0_36 = arith.constant 0 : index
    %c0_37 = arith.constant 0 : index
    %29 = vector.load %arg2[%c3, %c0_36, %c0_37] : memref<9x4x128xf32, #tpu.memory_space<vmem>>, vector<1x4x128xf32>
    %30 = vector.shape_cast %29 : vector<1x4x128xf32> to vector<4x128xf32>
    %cst_38 = arith.constant dense<0.000000e+00> : vector<384x128xf32>
    %31 = tpu.matmul %28, %30, %cst_38 {dimension_numbers = #tpu.dot_dimension_numbers<[1], [0], [0], [1], [0, 0, 1, 1], [], []>} : vector<384x4xf32>, vector<4x128xf32>, vector<384x128xf32> -> vector<384x128xf32>
    %32 = arith.addf %26, %31 : vector<384x128xf32>
    %c0_39 = arith.constant 0 : index
    %c0_40 = arith.constant 0 : index
    %33 = vector.load %arg4[%c0_39, %c0_40] : memref<384x128xf32, #tpu.memory_space<vmem>>, vector<384x128xf32>
    tpu.vector_store %arg4[%c0_39, %c0_40], %32 {strides = array<i32>} : memref<384x128xf32, #tpu.memory_space<vmem>>, vector<384x128xf32>,
    %c0_41 = arith.constant 0 : index
    %c0_42 = arith.constant 0 : index
    %34 = vector.load %arg4[%c0_41, %c0_42] : memref<384x128xf32, #tpu.memory_space<vmem>>, vector<384x128xf32>
    %c0_43 = arith.constant 0 : index
    %c25 = arith.constant 25 : index
    %c0_44 = arith.constant 0 : index
    %35 = vector.load %arg1[%c0_43, %c25, %c0_44] : memref<1x456x4xf32, #tpu.memory_space<vmem>>, vector<1x384x4xf32>
    %36 = vector.shape_cast %35 : vector<1x384x4xf32> to vector<384x4xf32>
    %c4 = arith.constant 4 : index
    %c0_45 = arith.constant 0 : index
    %c0_46 = arith.constant 0 : index
    %37 = vector.load %arg2[%c4, %c0_45, %c0_46] : memref<9x4x128xf32, #tpu.memory_space<vmem>>, vector<1x4x128xf32>
    %38 = vector.shape_cast %37 : vector<1x4x128xf32> to vector<4x128xf32>
    %cst_47 = arith.constant dense<0.000000e+00> : vector<384x128xf32>
    %39 = tpu.matmul %36, %38, %cst_47 {dimension_numbers = #tpu.dot_dimension_numbers<[1], [0], [0], [1], [0, 0, 1, 1], [], []>} : vector<384x4xf32>, vector<4x128xf32>, vector<384x128xf32> -> vector<384x128xf32>
    %40 = arith.addf %34, %39 : vector<384x128xf32>
    %c0_48 = arith.constant 0 : index
    %c0_49 = arith.constant 0 : index
    %41 = vector.load %arg4[%c0_48, %c0_49] : memref<384x128xf32, #tpu.memory_space<vmem>>, vector<384x128xf32>
    tpu.vector_store %arg4[%c0_48, %c0_49], %40 {strides = array<i32>} : memref<384x128xf32, #tpu.memory_space<vmem>>, vector<384x128xf32>,
    %c0_50 = arith.constant 0 : index
    %c0_51 = arith.constant 0 : index
    %42 = vector.load %arg4[%c0_50, %c0_51] : memref<384x128xf32, #tpu.memory_space<vmem>>, vector<384x128xf32>
    %c0_52 = arith.constant 0 : index
    %c26 = arith.constant 26 : index
    %c0_53 = arith.constant 0 : index
    %43 = vector.load %arg1[%c0_52, %c26, %c0_53] : memref<1x456x4xf32, #tpu.memory_space<vmem>>, vector<1x384x4xf32>
    %44 = vector.shape_cast %43 : vector<1x384x4xf32> to vector<384x4xf32>
    %c5 = arith.constant 5 : index
    %c0_54 = arith.constant 0 : index
    %c0_55 = arith.constant 0 : index
    %45 = vector.load %arg2[%c5, %c0_54, %c0_55] : memref<9x4x128xf32, #tpu.memory_space<vmem>>, vector<1x4x128xf32>
    %46 = vector.shape_cast %45 : vector<1x4x128xf32> to vector<4x128xf32>
    %cst_56 = arith.constant dense<0.000000e+00> : vector<384x128xf32>
    %47 = tpu.matmul %44, %46, %cst_56 {dimension_numbers = #tpu.dot_dimension_numbers<[1], [0], [0], [1], [0, 0, 1, 1], [], []>} : vector<384x4xf32>, vector<4x128xf32>, vector<384x128xf32> -> vector<384x128xf32>
    %48 = arith.addf %42, %47 : vector<384x128xf32>
    %c0_57 = arith.constant 0 : index
    %c0_58 = arith.constant 0 : index
    %49 = vector.load %arg4[%c0_57, %c0_58] : memref<384x128xf32, #tpu.memory_space<vmem>>, vector<384x128xf32>
    tpu.vector_store %arg4[%c0_57, %c0_58], %48 {strides = array<i32>} : memref<384x128xf32, #tpu.memory_space<vmem>>, vector<384x128xf32>,
    %c0_59 = arith.constant 0 : index
    %c0_60 = arith.constant 0 : index
    %50 = vector.load %arg4[%c0_59, %c0_60] : memref<384x128xf32, #tpu.memory_space<vmem>>, vector<384x128xf32>
    %c0_61 = arith.constant 0 : index
    %c48 = arith.constant 48 : index
    %c0_62 = arith.constant 0 : index
    %51 = vector.load %arg1[%c0_61, %c48, %c0_62] : memref<1x456x4xf32, #tpu.memory_space<vmem>>, vector<1x384x4xf32>
    %52 = vector.shape_cast %51 : vector<1x384x4xf32> to vector<384x4xf32>
    %c6 = arith.constant 6 : index
    %c0_63 = arith.constant 0 : index
    %c0_64 = arith.constant 0 : index
    %53 = vector.load %arg2[%c6, %c0_63, %c0_64] : memref<9x4x128xf32, #tpu.memory_space<vmem>>, vector<1x4x128xf32>
    %54 = vector.shape_cast %53 : vector<1x4x128xf32> to vector<4x128xf32>
    %cst_65 = arith.constant dense<0.000000e+00> : vector<384x128xf32>
    %55 = tpu.matmul %52, %54, %cst_65 {dimension_numbers = #tpu.dot_dimension_numbers<[1], [0], [0], [1], [0, 0, 1, 1], [], []>} : vector<384x4xf32>, vector<4x128xf32>, vector<384x128xf32> -> vector<384x128xf32>
    %56 = arith.addf %50, %55 : vector<384x128xf32>
    %c0_66 = arith.constant 0 : index
    %c0_67 = arith.constant 0 : index
    %57 = vector.load %arg4[%c0_66, %c0_67] : memref<384x128xf32, #tpu.memory_space<vmem>>, vector<384x128xf32>
    tpu.vector_store %arg4[%c0_66, %c0_67], %56 {strides = array<i32>} : memref<384x128xf32, #tpu.memory_space<vmem>>, vector<384x128xf32>,
    %c0_68 = arith.constant 0 : index
    %c0_69 = arith.constant 0 : index
    %58 = vector.load %arg4[%c0_68, %c0_69] : memref<384x128xf32, #tpu.memory_space<vmem>>, vector<384x128xf32>
    %c0_70 = arith.constant 0 : index
    %c49 = arith.constant 49 : index
    %c0_71 = arith.constant 0 : index
    %59 = vector.load %arg1[%c0_70, %c49, %c0_71] : memref<1x456x4xf32, #tpu.memory_space<vmem>>, vector<1x384x4xf32>
    %60 = vector.shape_cast %59 : vector<1x384x4xf32> to vector<384x4xf32>
    %c7 = arith.constant 7 : index
    %c0_72 = arith.constant 0 : index
    %c0_73 = arith.constant 0 : index
    %61 = vector.load %arg2[%c7, %c0_72, %c0_73] : memref<9x4x128xf32, #tpu.memory_space<vmem>>, vector<1x4x128xf32>
    %62 = vector.shape_cast %61 : vector<1x4x128xf32> to vector<4x128xf32>
    %cst_74 = arith.constant dense<0.000000e+00> : vector<384x128xf32>
    %63 = tpu.matmul %60, %62, %cst_74 {dimension_numbers = #tpu.dot_dimension_numbers<[1], [0], [0], [1], [0, 0, 1, 1], [], []>} : vector<384x4xf32>, vector<4x128xf32>, vector<384x128xf32> -> vector<384x128xf32>
    %64 = arith.addf %58, %63 : vector<384x128xf32>
    %c0_75 = arith.constant 0 : index
    %c0_76 = arith.constant 0 : index
    %65 = vector.load %arg4[%c0_75, %c0_76] : memref<384x128xf32, #tpu.memory_space<vmem>>, vector<384x128xf32>
    tpu.vector_store %arg4[%c0_75, %c0_76], %64 {strides = array<i32>} : memref<384x128xf32, #tpu.memory_space<vmem>>, vector<384x128xf32>,
    %c0_77 = arith.constant 0 : index
    %c0_78 = arith.constant 0 : index
    %66 = vector.load %arg4[%c0_77, %c0_78] : memref<384x128xf32, #tpu.memory_space<vmem>>, vector<384x128xf32>
    %c0_79 = arith.constant 0 : index
    %c50 = arith.constant 50 : index
    %c0_80 = arith.constant 0 : index
    %67 = vector.load %arg1[%c0_79, %c50, %c0_80] : memref<1x456x4xf32, #tpu.memory_space<vmem>>, vector<1x384x4xf32>
    %68 = vector.shape_cast %67 : vector<1x384x4xf32> to vector<384x4xf32>
    %c8 = arith.constant 8 : index
    %c0_81 = arith.constant 0 : index
    %c0_82 = arith.constant 0 : index
    %69 = vector.load %arg2[%c8, %c0_81, %c0_82] : memref<9x4x128xf32, #tpu.memory_space<vmem>>, vector<1x4x128xf32>
    %70 = vector.shape_cast %69 : vector<1x4x128xf32> to vector<4x128xf32>
    %cst_83 = arith.constant dense<0.000000e+00> : vector<384x128xf32>
    %71 = tpu.matmul %68, %70, %cst_83 {dimension_numbers = #tpu.dot_dimension_numbers<[1], [0], [0], [1], [0, 0, 1, 1], [], []>} : vector<384x4xf32>, vector<4x128xf32>, vector<384x128xf32> -> vector<384x128xf32>
    %72 = arith.addf %66, %71 : vector<384x128xf32>
    %c0_84 = arith.constant 0 : index
    %c0_85 = arith.constant 0 : index
    %73 = vector.load %arg4[%c0_84, %c0_85] : memref<384x128xf32, #tpu.memory_space<vmem>>, vector<384x128xf32>
    tpu.vector_store %arg4[%c0_84, %c0_85], %72 {strides = array<i32>} : memref<384x128xf32, #tpu.memory_space<vmem>>, vector<384x128xf32>,
    %c0_86 = arith.constant 0 : index
    %c0_87 = arith.constant 0 : index
    %74 = vector.load %arg4[%c0_86, %c0_87] : memref<384x128xf32, #tpu.memory_space<vmem>>, vector<384x128xf32>
    %75 = tpu.transpose %74, [1, 0] : vector<384x128xf32> -> vector<128x384xf32>
    %76 = vector.extract_strided_slice %75 {offsets = [0, 0], sizes = [8, 384], strides = [1, 1]} : vector<128x384xf32> to vector<8x384xf32>
    %c0_88 = arith.constant 0 : index
    %c0_89 = arith.constant 0 : index
    %c0_90 = arith.constant 0 : index
    %77 = vector.load %arg3[%c0_88, %c0_89, %c0_90] : memref<1x8x384xf32, #tpu.memory_space<vmem>>, vector<1x8x384xf32>
    %78 = vector.shape_cast %77 : vector<1x8x384xf32> to vector<8x384xf32>
    %79 = vector.shape_cast %76 : vector<8x384xf32> to vector<1x8x384xf32>
    tpu.vector_store %arg3[%c0_88, %c0_89, %c0_90], %79 {strides = array<i32>} : memref<1x8x384xf32, #tpu.memory_space<vmem>>, vector<1x8x384xf32>,
    return
  }
  func.func @transform_0(%arg0: i32) -> (i32, i32, i32) {
    %c0_i32 = arith.constant 0 : i32
    %c0_i32_0 = arith.constant 0 : i32
    %c0_i32_1 = arith.constant 0 : i32
    return %arg0, %c0_i32, %c0_i32_0 : i32, i32, i32
  }
  func.func @transform_1(%arg0: i32) -> (i32, i32, i32) {
    %c0_i32 = arith.constant 0 : i32
    %c0_i32_0 = arith.constant 0 : i32
    %c0_i32_1 = arith.constant 0 : i32
    %c0_i32_2 = arith.constant 0 : i32
    return %c0_i32, %c0_i32_0, %c0_i32_1 : i32, i32, i32
  }
  func.func @transform_2(%arg0: i32) -> (i32, i32, i32) {
    %c0_i32 = arith.constant 0 : i32
    %c0_i32_0 = arith.constant 0 : i32
    %c0_i32_1 = arith.constant 0 : i32
    return %arg0, %c0_i32, %c0_i32_0 : i32, i32, i32
  }
}

</mosaic_0001>

<llo_original>
// kernel: svd_conv2d.2
$region0: #{svd_conv2d.2}
  #allocation0 [shape = 'u32[]', space=smem, size = 0x4, offset = 0x4, fixed_abs, tag = 'smem constant byte address 0x4 - core index']
  #allocation1 [shape = 'u32[144,128]{1,0:T(1,128)}', space=vmem, size = 0x12000, scoped, tag = 'internal scratch']
  %s0 = inlined_call_operand.vmem [shape: f32[40,8], index: 0, kind: input, shape index: {}]
  %s1 = inlined_call_operand.vmem [shape: f32[128,8], index: 1, kind: input, shape index: {}]
  %s2 = inlined_call_operand.vmem [shape: f32[1,8], index: 2, kind: input, shape index: {}]
  %s3 = inlined_call_operand.vmem [shape: f32[40,128], index: 3, kind: output, shape index: {}]
  %s4 = sld [smem:[#allocation0]]
  $region22: #{svd_conv2d.2} parent=0
    _
  %s6 = ssub.s32 1, %s4
  %s7 = scalar_select 0, %s6, %s4
  // Predicated region
  $region2: #{svd_conv2d.2} parent=0 // pred_check
    _
  $region3: #{svd_conv2d.2} parent=0 // pred_check_branch
    %9 = sbr.rel (0) target = $region5
  $region4: #{svd_conv2d.2} parent=0 // pred_region
    _
  $region5: #{svd_conv2d.2} parent=0 // pred_fallthru
    _
  // Predicated region
  $region6: #{svd_conv2d.2} parent=0 // pred_check
    _
  $region7: #{svd_conv2d.2} parent=0 // pred_check_branch
    %11 = sbr.rel (0) target = $region9
  $region8: #{svd_conv2d.2} parent=0 // pred_region
    _
  $region9: #{svd_conv2d.2} parent=0 // pred_fallthru
    _
  // Predicated region
  $region10: #{svd_conv2d.2} parent=0 // pred_check
    _
  $region11: #{svd_conv2d.2} parent=0 // pred_check_branch
    %13 = sbr.rel (0) target = $region13
  $region12: #{svd_conv2d.2} parent=0 // pred_region
    _
  $region13: #{svd_conv2d.2} parent=0 // pred_fallthru
    _
  %v14 = vld [vmem:[%s0] sm:$0xff]
  %v15 = vld [vmem:[%s0 + $0x8] sm:$0xff]
  %v16 = vld [vmem:[%s0 + $0x10] sm:$0xff]
  %v17 = vld [vmem:[%s0 + $0x18] sm:$0xff]
  %v18 = vld [vmem:[%s0 + $0x20] sm:$0xff]
  %v19 = vld [vmem:[%s2] sm:$0x1]
  %v20 = vand.u32 2147483647, %v19
  %v22 = vlaneseq
  %v23 = vshrl.u32 %v22, 7
  %v24 = vsub.s32 0, %v23
  %v25 = vrot.slane %v20, %v24
  %v27 = vmul.f32 %v14, %v25
  %v28 = vmul.f32 %v15, %v25
  %v29 = vmul.f32 %v16, %v25
  %v30 = vmul.f32 %v17, %v25
  %v31 = vmul.f32 %v18, %v25
  %v32 = vld [vmem:[%s1] sm:$0xff]
  %v33 = vld [vmem:[%s1 + $0x8] sm:$0xff]
  %v34 = vld [vmem:[%s1 + $0x10] sm:$0xff]
  %v35 = vld [vmem:[%s1 + $0x18] sm:$0xff]
  %v36 = vld [vmem:[%s1 + $0x20] sm:$0xff]
  %v37 = vld [vmem:[%s1 + $0x28] sm:$0xff]
  %v38 = vld [vmem:[%s1 + $0x30] sm:$0xff]
  %v39 = vld [vmem:[%s1 + $0x38] sm:$0xff]
  %v40 = vld [vmem:[%s1 + $0x40] sm:$0xff]
  %v41 = vld [vmem:[%s1 + $0x48] sm:$0xff]
  %v42 = vld [vmem:[%s1 + $0x50] sm:$0xff]
  %v43 = vld [vmem:[%s1 + $0x58] sm:$0xff]
  %v44 = vld [vmem:[%s1 + $0x60] sm:$0xff]
  %v45 = vld [vmem:[%s1 + $0x68] sm:$0xff]
  %v46 = vld [vmem:[%s1 + $0x70] sm:$0xff]
  %v47 = vld [vmem:[%s1 + $0x78] sm:$0xff]
  %vm48 = vcmask 64512
  %v50 = vsel %vm48, %v27, 0
  %v53 = vsel %vm48, %v28, 0
  %v56 = vsel %vm48, %v29, 0
  %v59 = vsel %vm48, %v30, 0
  %v62 = vsel %vm48, %v31, 0
  %v65 = vsel %vm48, %v32, 0
  %v68 = vsel %vm48, %v33, 0
  %v71 = vsel %vm48, %v34, 0
  %v74 = vsel %vm48, %v35, 0
  %v77 = vsel %vm48, %v36, 0
  %v80 = vsel %vm48, %v37, 0
  %v83 = vsel %vm48, %v38, 0
  %v86 = vsel %vm48, %v39, 0
  %v89 = vsel %vm48, %v40, 0
  %v92 = vsel %vm48, %v41, 0
  %v95 = vsel %vm48, %v42, 0
  %v98 = vsel %vm48, %v43, 0
  %v101 = vsel %vm48, %v44, 0
  %v104 = vsel %vm48, %v45, 0
  %v107 = vsel %vm48, %v46, 0
  %v110 = vsel %vm48, %v47, 0
  %112 = vmatprep.subr.mxu0 0.0
  %113 = vmatpush1.xpose.msra.mxu0 %v110
  %114 = vmatprep.subr.mxu0 0.0
  %115 = vmatpush1.xpose.msra.mxu0 %v107
  %116 = vmatprep.subr.mxu0 0.0
  %117 = vmatpush1.xpose.msra.mxu0 %v104
  %118 = vmatprep.subr.mxu0 0.0
  %119 = vmatpush1.xpose.msra.mxu0 %v101
  %120 = vmatprep.subr.mxu0 0.0
  %121 = vmatpush1.xpose.msra.mxu0 %v98
  %122 = vmatprep.subr.mxu0 0.0
  %123 = vmatpush1.xpose.msra.mxu0 %v95
  %124 = vmatprep.subr.mxu0 0.0
  %125 = vmatpush1.xpose.msra.mxu0 %v92
  %126 = vmatprep.subr.mxu0 0.0
  %127 = vmatpush1.xpose.msra.mxu0 %v89
  %128 = vmatprep.subr.mxu0 0.0
  %129 = vmatpush1.xpose.msra.mxu0 %v86
  %130 = vmatprep.subr.mxu0 0.0
  %131 = vmatpush1.xpose.msra.mxu0 %v83
  %132 = vmatprep.subr.mxu0 0.0
  %133 = vmatpush1.xpose.msra.mxu0 %v80
  %134 = vmatprep.subr.mxu0 0.0
  %135 = vmatpush1.xpose.msra.mxu0 %v77
  %136 = vmatprep.subr.mxu0 0.0
  %137 = vmatpush1.xpose.msra.mxu0 %v74
  %138 = vmatprep.subr.mxu0 0.0
  %139 = vmatpush1.xpose.msra.mxu0 %v71
  %140 = vmatprep.subr.mxu0 0.0
  %141 = vmatpush1.xpose.msra.mxu0 %v68
  %142 = vmatprep.subr.mxu0 0.0
  %143 = vmatpush1.xpose.msra.mxu0 %v65
  %144 = vmatprep.subr.mxu0 0.0
  %145 = vmatpush2.xpose.msra.mxu0 0.0
  %146 = vmatprep.subr.mxu0 0.0
  %147 = vmatpush2.xpose.msra.mxu0 0.0
  %148 = vmatprep.subr.mxu0 0.0
  %149 = vmatpush2.xpose.msra.mxu0 0.0
  %150 = vmatprep.subr.mxu0 0.0
  %151 = vmatpush2.xpose.msra.mxu0 0.0
  %152 = vmatprep.subr.mxu0 0.0
  %153 = vmatpush2.xpose.msra.mxu0 0.0
  %154 = vmatprep.subr.mxu0 0.0
  %155 = vmatpush2.xpose.msra.mxu0 0.0
  %156 = vmatprep.subr.mxu0 0.0
  %157 = vmatpush2.xpose.msra.mxu0 0.0
  %158 = vmatprep.subr.mxu0 0.0
  %159 = vmatpush2.xpose.msra.mxu0 0.0
  %160 = vmatprep.subr.mxu0 0.0
  %161 = vmatpush2.xpose.msra.mxu0 0.0
  %162 = vmatprep.subr.mxu0 0.0
  %163 = vmatpush2.xpose.msra.mxu0 0.0
  %164 = vmatprep.subr.mxu0 0.0
  %165 = vmatpush2.xpose.msra.mxu0 0.0
  %166 = vmatprep.subr.mxu0 0.0
  %167 = vmatpush2.xpose.msra.mxu0 0.0
  %168 = vmatprep.subr.mxu0 0.0
  %169 = vmatpush2.xpose.msra.mxu0 0.0
  %170 = vmatprep.subr.mxu0 0.0
  %171 = vmatpush2.xpose.msra.mxu0 0.0
  %172 = vmatprep.subr.mxu0 0.0
  %173 = vmatpush2.xpose.msra.mxu0 0.0
  %174 = vmatprep.subr.mxu0 0.0
  %175 = vmatpush2.xpose.msra.mxu0 0.0
  %176 = vmatprep.mubr.f32.mxu0 0.0
  %177 = vmatmul.mubr.f32.gmra.mxu0 %v50
  %v178 = vpop.f32.mrf.mxu0
  %v179 = vadd.f32 0.0, %v178
  %v180 = vpop.f32.mrf.mxu0
  %181 = vmatprep.mubr.f32.mxu0 0.0
  %182 = vmatmul.mubr.f32.gmra.mxu0 %v53
  %v183 = vpop.f32.mrf.mxu0
  %v184 = vadd.f32 0.0, %v183
  %v185 = vpop.f32.mrf.mxu0
  %186 = vmatprep.mubr.f32.mxu0 0.0
  %187 = vmatmul.mubr.f32.gmra.mxu0 %v56
  %v188 = vpop.f32.mrf.mxu0
  %v189 = vadd.f32 0.0, %v188
  %v190 = vpop.f32.mrf.mxu0
  %191 = vmatprep.mubr.f32.mxu0 0.0
  %192 = vmatmul.mubr.f32.gmra.mxu0 %v59
  %v193 = vpop.f32.mrf.mxu0
  %v194 = vadd.f32 0.0, %v193
  %v195 = vpop.f32.mrf.mxu0
  %196 = vmatprep.mubr.f32.mxu0 0.0
  %197 = vmatmul.mubr.f32.gmra.mxu0 %v62
  %v198 = vpop.f32.mrf.mxu0
  %v199 = vadd.f32 0.0, %v198
  %v200 = vpop.f32.mrf.mxu0
  %201 = vdwg.mxu0
  %202 = vst [vmem:[%s3] sm:$0xff] %v179
  %203 = vst [vmem:[%s3 + $0x8] sm:$0xff] %v184
  %204 = vst [vmem:[%s3 + $0x10] sm:$0xff] %v189
  %205 = vst [vmem:[%s3 + $0x18] sm:$0xff] %v194
  %206 = vst [vmem:[%s3 + $0x20] sm:$0xff] %v199
  // Predicated region
  $region14: #{svd_conv2d.2} parent=0 // pred_check
    _
  $region15: #{svd_conv2d.2} parent=0 // pred_check_branch
    %208 = sbr.rel (0) target = $region17
  $region16: #{svd_conv2d.2} parent=0 // pred_region
    _
  $region17: #{svd_conv2d.2} parent=0 // pred_fallthru
    _
  // Predicated region
  $region18: #{svd_conv2d.2} parent=0 // pred_check
    _
  $region19: #{svd_conv2d.2} parent=0 // pred_check_branch
    %210 = sbr.rel (0) target = $region21
  $region20: #{svd_conv2d.2} parent=0 // pred_region
    _
  $region21: #{svd_conv2d.2} parent=0 // pred_fallthru
    _

// kernel: svd_conv2d.3
$region0: #{svd_conv2d.3}
  #allocation0 [shape = 'u32[]', space=smem, size = 0x4, offset = 0x4, fixed_abs, tag = 'smem constant byte address 0x4 - core index']
  #allocation1 [shape = 'u32[144,128]{1,0:T(1,128)}', space=vmem, size = 0x12000, scoped, tag = 'internal scratch']
  #allocation2 [shape = 'f32[384,128]{1,0:T(8,128)}', space=vmem, size = 0x30000, scoped, tag = 'scratch operand']
  %s0 = inlined_call_operand.vmem [shape: f32[2,456,4], index: 0, kind: input, shape index: {}]
  %s1 = inlined_call_operand.vmem [shape: f32[9,4,128], index: 1, kind: input, shape index: {}]
  %s2 = inlined_call_operand.vmem [shape: f32[2,8,384], index: 2, kind: output, shape index: {}]
  %s3 = sld [smem:[#allocation0]]
  $region41: #{svd_conv2d.3} parent=0
    _
  %s5 = ssub.s32 1, %s3
  %s6 = scalar_select 0, %s5, %s3
  loop: start=0, step=1, limit=4
  $region2: #{svd_conv2d.3} parent=0 // loop_pre_header
    _
  $region3: #{svd_conv2d.3} parent=0 // loop_header
    %s8 = sphi 0, %s12
    %p9 = scmp.ge.s32.totalorder %s8, 4
    %s18 = sphi 0, %s20
    %s21 = sphi 0, %s18
    %s22 = sphi 0, %s21
    %s38 = sphi 0, %s22
    %s42 = sphi 0, %s42
    %s44 = sphi 0, %s42
    %s45 = sphi 0, %s44
    %s59 = sphi 0, %s45
    %s65 = sphi 0, %s67
    %s68 = sphi 0, %s65
    %s69 = sphi 0, %s68
    %s85 = sphi 0, %s69
  $region4: #{svd_conv2d.3} parent=0 // loop_header_branch
    %11 = sbr.rel (%p9) target = $region8
  $region5: #{svd_conv2d.3} parent=0 // loop_body
    %s13 = ssub.s32 %s8, 1
    %s14 = ssub.s32 %s8, 2
    %s15 = sadd.s32 %s8, 1
    %s16 = ssub.s32 %s8, %s15
    %p17 = scmp.eq.s32.totalorder %s16, 0
    %s19 = sadd.s32 %s18, 1
    %s20 = scalar_select %p17, %s18, %s19
    %p23 = pneg %p17
    %p24 = scmp.eq.s32.totalorder %s8, 1
    %p25 = por %p23, %p24
    %p26 = scmp.ne.s32.totalorder %s18, %s21
    %p27 = scmp.eq.s32.totalorder %s8, 0
    %p28 = por %p26, %p27
    %p29 = scmp.ne.s32.totalorder %s18, %s21
    %p30 = scmp.eq.s32.totalorder %s13, 1
    %p31 = por %p29, %p30
    %p32 = scmp.ne.s32.totalorder %s21, %s22
    %p33 = scmp.eq.s32.totalorder %s13, 0
    %p34 = por %p32, %p33
    %p35 = scmp.ne.s32.totalorder %s21, %s22
    %p36 = scmp.eq.s32.totalorder %s14, 1
    %p37 = por %p35, %p36
    %p39 = scmp.ne.s32.totalorder %s22, %s38
    %p40 = scmp.eq.s32.totalorder %s14, 0
    %p41 = por %p39, %p40
    %s43 = sadd.s32 %s42, 1
    %p46 = scmp.eq.s32.totalorder %s8, 1
    %p47 = scmp.ne.s32.totalorder %s42, %s44
    %p48 = scmp.eq.s32.totalorder %s8, 0
    %p49 = por %p47, %p48
    %p50 = scmp.ne.s32.totalorder %s42, %s44
    %p51 = scmp.eq.s32.totalorder %s13, 1
    %p52 = por %p50, %p51
    %p53 = scmp.ne.s32.totalorder %s44, %s45
    %p54 = scmp.eq.s32.totalorder %s13, 0
    %p55 = por %p53, %p54
    %p56 = scmp.ne.s32.totalorder %s44, %s45
    %p57 = scmp.eq.s32.totalorder %s14, 1
    %p58 = por %p56, %p57
    %p60 = scmp.ne.s32.totalorder %s45, %s59
    %p61 = scmp.eq.s32.totalorder %s14, 0
    %p62 = por %p60, %p61
    %s63 = ssub.s32 %s8, %s15
    %p64 = scmp.eq.s32.totalorder %s63, 0
    %s66 = sadd.s32 %s65, 1
    %s67 = scalar_select %p64, %s65, %s66
    %p70 = pneg %p64
    %p71 = scmp.eq.s32.totalorder %s8, 1
    %p72 = por %p70, %p71
    %p73 = scmp.ne.s32.totalorder %s65, %s68
    %p74 = scmp.eq.s32.totalorder %s8, 0
    %p75 = por %p73, %p74
    %p76 = scmp.ne.s32.totalorder %s65, %s68
    %p77 = scmp.eq.s32.totalorder %s13, 1
    %p78 = por %p76, %p77
    %p79 = scmp.ne.s32.totalorder %s68, %s69
    %p80 = scmp.eq.s32.totalorder %s13, 0
    %p81 = por %p79, %p80
    %p82 = scmp.ne.s32.totalorder %s68, %s69
    %p83 = scmp.eq.s32.totalorder %s14, 1
    %p84 = por %p82, %p83
    %p86 = scmp.ne.s32.totalorder %s69, %s85
    %p87 = scmp.eq.s32.totalorder %s14, 0
    %p88 = por %p86, %p87
    %p89 = scmp.le.s32.totalorder 1, %s8
    %p90 = scmp.lt.s32.totalorder %s8, 3
    %p91 = pnand %p89, %p90
    %p92 = pneg %p91
    // Predicated region
    $region9: #{svd_conv2d.3} parent=5 // pred_check
      _
    $region10: #{svd_conv2d.3} parent=5 // pred_check_branch
      %94 = sbr.rel (%p91) target = $region12
    $region11: #{svd_conv2d.3} parent=5 // pred_region
      %s95 = ssub.s32 %s8, 1
      // Predicated region
      $region13: #{svd_conv2d.3} parent=11 // pred_check
        %p96 = pneg %p55
      $region14: #{svd_conv2d.3} parent=11 // pred_check_branch
        %98 = sbr.rel (%p96) target = $region16
      $region15: #{svd_conv2d.3} parent=11 // pred_region
        _
      $region16: #{svd_conv2d.3} parent=11 // pred_fallthru
        _
    $region12: #{svd_conv2d.3} parent=5 // pred_fallthru
      _
    %p99 = scmp.lt.s32.totalorder %s8, 2
    // Predicated region
    $region17: #{svd_conv2d.3} parent=5 // pred_check
      %p100 = pneg %p99
    $region18: #{svd_conv2d.3} parent=5 // pred_check_branch
      %102 = sbr.rel (%p100) target = $region20
    $region19: #{svd_conv2d.3} parent=5 // pred_region
      // Predicated region
      $region21: #{svd_conv2d.3} parent=19 // pred_check
        %p103 = pneg %p28
      $region22: #{svd_conv2d.3} parent=19 // pred_check_branch
        %105 = sbr.rel (%p103) target = $region24
      $region23: #{svd_conv2d.3} parent=19 // pred_region
        %p106 = scmp.lt.s32.totalorder %s8, 1
        %s107 = scalar_select %p106, %s8, 1
        %s108 = smul.addr %s107, 57
        %s109 = smul.addr %s108, 8
        %s110 = scalar_lea.vmem %s0, %s109
      $region24: #{svd_conv2d.3} parent=19 // pred_fallthru
        _
    $region20: #{svd_conv2d.3} parent=5 // pred_fallthru
      _
    %p111 = scmp.le.s32.totalorder 1, %s8
    %p112 = scmp.lt.s32.totalorder %s8, 3
    %p113 = pnand %p111, %p112
    %p114 = pneg %p113
    // Predicated region
    $region25: #{svd_conv2d.3} parent=5 // pred_check
      _
    $region26: #{svd_conv2d.3} parent=5 // pred_check_branch
      %116 = sbr.rel (%p113) target = $region28
    $region27: #{svd_conv2d.3} parent=5 // pred_region
      %s117 = ssub.s32 %s8, 1
      %p118 = scmp.lt.s32.totalorder %s13, 1
      %s119 = scalar_select %p118, %s13, 1
      %s120 = smul.addr %s119, 57
      %s121 = smul.addr %s120, 8
      %s122 = scalar_lea.vmem %s0, %s121
      %p123 = pneg %p34
      %p124 = pneg %p31
      %p125 = pneg %p55
      %p126 = pneg %p52
      %p127 = pneg %p81
      %p128 = pneg %p78
      %p129 = scmp.lt.s32.totalorder %s13, 1
      %s130 = scalar_select %p129, %s13, 1
      %s131 = smul.addr %s130, 3
      %s132 = smul.addr %s131, 8
      %s133 = scalar_lea.vmem %s2, %s132
      %p134 = scmp.lt.s32.totalorder %s13, 1
      %s135 = scalar_select %p134, %s13, 1
      %s136 = smul.addr %s135, 57
      %s137 = smul.addr %s136, 8
      %s138 = scalar_lea.vmem %s0, %s137
      %p139 = scmp.lt.s32.totalorder %s13, 1
      %s140 = scalar_select %p139, %s13, 1
      %s141 = smul.addr %s140, 3
      %s142 = smul.addr %s141, 8
      %s143 = scalar_lea.vmem %s2, %s142
      %144 = vst [vmem:[#allocation2] sm:$0xff] 0.0
      %145 = vst [vmem:[#allocation2 + $0x8] sm:$0xff] 0.0
      %146 = vst [vmem:[#allocation2 + $0x10] sm:$0xff] 0.0
      %147 = vst [vmem:[#allocation2 + $0x18] sm:$0xff] 0.0
      %148 = vst [vmem:[#allocation2 + $0x20] sm:$0xff] 0.0
      %149 = vst [vmem:[#allocation2 + $0x28] sm:$0xff] 0.0
      %150 = vst [vmem:[#allocation2 + $0x30] sm:$0xff] 0.0
      %151 = vst [vmem:[#allocation2 + $0x38] sm:$0xff] 0.0
      %152 = vst [vmem:[#allocation2 + $0x40] sm:$0xff] 0.0
      %153 = vst [vmem:[#allocation2 + $0x48] sm:$0xff] 0.0
      %154 = vst [vmem:[#allocation2 + $0x50] sm:$0xff] 0.0
      %155 = vst [vmem:[#allocation2 + $0x58] sm:$0xff] 0.0
      %156 = vst [vmem:[#allocation2 + $0x60] sm:$0xff] 0.0
      %157 = vst [vmem:[#allocation2 + $0x68] sm:$0xff] 0.0
      %158 = vst [vmem:[#allocation2 + $0x70] sm:$0xff] 0.0
      %159 = vst [vmem:[#allocation2 + $0x78] sm:$0xff] 0.0
      %160 = vst [vmem:[#allocation2 + $0x80] sm:$0xff] 0.0
      %161 = vst [vmem:[#allocation2 + $0x88] sm:$0xff] 0.0
      %162 = vst [vmem:[#allocation2 + $0x90] sm:$0xff] 0.0
      %163 = vst [vmem:[#allocation2 + $0x98] sm:$0xff] 0.0
      %164 = vst [vmem:[#allocation2 + $0xa0] sm:$0xff] 0.0
      %165 = vst [vmem:[#allocation2 + $0xa8] sm:$0xff] 0.0
      %166 = vst [vmem:[#allocation2 + $0xb0] sm:$0xff] 0.0
      %167 = vst [vmem:[#allocation2 + $0xb8] sm:$0xff] 0.0
      %168 = vst [vmem:[#allocation2 + $0xc0] sm:$0xff] 0.0
      %169 = vst [vmem:[#allocation2 + $0xc8] sm:$0xff] 0.0
      %170 = vst [vmem:[#allocation2 + $0xd0] sm:$0xff] 0.0
      %171 = vst [vmem:[#allocation2 + $0xd8] sm:$0xff] 0.0
      %172 = vst [vmem:[#allocation2 + $0xe0] sm:$0xff] 0.0
      %173 = vst [vmem:[#allocation2 + $0xe8] sm:$0xff] 0.0
      %174 = vst [vmem:[#allocation2 + $0xf0] sm:$0xff] 0.0
      %175 = vst [vmem:[#allocation2 + $0xf8] sm:$0xff] 0.0
      %176 = vst [vmem:[#allocation2 + $0x100] sm:$0xff] 0.0
      %177 = vst [vmem:[#allocation2 + $0x108] sm:$0xff] 0.0
      %178 = vst [vmem:[#allocation2 + $0x110] sm:$0xff] 0.0
      %179 = vst [vmem:[#allocation2 + $0x118] sm:$0xff] 0.0
      %180 = vst [vmem:[#allocation2 + $0x120] sm:$0xff] 0.0
      %181 = vst [vmem:[#allocation2 + $0x128] sm:$0xff] 0.0
      %182 = vst [vmem:[#allocation2 + $0x130] sm:$0xff] 0.0
      %183 = vst [vmem:[#allocation2 + $0x138] sm:$0xff] 0.0
      %184 = vst [vmem:[#allocation2 + $0x140] sm:$0xff] 0.0
      %185 = vst [vmem:[#allocation2 + $0x148] sm:$0xff] 0.0
      %186 = vst [vmem:[#allocation2 + $0x150] sm:$0xff] 0.0
      %187 = vst [vmem:[#allocation2 + $0x158] sm:$0xff] 0.0
      %188 = vst [vmem:[#allocation2 + $0x160] sm:$0xff] 0.0
      %189 = vst [vmem:[#allocation2 + $0x168] sm:$0xff] 0.0
      %190 = vst [vmem:[#allocation2 + $0x170] sm:$0xff] 0.0
      %191 = vst [vmem:[#allocation2 + $0x178] sm:$0xff] 0.0
      %v192 = vld [vmem:[#allocation2] sm:$0xff]
      %v193 = vld [vmem:[#allocation2 + $0x8] sm:$0xff]
      %v194 = vld [vmem:[#allocation2 + $0x10] sm:$0xff]
      %v195 = vld [vmem:[#allocation2 + $0x18] sm:$0xff]
      %v196 = vld [vmem:[#allocation2 + $0x20] sm:$0xff]
      %v197 = vld [vmem:[#allocation2 + $0x28] sm:$0xff]
      %v198 = vld [vmem:[#allocation2 + $0x30] sm:$0xff]
      %v199 = vld [vmem:[#allocation2 + $0x38] sm:$0xff]
      %v200 = vld [vmem:[#allocation2 + $0x40] sm:$0xff]
      %v201 = vld [vmem:[#allocation2 + $0x48] sm:$0xff]
      %v202 = vld [vmem:[#allocation2 + $0x50] sm:$0xff]
      %v203 = vld [vmem:[#allocation2 + $0x58] sm:$0xff]
      %v204 = vld [vmem:[#allocation2 + $0x60] sm:$0xff]
      %v205 = vld [vmem:[#allocation2 + $0x68] sm:$0xff]
      %v206 = vld [vmem:[#allocation2 + $0x70] sm:$0xff]
      %v207 = vld [vmem:[#allocation2 + $0x78] sm:$0xff]
      %v208 = vld [vmem:[#allocation2 + $0x80] sm:$0xff]
      %v209 = vld [vmem:[#allocation2 + $0x88] sm:$0xff]
      %v210 = vld [vmem:[#allocation2 + $0x90] sm:$0xff]
      %v211 = vld [vmem:[#allocation2 + $0x98] sm:$0xff]
      %v212 = vld [vmem:[#allocation2 + $0xa0] sm:$0xff]
      %v213 = vld [vmem:[#allocation2 + $0xa8] sm:$0xff]
      %v214 = vld [vmem:[#allocation2 + $0xb0] sm:$0xff]
      %v215 = vld [vmem:[#allocation2 + $0xb8] sm:$0xff]
      %v216 = vld [vmem:[#allocation2 + $0xc0] sm:$0xff]
      %v217 = vld [vmem:[#allocation2 + $0xc8] sm:$0xff]
      %v218 = vld [vmem:[#allocation2 + $0xd0] sm:$0xff]
      %v219 = vld [vmem:[#allocation2 + $0xd8] sm:$0xff]
      %v220 = vld [vmem:[#allocation2 + $0xe0] sm:$0xff]
      %v221 = vld [vmem:[#allocation2 + $0xe8] sm:$0xff]
      %v222 = vld [vmem:[#allocation2 + $0xf0] sm:$0xff]
      %v223 = vld [vmem:[#allocation2 + $0xf8] sm:$0xff]
      %v224 = vld [vmem:[#allocation2 + $0x100] sm:$0xff]
      %v225 = vld [vmem:[#allocation2 + $0x108] sm:$0xff]
      %v226 = vld [vmem:[#allocation2 + $0x110] sm:$0xff]
      %v227 = vld [vmem:[#allocation2 + $0x118] sm:$0xff]
      %v228 = vld [vmem:[#allocation2 + $0x120] sm:$0xff]
      %v229 = vld [vmem:[#allocation2 + $0x128] sm:$0xff]
      %v230 = vld [vmem:[#allocation2 + $0x130] sm:$0xff]
      %v231 = vld [vmem:[#allocation2 + $0x138] sm:$0xff]
      %v232 = vld [vmem:[#allocation2 + $0x140] sm:$0xff]
      %v233 = vld [vmem:[#allocation2 + $0x148] sm:$0xff]
      %v234 = vld [vmem:[#allocation2 + $0x150] sm:$0xff]
      %v235 = vld [vmem:[#allocation2 + $0x158] sm:$0xff]
      %v236 = vld [vmem:[#allocation2 + $0x160] sm:$0xff]
      %v237 = vld [vmem:[#allocation2 + $0x168] sm:$0xff]
      %v238 = vld [vmem:[#allocation2 + $0x170] sm:$0xff]
      %v239 = vld [vmem:[#allocation2 + $0x178] sm:$0xff]
      %v240 = vld [vmem:[%s138] sm:$0xff]
      %v241 = vld [vmem:[%s138 + $0x8] sm:$0xff]
      %v242 = vld [vmem:[%s138 + $0x10] sm:$0xff]
      %v243 = vld [vmem:[%s138 + $0x18] sm:$0xff]
      %v244 = vld [vmem:[%s138 + $0x20] sm:$0xff]
      %v245 = vld [vmem:[%s138 + $0x28] sm:$0xff]
      %v246 = vld [vmem:[%s138 + $0x30] sm:$0xff]
      %v247 = vld [vmem:[%s138 + $0x38] sm:$0xff]
      %v248 = vld [vmem:[%s138 + $0x40] sm:$0xff]
      %v249 = vld [vmem:[%s138 + $0x48] sm:$0xff]
      %v250 = vld [vmem:[%s138 + $0x50] sm:$0xff]
      %v251 = vld [vmem:[%s138 + $0x58] sm:$0xff]
      %v252 = vld [vmem:[%s138 + $0x60] sm:$0xff]
      %v253 = vld [vmem:[%s138 + $0x68] sm:$0xff]
      %v254 = vld [vmem:[%s138 + $0x70] sm:$0xff]
      %v255 = vld [vmem:[%s138 + $0x78] sm:$0xff]
      %v256 = vld [vmem:[%s138 + $0x80] sm:$0xff]
      %v257 = vld [vmem:[%s138 + $0x88] sm:$0xff]
      %v258 = vld [vmem:[%s138 + $0x90] sm:$0xff]
      %v259 = vld [vmem:[%s138 + $0x98] sm:$0xff]
      %v260 = vld [vmem:[%s138 + $0xa0] sm:$0xff]
      %v261 = vld [vmem:[%s138 + $0xa8] sm:$0xff]
      %v262 = vld [vmem:[%s138 + $0xb0] sm:$0xff]
      %v263 = vld [vmem:[%s138 + $0xb8] sm:$0xff]
      %v264 = vld [vmem:[%s138 + $0xc0] sm:$0xff]
      %v265 = vld [vmem:[%s138 + $0xc8] sm:$0xff]
      %v266 = vld [vmem:[%s138 + $0xd0] sm:$0xff]
      %v267 = vld [vmem:[%s138 + $0xd8] sm:$0xff]
      %v268 = vld [vmem:[%s138 + $0xe0] sm:$0xff]
      %v269 = vld [vmem:[%s138 + $0xe8] sm:$0xff]
      %v270 = vld [vmem:[%s138 + $0xf0] sm:$0xff]
      %v271 = vld [vmem:[%s138 + $0xf8] sm:$0xff]
      %v272 = vld [vmem:[%s138 + $0x100] sm:$0xff]
      %v273 = vld [vmem:[%s138 + $0x108] sm:$0xff]
      %v274 = vld [vmem:[%s138 + $0x110] sm:$0xff]
      %v275 = vld [vmem:[%s138 + $0x118] sm:$0xff]
      %v276 = vld [vmem:[%s138 + $0x120] sm:$0xff]
      %v277 = vld [vmem:[%s138 + $0x128] sm:$0xff]
      %v278 = vld [vmem:[%s138 + $0x130] sm:$0xff]
      %v279 = vld [vmem:[%s138 + $0x138] sm:$0xff]
      %v280 = vld [vmem:[%s138 + $0x140] sm:$0xff]
      %v281 = vld [vmem:[%s138 + $0x148] sm:$0xff]
      %v282 = vld [vmem:[%s138 + $0x150] sm:$0xff]
      %v283 = vld [vmem:[%s138 + $0x158] sm:$0xff]
      %v284 = vld [vmem:[%s138 + $0x160] sm:$0xff]
      %v285 = vld [vmem:[%s138 + $0x168] sm:$0xff]
      %v286 = vld [vmem:[%s138 + $0x170] sm:$0xff]
      %v287 = vld [vmem:[%s138 + $0x178] sm:$0xff]
      %v288 = vld [vmem:[%s1] sm:$0xf]
      %vm289 = vcmask 31744
      %v291 = vsel %vm289, %v240, 0
      %v294 = vsel %vm289, %v241, 0
      %v297 = vsel %vm289, %v242, 0
      %v300 = vsel %vm289, %v243, 0
      %v303 = vsel %vm289, %v244, 0
      %v306 = vsel %vm289, %v245, 0
      %v309 = vsel %vm289, %v246, 0
      %v312 = vsel %vm289, %v247, 0
      %v315 = vsel %vm289, %v248, 0
      %v318 = vsel %vm289, %v249, 0
      %v321 = vsel %vm289, %v250, 0
      %v324 = vsel %vm289, %v251, 0
      %v327 = vsel %vm289, %v252, 0
      %v330 = vsel %vm289, %v253, 0
      %v333 = vsel %vm289, %v254, 0
      %v336 = vsel %vm289, %v255, 0
      %v339 = vsel %vm289, %v256, 0
      %v342 = vsel %vm289, %v257, 0
      %v345 = vsel %vm289, %v258, 0
      %v348 = vsel %vm289, %v259, 0
      %v351 = vsel %vm289, %v260, 0
      %v354 = vsel %vm289, %v261, 0
      %v357 = vsel %vm289, %v262, 0
      %v360 = vsel %vm289, %v263, 0
      %v363 = vsel %vm289, %v264, 0
      %v366 = vsel %vm289, %v265, 0
      %v369 = vsel %vm289, %v266, 0
      %v372 = vsel %vm289, %v267, 0
      %v375 = vsel %vm289, %v268, 0
      %v378 = vsel %vm289, %v269, 0
      %v381 = vsel %vm289, %v270, 0
      %v384 = vsel %vm289, %v271, 0
      %v387 = vsel %vm289, %v272, 0
      %v390 = vsel %vm289, %v273, 0
      %v393 = vsel %vm289, %v274, 0
      %v396 = vsel %vm289, %v275, 0
      %v399 = vsel %vm289, %v276, 0
      %v402 = vsel %vm289, %v277, 0
      %v405 = vsel %vm289, %v278, 0
      %v408 = vsel %vm289, %v279, 0
      %v411 = vsel %vm289, %v280, 0
      %v414 = vsel %vm289, %v281, 0
      %v417 = vsel %vm289, %v282, 0
      %v420 = vsel %vm289, %v283, 0
      %v423 = vsel %vm289, %v284, 0
      %v426 = vsel %vm289, %v285, 0
      %v429 = vsel %vm289, %v286, 0
      %v432 = vsel %vm289, %v287, 0
      %vm434 = vcmask 1043456
      %v436 = vsel %vm434, %v288, 0
      %438 = vmatprep.subr.mxu0 0.0
      %439 = vmatpush1.msra.mxu0 0.0
      %440 = vmatprep.subr.mxu0 0.0
      %441 = vmatpush1.msra.mxu0 0.0
      %442 = vmatprep.subr.mxu0 0.0
      %443 = vmatpush1.msra.mxu0 0.0
      %444 = vmatprep.subr.mxu0 0.0
      %445 = vmatpush1.msra.mxu0 0.0
      %446 = vmatprep.subr.mxu0 0.0
      %447 = vmatpush1.msra.mxu0 0.0
      %448 = vmatprep.subr.mxu0 0.0
      %449 = vmatpush1.msra.mxu0 0.0
      %450 = vmatprep.subr.mxu0 0.0
      %451 = vmatpush1.msra.mxu0 0.0
      %452 = vmatprep.subr.mxu0 0.0
      %453 = vmatpush1.msra.mxu0 0.0
      %454 = vmatprep.subr.mxu0 0.0
      %455 = vmatpush1.msra.mxu0 0.0
      %456 = vmatprep.subr.mxu0 0.0
      %457 = vmatpush1.msra.mxu0 0.0
      %458 = vmatprep.subr.mxu0 0.0
      %459 = vmatpush1.msra.mxu0 0.0
      %460 = vmatprep.subr.mxu0 0.0
      %461 = vmatpush1.msra.mxu0 0.0
      %462 = vmatprep.subr.mxu0 0.0
      %463 = vmatpush1.msra.mxu0 0.0
      %464 = vmatprep.subr.mxu0 0.0
      %465 = vmatpush1.msra.mxu0 0.0
      %466 = vmatprep.subr.mxu0 0.0
      %467 = vmatpush1.msra.mxu0 0.0
      %468 = vmatprep.subr.mxu0 0.0
      %469 = vmatpush1.msra.mxu0 %v436
      %470 = vmatprep.subr.mxu0 0.0
      %471 = vmatpush2.msra.mxu0 0.0
      %472 = vmatprep.subr.mxu0 0.0
      %473 = vmatpush2.msra.mxu0 0.0
      %474 = vmatprep.subr.mxu0 0.0
      %475 = vmatpush2.msra.mxu0 0.0
      %476 = vmatprep.subr.mxu0 0.0
      %477 = vmatpush2.msra.mxu0 0.0
      %478 = vmatprep.subr.mxu0 0.0
      %479 = vmatpush2.msra.mxu0 0.0
      %480 = vmatprep.subr.mxu0 0.0
      %481 = vmatpush2.msra.mxu0 0.0
      %482 = vmatprep.subr.mxu0 0.0
      %483 = vmatpush2.msra.mxu0 0.0
      %484 = vmatprep.subr.mxu0 0.0
      %485 = vmatpush2.msra.mxu0 0.0
      %486 = vmatprep.subr.mxu0 0.0
      %487 = vmatpush2.msra.mxu0 0.0
      %488 = vmatprep.subr.mxu0 0.0
      %489 = vmatpush2.msra.mxu0 0.0
      %490 = vmatprep.subr.mxu0 0.0
      %491 = vmatpush2.msra.mxu0 0.0
      %492 = vmatprep.subr.mxu0 0.0
      %493 = vmatpush2.msra.mxu0 0.0
      %494 = vmatprep.subr.mxu0 0.0
      %495 = vmatpush2.msra.mxu0 0.0
      %496 = vmatprep.subr.mxu0 0.0
      %497 = vmatpush2.msra.mxu0 0.0
      %498 = vmatprep.subr.mxu0 0.0
      %499 = vmatpush2.msra.mxu0 0.0
      %500 = vmatprep.subr.mxu0 0.0
      %501 = vmatpush2.msra.mxu0 0.0
      %502 = vmatprep.mubr.f32.mxu0 0.0
      %503 = vmatmul.mubr.f32.gmra.mxu0 %v291
      %v504 = vpop.f32.mrf.mxu0
      %v505 = vadd.f32 0.0, %v504
      %v506 = vpop.f32.mrf.mxu0
      %507 = vmatprep.mubr.f32.mxu0 0.0
      %508 = vmatmul.mubr.f32.gmra.mxu0 %v294
      %v509 = vpop.f32.mrf.mxu0
      %v510 = vadd.f32 0.0, %v509
      %v511 = vpop.f32.mrf.mxu0
      %512 = vmatprep.mubr.f32.mxu0 0.0
      %513 = vmatmul.mubr.f32.gmra.mxu0 %v297
      %v514 = vpop.f32.mrf.mxu0
      %v515 = vadd.f32 0.0, %v514
      %v516 = vpop.f32.mrf.mxu0
      %517 = vmatprep.mubr.f32.mxu0 0.0
      %518 = vmatmul.mubr.f32.gmra.mxu0 %v300
      %v519 = vpop.f32.mrf.mxu0
      %v520 = vadd.f32 0.0, %v519
      %v521 = vpop.f32.mrf.mxu0
      %522 = vmatprep.mubr.f32.mxu0 0.0
      %523 = vmatmul.mubr.f32.gmra.mxu0 %v303
      %v524 = vpop.f32.mrf.mxu0
      %v525 = vadd.f32 0.0, %v524
      %v526 = vpop.f32.mrf.mxu0
      %527 = vmatprep.mubr.f32.mxu0 0.0
      %528 = vmatmul.mubr.f32.gmra.mxu0 %v306
      %v529 = vpop.f32.mrf.mxu0
      %v530 = vadd.f32 0.0, %v529
      %v531 = vpop.f32.mrf.mxu0
      %532 = vmatprep.mubr.f32.mxu0 0.0
      %533 = vmatmul.mubr.f32.gmra.mxu0 %v309
      %v534 = vpop.f32.mrf.mxu0
      %v535 = vadd.f32 0.0, %v534
      %v536 = vpop.f32.mrf.mxu0
      %537 = vmatprep.mubr.f32.mxu0 0.0
      %538 = vmatmul.mubr.f32.gmra.mxu0 %v312
      %v539 = vpop.f32.mrf.mxu0
      %v540 = vadd.f32 0.0, %v539
      %v541 = vpop.f32.mrf.mxu0
      %542 = vmatprep.mubr.f32.mxu0 0.0
      %543 = vmatmul.mubr.f32.gmra.mxu0 %v315
      %v544 = vpop.f32.mrf.mxu0
      %v545 = vadd.f32 0.0, %v544
      %v546 = vpop.f32.mrf.mxu0
      %547 = vmatprep.mubr.f32.mxu0 0.0
      %548 = vmatmul.mubr.f32.gmra.mxu0 %v318
      %v549 = vpop.f32.mrf.mxu0
      %v550 = vadd.f32 0.0, %v549
      %v551 = vpop.f32.mrf.mxu0
      %552 = vmatprep.mubr.f32.mxu0 0.0
      %553 = vmatmul.mubr.f32.gmra.mxu0 %v321
      %v554 = vpop.f32.mrf.mxu0
      %v555 = vadd.f32 0.0, %v554
      %v556 = vpop.f32.mrf.mxu0
      %557 = vmatprep.mubr.f32.mxu0 0.0
      %558 = vmatmul.mubr.f32.gmra.mxu0 %v324
      %v559 = vpop.f32.mrf.mxu0
      %v560 = vadd.f32 0.0, %v559
      %v561 = vpop.f32.mrf.mxu0
      %562 = vmatprep.mubr.f32.mxu0 0.0
      %563 = vmatmul.mubr.f32.gmra.mxu0 %v327
      %v564 = vpop.f32.mrf.mxu0
      %v565 = vadd.f32 0.0, %v564
      %v566 = vpop.f32.mrf.mxu0
      %567 = vmatprep.mubr.f32.mxu0 0.0
      %568 = vmatmul.mubr.f32.gmra.mxu0 %v330
      %v569 = vpop.f32.mrf.mxu0
      %v570 = vadd.f32 0.0, %v569
      %v571 = vpop.f32.mrf.mxu0
      %572 = vmatprep.mubr.f32.mxu0 0.0
      %573 = vmatmul.mubr.f32.gmra.mxu0 %v333
      %v574 = vpop.f32.mrf.mxu0
      %v575 = vadd.f32 0.0, %v574
      %v576 = vpop.f32.mrf.mxu0
      %577 = vmatprep.mubr.f32.mxu0 0.0
      %578 = vmatmul.mubr.f32.gmra.mxu0 %v336
      %v579 = vpop.f32.mrf.mxu0
      %v580 = vadd.f32 0.0, %v579
      %v581 = vpop.f32.mrf.mxu0
      %582 = vmatprep.mubr.f32.mxu0 0.0
      %583 = vmatmul.mubr.f32.gmra.mxu0 %v339
      %v584 = vpop.f32.mrf.mxu0
      %v585 = vadd.f32 0.0, %v584
      %v586 = vpop.f32.mrf.mxu0
      %587 = vmatprep.mubr.f32.mxu0 0.0
      %588 = vmatmul.mubr.f32.gmra.mxu0 %v342
      %v589 = vpop.f32.mrf.mxu0
      %v590 = vadd.f32 0.0, %v589
      %v591 = vpop.f32.mrf.mxu0
      %592 = vmatprep.mubr.f32.mxu0 0.0
      %593 = vmatmul.mubr.f32.gmra.mxu0 %v345
      %v594 = vpop.f32.mrf.mxu0
      %v595 = vadd.f32 0.0, %v594
      %v596 = vpop.f32.mrf.mxu0
      %597 = vmatprep.mubr.f32.mxu0 0.0
      %598 = vmatmul.mubr.f32.gmra.mxu0 %v348
      %v599 = vpop.f32.mrf.mxu0
      %v600 = vadd.f32 0.0, %v599
      %v601 = vpop.f32.mrf.mxu0
      %602 = vmatprep.mubr.f32.mxu0 0.0
      %603 = vmatmul.mubr.f32.gmra.mxu0 %v351
      %v604 = vpop.f32.mrf.mxu0
      %v605 = vadd.f32 0.0, %v604
      %v606 = vpop.f32.mrf.mxu0
      %607 = vmatprep.mubr.f32.mxu0 0.0
      %608 = vmatmul.mubr.f32.gmra.mxu0 %v354
      %v609 = vpop.f32.mrf.mxu0
      %v610 = vadd.f32 0.0, %v609
      %v611 = vpop.f32.mrf.mxu0
      %612 = vmatprep.mubr.f32.mxu0 0.0
      %613 = vmatmul.mubr.f32.gmra.mxu0 %v357
      %v614 = vpop.f32.mrf.mxu0
      %v615 = vadd.f32 0.0, %v614
      %v616 = vpop.f32.mrf.mxu0
      %617 = vmatprep.mubr.f32.mxu0 0.0
      %618 = vmatmul.mubr.f32.gmra.mxu0 %v360
      %v619 = vpop.f32.mrf.mxu0
      %v620 = vadd.f32 0.0, %v619
      %v621 = vpop.f32.mrf.mxu0
      %622 = vmatprep.mubr.f32.mxu0 0.0
      %623 = vmatmul.mubr.f32.gmra.mxu0 %v363
      %v624 = vpop.f32.mrf.mxu0
      %v625 = vadd.f32 0.0, %v624
      %v626 = vpop.f32.mrf.mxu0
      %627 = vmatprep.mubr.f32.mxu0 0.0
      %628 = vmatmul.mubr.f32.gmra.mxu0 %v366
      %v629 = vpop.f32.mrf.mxu0
      %v630 = vadd.f32 0.0, %v629
      %v631 = vpop.f32.mrf.mxu0
      %632 = vmatprep.mubr.f32.mxu0 0.0
      %633 = vmatmul.mubr.f32.gmra.mxu0 %v369
      %v634 = vpop.f32.mrf.mxu0
      %v635 = vadd.f32 0.0, %v634
      %v636 = vpop.f32.mrf.mxu0
      %637 = vmatprep.mubr.f32.mxu0 0.0
      %638 = vmatmul.mubr.f32.gmra.mxu0 %v372
      %v639 = vpop.f32.mrf.mxu0
      %v640 = vadd.f32 0.0, %v639
      %v641 = vpop.f32.mrf.mxu0
      %642 = vmatprep.mubr.f32.mxu0 0.0
      %643 = vmatmul.mubr.f32.gmra.mxu0 %v375
      %v644 = vpop.f32.mrf.mxu0
      %v645 = vadd.f32 0.0, %v644
      %v646 = vpop.f32.mrf.mxu0
      %647 = vmatprep.mubr.f32.mxu0 0.0
      %648 = vmatmul.mubr.f32.gmra.mxu0 %v378
      %v649 = vpop.f32.mrf.mxu0
      %v650 = vadd.f32 0.0, %v649
      %v651 = vpop.f32.mrf.mxu0
      %652 = vmatprep.mubr.f32.mxu0 0.0
      %653 = vmatmul.mubr.f32.gmra.mxu0 %v381
      %v654 = vpop.f32.mrf.mxu0
      %v655 = vadd.f32 0.0, %v654
      %v656 = vpop.f32.mrf.mxu0
      %657 = vmatprep.mubr.f32.mxu0 0.0
      %658 = vmatmul.mubr.f32.gmra.mxu0 %v384
      %v659 = vpop.f32.mrf.mxu0
      %v660 = vadd.f32 0.0, %v659
      %v661 = vpop.f32.mrf.mxu0
      %662 = vmatprep.mubr.f32.mxu0 0.0
      %663 = vmatmul.mubr.f32.gmra.mxu0 %v387
      %v664 = vpop.f32.mrf.mxu0
      %v665 = vadd.f32 0.0, %v664
      %v666 = vpop.f32.mrf.mxu0
      %667 = vmatprep.mubr.f32.mxu0 0.0
      %668 = vmatmul.mubr.f32.gmra.mxu0 %v390
      %v669 = vpop.f32.mrf.mxu0
      %v670 = vadd.f32 0.0, %v669
      %v671 = vpop.f32.mrf.mxu0
      %672 = vmatprep.mubr.f32.mxu0 0.0
      %673 = vmatmul.mubr.f32.gmra.mxu0 %v393
      %v674 = vpop.f32.mrf.mxu0
      %v675 = vadd.f32 0.0, %v674
      %v676 = vpop.f32.mrf.mxu0
      %677 = vmatprep.mubr.f32.mxu0 0.0
      %678 = vmatmul.mubr.f32.gmra.mxu0 %v396
      %v679 = vpop.f32.mrf.mxu0
      %v680 = vadd.f32 0.0, %v679
      %v681 = vpop.f32.mrf.mxu0
      %682 = vmatprep.mubr.f32.mxu0 0.0
      %683 = vmatmul.mubr.f32.gmra.mxu0 %v399
      %v684 = vpop.f32.mrf.mxu0
      %v685 = vadd.f32 0.0, %v684
      %v686 = vpop.f32.mrf.mxu0
      %687 = vmatprep.mubr.f32.mxu0 0.0
      %688 = vmatmul.mubr.f32.gmra.mxu0 %v402
      %v689 = vpop.f32.mrf.mxu0
      %v690 = vadd.f32 0.0, %v689
      %v691 = vpop.f32.mrf.mxu0
      %692 = vmatprep.mubr.f32.mxu0 0.0
      %693 = vmatmul.mubr.f32.gmra.mxu0 %v405
      %v694 = vpop.f32.mrf.mxu0
      %v695 = vadd.f32 0.0, %v694
      %v696 = vpop.f32.mrf.mxu0
      %697 = vmatprep.mubr.f32.mxu0 0.0
      %698 = vmatmul.mubr.f32.gmra.mxu0 %v408
      %v699 = vpop.f32.mrf.mxu0
      %v700 = vadd.f32 0.0, %v699
      %v701 = vpop.f32.mrf.mxu0
      %702 = vmatprep.mubr.f32.mxu0 0.0
      %703 = vmatmul.mubr.f32.gmra.mxu0 %v411
      %v704 = vpop.f32.mrf.mxu0
      %v705 = vadd.f32 0.0, %v704
      %v706 = vpop.f32.mrf.mxu0
      %707 = vmatprep.mubr.f32.mxu0 0.0
      %708 = vmatmul.mubr.f32.gmra.mxu0 %v414
      %v709 = vpop.f32.mrf.mxu0
      %v710 = vadd.f32 0.0, %v709
      %v711 = vpop.f32.mrf.mxu0
      %712 = vmatprep.mubr.f32.mxu0 0.0
      %713 = vmatmul.mubr.f32.gmra.mxu0 %v417
      %v714 = vpop.f32.mrf.mxu0
      %v715 = vadd.f32 0.0, %v714
      %v716 = vpop.f32.mrf.mxu0
      %717 = vmatprep.mubr.f32.mxu0 0.0
      %718 = vmatmul.mubr.f32.gmra.mxu0 %v420
      %v719 = vpop.f32.mrf.mxu0
      %v720 = vadd.f32 0.0, %v719
      %v721 = vpop.f32.mrf.mxu0
      %722 = vmatprep.mubr.f32.mxu0 0.0
      %723 = vmatmul.mubr.f32.gmra.mxu0 %v423
      %v724 = vpop.f32.mrf.mxu0
      %v725 = vadd.f32 0.0, %v724
      %v726 = vpop.f32.mrf.mxu0
      %727 = vmatprep.mubr.f32.mxu0 0.0
      %728 = vmatmul.mubr.f32.gmra.mxu0 %v426
      %v729 = vpop.f32.mrf.mxu0
      %v730 = vadd.f32 0.0, %v729
      %v731 = vpop.f32.mrf.mxu0
      %732 = vmatprep.mubr.f32.mxu0 0.0
      %733 = vmatmul.mubr.f32.gmra.mxu0 %v429
      %v734 = vpop.f32.mrf.mxu0
      %v735 = vadd.f32 0.0, %v734
      %v736 = vpop.f32.mrf.mxu0
      %737 = vmatprep.mubr.f32.mxu0 0.0
      %738 = vmatmul.mubr.f32.gmra.mxu0 %v432
      %v739 = vpop.f32.mrf.mxu0
      %v740 = vadd.f32 0.0, %v739
      %v741 = vpop.f32.mrf.mxu0
      %742 = vdwg.mxu0
      %v743 = vadd.f32 %v192, %v505
      %v744 = vadd.f32 %v193, %v510
      %v745 = vadd.f32 %v194, %v515
      %v746 = vadd.f32 %v195, %v520
      %v747 = vadd.f32 %v196, %v525
      %v748 = vadd.f32 %v197, %v530
      %v749 = vadd.f32 %v198, %v535
      %v750 = vadd.f32 %v199, %v540
      %v751 = vadd.f32 %v200, %v545
      %v752 = vadd.f32 %v201, %v550
      %v753 = vadd.f32 %v202, %v555
      %v754 = vadd.f32 %v203, %v560
      %v755 = vadd.f32 %v204, %v565
      %v756 = vadd.f32 %v205, %v570
      %v757 = vadd.f32 %v206, %v575
      %v758 = vadd.f32 %v207, %v580
      %v759 = vadd.f32 %v208, %v585
      %v760 = vadd.f32 %v209, %v590
      %v761 = vadd.f32 %v210, %v595
      %v762 = vadd.f32 %v211, %v600
      %v763 = vadd.f32 %v212, %v605
      %v764 = vadd.f32 %v213, %v610
      %v765 = vadd.f32 %v214, %v615
      %v766 = vadd.f32 %v215, %v620
      %v767 = vadd.f32 %v216, %v625
      %v768 = vadd.f32 %v217, %v630
      %v769 = vadd.f32 %v218, %v635
      %v770 = vadd.f32 %v219, %v640
      %v771 = vadd.f32 %v220, %v645
      %v772 = vadd.f32 %v221, %v650
      %v773 = vadd.f32 %v222, %v655
      %v774 = vadd.f32 %v223, %v660
      %v775 = vadd.f32 %v224, %v665
      %v776 = vadd.f32 %v225, %v670
      %v777 = vadd.f32 %v226, %v675
      %v778 = vadd.f32 %v227, %v680
      %v779 = vadd.f32 %v228, %v685
      %v780 = vadd.f32 %v229, %v690
      %v781 = vadd.f32 %v230, %v695
      %v782 = vadd.f32 %v231, %v700
      %v783 = vadd.f32 %v232, %v705
      %v784 = vadd.f32 %v233, %v710
      %v785 = vadd.f32 %v234, %v715
      %v786 = vadd.f32 %v235, %v720
      %v787 = vadd.f32 %v236, %v725
      %v788 = vadd.f32 %v237, %v730
      %v789 = vadd.f32 %v238, %v735
      %v790 = vadd.f32 %v239, %v740
      %791 = vst [vmem:[#allocation2] sm:$0xff] %v743
      %792 = vst [vmem:[#allocation2 + $0x8] sm:$0xff] %v744
      %793 = vst [vmem:[#allocation2 + $0x10] sm:$0xff] %v745
      %794 = vst [vmem:[#allocation2 + $0x18] sm:$0xff] %v746
      %795 = vst [vmem:[#allocation2 + $0x20] sm:$0xff] %v747
      %796 = vst [vmem:[#allocation2 + $0x28] sm:$0xff] %v748
      %797 = vst [vmem:[#allocation2 + $0x30] sm:$0xff] %v749
      %798 = vst [vmem:[#allocation2 + $0x38] sm:$0xff] %v750
      %799 = vst [vmem:[#allocation2 + $0x40] sm:$0xff] %v751
      %800 = vst [vmem:[#allocation2 + $0x48] sm:$0xff] %v752
      %801 = vst [vmem:[#allocation2 + $0x50] sm:$0xff] %v753
      %802 = vst [vmem:[#allocation2 + $0x58] sm:$0xff] %v754
      %803 = vst [vmem:[#allocation2 + $0x60] sm:$0xff] %v755
      %804 = vst [vmem:[#allocation2 + $0x68] sm:$0xff] %v756
      %805 = vst [vmem:[#allocation2 + $0x70] sm:$0xff] %v757
      %806 = vst [vmem:[#allocation2 + $0x78] sm:$0xff] %v758
      %807 = vst [vmem:[#allocation2 + $0x80] sm:$0xff] %v759
      %808 = vst [vmem:[#allocation2 + $0x88] sm:$0xff] %v760
      %809 = vst [vmem:[#allocation2 + $0x90] sm:$0xff] %v761
      %810 = vst [vmem:[#allocation2 + $0x98] sm:$0xff] %v762
      %811 = vst [vmem:[#allocation2 + $0xa0] sm:$0xff] %v763
      %812 = vst [vmem:[#allocation2 + $0xa8] sm:$0xff] %v764
      %813 = vst [vmem:[#allocation2 + $0xb0] sm:$0xff] %v765
      %814 = vst [vmem:[#allocation2 + $0xb8] sm:$0xff] %v766
      %815 = vst [vmem:[#allocation2 + $0xc0] sm:$0xff] %v767
      %816 = vst [vmem:[#allocation2 + $0xc8] sm:$0xff] %v768
      %817 = vst [vmem:[#allocation2 + $0xd0] sm:$0xff] %v769
      %818 = vst [vmem:[#allocation2 + $0xd8] sm:$0xff] %v770
      %819 = vst [vmem:[#allocation2 + $0xe0] sm:$0xff] %v771
      %820 = vst [vmem:[#allocation2 + $0xe8] sm:$0xff] %v772
      %821 = vst [vmem:[#allocation2 + $0xf0] sm:$0xff] %v773
      %822 = vst [vmem:[#allocation2 + $0xf8] sm:$0xff] %v774
      %823 = vst [vmem:[#allocation2 + $0x100] sm:$0xff] %v775
      %824 = vst [vmem:[#allocation2 + $0x108] sm:$0xff] %v776
      %825 = vst [vmem:[#allocation2 + $0x110] sm:$0xff] %v777
      %826 = vst [vmem:[#allocation2 + $0x118] sm:$0xff] %v778
      %827 = vst [vmem:[#allocation2 + $0x120] sm:$0xff] %v779
      %828 = vst [vmem:[#allocation2 + $0x128] sm:$0xff] %v780
      %829 = vst [vmem:[#allocation2 + $0x130] sm:$0xff] %v781
      %830 = vst [vmem:[#allocation2 + $0x138] sm:$0xff] %v782
      %831 = vst [vmem:[#allocation2 + $0x140] sm:$0xff] %v783
      %832 = vst [vmem:[#allocation2 + $0x148] sm:$0xff] %v784
      %833 = vst [vmem:[#allocation2 + $0x150] sm:$0xff] %v785
      %834 = vst [vmem:[#allocation2 + $0x158] sm:$0xff] %v786
      %835 = vst [vmem:[#allocation2 + $0x160] sm:$0xff] %v787
      %836 = vst [vmem:[#allocation2 + $0x168] sm:$0xff] %v788
      %837 = vst [vmem:[#allocation2 + $0x170] sm:$0xff] %v789
      %838 = vst [vmem:[#allocation2 + $0x178] sm:$0xff] %v790
      %v839 = vld [vmem:[#allocation2] sm:$0xff]
      %v840 = vld [vmem:[#allocation2 + $0x8] sm:$0xff]
      %v841 = vld [vmem:[#allocation2 + $0x10] sm:$0xff]
      %v842 = vld [vmem:[#allocation2 + $0x18] sm:$0xff]
      %v843 = vld [vmem:[#allocation2 + $0x20] sm:$0xff]
      %v844 = vld [vmem:[#allocation2 + $0x28] sm:$0xff]
      %v845 = vld [vmem:[#allocation2 + $0x30] sm:$0xff]
      %v846 = vld [vmem:[#allocation2 + $0x38] sm:$0xff]
      %v847 = vld [vmem:[#allocation2 + $0x40] sm:$0xff]
      %v848 = vld [vmem:[#allocation2 + $0x48] sm:$0xff]
      %v849 = vld [vmem:[#allocation2 + $0x50] sm:$0xff]
      %v850 = vld [vmem:[#allocation2 + $0x58] sm:$0xff]
      %v851 = vld [vmem:[#allocation2 + $0x60] sm:$0xff]
      %v852 = vld [vmem:[#allocation2 + $0x68] sm:$0xff]
      %v853 = vld [vmem:[#allocation2 + $0x70] sm:$0xff]
      %v854 = vld [vmem:[#allocation2 + $0x78] sm:$0xff]
      %v855 = vld [vmem:[#allocation2 + $0x80] sm:$0xff]
      %v856 = vld [vmem:[#allocation2 + $0x88] sm:$0xff]
      %v857 = vld [vmem:[#allocation2 + $0x90] sm:$0xff]
      %v858 = vld [vmem:[#allocation2 + $0x98] sm:$0xff]
      %v859 = vld [vmem:[#allocation2 + $0xa0] sm:$0xff]
      %v860 = vld [vmem:[#allocation2 + $0xa8] sm:$0xff]
      %v861 = vld [vmem:[#allocation2 + $0xb0] sm:$0xff]
      %v862 = vld [vmem:[#allocation2 + $0xb8] sm:$0xff]
      %v863 = vld [vmem:[#allocation2 + $0xc0] sm:$0xff]
      %v864 = vld [vmem:[#allocation2 + $0xc8] sm:$0xff]
      %v865 = vld [vmem:[#allocation2 + $0xd0] sm:$0xff]
      %v866 = vld [vmem:[#allocation2 + $0xd8] sm:$0xff]
      %v867 = vld [vmem:[#allocation2 + $0xe0] sm:$0xff]
      %v868 = vld [vmem:[#allocation2 + $0xe8] sm:$0xff]
      %v869 = vld [vmem:[#allocation2 + $0xf0] sm:$0xff]
      %v870 = vld [vmem:[#allocation2 + $0xf8] sm:$0xff]
      %v871 = vld [vmem:[#allocation2 + $0x100] sm:$0xff]
      %v872 = vld [vmem:[#allocation2 + $0x108] sm:$0xff]
      %v873 = vld [vmem:[#allocation2 + $0x110] sm:$0xff]
      %v874 = vld [vmem:[#allocation2 + $0x118] sm:$0xff]
      %v875 = vld [vmem:[#allocation2 + $0x120] sm:$0xff]
      %v876 = vld [vmem:[#allocation2 + $0x128] sm:$0xff]
      %v877 = vld [vmem:[#allocation2 + $0x130] sm:$0xff]
      %v878 = vld [vmem:[#allocation2 + $0x138] sm:$0xff]
      %v879 = vld [vmem:[#allocation2 + $0x140] sm:$0xff]
      %v880 = vld [vmem:[#allocation2 + $0x148] sm:$0xff]
      %v881 = vld [vmem:[#allocation2 + $0x150] sm:$0xff]
      %v882 = vld [vmem:[#allocation2 + $0x158] sm:$0xff]
      %v883 = vld [vmem:[#allocation2 + $0x160] sm:$0xff]
      %v884 = vld [vmem:[#allocation2 + $0x168] sm:$0xff]
      %v885 = vld [vmem:[#allocation2 + $0x170] sm:$0xff]
      %v886 = vld [vmem:[#allocation2 + $0x178] sm:$0xff]
      %v887 = vld [vmem:[%s138 + $0x1] sm:$0xff]
      %v888 = vld [vmem:[%s138 + $0x9] sm:$0xff]
      %v889 = vld [vmem:[%s138 + $0x11] sm:$0xff]
      %v890 = vld [vmem:[%s138 + $0x19] sm:$0xff]
      %v891 = vld [vmem:[%s138 + $0x21] sm:$0xff]
      %v892 = vld [vmem:[%s138 + $0x29] sm:$0xff]
      %v893 = vld [vmem:[%s138 + $0x31] sm:$0xff]
      %v894 = vld [vmem:[%s138 + $0x39] sm:$0xff]
      %v895 = vld [vmem:[%s138 + $0x41] sm:$0xff]
      %v896 = vld [vmem:[%s138 + $0x49] sm:$0xff]
      %v897 = vld [vmem:[%s138 + $0x51] sm:$0xff]
      %v898 = vld [vmem:[%s138 + $0x59] sm:$0xff]
      %v899 = vld [vmem:[%s138 + $0x61] sm:$0xff]
      %v900 = vld [vmem:[%s138 + $0x69] sm:$0xff]
      %v901 = vld [vmem:[%s138 + $0x71] sm:$0xff]
      %v902 = vld [vmem:[%s138 + $0x79] sm:$0xff]
      %v903 = vld [vmem:[%s138 + $0x81] sm:$0xff]
      %v904 = vld [vmem:[%s138 + $0x89] sm:$0xff]
      %v905 = vld [vmem:[%s138 + $0x91] sm:$0xff]
      %v906 = vld [vmem:[%s138 + $0x99] sm:$0xff]
      %v907 = vld [vmem:[%s138 + $0xa1] sm:$0xff]
      %v908 = vld [vmem:[%s138 + $0xa9] sm:$0xff]
      %v909 = vld [vmem:[%s138 + $0xb1] sm:$0xff]
      %v910 = vld [vmem:[%s138 + $0xb9] sm:$0xff]
      %v911 = vld [vmem:[%s138 + $0xc1] sm:$0xff]
      %v912 = vld [vmem:[%s138 + $0xc9] sm:$0xff]
      %v913 = vld [vmem:[%s138 + $0xd1] sm:$0xff]
      %v914 = vld [vmem:[%s138 + $0xd9] sm:$0xff]
      %v915 = vld [vmem:[%s138 + $0xe1] sm:$0xff]
      %v916 = vld [vmem:[%s138 + $0xe9] sm:$0xff]
      %v917 = vld [vmem:[%s138 + $0xf1] sm:$0xff]
      %v918 = vld [vmem:[%s138 + $0xf9] sm:$0xff]
      %v919 = vld [vmem:[%s138 + $0x101] sm:$0xff]
      %v920 = vld [vmem:[%s138 + $0x109] sm:$0xff]
      %v921 = vld [vmem:[%s138 + $0x111] sm:$0xff]
      %v922 = vld [vmem:[%s138 + $0x119] sm:$0xff]
      %v923 = vld [vmem:[%s138 + $0x121] sm:$0xff]
      %v924 = vld [vmem:[%s138 + $0x129] sm:$0xff]
      %v925 = vld [vmem:[%s138 + $0x131] sm:$0xff]
      %v926 = vld [vmem:[%s138 + $0x139] sm:$0xff]
      %v927 = vld [vmem:[%s138 + $0x141] sm:$0xff]
      %v928 = vld [vmem:[%s138 + $0x149] sm:$0xff]
      %v929 = vld [vmem:[%s138 + $0x151] sm:$0xff]
      %v930 = vld [vmem:[%s138 + $0x159] sm:$0xff]
      %v931 = vld [vmem:[%s138 + $0x161] sm:$0xff]
      %v932 = vld [vmem:[%s138 + $0x169] sm:$0xff]
      %v933 = vld [vmem:[%s138 + $0x171] sm:$0xff]
      %v934 = vld [vmem:[%s138 + $0x179] sm:$0xff]
      %s935 = scalar_lea.vmem %s1, 4
      %v936 = vld [vmem:[%s935] sm:$0xf]
      %v938 = vsel %vm289, %v887, 0
      %v941 = vsel %vm289, %v888, 0
      %v944 = vsel %vm289, %v889, 0
      %v947 = vsel %vm289, %v890, 0
      %v950 = vsel %vm289, %v891, 0
      %v953 = vsel %vm289, %v892, 0
      %v956 = vsel %vm289, %v893, 0
      %v959 = vsel %vm289, %v894, 0
      %v962 = vsel %vm289, %v895, 0
      %v965 = vsel %vm289, %v896, 0
      %v968 = vsel %vm289, %v897, 0
      %v971 = vsel %vm289, %v898, 0
      %v974 = vsel %vm289, %v899, 0
      %v977 = vsel %vm289, %v900, 0
      %v980 = vsel %vm289, %v901, 0
      %v983 = vsel %vm289, %v902, 0
      %v986 = vsel %vm289, %v903, 0
      %v989 = vsel %vm289, %v904, 0
      %v992 = vsel %vm289, %v905, 0
      %v995 = vsel %vm289, %v906, 0
      %v998 = vsel %vm289, %v907, 0
      %v1001 = vsel %vm289, %v908, 0
      %v1004 = vsel %vm289, %v909, 0
      %v1007 = vsel %vm289, %v910, 0
      %v1010 = vsel %vm289, %v911, 0
      %v1013 = vsel %vm289, %v912, 0
      %v1016 = vsel %vm289, %v913, 0
      %v1019 = vsel %vm289, %v914, 0
      %v1022 = vsel %vm289, %v915, 0
      %v1025 = vsel %vm289, %v916, 0
      %v1028 = vsel %vm289, %v917, 0
      %v1031 = vsel %vm289, %v918, 0
      %v1034 = vsel %vm289, %v919, 0
      %v1037 = vsel %vm289, %v920, 0
      %v1040 = vsel %vm289, %v921, 0
      %v1043 = vsel %vm289, %v922, 0
      %v1046 = vsel %vm289, %v923, 0
      %v1049 = vsel %vm289, %v924, 0
      %v1052 = vsel %vm289, %v925, 0
      %v1055 = vsel %vm289, %v926, 0
      %v1058 = vsel %vm289, %v927, 0
      %v1061 = vsel %vm289, %v928, 0
      %v1064 = vsel %vm289, %v929, 0
      %v1067 = vsel %vm289, %v930, 0
      %v1070 = vsel %vm289, %v931, 0
      %v1073 = vsel %vm289, %v932, 0
      %v1076 = vsel %vm289, %v933, 0
      %v1079 = vsel %vm289, %v934, 0
      %v1082 = vsel %vm434, %v936, 0
      %1084 = vmatprep.subr.mxu0 0.0
      %1085 = vmatpush1.msra.mxu0 0.0
      %1086 = vmatprep.subr.mxu0 0.0
      %1087 = vmatpush1.msra.mxu0 0.0
      %1088 = vmatprep.subr.mxu0 0.0
      %1089 = vmatpush1.msra.mxu0 0.0
      %1090 = vmatprep.subr.mxu0 0.0
      %1091 = vmatpush1.msra.mxu0 0.0
      %1092 = vmatprep.subr.mxu0 0.0
      %1093 = vmatpush1.msra.mxu0 0.0
      %1094 = vmatprep.subr.mxu0 0.0
      %1095 = vmatpush1.msra.mxu0 0.0
      %1096 = vmatprep.subr.mxu0 0.0
      %1097 = vmatpush1.msra.mxu0 0.0
      %1098 = vmatprep.subr.mxu0 0.0
      %1099 = vmatpush1.msra.mxu0 0.0
      %1100 = vmatprep.subr.mxu0 0.0
      %1101 = vmatpush1.msra.mxu0 0.0
      %1102 = vmatprep.subr.mxu0 0.0
      %1103 = vmatpush1.msra.mxu0 0.0
      %1104 = vmatprep.subr.mxu0 0.0
      %1105 = vmatpush1.msra.mxu0 0.0
      %1106 = vmatprep.subr.mxu0 0.0
      %1107 = vmatpush1.msra.mxu0 0.0
      %1108 = vmatprep.subr.mxu0 0.0
      %1109 = vmatpush1.msra.mxu0 0.0
      %1110 = vmatprep.subr.mxu0 0.0
      %1111 = vmatpush1.msra.mxu0 0.0
      %1112 = vmatprep.subr.mxu0 0.0
      %1113 = vmatpush1.msra.mxu0 0.0
      %1114 = vmatprep.subr.mxu0 0.0
      %1115 = vmatpush1.msra.mxu0 %v1082
      %1116 = vmatprep.subr.mxu0 0.0
      %1117 = vmatpush2.msra.mxu0 0.0
      %1118 = vmatprep.subr.mxu0 0.0
      %1119 = vmatpush2.msra.mxu0 0.0
      %1120 = vmatprep.subr.mxu0 0.0
      %1121 = vmatpush2.msra.mxu0 0.0
      %1122 = vmatprep.subr.mxu0 0.0
      %1123 = vmatpush2.msra.mxu0 0.0
      %1124 = vmatprep.subr.mxu0 0.0
      %1125 = vmatpush2.msra.mxu0 0.0
      %1126 = vmatprep.subr.mxu0 0.0
      %1127 = vmatpush2.msra.mxu0 0.0
      %1128 = vmatprep.subr.mxu0 0.0
      %1129 = vmatpush2.msra.mxu0 0.0
      %1130 = vmatprep.subr.mxu0 0.0
      %1131 = vmatpush2.msra.mxu0 0.0
      %1132 = vmatprep.subr.mxu0 0.0
      %1133 = vmatpush2.msra.mxu0 0.0
      %1134 = vmatprep.subr.mxu0 0.0
      %1135 = vmatpush2.msra.mxu0 0.0
      %1136 = vmatprep.subr.mxu0 0.0
      %1137 = vmatpush2.msra.mxu0 0.0
      %1138 = vmatprep.subr.mxu0 0.0
      %1139 = vmatpush2.msra.mxu0 0.0
      %1140 = vmatprep.subr.mxu0 0.0
      %1141 = vmatpush2.msra.mxu0 0.0
      %1142 = vmatprep.subr.mxu0 0.0
      %1143 = vmatpush2.msra.mxu0 0.0
      %1144 = vmatprep.subr.mxu0 0.0
      %1145 = vmatpush2.msra.mxu0 0.0
      %1146 = vmatprep.subr.mxu0 0.0
      %1147 = vmatpush2.msra.mxu0 0.0
      %1148 = vmatprep.mubr.f32.mxu0 0.0
      %1149 = vmatmul.mubr.f32.gmra.mxu0 %v938
      %v1150 = vpop.f32.mrf.mxu0
      %v1151 = vadd.f32 0.0, %v1150
      %v1152 = vpop.f32.mrf.mxu0
      %1153 = vmatprep.mubr.f32.mxu0 0.0
      %1154 = vmatmul.mubr.f32.gmra.mxu0 %v941
      %v1155 = vpop.f32.mrf.mxu0
      %v1156 = vadd.f32 0.0, %v1155
      %v1157 = vpop.f32.mrf.mxu0
      %1158 = vmatprep.mubr.f32.mxu0 0.0
      %1159 = vmatmul.mubr.f32.gmra.mxu0 %v944
      %v1160 = vpop.f32.mrf.mxu0
      %v1161 = vadd.f32 0.0, %v1160
      %v1162 = vpop.f32.mrf.mxu0
      %1163 = vmatprep.mubr.f32.mxu0 0.0
      %1164 = vmatmul.mubr.f32.gmra.mxu0 %v947
      %v1165 = vpop.f32.mrf.mxu0
      %v1166 = vadd.f32 0.0, %v1165
      %v1167 = vpop.f32.mrf.mxu0
      %1168 = vmatprep.mubr.f32.mxu0 0.0
      %1169 = vmatmul.mubr.f32.gmra.mxu0 %v950
      %v1170 = vpop.f32.mrf.mxu0
      %v1171 = vadd.f32 0.0, %v1170
      %v1172 = vpop.f32.mrf.mxu0
      %1173 = vmatprep.mubr.f32.mxu0 0.0
      %1174 = vmatmul.mubr.f32.gmra.mxu0 %v953
      %v1175 = vpop.f32.mrf.mxu0
      %v1176 = vadd.f32 0.0, %v1175
      %v1177 = vpop.f32.mrf.mxu0
      %1178 = vmatprep.mubr.f32.mxu0 0.0
      %1179 = vmatmul.mubr.f32.gmra.mxu0 %v956
      %v1180 = vpop.f32.mrf.mxu0
      %v1181 = vadd.f32 0.0, %v1180
      %v1182 = vpop.f32.mrf.mxu0
      %1183 = vmatprep.mubr.f32.mxu0 0.0
      %1184 = vmatmul.mubr.f32.gmra.mxu0 %v959
      %v1185 = vpop.f32.mrf.mxu0
      %v1186 = vadd.f32 0.0, %v1185
      %v1187 = vpop.f32.mrf.mxu0
      %1188 = vmatprep.mubr.f32.mxu0 0.0
      %1189 = vmatmul.mubr.f32.gmra.mxu0 %v962
      %v1190 = vpop.f32.mrf.mxu0
      %v1191 = vadd.f32 0.0, %v1190
      %v1192 = vpop.f32.mrf.mxu0
      %1193 = vmatprep.mubr.f32.mxu0 0.0
      %1194 = vmatmul.mubr.f32.gmra.mxu0 %v965
      %v1195 = vpop.f32.mrf.mxu0
      %v1196 = vadd.f32 0.0, %v1195
      %v1197 = vpop.f32.mrf.mxu0
      %1198 = vmatprep.mubr.f32.mxu0 0.0
      %1199 = vmatmul.mubr.f32.gmra.mxu0 %v968
      %v1200 = vpop.f32.mrf.mxu0
      %v1201 = vadd.f32 0.0, %v1200
      %v1202 = vpop.f32.mrf.mxu0
      %1203 = vmatprep.mubr.f32.mxu0 0.0
      %1204 = vmatmul.mubr.f32.gmra.mxu0 %v971
      %v1205 = vpop.f32.mrf.mxu0
      %v1206 = vadd.f32 0.0, %v1205
      %v1207 = vpop.f32.mrf.mxu0
      %1208 = vmatprep.mubr.f32.mxu0 0.0
      %1209 = vmatmul.mubr.f32.gmra.mxu0 %v974
      %v1210 = vpop.f32.mrf.mxu0
      %v1211 = vadd.f32 0.0, %v1210
      %v1212 = vpop.f32.mrf.mxu0
      %1213 = vmatprep.mubr.f32.mxu0 0.0
      %1214 = vmatmul.mubr.f32.gmra.mxu0 %v977
      %v1215 = vpop.f32.mrf.mxu0
      %v1216 = vadd.f32 0.0, %v1215
      %v1217 = vpop.f32.mrf.mxu0
      %1218 = vmatprep.mubr.f32.mxu0 0.0
      %1219 = vmatmul.mubr.f32.gmra.mxu0 %v980
      %v1220 = vpop.f32.mrf.mxu0
      %v1221 = vadd.f32 0.0, %v1220
      %v1222 = vpop.f32.mrf.mxu0
      %1223 = vmatprep.mubr.f32.mxu0 0.0
      %1224 = vmatmul.mubr.f32.gmra.mxu0 %v983
      %v1225 = vpop.f32.mrf.mxu0
      %v1226 = vadd.f32 0.0, %v1225
      %v1227 = vpop.f32.mrf.mxu0
      %1228 = vmatprep.mubr.f32.mxu0 0.0
      %1229 = vmatmul.mubr.f32.gmra.mxu0 %v986
      %v1230 = vpop.f32.mrf.mxu0
      %v1231 = vadd.f32 0.0, %v1230
      %v1232 = vpop.f32.mrf.mxu0
      %1233 = vmatprep.mubr.f32.mxu0 0.0
      %1234 = vmatmul.mubr.f32.gmra.mxu0 %v989
      %v1235 = vpop.f32.mrf.mxu0
      %v1236 = vadd.f32 0.0, %v1235
      %v1237 = vpop.f32.mrf.mxu0
      %1238 = vmatprep.mubr.f32.mxu0 0.0
      %1239 = vmatmul.mubr.f32.gmra.mxu0 %v992
      %v1240 = vpop.f32.mrf.mxu0
      %v1241 = vadd.f32 0.0, %v1240
      %v1242 = vpop.f32.mrf.mxu0
      %1243 = vmatprep.mubr.f32.mxu0 0.0
      %1244 = vmatmul.mubr.f32.gmra.mxu0 %v995
      %v1245 = vpop.f32.mrf.mxu0
      %v1246 = vadd.f32 0.0, %v1245
      %v1247 = vpop.f32.mrf.mxu0
      %1248 = vmatprep.mubr.f32.mxu0 0.0
      %1249 = vmatmul.mubr.f32.gmra.mxu0 %v998
      %v1250 = vpop.f32.mrf.mxu0
      %v1251 = vadd.f32 0.0, %v1250
      %v1252 = vpop.f32.mrf.mxu0
      %1253 = vmatprep.mubr.f32.mxu0 0.0
      %1254 = vmatmul.mubr.f32.gmra.mxu0 %v1001
      %v1255 = vpop.f32.mrf.mxu0
      %v1256 = vadd.f32 0.0, %v1255
      %v1257 = vpop.f32.mrf.mxu0
      %1258 = vmatprep.mubr.f32.mxu0 0.0
      %1259 = vmatmul.mubr.f32.gmra.mxu0 %v1004
      %v1260 = vpop.f32.mrf.mxu0
      %v1261 = vadd.f32 0.0, %v1260
      %v1262 = vpop.f32.mrf.mxu0
      %1263 = vmatprep.mubr.f32.mxu0 0.0
      %1264 = vmatmul.mubr.f32.gmra.mxu0 %v1007
      %v1265 = vpop.f32.mrf.mxu0
      %v1266 = vadd.f32 0.0, %v1265
      %v1267 = vpop.f32.mrf.mxu0
      %1268 = vmatprep.mubr.f32.mxu0 0.0
      %1269 = vmatmul.mubr.f32.gmra.mxu0 %v1010
      %v1270 = vpop.f32.mrf.mxu0
      %v1271 = vadd.f32 0.0, %v1270
      %v1272 = vpop.f32.mrf.mxu0
      %1273 = vmatprep.mubr.f32.mxu0 0.0
      %1274 = vmatmul.mubr.f32.gmra.mxu0 %v1013
      %v1275 = vpop.f32.mrf.mxu0
      %v1276 = vadd.f32 0.0, %v1275
      %v1277 = vpop.f32.mrf.mxu0
      %1278 = vmatprep.mubr.f32.mxu0 0.0
      %1279 = vmatmul.mubr.f32.gmra.mxu0 %v1016
      %v1280 = vpop.f32.mrf.mxu0
      %v1281 = vadd.f32 0.0, %v1280
      %v1282 = vpop.f32.mrf.mxu0
      %1283 = vmatprep.mubr.f32.mxu0 0.0
      %1284 = vmatmul.mubr.f32.gmra.mxu0 %v1019
      %v1285 = vpop.f32.mrf.mxu0
      %v1286 = vadd.f32 0.0, %v1285
      %v1287 = vpop.f32.mrf.mxu0
      %1288 = vmatprep.mubr.f32.mxu0 0.0
      %1289 = vmatmul.mubr.f32.gmra.mxu0 %v1022
      %v1290 = vpop.f32.mrf.mxu0
      %v1291 = vadd.f32 0.0, %v1290
      %v1292 = vpop.f32.mrf.mxu0
      %1293 = vmatprep.mubr.f32.mxu0 0.0
      %1294 = vmatmul.mubr.f32.gmra.mxu0 %v1025
      %v1295 = vpop.f32.mrf.mxu0
      %v1296 = vadd.f32 0.0, %v1295
      %v1297 = vpop.f32.mrf.mxu0
      %1298 = vmatprep.mubr.f32.mxu0 0.0
      %1299 = vmatmul.mubr.f32.gmra.mxu0 %v1028
      %v1300 = vpop.f32.mrf.mxu0
      %v1301 = vadd.f32 0.0, %v1300
      %v1302 = vpop.f32.mrf.mxu0
      %1303 = vmatprep.mubr.f32.mxu0 0.0
      %1304 = vmatmul.mubr.f32.gmra.mxu0 %v1031
      %v1305 = vpop.f32.mrf.mxu0
      %v1306 = vadd.f32 0.0, %v1305
      %v1307 = vpop.f32.mrf.mxu0
      %1308 = vmatprep.mubr.f32.mxu0 0.0
      %1309 = vmatmul.mubr.f32.gmra.mxu0 %v1034
      %v1310 = vpop.f32.mrf.mxu0
      %v1311 = vadd.f32 0.0, %v1310
      %v1312 = vpop.f32.mrf.mxu0
      %1313 = vmatprep.mubr.f32.mxu0 0.0
      %1314 = vmatmul.mubr.f32.gmra.mxu0 %v1037
      %v1315 = vpop.f32.mrf.mxu0
      %v1316 = vadd.f32 0.0, %v1315
      %v1317 = vpop.f32.mrf.mxu0
      %1318 = vmatprep.mubr.f32.mxu0 0.0
      %1319 = vmatmul.mubr.f32.gmra.mxu0 %v1040
      %v1320 = vpop.f32.mrf.mxu0
      %v1321 = vadd.f32 0.0, %v1320
      %v1322 = vpop.f32.mrf.mxu0
      %1323 = vmatprep.mubr.f32.mxu0 0.0
      %1324 = vmatmul.mubr.f32.gmra.mxu0 %v1043
      %v1325 = vpop.f32.mrf.mxu0
      %v1326 = vadd.f32 0.0, %v1325
      %v1327 = vpop.f32.mrf.mxu0
      %1328 = vmatprep.mubr.f32.mxu0 0.0
      %1329 = vmatmul.mubr.f32.gmra.mxu0 %v1046
      %v1330 = vpop.f32.mrf.mxu0
      %v1331 = vadd.f32 0.0, %v1330
      %v1332 = vpop.f32.mrf.mxu0
      %1333 = vmatprep.mubr.f32.mxu0 0.0
      %1334 = vmatmul.mubr.f32.gmra.mxu0 %v1049
      %v1335 = vpop.f32.mrf.mxu0
      %v1336 = vadd.f32 0.0, %v1335
      %v1337 = vpop.f32.mrf.mxu0
      %1338 = vmatprep.mubr.f32.mxu0 0.0
      %1339 = vmatmul.mubr.f32.gmra.mxu0 %v1052
      %v1340 = vpop.f32.mrf.mxu0
      %v1341 = vadd.f32 0.0, %v1340
      %v1342 = vpop.f32.mrf.mxu0
      %1343 = vmatprep.mubr.f32.mxu0 0.0
      %1344 = vmatmul.mubr.f32.gmra.mxu0 %v1055
      %v1345 = vpop.f32.mrf.mxu0
      %v1346 = vadd.f32 0.0, %v1345
      %v1347 = vpop.f32.mrf.mxu0
      %1348 = vmatprep.mubr.f32.mxu0 0.0
      %1349 = vmatmul.mubr.f32.gmra.mxu0 %v1058
      %v1350 = vpop.f32.mrf.mxu0
      %v1351 = vadd.f32 0.0, %v1350
      %v1352 = vpop.f32.mrf.mxu0
      %1353 = vmatprep.mubr.f32.mxu0 0.0
      %1354 = vmatmul.mubr.f32.gmra.mxu0 %v1061
      %v1355 = vpop.f32.mrf.mxu0
      %v1356 = vadd.f32 0.0, %v1355
      %v1357 = vpop.f32.mrf.mxu0
      %1358 = vmatprep.mubr.f32.mxu0 0.0
      %1359 = vmatmul.mubr.f32.gmra.mxu0 %v1064
      %v1360 = vpop.f32.mrf.mxu0
      %v1361 = vadd.f32 0.0, %v1360
      %v1362 = vpop.f32.mrf.mxu0
      %1363 = vmatprep.mubr.f32.mxu0 0.0
      %1364 = vmatmul.mubr.f32.gmra.mxu0 %v1067
      %v1365 = vpop.f32.mrf.mxu0
      %v1366 = vadd.f32 0.0, %v1365
      %v1367 = vpop.f32.mrf.mxu0
      %1368 = vmatprep.mubr.f32.mxu0 0.0
      %1369 = vmatmul.mubr.f32.gmra.mxu0 %v1070
      %v1370 = vpop.f32.mrf.mxu0
      %v1371 = vadd.f32 0.0, %v1370
      %v1372 = vpop.f32.mrf.mxu0
      %1373 = vmatprep.mubr.f32.mxu0 0.0
      %1374 = vmatmul.mubr.f32.gmra.mxu0 %v1073
      %v1375 = vpop.f32.mrf.mxu0
      %v1376 = vadd.f32 0.0, %v1375
      %v1377 = vpop.f32.mrf.mxu0
      %1378 = vmatprep.mubr.f32.mxu0 0.0
      %1379 = vmatmul.mubr.f32.gmra.mxu0 %v1076
      %v1380 = vpop.f32.mrf.mxu0
      %v1381 = vadd.f32 0.0, %v1380
      %v1382 = vpop.f32.mrf.mxu0
      %1383 = vmatprep.mubr.f32.mxu0 0.0
      %1384 = vmatmul.mubr.f32.gmra.mxu0 %v1079
      %v1385 = vpop.f32.mrf.mxu0
      %v1386 = vadd.f32 0.0, %v1385
      %v1387 = vpop.f32.mrf.mxu0
      %1388 = vdwg.mxu0
      %v1389 = vadd.f32 %v839, %v1151
      %v1390 = vadd.f32 %v840, %v1156
      %v1391 = vadd.f32 %v841, %v1161
      %v1392 = vadd.f32 %v842, %v1166
      %v1393 = vadd.f32 %v843, %v1171
      %v1394 = vadd.f32 %v844, %v1176
      %v1395 = vadd.f32 %v845, %v1181
      %v1396 = vadd.f32 %v846, %v1186
      %v1397 = vadd.f32 %v847, %v1191
      %v1398 = vadd.f32 %v848, %v1196
      %v1399 = vadd.f32 %v849, %v1201
      %v1400 = vadd.f32 %v850, %v1206
      %v1401 = vadd.f32 %v851, %v1211
      %v1402 = vadd.f32 %v852, %v1216
      %v1403 = vadd.f32 %v853, %v1221
      %v1404 = vadd.f32 %v854, %v1226
      %v1405 = vadd.f32 %v855, %v1231
      %v1406 = vadd.f32 %v856, %v1236
      %v1407 = vadd.f32 %v857, %v1241
      %v1408 = vadd.f32 %v858, %v1246
      %v1409 = vadd.f32 %v859, %v1251
      %v1410 = vadd.f32 %v860, %v1256
      %v1411 = vadd.f32 %v861, %v1261
      %v1412 = vadd.f32 %v862, %v1266
      %v1413 = vadd.f32 %v863, %v1271
      %v1414 = vadd.f32 %v864, %v1276
      %v1415 = vadd.f32 %v865, %v1281
      %v1416 = vadd.f32 %v866, %v1286
      %v1417 = vadd.f32 %v867, %v1291
      %v1418 = vadd.f32 %v868, %v1296
      %v1419 = vadd.f32 %v869, %v1301
      %v1420 = vadd.f32 %v870, %v1306
      %v1421 = vadd.f32 %v871, %v1311
      %v1422 = vadd.f32 %v872, %v1316
      %v1423 = vadd.f32 %v873, %v1321
      %v1424 = vadd.f32 %v874, %v1326
      %v1425 = vadd.f32 %v875, %v1331
      %v1426 = vadd.f32 %v876, %v1336
      %v1427 = vadd.f32 %v877, %v1341
      %v1428 = vadd.f32 %v878, %v1346
      %v1429 = vadd.f32 %v879, %v1351
      %v1430 = vadd.f32 %v880, %v1356
      %v1431 = vadd.f32 %v881, %v1361
      %v1432 = vadd.f32 %v882, %v1366
      %v1433 = vadd.f32 %v883, %v1371
      %v1434 = vadd.f32 %v884, %v1376
      %v1435 = vadd.f32 %v885, %v1381
      %v1436 = vadd.f32 %v886, %v1386
      %1437 = vst [vmem:[#allocation2] sm:$0xff] %v1389
      %1438 = vst [vmem:[#allocation2 + $0x8] sm:$0xff] %v1390
      %1439 = vst [vmem:[#allocation2 + $0x10] sm:$0xff] %v1391
      %1440 = vst [vmem:[#allocation2 + $0x18] sm:$0xff] %v1392
      %1441 = vst [vmem:[#allocation2 + $0x20] sm:$0xff] %v1393
      %1442 = vst [vmem:[#allocation2 + $0x28] sm:$0xff] %v1394
      %1443 = vst [vmem:[#allocation2 + $0x30] sm:$0xff] %v1395
      %1444 = vst [vmem:[#allocation2 + $0x38] sm:$0xff] %v1396
      %1445 = vst [vmem:[#allocation2 + $0x40] sm:$0xff] %v1397
      %1446 = vst [vmem:[#allocation2 + $0x48] sm:$0xff] %v1398
      %1447 = vst [vmem:[#allocation2 + $0x50] sm:$0xff] %v1399
      %1448 = vst [vmem:[#allocation2 + $0x58] sm:$0xff] %v1400
      %1449 = vst [vmem:[#allocation2 + $0x60] sm:$0xff] %v1401
      %1450 = vst [vmem:[#allocation2 + $0x68] sm:$0xff] %v1402
      %1451 = vst [vmem:[#allocation2 + $0x70] sm:$0xff] %v1403
      %1452 = vst [vmem:[#allocation2 + $0x78] sm:$0xff] %v1404
      %1453 = vst [vmem:[#allocation2 + $0x80] sm:$0xff] %v1405
      %1454 = vst [vmem:[#allocation2 + $0x88] sm:$0xff] %v1406
      %1455 = vst [vmem:[#allocation2 + $0x90] sm:$0xff] %v1407
      %1456 = vst [vmem:[#allocation2 + $0x98] sm:$0xff] %v1408
      %1457 = vst [vmem:[#allocation2 + $0xa0] sm:$0xff] %v1409
      %1458 = vst [vmem:[#allocation2 + $0xa8] sm:$0xff] %v1410
      %1459 = vst [vmem:[#allocation2 + $0xb0] sm:$0xff] %v1411
      %1460 = vst [vmem:[#allocation2 + $0xb8] sm:$0xff] %v1412
      %1461 = vst [vmem:[#allocation2 + $0xc0] sm:$0xff] %v1413
      %1462 = vst [vmem:[#allocation2 + $0xc8] sm:$0xff] %v1414
      %1463 = vst [vmem:[#allocation2 + $0xd0] sm:$0xff] %v1415
      %1464 = vst [vmem:[#allocation2 + $0xd8] sm:$0xff] %v1416
      %1465 = vst [vmem:[#allocation2 + $0xe0] sm:$0xff] %v1417
      %1466 = vst [vmem:[#allocation2 + $0xe8] sm:$0xff] %v1418
      %1467 = vst [vmem:[#allocation2 + $0xf0] sm:$0xff] %v1419
      %1468 = vst [vmem:[#allocation2 + $0xf8] sm:$0xff] %v1420
      %1469 = vst [vmem:[#allocation2 + $0x100] sm:$0xff] %v1421
      %1470 = vst [vmem:[#allocation2 + $0x108] sm:$0xff] %v1422
      %1471 = vst [vmem:[#allocation2 + $0x110] sm:$0xff] %v1423
      %1472 = vst [vmem:[#allocation2 + $0x118] sm:$0xff] %v1424
      %1473 = vst [vmem:[#allocation2 + $0x120] sm:$0xff] %v1425
      %1474 = vst [vmem:[#allocation2 + $0x128] sm:$0xff] %v1426
      %1475 = vst [vmem:[#allocation2 + $0x130] sm:$0xff] %v1427
      %1476 = vst [vmem:[#allocation2 + $0x138] sm:$0xff] %v1428
      %1477 = vst [vmem:[#allocation2 + $0x140] sm:$0xff] %v1429
      %1478 = vst [vmem:[#allocation2 + $0x148] sm:$0xff] %v1430
      %1479 = vst [vmem:[#allocation2 + $0x150] sm:$0xff] %v1431
      %1480 = vst [vmem:[#allocation2 + $0x158] sm:$0xff] %v1432
      %1481 = vst [vmem:[#allocation2 + $0x160] sm:$0xff] %v1433
      %1482 = vst [vmem:[#allocation2 + $0x168] sm:$0xff] %v1434
      %1483 = vst [vmem:[#allocation2 + $0x170] sm:$0xff] %v1435
      %1484 = vst [vmem:[#allocation2 + $0x178] sm:$0xff] %v1436
      %v1485 = vld [vmem:[#allocation2] sm:$0xff]
      %v1486 = vld [vmem:[#allocation2 + $0x8] sm:$0xff]
      %v1487 = vld [vmem:[#allocation2 + $0x10] sm:$0xff]
      %v1488 = vld [vmem:[#allocation2 + $0x18] sm:$0xff]
      %v1489 = vld [vmem:[#allocation2 + $0x20] sm:$0xff]
      %v1490 = vld [vmem:[#allocation2 + $0x28] sm:$0xff]
      %v1491 = vld [vmem:[#allocation2 + $0x30] sm:$0xff]
      %v1492 = vld [vmem:[#allocation2 + $0x38] sm:$0xff]
      %v1493 = vld [vmem:[#allocation2 + $0x40] sm:$0xff]
      %v1494 = vld [vmem:[#allocation2 + $0x48] sm:$0xff]
      %v1495 = vld [vmem:[#allocation2 + $0x50] sm:$0xff]
      %v1496 = vld [vmem:[#allocation2 + $0x58] sm:$0xff]
      %v1497 = vld [vmem:[#allocation2 + $0x60] sm:$0xff]
      %v1498 = vld [vmem:[#allocation2 + $0x68] sm:$0xff]
      %v1499 = vld [vmem:[#allocation2 + $0x70] sm:$0xff]
      %v1500 = vld [vmem:[#allocation2 + $0x78] sm:$0xff]
      %v1501 = vld [vmem:[#allocation2 + $0x80] sm:$0xff]
      %v1502 = vld [vmem:[#allocation2 + $0x88] sm:$0xff]
      %v1503 = vld [vmem:[#allocation2 + $0x90] sm:$0xff]
      %v1504 = vld [vmem:[#allocation2 + $0x98] sm:$0xff]
      %v1505 = vld [vmem:[#allocation2 + $0xa0] sm:$0xff]
      %v1506 = vld [vmem:[#allocation2 + $0xa8] sm:$0xff]
      %v1507 = vld [vmem:[#allocation2 + $0xb0] sm:$0xff]
      %v1508 = vld [vmem:[#allocation2 + $0xb8] sm:$0xff]
      %v1509 = vld [vmem:[#allocation2 + $0xc0] sm:$0xff]
      %v1510 = vld [vmem:[#allocation2 + $0xc8] sm:$0xff]
      %v1511 = vld [vmem:[#allocation2 + $0xd0] sm:$0xff]
      %v1512 = vld [vmem:[#allocation2 + $0xd8] sm:$0xff]
      %v1513 = vld [vmem:[#allocation2 + $0xe0] sm:$0xff]
      %v1514 = vld [vmem:[#allocation2 + $0xe8] sm:$0xff]
      %v1515 = vld [vmem:[#allocation2 + $0xf0] sm:$0xff]
      %v1516 = vld [vmem:[#allocation2 + $0xf8] sm:$0xff]
      %v1517 = vld [vmem:[#allocation2 + $0x100] sm:$0xff]
      %v1518 = vld [vmem:[#allocation2 + $0x108] sm:$0xff]
      %v1519 = vld [vmem:[#allocation2 + $0x110] sm:$0xff]
      %v1520 = vld [vmem:[#allocation2 + $0x118] sm:$0xff]
      %v1521 = vld [vmem:[#allocation2 + $0x120] sm:$0xff]
      %v1522 = vld [vmem:[#allocation2 + $0x128] sm:$0xff]
      %v1523 = vld [vmem:[#allocation2 + $0x130] sm:$0xff]
      %v1524 = vld [vmem:[#allocation2 + $0x138] sm:$0xff]
      %v1525 = vld [vmem:[#allocation2 + $0x140] sm:$0xff]
      %v1526 = vld [vmem:[#allocation2 + $0x148] sm:$0xff]
      %v1527 = vld [vmem:[#allocation2 + $0x150] sm:$0xff]
      %v1528 = vld [vmem:[#allocation2 + $0x158] sm:$0xff]
      %v1529 = vld [vmem:[#allocation2 + $0x160] sm:$0xff]
      %v1530 = vld [vmem:[#allocation2 + $0x168] sm:$0xff]
      %v1531 = vld [vmem:[#allocation2 + $0x170] sm:$0xff]
      %v1532 = vld [vmem:[#allocation2 + $0x178] sm:$0xff]
      %v1533 = vld [vmem:[%s138 + $0x2] sm:$0xff]
      %v1534 = vld [vmem:[%s138 + $0xa] sm:$0xff]
      %v1535 = vld [vmem:[%s138 + $0x12] sm:$0xff]
      %v1536 = vld [vmem:[%s138 + $0x1a] sm:$0xff]
      %v1537 = vld [vmem:[%s138 + $0x22] sm:$0xff]
      %v1538 = vld [vmem:[%s138 + $0x2a] sm:$0xff]
      %v1539 = vld [vmem:[%s138 + $0x32] sm:$0xff]
      %v1540 = vld [vmem:[%s138 + $0x3a] sm:$0xff]
      %v1541 = vld [vmem:[%s138 + $0x42] sm:$0xff]
      %v1542 = vld [vmem:[%s138 + $0x4a] sm:$0xff]
      %v1543 = vld [vmem:[%s138 + $0x52] sm:$0xff]
      %v1544 = vld [vmem:[%s138 + $0x5a] sm:$0xff]
      %v1545 = vld [vmem:[%s138 + $0x62] sm:$0xff]
      %v1546 = vld [vmem:[%s138 + $0x6a] sm:$0xff]
      %v1547 = vld [vmem:[%s138 + $0x72] sm:$0xff]
      %v1548 = vld [vmem:[%s138 + $0x7a] sm:$0xff]
      %v1549 = vld [vmem:[%s138 + $0x82] sm:$0xff]
      %v1550 = vld [vmem:[%s138 + $0x8a] sm:$0xff]
      %v1551 = vld [vmem:[%s138 + $0x92] sm:$0xff]
      %v1552 = vld [vmem:[%s138 + $0x9a] sm:$0xff]
      %v1553 = vld [vmem:[%s138 + $0xa2] sm:$0xff]
      %v1554 = vld [vmem:[%s138 + $0xaa] sm:$0xff]
      %v1555 = vld [vmem:[%s138 + $0xb2] sm:$0xff]
      %v1556 = vld [vmem:[%s138 + $0xba] sm:$0xff]
      %v1557 = vld [vmem:[%s138 + $0xc2] sm:$0xff]
      %v1558 = vld [vmem:[%s138 + $0xca] sm:$0xff]
      %v1559 = vld [vmem:[%s138 + $0xd2] sm:$0xff]
      %v1560 = vld [vmem:[%s138 + $0xda] sm:$0xff]
      %v1561 = vld [vmem:[%s138 + $0xe2] sm:$0xff]
      %v1562 = vld [vmem:[%s138 + $0xea] sm:$0xff]
      %v1563 = vld [vmem:[%s138 + $0xf2] sm:$0xff]
      %v1564 = vld [vmem:[%s138 + $0xfa] sm:$0xff]
      %v1565 = vld [vmem:[%s138 + $0x102] sm:$0xff]
      %v1566 = vld [vmem:[%s138 + $0x10a] sm:$0xff]
      %v1567 = vld [vmem:[%s138 + $0x112] sm:$0xff]
      %v1568 = vld [vmem:[%s138 + $0x11a] sm:$0xff]
      %v1569 = vld [vmem:[%s138 + $0x122] sm:$0xff]
      %v1570 = vld [vmem:[%s138 + $0x12a] sm:$0xff]
      %v1571 = vld [vmem:[%s138 + $0x132] sm:$0xff]
      %v1572 = vld [vmem:[%s138 + $0x13a] sm:$0xff]
      %v1573 = vld [vmem:[%s138 + $0x142] sm:$0xff]
      %v1574 = vld [vmem:[%s138 + $0x14a] sm:$0xff]
      %v1575 = vld [vmem:[%s138 + $0x152] sm:$0xff]
      %v1576 = vld [vmem:[%s138 + $0x15a] sm:$0xff]
      %v1577 = vld [vmem:[%s138 + $0x162] sm:$0xff]
      %v1578 = vld [vmem:[%s138 + $0x16a] sm:$0xff]
      %v1579 = vld [vmem:[%s138 + $0x172] sm:$0xff]
      %v1580 = vld [vmem:[%s138 + $0x17a] sm:$0xff]
      %s1581 = scalar_lea.vmem %s1, 8
      %v1582 = vld [vmem:[%s1581] sm:$0xf]
      %v1584 = vsel %vm289, %v1533, 0
      %v1587 = vsel %vm289, %v1534, 0
      %v1590 = vsel %vm289, %v1535, 0
      %v1593 = vsel %vm289, %v1536, 0
      %v1596 = vsel %vm289, %v1537, 0
      %v1599 = vsel %vm289, %v1538, 0
      %v1602 = vsel %vm289, %v1539, 0
      %v1605 = vsel %vm289, %v1540, 0
      %v1608 = vsel %vm289, %v1541, 0
      %v1611 = vsel %vm289, %v1542, 0
      %v1614 = vsel %vm289, %v1543, 0
      %v1617 = vsel %vm289, %v1544, 0
      %v1620 = vsel %vm289, %v1545, 0
      %v1623 = vsel %vm289, %v1546, 0
      %v1626 = vsel %vm289, %v1547, 0
      %v1629 = vsel %vm289, %v1548, 0
      %v1632 = vsel %vm289, %v1549, 0
      %v1635 = vsel %vm289, %v1550, 0
      %v1638 = vsel %vm289, %v1551, 0
      %v1641 = vsel %vm289, %v1552, 0
      %v1644 = vsel %vm289, %v1553, 0
      %v1647 = vsel %vm289, %v1554, 0
      %v1650 = vsel %vm289, %v1555, 0
      %v1653 = vsel %vm289, %v1556, 0
      %v1656 = vsel %vm289, %v1557, 0
      %v1659 = vsel %vm289, %v1558, 0
      %v1662 = vsel %vm289, %v1559, 0
      %v1665 = vsel %vm289, %v1560, 0
      %v1668 = vsel %vm289, %v1561, 0
      %v1671 = vsel %vm289, %v1562, 0
      %v1674 = vsel %vm289, %v1563, 0
      %v1677 = vsel %vm289, %v1564, 0
      %v1680 = vsel %vm289, %v1565, 0
      %v1683 = vsel %vm289, %v1566, 0
      %v1686 = vsel %vm289, %v1567, 0
      %v1689 = vsel %vm289, %v1568, 0
      %v1692 = vsel %vm289, %v1569, 0
      %v1695 = vsel %vm289, %v1570, 0
      %v1698 = vsel %vm289, %v1571, 0
      %v1701 = vsel %vm289, %v1572, 0
      %v1704 = vsel %vm289, %v1573, 0
      %v1707 = vsel %vm289, %v1574, 0
      %v1710 = vsel %vm289, %v1575, 0
      %v1713 = vsel %vm289, %v1576, 0
      %v1716 = vsel %vm289, %v1577, 0
      %v1719 = vsel %vm289, %v1578, 0
      %v1722 = vsel %vm289, %v1579, 0
      %v1725 = vsel %vm289, %v1580, 0
      %v1728 = vsel %vm434, %v1582, 0
      %1730 = vmatprep.subr.mxu0 0.0
      %1731 = vmatpush1.msra.mxu0 0.0
      %1732 = vmatprep.subr.mxu0 0.0
      %1733 = vmatpush1.msra.mxu0 0.0
      %1734 = vmatprep.subr.mxu0 0.0
      %1735 = vmatpush1.msra.mxu0 0.0
      %1736 = vmatprep.subr.mxu0 0.0
      %1737 = vmatpush1.msra.mxu0 0.0
      %1738 = vmatprep.subr.mxu0 0.0
      %1739 = vmatpush1.msra.mxu0 0.0
      %1740 = vmatprep.subr.mxu0 0.0
      %1741 = vmatpush1.msra.mxu0 0.0
      %1742 = vmatprep.subr.mxu0 0.0
      %1743 = vmatpush1.msra.mxu0 0.0
      %1744 = vmatprep.subr.mxu0 0.0
      %1745 = vmatpush1.msra.mxu0 0.0
      %1746 = vmatprep.subr.mxu0 0.0
      %1747 = vmatpush1.msra.mxu0 0.0
      %1748 = vmatprep.subr.mxu0 0.0
      %1749 = vmatpush1.msra.mxu0 0.0
      %1750 = vmatprep.subr.mxu0 0.0
      %1751 = vmatpush1.msra.mxu0 0.0
      %1752 = vmatprep.subr.mxu0 0.0
      %1753 = vmatpush1.msra.mxu0 0.0
      %1754 = vmatprep.subr.mxu0 0.0
      %1755 = vmatpush1.msra.mxu0 0.0
      %1756 = vmatprep.subr.mxu0 0.0
      %1757 = vmatpush1.msra.mxu0 0.0
      %1758 = vmatprep.subr.mxu0 0.0
      %1759 = vmatpush1.msra.mxu0 0.0
      %1760 = vmatprep.subr.mxu0 0.0
      %1761 = vmatpush1.msra.mxu0 %v1728
      %1762 = vmatprep.subr.mxu0 0.0
      %1763 = vmatpush2.msra.mxu0 0.0
      %1764 = vmatprep.subr.mxu0 0.0
      %1765 = vmatpush2.msra.mxu0 0.0
      %1766 = vmatprep.subr.mxu0 0.0
      %1767 = vmatpush2.msra.mxu0 0.0
      %1768 = vmatprep.subr.mxu0 0.0
      %1769 = vmatpush2.msra.mxu0 0.0
      %1770 = vmatprep.subr.mxu0 0.0
      %1771 = vmatpush2.msra.mxu0 0.0
      %1772 = vmatprep.subr.mxu0 0.0
      %1773 = vmatpush2.msra.mxu0 0.0
      %1774 = vmatprep.subr.mxu0 0.0
      %1775 = vmatpush2.msra.mxu0 0.0
      %1776 = vmatprep.subr.mxu0 0.0
      %1777 = vmatpush2.msra.mxu0 0.0
      %1778 = vmatprep.subr.mxu0 0.0
      %1779 = vmatpush2.msra.mxu0 0.0
      %1780 = vmatprep.subr.mxu0 0.0
      %1781 = vmatpush2.msra.mxu0 0.0
      %1782 = vmatprep.subr.mxu0 0.0
      %1783 = vmatpush2.msra.mxu0 0.0
      %1784 = vmatprep.subr.mxu0 0.0
      %1785 = vmatpush2.msra.mxu0 0.0
      %1786 = vmatprep.subr.mxu0 0.0
      %1787 = vmatpush2.msra.mxu0 0.0
      %1788 = vmatprep.subr.mxu0 0.0
      %1789 = vmatpush2.msra.mxu0 0.0
      %1790 = vmatprep.subr.mxu0 0.0
      %1791 = vmatpush2.msra.mxu0 0.0
      %1792 = vmatprep.subr.mxu0 0.0
      %1793 = vmatpush2.msra.mxu0 0.0
      %1794 = vmatprep.mubr.f32.mxu0 0.0
      %1795 = vmatmul.mubr.f32.gmra.mxu0 %v1584
      %v1796 = vpop.f32.mrf.mxu0
      %v1797 = vadd.f32 0.0, %v1796
      %v1798 = vpop.f32.mrf.mxu0
      %1799 = vmatprep.mubr.f32.mxu0 0.0
      %1800 = vmatmul.mubr.f32.gmra.mxu0 %v1587
      %v1801 = vpop.f32.mrf.mxu0
      %v1802 = vadd.f32 0.0, %v1801
      %v1803 = vpop.f32.mrf.mxu0
      %1804 = vmatprep.mubr.f32.mxu0 0.0
      %1805 = vmatmul.mubr.f32.gmra.mxu0 %v1590
      %v1806 = vpop.f32.mrf.mxu0
      %v1807 = vadd.f32 0.0, %v1806
      %v1808 = vpop.f32.mrf.mxu0
      %1809 = vmatprep.mubr.f32.mxu0 0.0
      %1810 = vmatmul.mubr.f32.gmra.mxu0 %v1593
      %v1811 = vpop.f32.mrf.mxu0
      %v1812 = vadd.f32 0.0, %v1811
      %v1813 = vpop.f32.mrf.mxu0
      %1814 = vmatprep.mubr.f32.mxu0 0.0
      %1815 = vmatmul.mubr.f32.gmra.mxu0 %v1596
      %v1816 = vpop.f32.mrf.mxu0
      %v1817 = vadd.f32 0.0, %v1816
      %v1818 = vpop.f32.mrf.mxu0
      %1819 = vmatprep.mubr.f32.mxu0 0.0
      %1820 = vmatmul.mubr.f32.gmra.mxu0 %v1599
      %v1821 = vpop.f32.mrf.mxu0
      %v1822 = vadd.f32 0.0, %v1821
      %v1823 = vpop.f32.mrf.mxu0
      %1824 = vmatprep.mubr.f32.mxu0 0.0
      %1825 = vmatmul.mubr.f32.gmra.mxu0 %v1602
      %v1826 = vpop.f32.mrf.mxu0
      %v1827 = vadd.f32 0.0, %v1826
      %v1828 = vpop.f32.mrf.mxu0
      %1829 = vmatprep.mubr.f32.mxu0 0.0
      %1830 = vmatmul.mubr.f32.gmra.mxu0 %v1605
      %v1831 = vpop.f32.mrf.mxu0
      %v1832 = vadd.f32 0.0, %v1831
      %v1833 = vpop.f32.mrf.mxu0
      %1834 = vmatprep.mubr.f32.mxu0 0.0
      %1835 = vmatmul.mubr.f32.gmra.mxu0 %v1608
      %v1836 = vpop.f32.mrf.mxu0
      %v1837 = vadd.f32 0.0, %v1836
      %v1838 = vpop.f32.mrf.mxu0
      %1839 = vmatprep.mubr.f32.mxu0 0.0
      %1840 = vmatmul.mubr.f32.gmra.mxu0 %v1611
      %v1841 = vpop.f32.mrf.mxu0
      %v1842 = vadd.f32 0.0, %v1841
      %v1843 = vpop.f32.mrf.mxu0
      %1844 = vmatprep.mubr.f32.mxu0 0.0
      %1845 = vmatmul.mubr.f32.gmra.mxu0 %v1614
      %v1846 = vpop.f32.mrf.mxu0
      %v1847 = vadd.f32 0.0, %v1846
      %v1848 = vpop.f32.mrf.mxu0
      %1849 = vmatprep.mubr.f32.mxu0 0.0
      %1850 = vmatmul.mubr.f32.gmra.mxu0 %v1617
      %v1851 = vpop.f32.mrf.mxu0
      %v1852 = vadd.f32 0.0, %v1851
      %v1853 = vpop.f32.mrf.mxu0
      %1854 = vmatprep.mubr.f32.mxu0 0.0
      %1855 = vmatmul.mubr.f32.gmra.mxu0 %v1620
      %v1856 = vpop.f32.mrf.mxu0
      %v1857 = vadd.f32 0.0, %v1856
      %v1858 = vpop.f32.mrf.mxu0
      %1859 = vmatprep.mubr.f32.mxu0 0.0
      %1860 = vmatmul.mubr.f32.gmra.mxu0 %v1623
      %v1861 = vpop.f32.mrf.mxu0
      %v1862 = vadd.f32 0.0, %v1861
      %v1863 = vpop.f32.mrf.mxu0
      %1864 = vmatprep.mubr.f32.mxu0 0.0
      %1865 = vmatmul.mubr.f32.gmra.mxu0 %v1626
      %v1866 = vpop.f32.mrf.mxu0
      %v1867 = vadd.f32 0.0, %v1866
      %v1868 = vpop.f32.mrf.mxu0
      %1869 = vmatprep.mubr.f32.mxu0 0.0
      %1870 = vmatmul.mubr.f32.gmra.mxu0 %v1629
      %v1871 = vpop.f32.mrf.mxu0
      %v1872 = vadd.f32 0.0, %v1871
      %v1873 = vpop.f32.mrf.mxu0
      %1874 = vmatprep.mubr.f32.mxu0 0.0
      %1875 = vmatmul.mubr.f32.gmra.mxu0 %v1632
      %v1876 = vpop.f32.mrf.mxu0
      %v1877 = vadd.f32 0.0, %v1876
      %v1878 = vpop.f32.mrf.mxu0
      %1879 = vmatprep.mubr.f32.mxu0 0.0
      %1880 = vmatmul.mubr.f32.gmra.mxu0 %v1635
      %v1881 = vpop.f32.mrf.mxu0
      %v1882 = vadd.f32 0.0, %v1881
      %v1883 = vpop.f32.mrf.mxu0
      %1884 = vmatprep.mubr.f32.mxu0 0.0
      %1885 = vmatmul.mubr.f32.gmra.mxu0 %v1638
      %v1886 = vpop.f32.mrf.mxu0
      %v1887 = vadd.f32 0.0, %v1886
      %v1888 = vpop.f32.mrf.mxu0
      %1889 = vmatprep.mubr.f32.mxu0 0.0
      %1890 = vmatmul.mubr.f32.gmra.mxu0 %v1641
      %v1891 = vpop.f32.mrf.mxu0
      %v1892 = vadd.f32 0.0, %v1891
      %v1893 = vpop.f32.mrf.mxu0
      %1894 = vmatprep.mubr.f32.mxu0 0.0
      %1895 = vmatmul.mubr.f32.gmra.mxu0 %v1644
      %v1896 = vpop.f32.mrf.mxu0
      %v1897 = vadd.f32 0.0, %v1896
      %v1898 = vpop.f32.mrf.mxu0
      %1899 = vmatprep.mubr.f32.mxu0 0.0
      %1900 = vmatmul.mubr.f32.gmra.mxu0 %v1647
      %v1901 = vpop.f32.mrf.mxu0
      %v1902 = vadd.f32 0.0, %v1901
      %v1903 = vpop.f32.mrf.mxu0
      %1904 = vmatprep.mubr.f32.mxu0 0.0
      %1905 = vmatmul.mubr.f32.gmra.mxu0 %v1650
      %v1906 = vpop.f32.mrf.mxu0
      %v1907 = vadd.f32 0.0, %v1906
      %v1908 = vpop.f32.mrf.mxu0
      %1909 = vmatprep.mubr.f32.mxu0 0.0
      %1910 = vmatmul.mubr.f32.gmra.mxu0 %v1653
      %v1911 = vpop.f32.mrf.mxu0
      %v1912 = vadd.f32 0.0, %v1911
      %v1913 = vpop.f32.mrf.mxu0
      %1914 = vmatprep.mubr.f32.mxu0 0.0
      %1915 = vmatmul.mubr.f32.gmra.mxu0 %v1656
      %v1916 = vpop.f32.mrf.mxu0
      %v1917 = vadd.f32 0.0, %v1916
      %v1918 = vpop.f32.mrf.mxu0
      %1919 = vmatprep.mubr.f32.mxu0 0.0
      %1920 = vmatmul.mubr.f32.gmra.mxu0 %v1659
      %v1921 = vpop.f32.mrf.mxu0
      %v1922 = vadd.f32 0.0, %v1921
      %v1923 = vpop.f32.mrf.mxu0
      %1924 = vmatprep.mubr.f32.mxu0 0.0
      %1925 = vmatmul.mubr.f32.gmra.mxu0 %v1662
      %v1926 = vpop.f32.mrf.mxu0
      %v1927 = vadd.f32 0.0, %v1926
      %v1928 = vpop.f32.mrf.mxu0
      %1929 = vmatprep.mubr.f32.mxu0 0.0
      %1930 = vmatmul.mubr.f32.gmra.mxu0 %v1665
      %v1931 = vpop.f32.mrf.mxu0
      %v1932 = vadd.f32 0.0, %v1931
      %v1933 = vpop.f32.mrf.mxu0
      %1934 = vmatprep.mubr.f32.mxu0 0.0
      %1935 = vmatmul.mubr.f32.gmra.mxu0 %v1668
      %v1936 = vpop.f32.mrf.mxu0
      %v1937 = vadd.f32 0.0, %v1936
      %v1938 = vpop.f32.mrf.mxu0
      %1939 = vmatprep.mubr.f32.mxu0 0.0
      %1940 = vmatmul.mubr.f32.gmra.mxu0 %v1671
      %v1941 = vpop.f32.mrf.mxu0
      %v1942 = vadd.f32 0.0, %v1941
      %v1943 = vpop.f32.mrf.mxu0
      %1944 = vmatprep.mubr.f32.mxu0 0.0
      %1945 = vmatmul.mubr.f32.gmra.mxu0 %v1674
      %v1946 = vpop.f32.mrf.mxu0
      %v1947 = vadd.f32 0.0, %v1946
      %v1948 = vpop.f32.mrf.mxu0
      %1949 = vmatprep.mubr.f32.mxu0 0.0
      %1950 = vmatmul.mubr.f32.gmra.mxu0 %v1677
      %v1951 = vpop.f32.mrf.mxu0
      %v1952 = vadd.f32 0.0, %v1951
      %v1953 = vpop.f32.mrf.mxu0
      %1954 = vmatprep.mubr.f32.mxu0 0.0
      %1955 = vmatmul.mubr.f32.gmra.mxu0 %v1680
      %v1956 = vpop.f32.mrf.mxu0
      %v1957 = vadd.f32 0.0, %v1956
      %v1958 = vpop.f32.mrf.mxu0
      %1959 = vmatprep.mubr.f32.mxu0 0.0
      %1960 = vmatmul.mubr.f32.gmra.mxu0 %v1683
      %v1961 = vpop.f32.mrf.mxu0
      %v1962 = vadd.f32 0.0, %v1961
      %v1963 = vpop.f32.mrf.mxu0
      %1964 = vmatprep.mubr.f32.mxu0 0.0
      %1965 = vmatmul.mubr.f32.gmra.mxu0 %v1686
      %v1966 = vpop.f32.mrf.mxu0
      %v1967 = vadd.f32 0.0, %v1966
      %v1968 = vpop.f32.mrf.mxu0
      %1969 = vmatprep.mubr.f32.mxu0 0.0
      %1970 = vmatmul.mubr.f32.gmra.mxu0 %v1689
      %v1971 = vpop.f32.mrf.mxu0
      %v1972 = vadd.f32 0.0, %v1971
      %v1973 = vpop.f32.mrf.mxu0
      %1974 = vmatprep.mubr.f32.mxu0 0.0
      %1975 = vmatmul.mubr.f32.gmra.mxu0 %v1692
      %v1976 = vpop.f32.mrf.mxu0
      %v1977 = vadd.f32 0.0, %v1976
      %v1978 = vpop.f32.mrf.mxu0
      %1979 = vmatprep.mubr.f32.mxu0 0.0
      %1980 = vmatmul.mubr.f32.gmra.mxu0 %v1695
      %v1981 = vpop.f32.mrf.mxu0
      %v1982 = vadd.f32 0.0, %v1981
      %v1983 = vpop.f32.mrf.mxu0
      %1984 = vmatprep.mubr.f32.mxu0 0.0
      %1985 = vmatmul.mubr.f32.gmra.mxu0 %v1698
      %v1986 = vpop.f32.mrf.mxu0
      %v1987 = vadd.f32 0.0, %v1986
      %v1988 = vpop.f32.mrf.mxu0
      %1989 = vmatprep.mubr.f32.mxu0 0.0
      %1990 = vmatmul.mubr.f32.gmra.mxu0 %v1701
      %v1991 = vpop.f32.mrf.mxu0
      %v1992 = vadd.f32 0.0, %v1991
      %v1993 = vpop.f32.mrf.mxu0
      %1994 = vmatprep.mubr.f32.mxu0 0.0
      %1995 = vmatmul.mubr.f32.gmra.mxu0 %v1704
      %v1996 = vpop.f32.mrf.mxu0
      %v1997 = vadd.f32 0.0, %v1996
      %v1998 = vpop.f32.mrf.mxu0
      %1999 = vmatprep.mubr.f32.mxu0 0.0
      %2000 = vmatmul.mubr.f32.gmra.mxu0 %v1707
      %v2001 = vpop.f32.mrf.mxu0
      %v2002 = vadd.f32 0.0, %v2001
      %v2003 = vpop.f32.mrf.mxu0
      %2004 = vmatprep.mubr.f32.mxu0 0.0
      %2005 = vmatmul.mubr.f32.gmra.mxu0 %v1710
      %v2006 = vpop.f32.mrf.mxu0
      %v2007 = vadd.f32 0.0, %v2006
      %v2008 = vpop.f32.mrf.mxu0
      %2009 = vmatprep.mubr.f32.mxu0 0.0
      %2010 = vmatmul.mubr.f32.gmra.mxu0 %v1713
      %v2011 = vpop.f32.mrf.mxu0
      %v2012 = vadd.f32 0.0, %v2011
      %v2013 = vpop.f32.mrf.mxu0
      %2014 = vmatprep.mubr.f32.mxu0 0.0
      %2015 = vmatmul.mubr.f32.gmra.mxu0 %v1716
      %v2016 = vpop.f32.mrf.mxu0
      %v2017 = vadd.f32 0.0, %v2016
      %v2018 = vpop.f32.mrf.mxu0
      %2019 = vmatprep.mubr.f32.mxu0 0.0
      %2020 = vmatmul.mubr.f32.gmra.mxu0 %v1719
      %v2021 = vpop.f32.mrf.mxu0
      %v2022 = vadd.f32 0.0, %v2021
      %v2023 = vpop.f32.mrf.mxu0
      %2024 = vmatprep.mubr.f32.mxu0 0.0
      %2025 = vmatmul.mubr.f32.gmra.mxu0 %v1722
      %v2026 = vpop.f32.mrf.mxu0
      %v2027 = vadd.f32 0.0, %v2026
      %v2028 = vpop.f32.mrf.mxu0
      %2029 = vmatprep.mubr.f32.mxu0 0.0
      %2030 = vmatmul.mubr.f32.gmra.mxu0 %v1725
      %v2031 = vpop.f32.mrf.mxu0
      %v2032 = vadd.f32 0.0, %v2031
      %v2033 = vpop.f32.mrf.mxu0
      %2034 = vdwg.mxu0
      %v2035 = vadd.f32 %v1485, %v1797
      %v2036 = vadd.f32 %v1486, %v1802
      %v2037 = vadd.f32 %v1487, %v1807
      %v2038 = vadd.f32 %v1488, %v1812
      %v2039 = vadd.f32 %v1489, %v1817
      %v2040 = vadd.f32 %v1490, %v1822
      %v2041 = vadd.f32 %v1491, %v1827
      %v2042 = vadd.f32 %v1492, %v1832
      %v2043 = vadd.f32 %v1493, %v1837
      %v2044 = vadd.f32 %v1494, %v1842
      %v2045 = vadd.f32 %v1495, %v1847
      %v2046 = vadd.f32 %v1496, %v1852
      %v2047 = vadd.f32 %v1497, %v1857
      %v2048 = vadd.f32 %v1498, %v1862
      %v2049 = vadd.f32 %v1499, %v1867
      %v2050 = vadd.f32 %v1500, %v1872
      %v2051 = vadd.f32 %v1501, %v1877
      %v2052 = vadd.f32 %v1502, %v1882
      %v2053 = vadd.f32 %v1503, %v1887
      %v2054 = vadd.f32 %v1504, %v1892
      %v2055 = vadd.f32 %v1505, %v1897
      %v2056 = vadd.f32 %v1506, %v1902
      %v2057 = vadd.f32 %v1507, %v1907
      %v2058 = vadd.f32 %v1508, %v1912
      %v2059 = vadd.f32 %v1509, %v1917
      %v2060 = vadd.f32 %v1510, %v1922
      %v2061 = vadd.f32 %v1511, %v1927
      %v2062 = vadd.f32 %v1512, %v1932
      %v2063 = vadd.f32 %v1513, %v1937
      %v2064 = vadd.f32 %v1514, %v1942
      %v2065 = vadd.f32 %v1515, %v1947
      %v2066 = vadd.f32 %v1516, %v1952
      %v2067 = vadd.f32 %v1517, %v1957
      %v2068 = vadd.f32 %v1518, %v1962
      %v2069 = vadd.f32 %v1519, %v1967
      %v2070 = vadd.f32 %v1520, %v1972
      %v2071 = vadd.f32 %v1521, %v1977
      %v2072 = vadd.f32 %v1522, %v1982
      %v2073 = vadd.f32 %v1523, %v1987
      %v2074 = vadd.f32 %v1524, %v1992
      %v2075 = vadd.f32 %v1525, %v1997
      %v2076 = vadd.f32 %v1526, %v2002
      %v2077 = vadd.f32 %v1527, %v2007
      %v2078 = vadd.f32 %v1528, %v2012
      %v2079 = vadd.f32 %v1529, %v2017
      %v2080 = vadd.f32 %v1530, %v2022
      %v2081 = vadd.f32 %v1531, %v2027
      %v2082 = vadd.f32 %v1532, %v2032
      %2083 = vst [vmem:[#allocation2] sm:$0xff] %v2035
      %2084 = vst [vmem:[#allocation2 + $0x8] sm:$0xff] %v2036
      %2085 = vst [vmem:[#allocation2 + $0x10] sm:$0xff] %v2037
      %2086 = vst [vmem:[#allocation2 + $0x18] sm:$0xff] %v2038
      %2087 = vst [vmem:[#allocation2 + $0x20] sm:$0xff] %v2039
      %2088 = vst [vmem:[#allocation2 + $0x28] sm:$0xff] %v2040
      %2089 = vst [vmem:[#allocation2 + $0x30] sm:$0xff] %v2041
      %2090 = vst [vmem:[#allocation2 + $0x38] sm:$0xff] %v2042
      %2091 = vst [vmem:[#allocation2 + $0x40] sm:$0xff] %v2043
      %2092 = vst [vmem:[#allocation2 + $0x48] sm:$0xff] %v2044
      %2093 = vst [vmem:[#allocation2 + $0x50] sm:$0xff] %v2045
      %2094 = vst [vmem:[#allocation2 + $0x58] sm:$0xff] %v2046
      %2095 = vst [vmem:[#allocation2 + $0x60] sm:$0xff] %v2047
      %2096 = vst [vmem:[#allocation2 + $0x68] sm:$0xff] %v2048
      %2097 = vst [vmem:[#allocation2 + $0x70] sm:$0xff] %v2049
      %2098 = vst [vmem:[#allocation2 + $0x78] sm:$0xff] %v2050
      %2099 = vst [vmem:[#allocation2 + $0x80] sm:$0xff] %v2051
      %2100 = vst [vmem:[#allocation2 + $0x88] sm:$0xff] %v2052
      %2101 = vst [vmem:[#allocation2 + $0x90] sm:$0xff] %v2053
      %2102 = vst [vmem:[#allocation2 + $0x98] sm:$0xff] %v2054
      %2103 = vst [vmem:[#allocation2 + $0xa0] sm:$0xff] %v2055
      %2104 = vst [vmem:[#allocation2 + $0xa8] sm:$0xff] %v2056
      %2105 = vst [vmem:[#allocation2 + $0xb0] sm:$0xff] %v2057
      %2106 = vst [vmem:[#allocation2 + $0xb8] sm:$0xff] %v2058
      %2107 = vst [vmem:[#allocation2 + $0xc0] sm:$0xff] %v2059
      %2108 = vst [vmem:[#allocation2 + $0xc8] sm:$0xff] %v2060
      %2109 = vst [vmem:[#allocation2 + $0xd0] sm:$0xff] %v2061
      %2110 = vst [vmem:[#allocation2 + $0xd8] sm:$0xff] %v2062
      %2111 = vst [vmem:[#allocation2 + $0xe0] sm:$0xff] %v2063
      %2112 = vst [vmem:[#allocation2 + $0xe8] sm:$0xff] %v2064
      %2113 = vst [vmem:[#allocation2 + $0xf0] sm:$0xff] %v2065
      %2114 = vst [vmem:[#allocation2 + $0xf8] sm:$0xff] %v2066
      %2115 = vst [vmem:[#allocation2 + $0x100] sm:$0xff] %v2067
      %2116 = vst [vmem:[#allocation2 + $0x108] sm:$0xff] %v2068
      %2117 = vst [vmem:[#allocation2 + $0x110] sm:$0xff] %v2069
      %2118 = vst [vmem:[#allocation2 + $0x118] sm:$0xff] %v2070
      %2119 = vst [vmem:[#allocation2 + $0x120] sm:$0xff] %v2071
      %2120 = vst [vmem:[#allocation2 + $0x128] sm:$0xff] %v2072
      %2121 = vst [vmem:[#allocation2 + $0x130] sm:$0xff] %v2073
      %2122 = vst [vmem:[#allocation2 + $0x138] sm:$0xff] %v2074
      %2123 = vst [vmem:[#allocation2 + $0x140] sm:$0xff] %v2075
      %2124 = vst [vmem:[#allocation2 + $0x148] sm:$0xff] %v2076
      %2125 = vst [vmem:[#allocation2 + $0x150] sm:$0xff] %v2077
      %2126 = vst [vmem:[#allocation2 + $0x158] sm:$0xff] %v2078
      %2127 = vst [vmem:[#allocation2 + $0x160] sm:$0xff] %v2079
      %2128 = vst [vmem:[#allocation2 + $0x168] sm:$0xff] %v2080
      %2129 = vst [vmem:[#allocation2 + $0x170] sm:$0xff] %v2081
      %2130 = vst [vmem:[#allocation2 + $0x178] sm:$0xff] %v2082
      %v2131 = vld [vmem:[#allocation2] sm:$0xff]
      %v2132 = vld [vmem:[#allocation2 + $0x8] sm:$0xff]
      %v2133 = vld [vmem:[#allocation2 + $0x10] sm:$0xff]
      %v2134 = vld [vmem:[#allocation2 + $0x18] sm:$0xff]
      %v2135 = vld [vmem:[#allocation2 + $0x20] sm:$0xff]
      %v2136 = vld [vmem:[#allocation2 + $0x28] sm:$0xff]
      %v2137 = vld [vmem:[#allocation2 + $0x30] sm:$0xff]
      %v2138 = vld [vmem:[#allocation2 + $0x38] sm:$0xff]
      %v2139 = vld [vmem:[#allocation2 + $0x40] sm:$0xff]
      %v2140 = vld [vmem:[#allocation2 + $0x48] sm:$0xff]
      %v2141 = vld [vmem:[#allocation2 + $0x50] sm:$0xff]
      %v2142 = vld [vmem:[#allocation2 + $0x58] sm:$0xff]
      %v2143 = vld [vmem:[#allocation2 + $0x60] sm:$0xff]
      %v2144 = vld [vmem:[#allocation2 + $0x68] sm:$0xff]
      %v2145 = vld [vmem:[#allocation2 + $0x70] sm:$0xff]
      %v2146 = vld [vmem:[#allocation2 + $0x78] sm:$0xff]
      %v2147 = vld [vmem:[#allocation2 + $0x80] sm:$0xff]
      %v2148 = vld [vmem:[#allocation2 + $0x88] sm:$0xff]
      %v2149 = vld [vmem:[#allocation2 + $0x90] sm:$0xff]
      %v2150 = vld [vmem:[#allocation2 + $0x98] sm:$0xff]
      %v2151 = vld [vmem:[#allocation2 + $0xa0] sm:$0xff]
      %v2152 = vld [vmem:[#allocation2 + $0xa8] sm:$0xff]
      %v2153 = vld [vmem:[#allocation2 + $0xb0] sm:$0xff]
      %v2154 = vld [vmem:[#allocation2 + $0xb8] sm:$0xff]
      %v2155 = vld [vmem:[#allocation2 + $0xc0] sm:$0xff]
      %v2156 = vld [vmem:[#allocation2 + $0xc8] sm:$0xff]
      %v2157 = vld [vmem:[#allocation2 + $0xd0] sm:$0xff]
      %v2158 = vld [vmem:[#allocation2 + $0xd8] sm:$0xff]
      %v2159 = vld [vmem:[#allocation2 + $0xe0] sm:$0xff]
      %v2160 = vld [vmem:[#allocation2 + $0xe8] sm:$0xff]
      %v2161 = vld [vmem:[#allocation2 + $0xf0] sm:$0xff]
      %v2162 = vld [vmem:[#allocation2 + $0xf8] sm:$0xff]
      %v2163 = vld [vmem:[#allocation2 + $0x100] sm:$0xff]
      %v2164 = vld [vmem:[#allocation2 + $0x108] sm:$0xff]
      %v2165 = vld [vmem:[#allocation2 + $0x110] sm:$0xff]
      %v2166 = vld [vmem:[#allocation2 + $0x118] sm:$0xff]
      %v2167 = vld [vmem:[#allocation2 + $0x120] sm:$0xff]
      %v2168 = vld [vmem:[#allocation2 + $0x128] sm:$0xff]
      %v2169 = vld [vmem:[#allocation2 + $0x130] sm:$0xff]
      %v2170 = vld [vmem:[#allocation2 + $0x138] sm:$0xff]
      %v2171 = vld [vmem:[#allocation2 + $0x140] sm:$0xff]
      %v2172 = vld [vmem:[#allocation2 + $0x148] sm:$0xff]
      %v2173 = vld [vmem:[#allocation2 + $0x150] sm:$0xff]
      %v2174 = vld [vmem:[#allocation2 + $0x158] sm:$0xff]
      %v2175 = vld [vmem:[#allocation2 + $0x160] sm:$0xff]
      %v2176 = vld [vmem:[#allocation2 + $0x168] sm:$0xff]
      %v2177 = vld [vmem:[#allocation2 + $0x170] sm:$0xff]
      %v2178 = vld [vmem:[#allocation2 + $0x178] sm:$0xff]
      %v2179 = vld [vmem:[%s138 + $0x18] sm:$0xff]
      %v2180 = vld [vmem:[%s138 + $0x20] sm:$0xff]
      %v2181 = vld [vmem:[%s138 + $0x28] sm:$0xff]
      %v2182 = vld [vmem:[%s138 + $0x30] sm:$0xff]
      %v2183 = vld [vmem:[%s138 + $0x38] sm:$0xff]
      %v2184 = vld [vmem:[%s138 + $0x40] sm:$0xff]
      %v2185 = vld [vmem:[%s138 + $0x48] sm:$0xff]
      %v2186 = vld [vmem:[%s138 + $0x50] sm:$0xff]
      %v2187 = vld [vmem:[%s138 + $0x58] sm:$0xff]
      %v2188 = vld [vmem:[%s138 + $0x60] sm:$0xff]
      %v2189 = vld [vmem:[%s138 + $0x68] sm:$0xff]
      %v2190 = vld [vmem:[%s138 + $0x70] sm:$0xff]
      %v2191 = vld [vmem:[%s138 + $0x78] sm:$0xff]
      %v2192 = vld [vmem:[%s138 + $0x80] sm:$0xff]
      %v2193 = vld [vmem:[%s138 + $0x88] sm:$0xff]
      %v2194 = vld [vmem:[%s138 + $0x90] sm:$0xff]
      %v2195 = vld [vmem:[%s138 + $0x98] sm:$0xff]
      %v2196 = vld [vmem:[%s138 + $0xa0] sm:$0xff]
      %v2197 = vld [vmem:[%s138 + $0xa8] sm:$0xff]
      %v2198 = vld [vmem:[%s138 + $0xb0] sm:$0xff]
      %v2199 = vld [vmem:[%s138 + $0xb8] sm:$0xff]
      %v2200 = vld [vmem:[%s138 + $0xc0] sm:$0xff]
      %v2201 = vld [vmem:[%s138 + $0xc8] sm:$0xff]
      %v2202 = vld [vmem:[%s138 + $0xd0] sm:$0xff]
      %v2203 = vld [vmem:[%s138 + $0xd8] sm:$0xff]
      %v2204 = vld [vmem:[%s138 + $0xe0] sm:$0xff]
      %v2205 = vld [vmem:[%s138 + $0xe8] sm:$0xff]
      %v2206 = vld [vmem:[%s138 + $0xf0] sm:$0xff]
      %v2207 = vld [vmem:[%s138 + $0xf8] sm:$0xff]
      %v2208 = vld [vmem:[%s138 + $0x100] sm:$0xff]
      %v2209 = vld [vmem:[%s138 + $0x108] sm:$0xff]
      %v2210 = vld [vmem:[%s138 + $0x110] sm:$0xff]
      %v2211 = vld [vmem:[%s138 + $0x118] sm:$0xff]
      %v2212 = vld [vmem:[%s138 + $0x120] sm:$0xff]
      %v2213 = vld [vmem:[%s138 + $0x128] sm:$0xff]
      %v2214 = vld [vmem:[%s138 + $0x130] sm:$0xff]
      %v2215 = vld [vmem:[%s138 + $0x138] sm:$0xff]
      %v2216 = vld [vmem:[%s138 + $0x140] sm:$0xff]
      %v2217 = vld [vmem:[%s138 + $0x148] sm:$0xff]
      %v2218 = vld [vmem:[%s138 + $0x150] sm:$0xff]
      %v2219 = vld [vmem:[%s138 + $0x158] sm:$0xff]
      %v2220 = vld [vmem:[%s138 + $0x160] sm:$0xff]
      %v2221 = vld [vmem:[%s138 + $0x168] sm:$0xff]
      %v2222 = vld [vmem:[%s138 + $0x170] sm:$0xff]
      %v2223 = vld [vmem:[%s138 + $0x178] sm:$0xff]
      %v2224 = vld [vmem:[%s138 + $0x180] sm:$0xff]
      %v2225 = vld [vmem:[%s138 + $0x188] sm:$0xff]
      %v2226 = vld [vmem:[%s138 + $0x190] sm:$0xff]
      %s2227 = scalar_lea.vmem %s1, 12
      %v2228 = vld [vmem:[%s2227] sm:$0xf]
      %v2230 = vsel %vm289, %v2179, 0
      %v2233 = vsel %vm289, %v2180, 0
      %v2236 = vsel %vm289, %v2181, 0
      %v2239 = vsel %vm289, %v2182, 0
      %v2242 = vsel %vm289, %v2183, 0
      %v2245 = vsel %vm289, %v2184, 0
      %v2248 = vsel %vm289, %v2185, 0
      %v2251 = vsel %vm289, %v2186, 0
      %v2254 = vsel %vm289, %v2187, 0
      %v2257 = vsel %vm289, %v2188, 0
      %v2260 = vsel %vm289, %v2189, 0
      %v2263 = vsel %vm289, %v2190, 0
      %v2266 = vsel %vm289, %v2191, 0
      %v2269 = vsel %vm289, %v2192, 0
      %v2272 = vsel %vm289, %v2193, 0
      %v2275 = vsel %vm289, %v2194, 0
      %v2278 = vsel %vm289, %v2195, 0
      %v2281 = vsel %vm289, %v2196, 0
      %v2284 = vsel %vm289, %v2197, 0
      %v2287 = vsel %vm289, %v2198, 0
      %v2290 = vsel %vm289, %v2199, 0
      %v2293 = vsel %vm289, %v2200, 0
      %v2296 = vsel %vm289, %v2201, 0
      %v2299 = vsel %vm289, %v2202, 0
      %v2302 = vsel %vm289, %v2203, 0
      %v2305 = vsel %vm289, %v2204, 0
      %v2308 = vsel %vm289, %v2205, 0
      %v2311 = vsel %vm289, %v2206, 0
      %v2314 = vsel %vm289, %v2207, 0
      %v2317 = vsel %vm289, %v2208, 0
      %v2320 = vsel %vm289, %v2209, 0
      %v2323 = vsel %vm289, %v2210, 0
      %v2326 = vsel %vm289, %v2211, 0
      %v2329 = vsel %vm289, %v2212, 0
      %v2332 = vsel %vm289, %v2213, 0
      %v2335 = vsel %vm289, %v2214, 0
      %v2338 = vsel %vm289, %v2215, 0
      %v2341 = vsel %vm289, %v2216, 0
      %v2344 = vsel %vm289, %v2217, 0
      %v2347 = vsel %vm289, %v2218, 0
      %v2350 = vsel %vm289, %v2219, 0
      %v2353 = vsel %vm289, %v2220, 0
      %v2356 = vsel %vm289, %v2221, 0
      %v2359 = vsel %vm289, %v2222, 0
      %v2362 = vsel %vm289, %v2223, 0
      %v2365 = vsel %vm289, %v2224, 0
      %v2368 = vsel %vm289, %v2225, 0
      %v2371 = vsel %vm289, %v2226, 0
      %v2374 = vsel %vm434, %v2228, 0
      %2376 = vmatprep.subr.mxu0 0.0
      %2377 = vmatpush1.msra.mxu0 0.0
      %2378 = vmatprep.subr.mxu0 0.0
      %2379 = vmatpush1.msra.mxu0 0.0
      %2380 = vmatprep.subr.mxu0 0.0
      %2381 = vmatpush1.msra.mxu0 0.0
      %2382 = vmatprep.subr.mxu0 0.0
      %2383 = vmatpush1.msra.mxu0 0.0
      %2384 = vmatprep.subr.mxu0 0.0
      %2385 = vmatpush1.msra.mxu0 0.0
      %2386 = vmatprep.subr.mxu0 0.0
      %2387 = vmatpush1.msra.mxu0 0.0
      %2388 = vmatprep.subr.mxu0 0.0
      %2389 = vmatpush1.msra.mxu0 0.0
      %2390 = vmatprep.subr.mxu0 0.0
      %2391 = vmatpush1.msra.mxu0 0.0
      %2392 = vmatprep.subr.mxu0 0.0
      %2393 = vmatpush1.msra.mxu0 0.0
      %2394 = vmatprep.subr.mxu0 0.0
      %2395 = vmatpush1.msra.mxu0 0.0
      %2396 = vmatprep.subr.mxu0 0.0
      %2397 = vmatpush1.msra.mxu0 0.0
      %2398 = vmatprep.subr.mxu0 0.0
      %2399 = vmatpush1.msra.mxu0 0.0
      %2400 = vmatprep.subr.mxu0 0.0
      %2401 = vmatpush1.msra.mxu0 0.0
      %2402 = vmatprep.subr.mxu0 0.0
      %2403 = vmatpush1.msra.mxu0 0.0
      %2404 = vmatprep.subr.mxu0 0.0
      %2405 = vmatpush1.msra.mxu0 0.0
      %2406 = vmatprep.subr.mxu0 0.0
      %2407 = vmatpush1.msra.mxu0 %v2374
      %2408 = vmatprep.subr.mxu0 0.0
      %2409 = vmatpush2.msra.mxu0 0.0
      %2410 = vmatprep.subr.mxu0 0.0
      %2411 = vmatpush2.msra.mxu0 0.0
      %2412 = vmatprep.subr.mxu0 0.0
      %2413 = vmatpush2.msra.mxu0 0.0
      %2414 = vmatprep.subr.mxu0 0.0
      %2415 = vmatpush2.msra.mxu0 0.0
      %2416 = vmatprep.subr.mxu0 0.0
      %2417 = vmatpush2.msra.mxu0 0.0
      %2418 = vmatprep.subr.mxu0 0.0
      %2419 = vmatpush2.msra.mxu0 0.0
      %2420 = vmatprep.subr.mxu0 0.0
      %2421 = vmatpush2.msra.mxu0 0.0
      %2422 = vmatprep.subr.mxu0 0.0
      %2423 = vmatpush2.msra.mxu0 0.0
      %2424 = vmatprep.subr.mxu0 0.0
      %2425 = vmatpush2.msra.mxu0 0.0
      %2426 = vmatprep.subr.mxu0 0.0
      %2427 = vmatpush2.msra.mxu0 0.0
      %2428 = vmatprep.subr.mxu0 0.0
      %2429 = vmatpush2.msra.mxu0 0.0
      %2430 = vmatprep.subr.mxu0 0.0
      %2431 = vmatpush2.msra.mxu0 0.0
      %2432 = vmatprep.subr.mxu0 0.0
      %2433 = vmatpush2.msra.mxu0 0.0
      %2434 = vmatprep.subr.mxu0 0.0
      %2435 = vmatpush2.msra.mxu0 0.0
      %2436 = vmatprep.subr.mxu0 0.0
      %2437 = vmatpush2.msra.mxu0 0.0
      %2438 = vmatprep.subr.mxu0 0.0
      %2439 = vmatpush2.msra.mxu0 0.0
      %2440 = vmatprep.mubr.f32.mxu0 0.0
      %2441 = vmatmul.mubr.f32.gmra.mxu0 %v2230
      %v2442 = vpop.f32.mrf.mxu0
      %v2443 = vadd.f32 0.0, %v2442
      %v2444 = vpop.f32.mrf.mxu0
      %2445 = vmatprep.mubr.f32.mxu0 0.0
      %2446 = vmatmul.mubr.f32.gmra.mxu0 %v2233
      %v2447 = vpop.f32.mrf.mxu0
      %v2448 = vadd.f32 0.0, %v2447
      %v2449 = vpop.f32.mrf.mxu0
      %2450 = vmatprep.mubr.f32.mxu0 0.0
      %2451 = vmatmul.mubr.f32.gmra.mxu0 %v2236
      %v2452 = vpop.f32.mrf.mxu0
      %v2453 = vadd.f32 0.0, %v2452
      %v2454 = vpop.f32.mrf.mxu0
      %2455 = vmatprep.mubr.f32.mxu0 0.0
      %2456 = vmatmul.mubr.f32.gmra.mxu0 %v2239
      %v2457 = vpop.f32.mrf.mxu0
      %v2458 = vadd.f32 0.0, %v2457
      %v2459 = vpop.f32.mrf.mxu0
      %2460 = vmatprep.mubr.f32.mxu0 0.0
      %2461 = vmatmul.mubr.f32.gmra.mxu0 %v2242
      %v2462 = vpop.f32.mrf.mxu0
      %v2463 = vadd.f32 0.0, %v2462
      %v2464 = vpop.f32.mrf.mxu0
      %2465 = vmatprep.mubr.f32.mxu0 0.0
      %2466 = vmatmul.mubr.f32.gmra.mxu0 %v2245
      %v2467 = vpop.f32.mrf.mxu0
      %v2468 = vadd.f32 0.0, %v2467
      %v2469 = vpop.f32.mrf.mxu0
      %2470 = vmatprep.mubr.f32.mxu0 0.0
      %2471 = vmatmul.mubr.f32.gmra.mxu0 %v2248
      %v2472 = vpop.f32.mrf.mxu0
      %v2473 = vadd.f32 0.0, %v2472
      %v2474 = vpop.f32.mrf.mxu0
      %2475 = vmatprep.mubr.f32.mxu0 0.0
      %2476 = vmatmul.mubr.f32.gmra.mxu0 %v2251
      %v2477 = vpop.f32.mrf.mxu0
      %v2478 = vadd.f32 0.0, %v2477
      %v2479 = vpop.f32.mrf.mxu0
      %2480 = vmatprep.mubr.f32.mxu0 0.0
      %2481 = vmatmul.mubr.f32.gmra.mxu0 %v2254
      %v2482 = vpop.f32.mrf.mxu0
      %v2483 = vadd.f32 0.0, %v2482
      %v2484 = vpop.f32.mrf.mxu0
      %2485 = vmatprep.mubr.f32.mxu0 0.0
      %2486 = vmatmul.mubr.f32.gmra.mxu0 %v2257
      %v2487 = vpop.f32.mrf.mxu0
      %v2488 = vadd.f32 0.0, %v2487
      %v2489 = vpop.f32.mrf.mxu0
      %2490 = vmatprep.mubr.f32.mxu0 0.0
      %2491 = vmatmul.mubr.f32.gmra.mxu0 %v2260
      %v2492 = vpop.f32.mrf.mxu0
      %v2493 = vadd.f32 0.0, %v2492
      %v2494 = vpop.f32.mrf.mxu0
      %2495 = vmatprep.mubr.f32.mxu0 0.0
      %2496 = vmatmul.mubr.f32.gmra.mxu0 %v2263
      %v2497 = vpop.f32.mrf.mxu0
      %v2498 = vadd.f32 0.0, %v2497
      %v2499 = vpop.f32.mrf.mxu0
      %2500 = vmatprep.mubr.f32.mxu0 0.0
      %2501 = vmatmul.mubr.f32.gmra.mxu0 %v2266
      %v2502 = vpop.f32.mrf.mxu0
      %v2503 = vadd.f32 0.0, %v2502
      %v2504 = vpop.f32.mrf.mxu0
      %2505 = vmatprep.mubr.f32.mxu0 0.0
      %2506 = vmatmul.mubr.f32.gmra.mxu0 %v2269
      %v2507 = vpop.f32.mrf.mxu0
      %v2508 = vadd.f32 0.0, %v2507
      %v2509 = vpop.f32.mrf.mxu0
      %2510 = vmatprep.mubr.f32.mxu0 0.0
      %2511 = vmatmul.mubr.f32.gmra.mxu0 %v2272
      %v2512 = vpop.f32.mrf.mxu0
      %v2513 = vadd.f32 0.0, %v2512
      %v2514 = vpop.f32.mrf.mxu0
      %2515 = vmatprep.mubr.f32.mxu0 0.0
      %2516 = vmatmul.mubr.f32.gmra.mxu0 %v2275
      %v2517 = vpop.f32.mrf.mxu0
      %v2518 = vadd.f32 0.0, %v2517
      %v2519 = vpop.f32.mrf.mxu0
      %2520 = vmatprep.mubr.f32.mxu0 0.0
      %2521 = vmatmul.mubr.f32.gmra.mxu0 %v2278
      %v2522 = vpop.f32.mrf.mxu0
      %v2523 = vadd.f32 0.0, %v2522
      %v2524 = vpop.f32.mrf.mxu0
      %2525 = vmatprep.mubr.f32.mxu0 0.0
      %2526 = vmatmul.mubr.f32.gmra.mxu0 %v2281
      %v2527 = vpop.f32.mrf.mxu0
      %v2528 = vadd.f32 0.0, %v2527
      %v2529 = vpop.f32.mrf.mxu0
      %2530 = vmatprep.mubr.f32.mxu0 0.0
      %2531 = vmatmul.mubr.f32.gmra.mxu0 %v2284
      %v2532 = vpop.f32.mrf.mxu0
      %v2533 = vadd.f32 0.0, %v2532
      %v2534 = vpop.f32.mrf.mxu0
      %2535 = vmatprep.mubr.f32.mxu0 0.0
      %2536 = vmatmul.mubr.f32.gmra.mxu0 %v2287
      %v2537 = vpop.f32.mrf.mxu0
      %v2538 = vadd.f32 0.0, %v2537
      %v2539 = vpop.f32.mrf.mxu0
      %2540 = vmatprep.mubr.f32.mxu0 0.0
      %2541 = vmatmul.mubr.f32.gmra.mxu0 %v2290
      %v2542 = vpop.f32.mrf.mxu0
      %v2543 = vadd.f32 0.0, %v2542
      %v2544 = vpop.f32.mrf.mxu0
      %2545 = vmatprep.mubr.f32.mxu0 0.0
      %2546 = vmatmul.mubr.f32.gmra.mxu0 %v2293
      %v2547 = vpop.f32.mrf.mxu0
      %v2548 = vadd.f32 0.0, %v2547
      %v2549 = vpop.f32.mrf.mxu0
      %2550 = vmatprep.mubr.f32.mxu0 0.0
      %2551 = vmatmul.mubr.f32.gmra.mxu0 %v2296
      %v2552 = vpop.f32.mrf.mxu0
      %v2553 = vadd.f32 0.0, %v2552
      %v2554 = vpop.f32.mrf.mxu0
      %2555 = vmatprep.mubr.f32.mxu0 0.0
      %2556 = vmatmul.mubr.f32.gmra.mxu0 %v2299
      %v2557 = vpop.f32.mrf.mxu0
      %v2558 = vadd.f32 0.0, %v2557
      %v2559 = vpop.f32.mrf.mxu0
      %2560 = vmatprep.mubr.f32.mxu0 0.0
      %2561 = vmatmul.mubr.f32.gmra.mxu0 %v2302
      %v2562 = vpop.f32.mrf.mxu0
      %v2563 = vadd.f32 0.0, %v2562
      %v2564 = vpop.f32.mrf.mxu0
      %2565 = vmatprep.mubr.f32.mxu0 0.0
      %2566 = vmatmul.mubr.f32.gmra.mxu0 %v2305
      %v2567 = vpop.f32.mrf.mxu0
      %v2568 = vadd.f32 0.0, %v2567
      %v2569 = vpop.f32.mrf.mxu0
      %2570 = vmatprep.mubr.f32.mxu0 0.0
      %2571 = vmatmul.mubr.f32.gmra.mxu0 %v2308
      %v2572 = vpop.f32.mrf.mxu0
      %v2573 = vadd.f32 0.0, %v2572
      %v2574 = vpop.f32.mrf.mxu0
      %2575 = vmatprep.mubr.f32.mxu0 0.0
      %2576 = vmatmul.mubr.f32.gmra.mxu0 %v2311
      %v2577 = vpop.f32.mrf.mxu0
      %v2578 = vadd.f32 0.0, %v2577
      %v2579 = vpop.f32.mrf.mxu0
      %2580 = vmatprep.mubr.f32.mxu0 0.0
      %2581 = vmatmul.mubr.f32.gmra.mxu0 %v2314
      %v2582 = vpop.f32.mrf.mxu0
      %v2583 = vadd.f32 0.0, %v2582
      %v2584 = vpop.f32.mrf.mxu0
      %2585 = vmatprep.mubr.f32.mxu0 0.0
      %2586 = vmatmul.mubr.f32.gmra.mxu0 %v2317
      %v2587 = vpop.f32.mrf.mxu0
      %v2588 = vadd.f32 0.0, %v2587
      %v2589 = vpop.f32.mrf.mxu0
      %2590 = vmatprep.mubr.f32.mxu0 0.0
      %2591 = vmatmul.mubr.f32.gmra.mxu0 %v2320
      %v2592 = vpop.f32.mrf.mxu0
      %v2593 = vadd.f32 0.0, %v2592
      %v2594 = vpop.f32.mrf.mxu0
      %2595 = vmatprep.mubr.f32.mxu0 0.0
      %2596 = vmatmul.mubr.f32.gmra.mxu0 %v2323
      %v2597 = vpop.f32.mrf.mxu0
      %v2598 = vadd.f32 0.0, %v2597
      %v2599 = vpop.f32.mrf.mxu0
      %2600 = vmatprep.mubr.f32.mxu0 0.0
      %2601 = vmatmul.mubr.f32.gmra.mxu0 %v2326
      %v2602 = vpop.f32.mrf.mxu0
      %v2603 = vadd.f32 0.0, %v2602
      %v2604 = vpop.f32.mrf.mxu0
      %2605 = vmatprep.mubr.f32.mxu0 0.0
      %2606 = vmatmul.mubr.f32.gmra.mxu0 %v2329
      %v2607 = vpop.f32.mrf.mxu0
      %v2608 = vadd.f32 0.0, %v2607
      %v2609 = vpop.f32.mrf.mxu0
      %2610 = vmatprep.mubr.f32.mxu0 0.0
      %2611 = vmatmul.mubr.f32.gmra.mxu0 %v2332
      %v2612 = vpop.f32.mrf.mxu0
      %v2613 = vadd.f32 0.0, %v2612
      %v2614 = vpop.f32.mrf.mxu0
      %2615 = vmatprep.mubr.f32.mxu0 0.0
      %2616 = vmatmul.mubr.f32.gmra.mxu0 %v2335
      %v2617 = vpop.f32.mrf.mxu0
      %v2618 = vadd.f32 0.0, %v2617
      %v2619 = vpop.f32.mrf.mxu0
      %2620 = vmatprep.mubr.f32.mxu0 0.0
      %2621 = vmatmul.mubr.f32.gmra.mxu0 %v2338
      %v2622 = vpop.f32.mrf.mxu0
      %v2623 = vadd.f32 0.0, %v2622
      %v2624 = vpop.f32.mrf.mxu0
      %2625 = vmatprep.mubr.f32.mxu0 0.0
      %2626 = vmatmul.mubr.f32.gmra.mxu0 %v2341
      %v2627 = vpop.f32.mrf.mxu0
      %v2628 = vadd.f32 0.0, %v2627
      %v2629 = vpop.f32.mrf.mxu0
      %2630 = vmatprep.mubr.f32.mxu0 0.0
      %2631 = vmatmul.mubr.f32.gmra.mxu0 %v2344
      %v2632 = vpop.f32.mrf.mxu0
      %v2633 = vadd.f32 0.0, %v2632
      %v2634 = vpop.f32.mrf.mxu0
      %2635 = vmatprep.mubr.f32.mxu0 0.0
      %2636 = vmatmul.mubr.f32.gmra.mxu0 %v2347
      %v2637 = vpop.f32.mrf.mxu0
      %v2638 = vadd.f32 0.0, %v2637
      %v2639 = vpop.f32.mrf.mxu0
      %2640 = vmatprep.mubr.f32.mxu0 0.0
      %2641 = vmatmul.mubr.f32.gmra.mxu0 %v2350
      %v2642 = vpop.f32.mrf.mxu0
      %v2643 = vadd.f32 0.0, %v2642
      %v2644 = vpop.f32.mrf.mxu0
      %2645 = vmatprep.mubr.f32.mxu0 0.0
      %2646 = vmatmul.mubr.f32.gmra.mxu0 %v2353
      %v2647 = vpop.f32.mrf.mxu0
      %v2648 = vadd.f32 0.0, %v2647
      %v2649 = vpop.f32.mrf.mxu0
      %2650 = vmatprep.mubr.f32.mxu0 0.0
      %2651 = vmatmul.mubr.f32.gmra.mxu0 %v2356
      %v2652 = vpop.f32.mrf.mxu0
      %v2653 = vadd.f32 0.0, %v2652
      %v2654 = vpop.f32.mrf.mxu0
      %2655 = vmatprep.mubr.f32.mxu0 0.0
      %2656 = vmatmul.mubr.f32.gmra.mxu0 %v2359
      %v2657 = vpop.f32.mrf.mxu0
      %v2658 = vadd.f32 0.0, %v2657
      %v2659 = vpop.f32.mrf.mxu0
      %2660 = vmatprep.mubr.f32.mxu0 0.0
      %2661 = vmatmul.mubr.f32.gmra.mxu0 %v2362
      %v2662 = vpop.f32.mrf.mxu0
      %v2663 = vadd.f32 0.0, %v2662
      %v2664 = vpop.f32.mrf.mxu0
      %2665 = vmatprep.mubr.f32.mxu0 0.0
      %2666 = vmatmul.mubr.f32.gmra.mxu0 %v2365
      %v2667 = vpop.f32.mrf.mxu0
      %v2668 = vadd.f32 0.0, %v2667
      %v2669 = vpop.f32.mrf.mxu0
      %2670 = vmatprep.mubr.f32.mxu0 0.0
      %2671 = vmatmul.mubr.f32.gmra.mxu0 %v2368
      %v2672 = vpop.f32.mrf.mxu0
      %v2673 = vadd.f32 0.0, %v2672
      %v2674 = vpop.f32.mrf.mxu0
      %2675 = vmatprep.mubr.f32.mxu0 0.0
      %2676 = vmatmul.mubr.f32.gmra.mxu0 %v2371
      %v2677 = vpop.f32.mrf.mxu0
      %v2678 = vadd.f32 0.0, %v2677
      %v2679 = vpop.f32.mrf.mxu0
      %2680 = vdwg.mxu0
      %v2681 = vadd.f32 %v2131, %v2443
      %v2682 = vadd.f32 %v2132, %v2448
      %v2683 = vadd.f32 %v2133, %v2453
      %v2684 = vadd.f32 %v2134, %v2458
      %v2685 = vadd.f32 %v2135, %v2463
      %v2686 = vadd.f32 %v2136, %v2468
      %v2687 = vadd.f32 %v2137, %v2473
      %v2688 = vadd.f32 %v2138, %v2478
      %v2689 = vadd.f32 %v2139, %v2483
      %v2690 = vadd.f32 %v2140, %v2488
      %v2691 = vadd.f32 %v2141, %v2493
      %v2692 = vadd.f32 %v2142, %v2498
      %v2693 = vadd.f32 %v2143, %v2503
      %v2694 = vadd.f32 %v2144, %v2508
      %v2695 = vadd.f32 %v2145, %v2513
      %v2696 = vadd.f32 %v2146, %v2518
      %v2697 = vadd.f32 %v2147, %v2523
      %v2698 = vadd.f32 %v2148, %v2528
      %v2699 = vadd.f32 %v2149, %v2533
      %v2700 = vadd.f32 %v2150, %v2538
      %v2701 = vadd.f32 %v2151, %v2543
      %v2702 = vadd.f32 %v2152, %v2548
      %v2703 = vadd.f32 %v2153, %v2553
      %v2704 = vadd.f32 %v2154, %v2558
      %v2705 = vadd.f32 %v2155, %v2563
      %v2706 = vadd.f32 %v2156, %v2568
      %v2707 = vadd.f32 %v2157, %v2573
      %v2708 = vadd.f32 %v2158, %v2578
      %v2709 = vadd.f32 %v2159, %v2583
      %v2710 = vadd.f32 %v2160, %v2588
      %v2711 = vadd.f32 %v2161, %v2593
      %v2712 = vadd.f32 %v2162, %v2598
      %v2713 = vadd.f32 %v2163, %v2603
      %v2714 = vadd.f32 %v2164, %v2608
      %v2715 = vadd.f32 %v2165, %v2613
      %v2716 = vadd.f32 %v2166, %v2618
      %v2717 = vadd.f32 %v2167, %v2623
      %v2718 = vadd.f32 %v2168, %v2628
      %v2719 = vadd.f32 %v2169, %v2633
      %v2720 = vadd.f32 %v2170, %v2638
      %v2721 = vadd.f32 %v2171, %v2643
      %v2722 = vadd.f32 %v2172, %v2648
      %v2723 = vadd.f32 %v2173, %v2653
      %v2724 = vadd.f32 %v2174, %v2658
      %v2725 = vadd.f32 %v2175, %v2663
      %v2726 = vadd.f32 %v2176, %v2668
      %v2727 = vadd.f32 %v2177, %v2673
      %v2728 = vadd.f32 %v2178, %v2678
      %2729 = vst [vmem:[#allocation2] sm:$0xff] %v2681
      %2730 = vst [vmem:[#allocation2 + $0x8] sm:$0xff] %v2682
      %2731 = vst [vmem:[#allocation2 + $0x10] sm:$0xff] %v2683
      %2732 = vst [vmem:[#allocation2 + $0x18] sm:$0xff] %v2684
      %2733 = vst [vmem:[#allocation2 + $0x20] sm:$0xff] %v2685
      %2734 = vst [vmem:[#allocation2 + $0x28] sm:$0xff] %v2686
      %2735 = vst [vmem:[#allocation2 + $0x30] sm:$0xff] %v2687
      %2736 = vst [vmem:[#allocation2 + $0x38] sm:$0xff] %v2688
      %2737 = vst [vmem:[#allocation2 + $0x40] sm:$0xff] %v2689
      %2738 = vst [vmem:[#allocation2 + $0x48] sm:$0xff] %v2690
      %2739 = vst [vmem:[#allocation2 + $0x50] sm:$0xff] %v2691
      %2740 = vst [vmem:[#allocation2 + $0x58] sm:$0xff] %v2692
      %2741 = vst [vmem:[#allocation2 + $0x60] sm:$0xff] %v2693
      %2742 = vst [vmem:[#allocation2 + $0x68] sm:$0xff] %v2694
      %2743 = vst [vmem:[#allocation2 + $0x70] sm:$0xff] %v2695
      %2744 = vst [vmem:[#allocation2 + $0x78] sm:$0xff] %v2696
      %2745 = vst [vmem:[#allocation2 + $0x80] sm:$0xff] %v2697
      %2746 = vst [vmem:[#allocation2 + $0x88] sm:$0xff] %v2698
      %2747 = vst [vmem:[#allocation2 + $0x90] sm:$0xff] %v2699
      %2748 = vst [vmem:[#allocation2 + $0x98] sm:$0xff] %v2700
      %2749 = vst [vmem:[#allocation2 + $0xa0] sm:$0xff] %v2701
      %2750 = vst [vmem:[#allocation2 + $0xa8] sm:$0xff] %v2702
      %2751 = vst [vmem:[#allocation2 + $0xb0] sm:$0xff] %v2703
      %2752 = vst [vmem:[#allocation2 + $0xb8] sm:$0xff] %v2704
      %2753 = vst [vmem:[#allocation2 + $0xc0] sm:$0xff] %v2705
      %2754 = vst [vmem:[#allocation2 + $0xc8] sm:$0xff] %v2706
      %2755 = vst [vmem:[#allocation2 + $0xd0] sm:$0xff] %v2707
      %2756 = vst [vmem:[#allocation2 + $0xd8] sm:$0xff] %v2708
      %2757 = vst [vmem:[#allocation2 + $0xe0] sm:$0xff] %v2709
      %2758 = vst [vmem:[#allocation2 + $0xe8] sm:$0xff] %v2710
      %2759 = vst [vmem:[#allocation2 + $0xf0] sm:$0xff] %v2711
      %2760 = vst [vmem:[#allocation2 + $0xf8] sm:$0xff] %v2712
      %2761 = vst [vmem:[#allocation2 + $0x100] sm:$0xff] %v2713
      %2762 = vst [vmem:[#allocation2 + $0x108] sm:$0xff] %v2714
      %2763 = vst [vmem:[#allocation2 + $0x110] sm:$0xff] %v2715
      %2764 = vst [vmem:[#allocation2 + $0x118] sm:$0xff] %v2716
      %2765 = vst [vmem:[#allocation2 + $0x120] sm:$0xff] %v2717
      %2766 = vst [vmem:[#allocation2 + $0x128] sm:$0xff] %v2718
      %2767 = vst [vmem:[#allocation2 + $0x130] sm:$0xff] %v2719
      %2768 = vst [vmem:[#allocation2 + $0x138] sm:$0xff] %v2720
      %2769 = vst [vmem:[#allocation2 + $0x140] sm:$0xff] %v2721
      %2770 = vst [vmem:[#allocation2 + $0x148] sm:$0xff] %v2722
      %2771 = vst [vmem:[#allocation2 + $0x150] sm:$0xff] %v2723
      %2772 = vst [vmem:[#allocation2 + $0x158] sm:$0xff] %v2724
      %2773 = vst [vmem:[#allocation2 + $0x160] sm:$0xff] %v2725
      %2774 = vst [vmem:[#allocation2 + $0x168] sm:$0xff] %v2726
      %2775 = vst [vmem:[#allocation2 + $0x170] sm:$0xff] %v2727
      %2776 = vst [vmem:[#allocation2 + $0x178] sm:$0xff] %v2728
      %v2777 = vld [vmem:[#allocation2] sm:$0xff]
      %v2778 = vld [vmem:[#allocation2 + $0x8] sm:$0xff]
      %v2779 = vld [vmem:[#allocation2 + $0x10] sm:$0xff]
      %v2780 = vld [vmem:[#allocation2 + $0x18] sm:$0xff]
      %v2781 = vld [vmem:[#allocation2 + $0x20] sm:$0xff]
      %v2782 = vld [vmem:[#allocation2 + $0x28] sm:$0xff]
      %v2783 = vld [vmem:[#allocation2 + $0x30] sm:$0xff]
      %v2784 = vld [vmem:[#allocation2 + $0x38] sm:$0xff]
      %v2785 = vld [vmem:[#allocation2 + $0x40] sm:$0xff]
      %v2786 = vld [vmem:[#allocation2 + $0x48] sm:$0xff]
      %v2787 = vld [vmem:[#allocation2 + $0x50] sm:$0xff]
      %v2788 = vld [vmem:[#allocation2 + $0x58] sm:$0xff]
      %v2789 = vld [vmem:[#allocation2 + $0x60] sm:$0xff]
      %v2790 = vld [vmem:[#allocation2 + $0x68] sm:$0xff]
      %v2791 = vld [vmem:[#allocation2 + $0x70] sm:$0xff]
      %v2792 = vld [vmem:[#allocation2 + $0x78] sm:$0xff]
      %v2793 = vld [vmem:[#allocation2 + $0x80] sm:$0xff]
      %v2794 = vld [vmem:[#allocation2 + $0x88] sm:$0xff]
      %v2795 = vld [vmem:[#allocation2 + $0x90] sm:$0xff]
      %v2796 = vld [vmem:[#allocation2 + $0x98] sm:$0xff]
      %v2797 = vld [vmem:[#allocation2 + $0xa0] sm:$0xff]
      %v2798 = vld [vmem:[#allocation2 + $0xa8] sm:$0xff]
      %v2799 = vld [vmem:[#allocation2 + $0xb0] sm:$0xff]
      %v2800 = vld [vmem:[#allocation2 + $0xb8] sm:$0xff]
      %v2801 = vld [vmem:[#allocation2 + $0xc0] sm:$0xff]
      %v2802 = vld [vmem:[#allocation2 + $0xc8] sm:$0xff]
      %v2803 = vld [vmem:[#allocation2 + $0xd0] sm:$0xff]
      %v2804 = vld [vmem:[#allocation2 + $0xd8] sm:$0xff]
      %v2805 = vld [vmem:[#allocation2 + $0xe0] sm:$0xff]
      %v2806 = vld [vmem:[#allocation2 + $0xe8] sm:$0xff]
      %v2807 = vld [vmem:[#allocation2 + $0xf0] sm:$0xff]
      %v2808 = vld [vmem:[#allocation2 + $0xf8] sm:$0xff]
      %v2809 = vld [vmem:[#allocation2 + $0x100] sm:$0xff]
      %v2810 = vld [vmem:[#allocation2 + $0x108] sm:$0xff]
      %v2811 = vld [vmem:[#allocation2 + $0x110] sm:$0xff]
      %v2812 = vld [vmem:[#allocation2 + $0x118] sm:$0xff]
      %v2813 = vld [vmem:[#allocation2 + $0x120] sm:$0xff]
      %v2814 = vld [vmem:[#allocation2 + $0x128] sm:$0xff]
      %v2815 = vld [vmem:[#allocation2 + $0x130] sm:$0xff]
      %v2816 = vld [vmem:[#allocation2 + $0x138] sm:$0xff]
      %v2817 = vld [vmem:[#allocation2 + $0x140] sm:$0xff]
      %v2818 = vld [vmem:[#allocation2 + $0x148] sm:$0xff]
      %v2819 = vld [vmem:[#allocation2 + $0x150] sm:$0xff]
      %v2820 = vld [vmem:[#allocation2 + $0x158] sm:$0xff]
      %v2821 = vld [vmem:[#allocation2 + $0x160] sm:$0xff]
      %v2822 = vld [vmem:[#allocation2 + $0x168] sm:$0xff]
      %v2823 = vld [vmem:[#allocation2 + $0x170] sm:$0xff]
      %v2824 = vld [vmem:[#allocation2 + $0x178] sm:$0xff]
      %v2825 = vld [vmem:[%s138 + $0x19] sm:$0xff]
      %v2826 = vld [vmem:[%s138 + $0x21] sm:$0xff]
      %v2827 = vld [vmem:[%s138 + $0x29] sm:$0xff]
      %v2828 = vld [vmem:[%s138 + $0x31] sm:$0xff]
      %v2829 = vld [vmem:[%s138 + $0x39] sm:$0xff]
      %v2830 = vld [vmem:[%s138 + $0x41] sm:$0xff]
      %v2831 = vld [vmem:[%s138 + $0x49] sm:$0xff]
      %v2832 = vld [vmem:[%s138 + $0x51] sm:$0xff]
      %v2833 = vld [vmem:[%s138 + $0x59] sm:$0xff]
      %v2834 = vld [vmem:[%s138 + $0x61] sm:$0xff]
      %v2835 = vld [vmem:[%s138 + $0x69] sm:$0xff]
      %v2836 = vld [vmem:[%s138 + $0x71] sm:$0xff]
      %v2837 = vld [vmem:[%s138 + $0x79] sm:$0xff]
      %v2838 = vld [vmem:[%s138 + $0x81] sm:$0xff]
      %v2839 = vld [vmem:[%s138 + $0x89] sm:$0xff]
      %v2840 = vld [vmem:[%s138 + $0x91] sm:$0xff]
      %v2841 = vld [vmem:[%s138 + $0x99] sm:$0xff]
      %v2842 = vld [vmem:[%s138 + $0xa1] sm:$0xff]
      %v2843 = vld [vmem:[%s138 + $0xa9] sm:$0xff]
      %v2844 = vld [vmem:[%s138 + $0xb1] sm:$0xff]
      %v2845 = vld [vmem:[%s138 + $0xb9] sm:$0xff]
      %v2846 = vld [vmem:[%s138 + $0xc1] sm:$0xff]
      %v2847 = vld [vmem:[%s138 + $0xc9] sm:$0xff]
      %v2848 = vld [vmem:[%s138 + $0xd1] sm:$0xff]
      %v2849 = vld [vmem:[%s138 + $0xd9] sm:$0xff]
      %v2850 = vld [vmem:[%s138 + $0xe1] sm:$0xff]
      %v2851 = vld [vmem:[%s138 + $0xe9] sm:$0xff]
      %v2852 = vld [vmem:[%s138 + $0xf1] sm:$0xff]
      %v2853 = vld [vmem:[%s138 + $0xf9] sm:$0xff]
      %v2854 = vld [vmem:[%s138 + $0x101] sm:$0xff]
      %v2855 = vld [vmem:[%s138 + $0x109] sm:$0xff]
      %v2856 = vld [vmem:[%s138 + $0x111] sm:$0xff]
      %v2857 = vld [vmem:[%s138 + $0x119] sm:$0xff]
      %v2858 = vld [vmem:[%s138 + $0x121] sm:$0xff]
      %v2859 = vld [vmem:[%s138 + $0x129] sm:$0xff]
      %v2860 = vld [vmem:[%s138 + $0x131] sm:$0xff]
      %v2861 = vld [vmem:[%s138 + $0x139] sm:$0xff]
      %v2862 = vld [vmem:[%s138 + $0x141] sm:$0xff]
      %v2863 = vld [vmem:[%s138 + $0x149] sm:$0xff]
      %v2864 = vld [vmem:[%s138 + $0x151] sm:$0xff]
      %v2865 = vld [vmem:[%s138 + $0x159] sm:$0xff]
      %v2866 = vld [vmem:[%s138 + $0x161] sm:$0xff]
      %v2867 = vld [vmem:[%s138 + $0x169] sm:$0xff]
      %v2868 = vld [vmem:[%s138 + $0x171] sm:$0xff]
      %v2869 = vld [vmem:[%s138 + $0x179] sm:$0xff]
      %v2870 = vld [vmem:[%s138 + $0x181] sm:$0xff]
      %v2871 = vld [vmem:[%s138 + $0x189] sm:$0xff]
      %v2872 = vld [vmem:[%s138 + $0x191] sm:$0xff]
      %s2873 = scalar_lea.vmem %s1, 16
      %v2874 = vld [vmem:[%s2873] sm:$0xf]
      %v2876 = vsel %vm289, %v2825, 0
      %v2879 = vsel %vm289, %v2826, 0
      %v2882 = vsel %vm289, %v2827, 0
      %v2885 = vsel %vm289, %v2828, 0
      %v2888 = vsel %vm289, %v2829, 0
      %v2891 = vsel %vm289, %v2830, 0
      %v2894 = vsel %vm289, %v2831, 0
      %v2897 = vsel %vm289, %v2832, 0
      %v2900 = vsel %vm289, %v2833, 0
      %v2903 = vsel %vm289, %v2834, 0
      %v2906 = vsel %vm289, %v2835, 0
      %v2909 = vsel %vm289, %v2836, 0
      %v2912 = vsel %vm289, %v2837, 0
      %v2915 = vsel %vm289, %v2838, 0
      %v2918 = vsel %vm289, %v2839, 0
      %v2921 = vsel %vm289, %v2840, 0
      %v2924 = vsel %vm289, %v2841, 0
      %v2927 = vsel %vm289, %v2842, 0
      %v2930 = vsel %vm289, %v2843, 0
      %v2933 = vsel %vm289, %v2844, 0
      %v2936 = vsel %vm289, %v2845, 0
      %v2939 = vsel %vm289, %v2846, 0
      %v2942 = vsel %vm289, %v2847, 0
      %v2945 = vsel %vm289, %v2848, 0
      %v2948 = vsel %vm289, %v2849, 0
      %v2951 = vsel %vm289, %v2850, 0
      %v2954 = vsel %vm289, %v2851, 0
      %v2957 = vsel %vm289, %v2852, 0
      %v2960 = vsel %vm289, %v2853, 0
      %v2963 = vsel %vm289, %v2854, 0
      %v2966 = vsel %vm289, %v2855, 0
      %v2969 = vsel %vm289, %v2856, 0
      %v2972 = vsel %vm289, %v2857, 0
      %v2975 = vsel %vm289, %v2858, 0
      %v2978 = vsel %vm289, %v2859, 0
      %v2981 = vsel %vm289, %v2860, 0
      %v2984 = vsel %vm289, %v2861, 0
      %v2987 = vsel %vm289, %v2862, 0
      %v2990 = vsel %vm289, %v2863, 0
      %v2993 = vsel %vm289, %v2864, 0
      %v2996 = vsel %vm289, %v2865, 0
      %v2999 = vsel %vm289, %v2866, 0
      %v3002 = vsel %vm289, %v2867, 0
      %v3005 = vsel %vm289, %v2868, 0
      %v3008 = vsel %vm289, %v2869, 0
      %v3011 = vsel %vm289, %v2870, 0
      %v3014 = vsel %vm289, %v2871, 0
      %v3017 = vsel %vm289, %v2872, 0
      %v3020 = vsel %vm434, %v2874, 0
      %3022 = vmatprep.subr.mxu0 0.0
      %3023 = vmatpush1.msra.mxu0 0.0
      %3024 = vmatprep.subr.mxu0 0.0
      %3025 = vmatpush1.msra.mxu0 0.0
      %3026 = vmatprep.subr.mxu0 0.0
      %3027 = vmatpush1.msra.mxu0 0.0
      %3028 = vmatprep.subr.mxu0 0.0
      %3029 = vmatpush1.msra.mxu0 0.0
      %3030 = vmatprep.subr.mxu0 0.0
      %3031 = vmatpush1.msra.mxu0 0.0
      %3032 = vmatprep.subr.mxu0 0.0
      %3033 = vmatpush1.msra.mxu0 0.0
      %3034 = vmatprep.subr.mxu0 0.0
      %3035 = vmatpush1.msra.mxu0 0.0
      %3036 = vmatprep.subr.mxu0 0.0
      %3037 = vmatpush1.msra.mxu0 0.0
      %3038 = vmatprep.subr.mxu0 0.0
      %3039 = vmatpush1.msra.mxu0 0.0
      %3040 = vmatprep.subr.mxu0 0.0
      %3041 = vmatpush1.msra.mxu0 0.0
      %3042 = vmatprep.subr.mxu0 0.0
      %3043 = vmatpush1.msra.mxu0 0.0
      %3044 = vmatprep.subr.mxu0 0.0
      %3045 = vmatpush1.msra.mxu0 0.0
      %3046 = vmatprep.subr.mxu0 0.0
      %3047 = vmatpush1.msra.mxu0 0.0
      %3048 = vmatprep.subr.mxu0 0.0
      %3049 = vmatpush1.msra.mxu0 0.0
      %3050 = vmatprep.subr.mxu0 0.0
      %3051 = vmatpush1.msra.mxu0 0.0
      %3052 = vmatprep.subr.mxu0 0.0
      %3053 = vmatpush1.msra.mxu0 %v3020
      %3054 = vmatprep.subr.mxu0 0.0
      %3055 = vmatpush2.msra.mxu0 0.0
      %3056 = vmatprep.subr.mxu0 0.0
      %3057 = vmatpush2.msra.mxu0 0.0
      %3058 = vmatprep.subr.mxu0 0.0
      %3059 = vmatpush2.msra.mxu0 0.0
      %3060 = vmatprep.subr.mxu0 0.0
      %3061 = vmatpush2.msra.mxu0 0.0
      %3062 = vmatprep.subr.mxu0 0.0
      %3063 = vmatpush2.msra.mxu0 0.0
      %3064 = vmatprep.subr.mxu0 0.0
      %3065 = vmatpush2.msra.mxu0 0.0
      %3066 = vmatprep.subr.mxu0 0.0
      %3067 = vmatpush2.msra.mxu0 0.0
      %3068 = vmatprep.subr.mxu0 0.0
      %3069 = vmatpush2.msra.mxu0 0.0
      %3070 = vmatprep.subr.mxu0 0.0
      %3071 = vmatpush2.msra.mxu0 0.0
      %3072 = vmatprep.subr.mxu0 0.0
      %3073 = vmatpush2.msra.mxu0 0.0
      %3074 = vmatprep.subr.mxu0 0.0
      %3075 = vmatpush2.msra.mxu0 0.0
      %3076 = vmatprep.subr.mxu0 0.0
      %3077 = vmatpush2.msra.mxu0 0.0
      %3078 = vmatprep.subr.mxu0 0.0
      %3079 = vmatpush2.msra.mxu0 0.0
      %3080 = vmatprep.subr.mxu0 0.0
      %3081 = vmatpush2.msra.mxu0 0.0
      %3082 = vmatprep.subr.mxu0 0.0
      %3083 = vmatpush2.msra.mxu0 0.0
      %3084 = vmatprep.subr.mxu0 0.0
      %3085 = vmatpush2.msra.mxu0 0.0
      %3086 = vmatprep.mubr.f32.mxu0 0.0
      %3087 = vmatmul.mubr.f32.gmra.mxu0 %v2876
      %v3088 = vpop.f32.mrf.mxu0
      %v3089 = vadd.f32 0.0, %v3088
      %v3090 = vpop.f32.mrf.mxu0
      %3091 = vmatprep.mubr.f32.mxu0 0.0
      %3092 = vmatmul.mubr.f32.gmra.mxu0 %v2879
      %v3093 = vpop.f32.mrf.mxu0
      %v3094 = vadd.f32 0.0, %v3093
      %v3095 = vpop.f32.mrf.mxu0
      %3096 = vmatprep.mubr.f32.mxu0 0.0
      %3097 = vmatmul.mubr.f32.gmra.mxu0 %v2882
      %v3098 = vpop.f32.mrf.mxu0
      %v3099 = vadd.f32 0.0, %v3098
      %v3100 = vpop.f32.mrf.mxu0
      %3101 = vmatprep.mubr.f32.mxu0 0.0
      %3102 = vmatmul.mubr.f32.gmra.mxu0 %v2885
      %v3103 = vpop.f32.mrf.mxu0
      %v3104 = vadd.f32 0.0, %v3103
      %v3105 = vpop.f32.mrf.mxu0
      %3106 = vmatprep.mubr.f32.mxu0 0.0
      %3107 = vmatmul.mubr.f32.gmra.mxu0 %v2888
      %v3108 = vpop.f32.mrf.mxu0
      %v3109 = vadd.f32 0.0, %v3108
      %v3110 = vpop.f32.mrf.mxu0
      %3111 = vmatprep.mubr.f32.mxu0 0.0
      %3112 = vmatmul.mubr.f32.gmra.mxu0 %v2891
      %v3113 = vpop.f32.mrf.mxu0
      %v3114 = vadd.f32 0.0, %v3113
      %v3115 = vpop.f32.mrf.mxu0
      %3116 = vmatprep.mubr.f32.mxu0 0.0
      %3117 = vmatmul.mubr.f32.gmra.mxu0 %v2894
      %v3118 = vpop.f32.mrf.mxu0
      %v3119 = vadd.f32 0.0, %v3118
      %v3120 = vpop.f32.mrf.mxu0
      %3121 = vmatprep.mubr.f32.mxu0 0.0
      %3122 = vmatmul.mubr.f32.gmra.mxu0 %v2897
      %v3123 = vpop.f32.mrf.mxu0
      %v3124 = vadd.f32 0.0, %v3123
      %v3125 = vpop.f32.mrf.mxu0
      %3126 = vmatprep.mubr.f32.mxu0 0.0
      %3127 = vmatmul.mubr.f32.gmra.mxu0 %v2900
      %v3128 = vpop.f32.mrf.mxu0
      %v3129 = vadd.f32 0.0, %v3128
      %v3130 = vpop.f32.mrf.mxu0
      %3131 = vmatprep.mubr.f32.mxu0 0.0
      %3132 = vmatmul.mubr.f32.gmra.mxu0 %v2903
      %v3133 = vpop.f32.mrf.mxu0
      %v3134 = vadd.f32 0.0, %v3133
      %v3135 = vpop.f32.mrf.mxu0
      %3136 = vmatprep.mubr.f32.mxu0 0.0
      %3137 = vmatmul.mubr.f32.gmra.mxu0 %v2906
      %v3138 = vpop.f32.mrf.mxu0
      %v3139 = vadd.f32 0.0, %v3138
      %v3140 = vpop.f32.mrf.mxu0
      %3141 = vmatprep.mubr.f32.mxu0 0.0
      %3142 = vmatmul.mubr.f32.gmra.mxu0 %v2909
      %v3143 = vpop.f32.mrf.mxu0
      %v3144 = vadd.f32 0.0, %v3143
      %v3145 = vpop.f32.mrf.mxu0
      %3146 = vmatprep.mubr.f32.mxu0 0.0
      %3147 = vmatmul.mubr.f32.gmra.mxu0 %v2912
      %v3148 = vpop.f32.mrf.mxu0
      %v3149 = vadd.f32 0.0, %v3148
      %v3150 = vpop.f32.mrf.mxu0
      %3151 = vmatprep.mubr.f32.mxu0 0.0
      %3152 = vmatmul.mubr.f32.gmra.mxu0 %v2915
      %v3153 = vpop.f32.mrf.mxu0
      %v3154 = vadd.f32 0.0, %v3153
      %v3155 = vpop.f32.mrf.mxu0
      %3156 = vmatprep.mubr.f32.mxu0 0.0
      %3157 = vmatmul.mubr.f32.gmra.mxu0 %v2918
      %v3158 = vpop.f32.mrf.mxu0
      %v3159 = vadd.f32 0.0, %v3158
      %v3160 = vpop.f32.mrf.mxu0
      %3161 = vmatprep.mubr.f32.mxu0 0.0
      %3162 = vmatmul.mubr.f32.gmra.mxu0 %v2921
      %v3163 = vpop.f32.mrf.mxu0
      %v3164 = vadd.f32 0.0, %v3163
      %v3165 = vpop.f32.mrf.mxu0
      %3166 = vmatprep.mubr.f32.mxu0 0.0
      %3167 = vmatmul.mubr.f32.gmra.mxu0 %v2924
      %v3168 = vpop.f32.mrf.mxu0
      %v3169 = vadd.f32 0.0, %v3168
      %v3170 = vpop.f32.mrf.mxu0
      %3171 = vmatprep.mubr.f32.mxu0 0.0
      %3172 = vmatmul.mubr.f32.gmra.mxu0 %v2927
      %v3173 = vpop.f32.mrf.mxu0
      %v3174 = vadd.f32 0.0, %v3173
      %v3175 = vpop.f32.mrf.mxu0
      %3176 = vmatprep.mubr.f32.mxu0 0.0
      %3177 = vmatmul.mubr.f32.gmra.mxu0 %v2930
      %v3178 = vpop.f32.mrf.mxu0
      %v3179 = vadd.f32 0.0, %v3178
      %v3180 = vpop.f32.mrf.mxu0
      %3181 = vmatprep.mubr.f32.mxu0 0.0
      %3182 = vmatmul.mubr.f32.gmra.mxu0 %v2933
      %v3183 = vpop.f32.mrf.mxu0
      %v3184 = vadd.f32 0.0, %v3183
      %v3185 = vpop.f32.mrf.mxu0
      %3186 = vmatprep.mubr.f32.mxu0 0.0
      %3187 = vmatmul.mubr.f32.gmra.mxu0 %v2936
      %v3188 = vpop.f32.mrf.mxu0
      %v3189 = vadd.f32 0.0, %v3188
      %v3190 = vpop.f32.mrf.mxu0
      %3191 = vmatprep.mubr.f32.mxu0 0.0
      %3192 = vmatmul.mubr.f32.gmra.mxu0 %v2939
      %v3193 = vpop.f32.mrf.mxu0
      %v3194 = vadd.f32 0.0, %v3193
      %v3195 = vpop.f32.mrf.mxu0
      %3196 = vmatprep.mubr.f32.mxu0 0.0
      %3197 = vmatmul.mubr.f32.gmra.mxu0 %v2942
      %v3198 = vpop.f32.mrf.mxu0
      %v3199 = vadd.f32 0.0, %v3198
      %v3200 = vpop.f32.mrf.mxu0
      %3201 = vmatprep.mubr.f32.mxu0 0.0
      %3202 = vmatmul.mubr.f32.gmra.mxu0 %v2945
      %v3203 = vpop.f32.mrf.mxu0
      %v3204 = vadd.f32 0.0, %v3203
      %v3205 = vpop.f32.mrf.mxu0
      %3206 = vmatprep.mubr.f32.mxu0 0.0
      %3207 = vmatmul.mubr.f32.gmra.mxu0 %v2948
      %v3208 = vpop.f32.mrf.mxu0
      %v3209 = vadd.f32 0.0, %v3208
      %v3210 = vpop.f32.mrf.mxu0
      %3211 = vmatprep.mubr.f32.mxu0 0.0
      %3212 = vmatmul.mubr.f32.gmra.mxu0 %v2951
      %v3213 = vpop.f32.mrf.mxu0
      %v3214 = vadd.f32 0.0, %v3213
      %v3215 = vpop.f32.mrf.mxu0
      %3216 = vmatprep.mubr.f32.mxu0 0.0
      %3217 = vmatmul.mubr.f32.gmra.mxu0 %v2954
      %v3218 = vpop.f32.mrf.mxu0
      %v3219 = vadd.f32 0.0, %v3218
      %v3220 = vpop.f32.mrf.mxu0
      %3221 = vmatprep.mubr.f32.mxu0 0.0
      %3222 = vmatmul.mubr.f32.gmra.mxu0 %v2957
      %v3223 = vpop.f32.mrf.mxu0
      %v3224 = vadd.f32 0.0, %v3223
      %v3225 = vpop.f32.mrf.mxu0
      %3226 = vmatprep.mubr.f32.mxu0 0.0
      %3227 = vmatmul.mubr.f32.gmra.mxu0 %v2960
      %v3228 = vpop.f32.mrf.mxu0
      %v3229 = vadd.f32 0.0, %v3228
      %v3230 = vpop.f32.mrf.mxu0
      %3231 = vmatprep.mubr.f32.mxu0 0.0
      %3232 = vmatmul.mubr.f32.gmra.mxu0 %v2963
      %v3233 = vpop.f32.mrf.mxu0
      %v3234 = vadd.f32 0.0, %v3233
      %v3235 = vpop.f32.mrf.mxu0
      %3236 = vmatprep.mubr.f32.mxu0 0.0
      %3237 = vmatmul.mubr.f32.gmra.mxu0 %v2966
      %v3238 = vpop.f32.mrf.mxu0
      %v3239 = vadd.f32 0.0, %v3238
      %v3240 = vpop.f32.mrf.mxu0
      %3241 = vmatprep.mubr.f32.mxu0 0.0
      %3242 = vmatmul.mubr.f32.gmra.mxu0 %v2969
      %v3243 = vpop.f32.mrf.mxu0
      %v3244 = vadd.f32 0.0, %v3243
      %v3245 = vpop.f32.mrf.mxu0
      %3246 = vmatprep.mubr.f32.mxu0 0.0
      %3247 = vmatmul.mubr.f32.gmra.mxu0 %v2972
      %v3248 = vpop.f32.mrf.mxu0
      %v3249 = vadd.f32 0.0, %v3248
      %v3250 = vpop.f32.mrf.mxu0
      %3251 = vmatprep.mubr.f32.mxu0 0.0
      %3252 = vmatmul.mubr.f32.gmra.mxu0 %v2975
      %v3253 = vpop.f32.mrf.mxu0
      %v3254 = vadd.f32 0.0, %v3253
      %v3255 = vpop.f32.mrf.mxu0
      %3256 = vmatprep.mubr.f32.mxu0 0.0
      %3257 = vmatmul.mubr.f32.gmra.mxu0 %v2978
      %v3258 = vpop.f32.mrf.mxu0
      %v3259 = vadd.f32 0.0, %v3258
      %v3260 = vpop.f32.mrf.mxu0
      %3261 = vmatprep.mubr.f32.mxu0 0.0
      %3262 = vmatmul.mubr.f32.gmra.mxu0 %v2981
      %v3263 = vpop.f32.mrf.mxu0
      %v3264 = vadd.f32 0.0, %v3263
      %v3265 = vpop.f32.mrf.mxu0
      %3266 = vmatprep.mubr.f32.mxu0 0.0
      %3267 = vmatmul.mubr.f32.gmra.mxu0 %v2984
      %v3268 = vpop.f32.mrf.mxu0
      %v3269 = vadd.f32 0.0, %v3268
      %v3270 = vpop.f32.mrf.mxu0
      %3271 = vmatprep.mubr.f32.mxu0 0.0
      %3272 = vmatmul.mubr.f32.gmra.mxu0 %v2987
      %v3273 = vpop.f32.mrf.mxu0
      %v3274 = vadd.f32 0.0, %v3273
      %v3275 = vpop.f32.mrf.mxu0
      %3276 = vmatprep.mubr.f32.mxu0 0.0
      %3277 = vmatmul.mubr.f32.gmra.mxu0 %v2990
      %v3278 = vpop.f32.mrf.mxu0
      %v3279 = vadd.f32 0.0, %v3278
      %v3280 = vpop.f32.mrf.mxu0
      %3281 = vmatprep.mubr.f32.mxu0 0.0
      %3282 = vmatmul.mubr.f32.gmra.mxu0 %v2993
      %v3283 = vpop.f32.mrf.mxu0
      %v3284 = vadd.f32 0.0, %v3283
      %v3285 = vpop.f32.mrf.mxu0
      %3286 = vmatprep.mubr.f32.mxu0 0.0
      %3287 = vmatmul.mubr.f32.gmra.mxu0 %v2996
      %v3288 = vpop.f32.mrf.mxu0
      %v3289 = vadd.f32 0.0, %v3288
      %v3290 = vpop.f32.mrf.mxu0
      %3291 = vmatprep.mubr.f32.mxu0 0.0
      %3292 = vmatmul.mubr.f32.gmra.mxu0 %v2999
      %v3293 = vpop.f32.mrf.mxu0
      %v3294 = vadd.f32 0.0, %v3293
      %v3295 = vpop.f32.mrf.mxu0
      %3296 = vmatprep.mubr.f32.mxu0 0.0
      %3297 = vmatmul.mubr.f32.gmra.mxu0 %v3002
      %v3298 = vpop.f32.mrf.mxu0
      %v3299 = vadd.f32 0.0, %v3298
      %v3300 = vpop.f32.mrf.mxu0
      %3301 = vmatprep.mubr.f32.mxu0 0.0
      %3302 = vmatmul.mubr.f32.gmra.mxu0 %v3005
      %v3303 = vpop.f32.mrf.mxu0
      %v3304 = vadd.f32 0.0, %v3303
      %v3305 = vpop.f32.mrf.mxu0
      %3306 = vmatprep.mubr.f32.mxu0 0.0
      %3307 = vmatmul.mubr.f32.gmra.mxu0 %v3008
      %v3308 = vpop.f32.mrf.mxu0
      %v3309 = vadd.f32 0.0, %v3308
      %v3310 = vpop.f32.mrf.mxu0
      %3311 = vmatprep.mubr.f32.mxu0 0.0
      %3312 = vmatmul.mubr.f32.gmra.mxu0 %v3011
      %v3313 = vpop.f32.mrf.mxu0
      %v3314 = vadd.f32 0.0, %v3313
      %v3315 = vpop.f32.mrf.mxu0
      %3316 = vmatprep.mubr.f32.mxu0 0.0
      %3317 = vmatmul.mubr.f32.gmra.mxu0 %v3014
      %v3318 = vpop.f32.mrf.mxu0
      %v3319 = vadd.f32 0.0, %v3318
      %v3320 = vpop.f32.mrf.mxu0
      %3321 = vmatprep.mubr.f32.mxu0 0.0
      %3322 = vmatmul.mubr.f32.gmra.mxu0 %v3017
      %v3323 = vpop.f32.mrf.mxu0
      %v3324 = vadd.f32 0.0, %v3323
      %v3325 = vpop.f32.mrf.mxu0
      %3326 = vdwg.mxu0
      %v3327 = vadd.f32 %v2777, %v3089
      %v3328 = vadd.f32 %v2778, %v3094
      %v3329 = vadd.f32 %v2779, %v3099
      %v3330 = vadd.f32 %v2780, %v3104
      %v3331 = vadd.f32 %v2781, %v3109
      %v3332 = vadd.f32 %v2782, %v3114
      %v3333 = vadd.f32 %v2783, %v3119
      %v3334 = vadd.f32 %v2784, %v3124
      %v3335 = vadd.f32 %v2785, %v3129
      %v3336 = vadd.f32 %v2786, %v3134
      %v3337 = vadd.f32 %v2787, %v3139
      %v3338 = vadd.f32 %v2788, %v3144
      %v3339 = vadd.f32 %v2789, %v3149
      %v3340 = vadd.f32 %v2790, %v3154
      %v3341 = vadd.f32 %v2791, %v3159
      %v3342 = vadd.f32 %v2792, %v3164
      %v3343 = vadd.f32 %v2793, %v3169
      %v3344 = vadd.f32 %v2794, %v3174
      %v3345 = vadd.f32 %v2795, %v3179
      %v3346 = vadd.f32 %v2796, %v3184
      %v3347 = vadd.f32 %v2797, %v3189
      %v3348 = vadd.f32 %v2798, %v3194
      %v3349 = vadd.f32 %v2799, %v3199
      %v3350 = vadd.f32 %v2800, %v3204
      %v3351 = vadd.f32 %v2801, %v3209
      %v3352 = vadd.f32 %v2802, %v3214
      %v3353 = vadd.f32 %v2803, %v3219
      %v3354 = vadd.f32 %v2804, %v3224
      %v3355 = vadd.f32 %v2805, %v3229
      %v3356 = vadd.f32 %v2806, %v3234
      %v3357 = vadd.f32 %v2807, %v3239
      %v3358 = vadd.f32 %v2808, %v3244
      %v3359 = vadd.f32 %v2809, %v3249
      %v3360 = vadd.f32 %v2810, %v3254
      %v3361 = vadd.f32 %v2811, %v3259
      %v3362 = vadd.f32 %v2812, %v3264
      %v3363 = vadd.f32 %v2813, %v3269
      %v3364 = vadd.f32 %v2814, %v3274
      %v3365 = vadd.f32 %v2815, %v3279
      %v3366 = vadd.f32 %v2816, %v3284
      %v3367 = vadd.f32 %v2817, %v3289
      %v3368 = vadd.f32 %v2818, %v3294
      %v3369 = vadd.f32 %v2819, %v3299
      %v3370 = vadd.f32 %v2820, %v3304
      %v3371 = vadd.f32 %v2821, %v3309
      %v3372 = vadd.f32 %v2822, %v3314
      %v3373 = vadd.f32 %v2823, %v3319
      %v3374 = vadd.f32 %v2824, %v3324
      %3375 = vst [vmem:[#allocation2] sm:$0xff] %v3327
      %3376 = vst [vmem:[#allocation2 + $0x8] sm:$0xff] %v3328
      %3377 = vst [vmem:[#allocation2 + $0x10] sm:$0xff] %v3329
      %3378 = vst [vmem:[#allocation2 + $0x18] sm:$0xff] %v3330
      %3379 = vst [vmem:[#allocation2 + $0x20] sm:$0xff] %v3331
      %3380 = vst [vmem:[#allocation2 + $0x28] sm:$0xff] %v3332
      %3381 = vst [vmem:[#allocation2 + $0x30] sm:$0xff] %v3333
      %3382 = vst [vmem:[#allocation2 + $0x38] sm:$0xff] %v3334
      %3383 = vst [vmem:[#allocation2 + $0x40] sm:$0xff] %v3335
      %3384 = vst [vmem:[#allocation2 + $0x48] sm:$0xff] %v3336
      %3385 = vst [vmem:[#allocation2 + $0x50] sm:$0xff] %v3337
      %3386 = vst [vmem:[#allocation2 + $0x58] sm:$0xff] %v3338
      %3387 = vst [vmem:[#allocation2 + $0x60] sm:$0xff] %v3339
      %3388 = vst [vmem:[#allocation2 + $0x68] sm:$0xff] %v3340
      %3389 = vst [vmem:[#allocation2 + $0x70] sm:$0xff] %v3341
      %3390 = vst [vmem:[#allocation2 + $0x78] sm:$0xff] %v3342
      %3391 = vst [vmem:[#allocation2 + $0x80] sm:$0xff] %v3343
      %3392 = vst [vmem:[#allocation2 + $0x88] sm:$0xff] %v3344
      %3393 = vst [vmem:[#allocation2 + $0x90] sm:$0xff] %v3345
      %3394 = vst [vmem:[#allocation2 + $0x98] sm:$0xff] %v3346
      %3395 = vst [vmem:[#allocation2 + $0xa0] sm:$0xff] %v3347
      %3396 = vst [vmem:[#allocation2 + $0xa8] sm:$0xff] %v3348
      %3397 = vst [vmem:[#allocation2 + $0xb0] sm:$0xff] %v3349
      %3398 = vst [vmem:[#allocation2 + $0xb8] sm:$0xff] %v3350
      %3399 = vst [vmem:[#allocation2 + $0xc0] sm:$0xff] %v3351
      %3400 = vst [vmem:[#allocation2 + $0xc8] sm:$0xff] %v3352
      %3401 = vst [vmem:[#allocation2 + $0xd0] sm:$0xff] %v3353
      %3402 = vst [vmem:[#allocation2 + $0xd8] sm:$0xff] %v3354
      %3403 = vst [vmem:[#allocation2 + $0xe0] sm:$0xff] %v3355
      %3404 = vst [vmem:[#allocation2 + $0xe8] sm:$0xff] %v3356
      %3405 = vst [vmem:[#allocation2 + $0xf0] sm:$0xff] %v3357
      %3406 = vst [vmem:[#allocation2 + $0xf8] sm:$0xff] %v3358
      %3407 = vst [vmem:[#allocation2 + $0x100] sm:$0xff] %v3359
      %3408 = vst [vmem:[#allocation2 + $0x108] sm:$0xff] %v3360
      %3409 = vst [vmem:[#allocation2 + $0x110] sm:$0xff] %v3361
      %3410 = vst [vmem:[#allocation2 + $0x118] sm:$0xff] %v3362
      %3411 = vst [vmem:[#allocation2 + $0x120] sm:$0xff] %v3363
      %3412 = vst [vmem:[#allocation2 + $0x128] sm:$0xff] %v3364
      %3413 = vst [vmem:[#allocation2 + $0x130] sm:$0xff] %v3365
      %3414 = vst [vmem:[#allocation2 + $0x138] sm:$0xff] %v3366
      %3415 = vst [vmem:[#allocation2 + $0x140] sm:$0xff] %v3367
      %3416 = vst [vmem:[#allocation2 + $0x148] sm:$0xff] %v3368
      %3417 = vst [vmem:[#allocation2 + $0x150] sm:$0xff] %v3369
      %3418 = vst [vmem:[#allocation2 + $0x158] sm:$0xff] %v3370
      %3419 = vst [vmem:[#allocation2 + $0x160] sm:$0xff] %v3371
      %3420 = vst [vmem:[#allocation2 + $0x168] sm:$0xff] %v3372
      %3421 = vst [vmem:[#allocation2 + $0x170] sm:$0xff] %v3373
      %3422 = vst [vmem:[#allocation2 + $0x178] sm:$0xff] %v3374
      %v3423 = vld [vmem:[#allocation2] sm:$0xff]
      %v3424 = vld [vmem:[#allocation2 + $0x8] sm:$0xff]
      %v3425 = vld [vmem:[#allocation2 + $0x10] sm:$0xff]
      %v3426 = vld [vmem:[#allocation2 + $0x18] sm:$0xff]
      %v3427 = vld [vmem:[#allocation2 + $0x20] sm:$0xff]
      %v3428 = vld [vmem:[#allocation2 + $0x28] sm:$0xff]
      %v3429 = vld [vmem:[#allocation2 + $0x30] sm:$0xff]
      %v3430 = vld [vmem:[#allocation2 + $0x38] sm:$0xff]
      %v3431 = vld [vmem:[#allocation2 + $0x40] sm:$0xff]
      %v3432 = vld [vmem:[#allocation2 + $0x48] sm:$0xff]
      %v3433 = vld [vmem:[#allocation2 + $0x50] sm:$0xff]
      %v3434 = vld [vmem:[#allocation2 + $0x58] sm:$0xff]
      %v3435 = vld [vmem:[#allocation2 + $0x60] sm:$0xff]
      %v3436 = vld [vmem:[#allocation2 + $0x68] sm:$0xff]
      %v3437 = vld [vmem:[#allocation2 + $0x70] sm:$0xff]
      %v3438 = vld [vmem:[#allocation2 + $0x78] sm:$0xff]
      %v3439 = vld [vmem:[#allocation2 + $0x80] sm:$0xff]
      %v3440 = vld [vmem:[#allocation2 + $0x88] sm:$0xff]
      %v3441 = vld [vmem:[#allocation2 + $0x90] sm:$0xff]
      %v3442 = vld [vmem:[#allocation2 + $0x98] sm:$0xff]
      %v3443 = vld [vmem:[#allocation2 + $0xa0] sm:$0xff]
      %v3444 = vld [vmem:[#allocation2 + $0xa8] sm:$0xff]
      %v3445 = vld [vmem:[#allocation2 + $0xb0] sm:$0xff]
      %v3446 = vld [vmem:[#allocation2 + $0xb8] sm:$0xff]
      %v3447 = vld [vmem:[#allocation2 + $0xc0] sm:$0xff]
      %v3448 = vld [vmem:[#allocation2 + $0xc8] sm:$0xff]
      %v3449 = vld [vmem:[#allocation2 + $0xd0] sm:$0xff]
      %v3450 = vld [vmem:[#allocation2 + $0xd8] sm:$0xff]
      %v3451 = vld [vmem:[#allocation2 + $0xe0] sm:$0xff]
      %v3452 = vld [vmem:[#allocation2 + $0xe8] sm:$0xff]
      %v3453 = vld [vmem:[#allocation2 + $0xf0] sm:$0xff]
      %v3454 = vld [vmem:[#allocation2 + $0xf8] sm:$0xff]
      %v3455 = vld [vmem:[#allocation2 + $0x100] sm:$0xff]
      %v3456 = vld [vmem:[#allocation2 + $0x108] sm:$0xff]
      %v3457 = vld [vmem:[#allocation2 + $0x110] sm:$0xff]
      %v3458 = vld [vmem:[#allocation2 + $0x118] sm:$0xff]
      %v3459 = vld [vmem:[#allocation2 + $0x120] sm:$0xff]
      %v3460 = vld [vmem:[#allocation2 + $0x128] sm:$0xff]
      %v3461 = vld [vmem:[#allocation2 + $0x130] sm:$0xff]
      %v3462 = vld [vmem:[#allocation2 + $0x138] sm:$0xff]
      %v3463 = vld [vmem:[#allocation2 + $0x140] sm:$0xff]
      %v3464 = vld [vmem:[#allocation2 + $0x148] sm:$0xff]
      %v3465 = vld [vmem:[#allocation2 + $0x150] sm:$0xff]
      %v3466 = vld [vmem:[#allocation2 + $0x158] sm:$0xff]
      %v3467 = vld [vmem:[#allocation2 + $0x160] sm:$0xff]
      %v3468 = vld [vmem:[#allocation2 + $0x168] sm:$0xff]
      %v3469 = vld [vmem:[#allocation2 + $0x170] sm:$0xff]
      %v3470 = vld [vmem:[#allocation2 + $0x178] sm:$0xff]
      %v3471 = vld [vmem:[%s138 + $0x1a] sm:$0xff]
      %v3472 = vld [vmem:[%s138 + $0x22] sm:$0xff]
      %v3473 = vld [vmem:[%s138 + $0x2a] sm:$0xff]
      %v3474 = vld [vmem:[%s138 + $0x32] sm:$0xff]
      %v3475 = vld [vmem:[%s138 + $0x3a] sm:$0xff]
      %v3476 = vld [vmem:[%s138 + $0x42] sm:$0xff]
      %v3477 = vld [vmem:[%s138 + $0x4a] sm:$0xff]
      %v3478 = vld [vmem:[%s138 + $0x52] sm:$0xff]
      %v3479 = vld [vmem:[%s138 + $0x5a] sm:$0xff]
      %v3480 = vld [vmem:[%s138 + $0x62] sm:$0xff]
      %v3481 = vld [vmem:[%s138 + $0x6a] sm:$0xff]
      %v3482 = vld [vmem:[%s138 + $0x72] sm:$0xff]
      %v3483 = vld [vmem:[%s138 + $0x7a] sm:$0xff]
      %v3484 = vld [vmem:[%s138 + $0x82] sm:$0xff]
      %v3485 = vld [vmem:[%s138 + $0x8a] sm:$0xff]
      %v3486 = vld [vmem:[%s138 + $0x92] sm:$0xff]
      %v3487 = vld [vmem:[%s138 + $0x9a] sm:$0xff]
      %v3488 = vld [vmem:[%s138 + $0xa2] sm:$0xff]
      %v3489 = vld [vmem:[%s138 + $0xaa] sm:$0xff]
      %v3490 = vld [vmem:[%s138 + $0xb2] sm:$0xff]
      %v3491 = vld [vmem:[%s138 + $0xba] sm:$0xff]
      %v3492 = vld [vmem:[%s138 + $0xc2] sm:$0xff]
      %v3493 = vld [vmem:[%s138 + $0xca] sm:$0xff]
      %v3494 = vld [vmem:[%s138 + $0xd2] sm:$0xff]
      %v3495 = vld [vmem:[%s138 + $0xda] sm:$0xff]
      %v3496 = vld [vmem:[%s138 + $0xe2] sm:$0xff]
      %v3497 = vld [vmem:[%s138 + $0xea] sm:$0xff]
      %v3498 = vld [vmem:[%s138 + $0xf2] sm:$0xff]
      %v3499 = vld [vmem:[%s138 + $0xfa] sm:$0xff]
      %v3500 = vld [vmem:[%s138 + $0x102] sm:$0xff]
      %v3501 = vld [vmem:[%s138 + $0x10a] sm:$0xff]
      %v3502 = vld [vmem:[%s138 + $0x112] sm:$0xff]
      %v3503 = vld [vmem:[%s138 + $0x11a] sm:$0xff]
      %v3504 = vld [vmem:[%s138 + $0x122] sm:$0xff]
      %v3505 = vld [vmem:[%s138 + $0x12a] sm:$0xff]
      %v3506 = vld [vmem:[%s138 + $0x132] sm:$0xff]
      %v3507 = vld [vmem:[%s138 + $0x13a] sm:$0xff]
      %v3508 = vld [vmem:[%s138 + $0x142] sm:$0xff]
      %v3509 = vld [vmem:[%s138 + $0x14a] sm:$0xff]
      %v3510 = vld [vmem:[%s138 + $0x152] sm:$0xff]
      %v3511 = vld [vmem:[%s138 + $0x15a] sm:$0xff]
      %v3512 = vld [vmem:[%s138 + $0x162] sm:$0xff]
      %v3513 = vld [vmem:[%s138 + $0x16a] sm:$0xff]
      %v3514 = vld [vmem:[%s138 + $0x172] sm:$0xff]
      %v3515 = vld [vmem:[%s138 + $0x17a] sm:$0xff]
      %v3516 = vld [vmem:[%s138 + $0x182] sm:$0xff]
      %v3517 = vld [vmem:[%s138 + $0x18a] sm:$0xff]
      %v3518 = vld [vmem:[%s138 + $0x192] sm:$0xff]
      %s3519 = scalar_lea.vmem %s1, 20
      %v3520 = vld [vmem:[%s3519] sm:$0xf]
      %v3522 = vsel %vm289, %v3471, 0
      %v3525 = vsel %vm289, %v3472, 0
      %v3528 = vsel %vm289, %v3473, 0
      %v3531 = vsel %vm289, %v3474, 0
      %v3534 = vsel %vm289, %v3475, 0
      %v3537 = vsel %vm289, %v3476, 0
      %v3540 = vsel %vm289, %v3477, 0
      %v3543 = vsel %vm289, %v3478, 0
      %v3546 = vsel %vm289, %v3479, 0
      %v3549 = vsel %vm289, %v3480, 0
      %v3552 = vsel %vm289, %v3481, 0
      %v3555 = vsel %vm289, %v3482, 0
      %v3558 = vsel %vm289, %v3483, 0
      %v3561 = vsel %vm289, %v3484, 0
      %v3564 = vsel %vm289, %v3485, 0
      %v3567 = vsel %vm289, %v3486, 0
      %v3570 = vsel %vm289, %v3487, 0
      %v3573 = vsel %vm289, %v3488, 0
      %v3576 = vsel %vm289, %v3489, 0
      %v3579 = vsel %vm289, %v3490, 0
      %v3582 = vsel %vm289, %v3491, 0
      %v3585 = vsel %vm289, %v3492, 0
      %v3588 = vsel %vm289, %v3493, 0
      %v3591 = vsel %vm289, %v3494, 0
      %v3594 = vsel %vm289, %v3495, 0
      %v3597 = vsel %vm289, %v3496, 0
      %v3600 = vsel %vm289, %v3497, 0
      %v3603 = vsel %vm289, %v3498, 0
      %v3606 = vsel %vm289, %v3499, 0
      %v3609 = vsel %vm289, %v3500, 0
      %v3612 = vsel %vm289, %v3501, 0
      %v3615 = vsel %vm289, %v3502, 0
      %v3618 = vsel %vm289, %v3503, 0
      %v3621 = vsel %vm289, %v3504, 0
      %v3624 = vsel %vm289, %v3505, 0
      %v3627 = vsel %vm289, %v3506, 0
      %v3630 = vsel %vm289, %v3507, 0
      %v3633 = vsel %vm289, %v3508, 0
      %v3636 = vsel %vm289, %v3509, 0
      %v3639 = vsel %vm289, %v3510, 0
      %v3642 = vsel %vm289, %v3511, 0
      %v3645 = vsel %vm289, %v3512, 0
      %v3648 = vsel %vm289, %v3513, 0
      %v3651 = vsel %vm289, %v3514, 0
      %v3654 = vsel %vm289, %v3515, 0
      %v3657 = vsel %vm289, %v3516, 0
      %v3660 = vsel %vm289, %v3517, 0
      %v3663 = vsel %vm289, %v3518, 0
      %v3666 = vsel %vm434, %v3520, 0
      %3668 = vmatprep.subr.mxu0 0.0
      %3669 = vmatpush1.msra.mxu0 0.0
      %3670 = vmatprep.subr.mxu0 0.0
      %3671 = vmatpush1.msra.mxu0 0.0
      %3672 = vmatprep.subr.mxu0 0.0
      %3673 = vmatpush1.msra.mxu0 0.0
      %3674 = vmatprep.subr.mxu0 0.0
      %3675 = vmatpush1.msra.mxu0 0.0
      %3676 = vmatprep.subr.mxu0 0.0
      %3677 = vmatpush1.msra.mxu0 0.0
      %3678 = vmatprep.subr.mxu0 0.0
      %3679 = vmatpush1.msra.mxu0 0.0
      %3680 = vmatprep.subr.mxu0 0.0
      %3681 = vmatpush1.msra.mxu0 0.0
      %3682 = vmatprep.subr.mxu0 0.0
      %3683 = vmatpush1.msra.mxu0 0.0
      %3684 = vmatprep.subr.mxu0 0.0
      %3685 = vmatpush1.msra.mxu0 0.0
      %3686 = vmatprep.subr.mxu0 0.0
      %3687 = vmatpush1.msra.mxu0 0.0
      %3688 = vmatprep.subr.mxu0 0.0
      %3689 = vmatpush1.msra.mxu0 0.0
      %3690 = vmatprep.subr.mxu0 0.0
      %3691 = vmatpush1.msra.mxu0 0.0
      %3692 = vmatprep.subr.mxu0 0.0
      %3693 = vmatpush1.msra.mxu0 0.0
      %3694 = vmatprep.subr.mxu0 0.0
      %3695 = vmatpush1.msra.mxu0 0.0
      %3696 = vmatprep.subr.mxu0 0.0
      %3697 = vmatpush1.msra.mxu0 0.0
      %3698 = vmatprep.subr.mxu0 0.0
      %3699 = vmatpush1.msra.mxu0 %v3666
      %3700 = vmatprep.subr.mxu0 0.0
      %3701 = vmatpush2.msra.mxu0 0.0
      %3702 = vmatprep.subr.mxu0 0.0
      %3703 = vmatpush2.msra.mxu0 0.0
      %3704 = vmatprep.subr.mxu0 0.0
      %3705 = vmatpush2.msra.mxu0 0.0
      %3706 = vmatprep.subr.mxu0 0.0
      %3707 = vmatpush2.msra.mxu0 0.0
      %3708 = vmatprep.subr.mxu0 0.0
      %3709 = vmatpush2.msra.mxu0 0.0
      %3710 = vmatprep.subr.mxu0 0.0
      %3711 = vmatpush2.msra.mxu0 0.0
      %3712 = vmatprep.subr.mxu0 0.0
      %3713 = vmatpush2.msra.mxu0 0.0
      %3714 = vmatprep.subr.mxu0 0.0
      %3715 = vmatpush2.msra.mxu0 0.0
      %3716 = vmatprep.subr.mxu0 0.0
      %3717 = vmatpush2.msra.mxu0 0.0
      %3718 = vmatprep.subr.mxu0 0.0
      %3719 = vmatpush2.msra.mxu0 0.0
      %3720 = vmatprep.subr.mxu0 0.0
      %3721 = vmatpush2.msra.mxu0 0.0
      %3722 = vmatprep.subr.mxu0 0.0
      %3723 = vmatpush2.msra.mxu0 0.0
      %3724 = vmatprep.subr.mxu0 0.0
      %3725 = vmatpush2.msra.mxu0 0.0
      %3726 = vmatprep.subr.mxu0 0.0
      %3727 = vmatpush2.msra.mxu0 0.0
      %3728 = vmatprep.subr.mxu0 0.0
      %3729 = vmatpush2.msra.mxu0 0.0
      %3730 = vmatprep.subr.mxu0 0.0
      %3731 = vmatpush2.msra.mxu0 0.0
      %3732 = vmatprep.mubr.f32.mxu0 0.0
      %3733 = vmatmul.mubr.f32.gmra.mxu0 %v3522
      %v3734 = vpop.f32.mrf.mxu0
      %v3735 = vadd.f32 0.0, %v3734
      %v3736 = vpop.f32.mrf.mxu0
      %3737 = vmatprep.mubr.f32.mxu0 0.0
      %3738 = vmatmul.mubr.f32.gmra.mxu0 %v3525
      %v3739 = vpop.f32.mrf.mxu0
      %v3740 = vadd.f32 0.0, %v3739
      %v3741 = vpop.f32.mrf.mxu0
      %3742 = vmatprep.mubr.f32.mxu0 0.0
      %3743 = vmatmul.mubr.f32.gmra.mxu0 %v3528
      %v3744 = vpop.f32.mrf.mxu0
      %v3745 = vadd.f32 0.0, %v3744
      %v3746 = vpop.f32.mrf.mxu0
      %3747 = vmatprep.mubr.f32.mxu0 0.0
      %3748 = vmatmul.mubr.f32.gmra.mxu0 %v3531
      %v3749 = vpop.f32.mrf.mxu0
      %v3750 = vadd.f32 0.0, %v3749
      %v3751 = vpop.f32.mrf.mxu0
      %3752 = vmatprep.mubr.f32.mxu0 0.0
      %3753 = vmatmul.mubr.f32.gmra.mxu0 %v3534
      %v3754 = vpop.f32.mrf.mxu0
      %v3755 = vadd.f32 0.0, %v3754
      %v3756 = vpop.f32.mrf.mxu0
      %3757 = vmatprep.mubr.f32.mxu0 0.0
      %3758 = vmatmul.mubr.f32.gmra.mxu0 %v3537
      %v3759 = vpop.f32.mrf.mxu0
      %v3760 = vadd.f32 0.0, %v3759
      %v3761 = vpop.f32.mrf.mxu0
      %3762 = vmatprep.mubr.f32.mxu0 0.0
      %3763 = vmatmul.mubr.f32.gmra.mxu0 %v3540
      %v3764 = vpop.f32.mrf.mxu0
      %v3765 = vadd.f32 0.0, %v3764
      %v3766 = vpop.f32.mrf.mxu0
      %3767 = vmatprep.mubr.f32.mxu0 0.0
      %3768 = vmatmul.mubr.f32.gmra.mxu0 %v3543
      %v3769 = vpop.f32.mrf.mxu0
      %v3770 = vadd.f32 0.0, %v3769
      %v3771 = vpop.f32.mrf.mxu0
      %3772 = vmatprep.mubr.f32.mxu0 0.0
      %3773 = vmatmul.mubr.f32.gmra.mxu0 %v3546
      %v3774 = vpop.f32.mrf.mxu0
      %v3775 = vadd.f32 0.0, %v3774
      %v3776 = vpop.f32.mrf.mxu0
      %3777 = vmatprep.mubr.f32.mxu0 0.0
      %3778 = vmatmul.mubr.f32.gmra.mxu0 %v3549
      %v3779 = vpop.f32.mrf.mxu0
      %v3780 = vadd.f32 0.0, %v3779
      %v3781 = vpop.f32.mrf.mxu0
      %3782 = vmatprep.mubr.f32.mxu0 0.0
      %3783 = vmatmul.mubr.f32.gmra.mxu0 %v3552
      %v3784 = vpop.f32.mrf.mxu0
      %v3785 = vadd.f32 0.0, %v3784
      %v3786 = vpop.f32.mrf.mxu0
      %3787 = vmatprep.mubr.f32.mxu0 0.0
      %3788 = vmatmul.mubr.f32.gmra.mxu0 %v3555
      %v3789 = vpop.f32.mrf.mxu0
      %v3790 = vadd.f32 0.0, %v3789
      %v3791 = vpop.f32.mrf.mxu0
      %3792 = vmatprep.mubr.f32.mxu0 0.0
      %3793 = vmatmul.mubr.f32.gmra.mxu0 %v3558
      %v3794 = vpop.f32.mrf.mxu0
      %v3795 = vadd.f32 0.0, %v3794
      %v3796 = vpop.f32.mrf.mxu0
      %3797 = vmatprep.mubr.f32.mxu0 0.0
      %3798 = vmatmul.mubr.f32.gmra.mxu0 %v3561
      %v3799 = vpop.f32.mrf.mxu0
      %v3800 = vadd.f32 0.0, %v3799
      %v3801 = vpop.f32.mrf.mxu0
      %3802 = vmatprep.mubr.f32.mxu0 0.0
      %3803 = vmatmul.mubr.f32.gmra.mxu0 %v3564
      %v3804 = vpop.f32.mrf.mxu0
      %v3805 = vadd.f32 0.0, %v3804
      %v3806 = vpop.f32.mrf.mxu0
      %3807 = vmatprep.mubr.f32.mxu0 0.0
      %3808 = vmatmul.mubr.f32.gmra.mxu0 %v3567
      %v3809 = vpop.f32.mrf.mxu0
      %v3810 = vadd.f32 0.0, %v3809
      %v3811 = vpop.f32.mrf.mxu0
      %3812 = vmatprep.mubr.f32.mxu0 0.0
      %3813 = vmatmul.mubr.f32.gmra.mxu0 %v3570
      %v3814 = vpop.f32.mrf.mxu0
      %v3815 = vadd.f32 0.0, %v3814
      %v3816 = vpop.f32.mrf.mxu0
      %3817 = vmatprep.mubr.f32.mxu0 0.0
      %3818 = vmatmul.mubr.f32.gmra.mxu0 %v3573
      %v3819 = vpop.f32.mrf.mxu0
      %v3820 = vadd.f32 0.0, %v3819
      %v3821 = vpop.f32.mrf.mxu0
      %3822 = vmatprep.mubr.f32.mxu0 0.0
      %3823 = vmatmul.mubr.f32.gmra.mxu0 %v3576
      %v3824 = vpop.f32.mrf.mxu0
      %v3825 = vadd.f32 0.0, %v3824
      %v3826 = vpop.f32.mrf.mxu0
      %3827 = vmatprep.mubr.f32.mxu0 0.0
      %3828 = vmatmul.mubr.f32.gmra.mxu0 %v3579
      %v3829 = vpop.f32.mrf.mxu0
      %v3830 = vadd.f32 0.0, %v3829
      %v3831 = vpop.f32.mrf.mxu0
      %3832 = vmatprep.mubr.f32.mxu0 0.0
      %3833 = vmatmul.mubr.f32.gmra.mxu0 %v3582
      %v3834 = vpop.f32.mrf.mxu0
      %v3835 = vadd.f32 0.0, %v3834
      %v3836 = vpop.f32.mrf.mxu0
      %3837 = vmatprep.mubr.f32.mxu0 0.0
      %3838 = vmatmul.mubr.f32.gmra.mxu0 %v3585
      %v3839 = vpop.f32.mrf.mxu0
      %v3840 = vadd.f32 0.0, %v3839
      %v3841 = vpop.f32.mrf.mxu0
      %3842 = vmatprep.mubr.f32.mxu0 0.0
      %3843 = vmatmul.mubr.f32.gmra.mxu0 %v3588
      %v3844 = vpop.f32.mrf.mxu0
      %v3845 = vadd.f32 0.0, %v3844
      %v3846 = vpop.f32.mrf.mxu0
      %3847 = vmatprep.mubr.f32.mxu0 0.0
      %3848 = vmatmul.mubr.f32.gmra.mxu0 %v3591
      %v3849 = vpop.f32.mrf.mxu0
      %v3850 = vadd.f32 0.0, %v3849
      %v3851 = vpop.f32.mrf.mxu0
      %3852 = vmatprep.mubr.f32.mxu0 0.0
      %3853 = vmatmul.mubr.f32.gmra.mxu0 %v3594
      %v3854 = vpop.f32.mrf.mxu0
      %v3855 = vadd.f32 0.0, %v3854
      %v3856 = vpop.f32.mrf.mxu0
      %3857 = vmatprep.mubr.f32.mxu0 0.0
      %3858 = vmatmul.mubr.f32.gmra.mxu0 %v3597
      %v3859 = vpop.f32.mrf.mxu0
      %v3860 = vadd.f32 0.0, %v3859
      %v3861 = vpop.f32.mrf.mxu0
      %3862 = vmatprep.mubr.f32.mxu0 0.0
      %3863 = vmatmul.mubr.f32.gmra.mxu0 %v3600
      %v3864 = vpop.f32.mrf.mxu0
      %v3865 = vadd.f32 0.0, %v3864
      %v3866 = vpop.f32.mrf.mxu0
      %3867 = vmatprep.mubr.f32.mxu0 0.0
      %3868 = vmatmul.mubr.f32.gmra.mxu0 %v3603
      %v3869 = vpop.f32.mrf.mxu0
      %v3870 = vadd.f32 0.0, %v3869
      %v3871 = vpop.f32.mrf.mxu0
      %3872 = vmatprep.mubr.f32.mxu0 0.0
      %3873 = vmatmul.mubr.f32.gmra.mxu0 %v3606
      %v3874 = vpop.f32.mrf.mxu0
      %v3875 = vadd.f32 0.0, %v3874
      %v3876 = vpop.f32.mrf.mxu0
      %3877 = vmatprep.mubr.f32.mxu0 0.0
      %3878 = vmatmul.mubr.f32.gmra.mxu0 %v3609
      %v3879 = vpop.f32.mrf.mxu0
      %v3880 = vadd.f32 0.0, %v3879
      %v3881 = vpop.f32.mrf.mxu0
      %3882 = vmatprep.mubr.f32.mxu0 0.0
      %3883 = vmatmul.mubr.f32.gmra.mxu0 %v3612
      %v3884 = vpop.f32.mrf.mxu0
      %v3885 = vadd.f32 0.0, %v3884
      %v3886 = vpop.f32.mrf.mxu0
      %3887 = vmatprep.mubr.f32.mxu0 0.0
      %3888 = vmatmul.mubr.f32.gmra.mxu0 %v3615
      %v3889 = vpop.f32.mrf.mxu0
      %v3890 = vadd.f32 0.0, %v3889
      %v3891 = vpop.f32.mrf.mxu0
      %3892 = vmatprep.mubr.f32.mxu0 0.0
      %3893 = vmatmul.mubr.f32.gmra.mxu0 %v3618
      %v3894 = vpop.f32.mrf.mxu0
      %v3895 = vadd.f32 0.0, %v3894
      %v3896 = vpop.f32.mrf.mxu0
      %3897 = vmatprep.mubr.f32.mxu0 0.0
      %3898 = vmatmul.mubr.f32.gmra.mxu0 %v3621
      %v3899 = vpop.f32.mrf.mxu0
      %v3900 = vadd.f32 0.0, %v3899
      %v3901 = vpop.f32.mrf.mxu0
      %3902 = vmatprep.mubr.f32.mxu0 0.0
      %3903 = vmatmul.mubr.f32.gmra.mxu0 %v3624
      %v3904 = vpop.f32.mrf.mxu0
      %v3905 = vadd.f32 0.0, %v3904
      %v3906 = vpop.f32.mrf.mxu0
      %3907 = vmatprep.mubr.f32.mxu0 0.0
      %3908 = vmatmul.mubr.f32.gmra.mxu0 %v3627
      %v3909 = vpop.f32.mrf.mxu0
      %v3910 = vadd.f32 0.0, %v3909
      %v3911 = vpop.f32.mrf.mxu0
      %3912 = vmatprep.mubr.f32.mxu0 0.0
      %3913 = vmatmul.mubr.f32.gmra.mxu0 %v3630
      %v3914 = vpop.f32.mrf.mxu0
      %v3915 = vadd.f32 0.0, %v3914
      %v3916 = vpop.f32.mrf.mxu0
      %3917 = vmatprep.mubr.f32.mxu0 0.0
      %3918 = vmatmul.mubr.f32.gmra.mxu0 %v3633
      %v3919 = vpop.f32.mrf.mxu0
      %v3920 = vadd.f32 0.0, %v3919
      %v3921 = vpop.f32.mrf.mxu0
      %3922 = vmatprep.mubr.f32.mxu0 0.0
      %3923 = vmatmul.mubr.f32.gmra.mxu0 %v3636
      %v3924 = vpop.f32.mrf.mxu0
      %v3925 = vadd.f32 0.0, %v3924
      %v3926 = vpop.f32.mrf.mxu0
      %3927 = vmatprep.mubr.f32.mxu0 0.0
      %3928 = vmatmul.mubr.f32.gmra.mxu0 %v3639
      %v3929 = vpop.f32.mrf.mxu0
      %v3930 = vadd.f32 0.0, %v3929
      %v3931 = vpop.f32.mrf.mxu0
      %3932 = vmatprep.mubr.f32.mxu0 0.0
      %3933 = vmatmul.mubr.f32.gmra.mxu0 %v3642
      %v3934 = vpop.f32.mrf.mxu0
      %v3935 = vadd.f32 0.0, %v3934
      %v3936 = vpop.f32.mrf.mxu0
      %3937 = vmatprep.mubr.f32.mxu0 0.0
      %3938 = vmatmul.mubr.f32.gmra.mxu0 %v3645
      %v3939 = vpop.f32.mrf.mxu0
      %v3940 = vadd.f32 0.0, %v3939
      %v3941 = vpop.f32.mrf.mxu0
      %3942 = vmatprep.mubr.f32.mxu0 0.0
      %3943 = vmatmul.mubr.f32.gmra.mxu0 %v3648
      %v3944 = vpop.f32.mrf.mxu0
      %v3945 = vadd.f32 0.0, %v3944
      %v3946 = vpop.f32.mrf.mxu0
      %3947 = vmatprep.mubr.f32.mxu0 0.0
      %3948 = vmatmul.mubr.f32.gmra.mxu0 %v3651
      %v3949 = vpop.f32.mrf.mxu0
      %v3950 = vadd.f32 0.0, %v3949
      %v3951 = vpop.f32.mrf.mxu0
      %3952 = vmatprep.mubr.f32.mxu0 0.0
      %3953 = vmatmul.mubr.f32.gmra.mxu0 %v3654
      %v3954 = vpop.f32.mrf.mxu0
      %v3955 = vadd.f32 0.0, %v3954
      %v3956 = vpop.f32.mrf.mxu0
      %3957 = vmatprep.mubr.f32.mxu0 0.0
      %3958 = vmatmul.mubr.f32.gmra.mxu0 %v3657
      %v3959 = vpop.f32.mrf.mxu0
      %v3960 = vadd.f32 0.0, %v3959
      %v3961 = vpop.f32.mrf.mxu0
      %3962 = vmatprep.mubr.f32.mxu0 0.0
      %3963 = vmatmul.mubr.f32.gmra.mxu0 %v3660
      %v3964 = vpop.f32.mrf.mxu0
      %v3965 = vadd.f32 0.0, %v3964
      %v3966 = vpop.f32.mrf.mxu0
      %3967 = vmatprep.mubr.f32.mxu0 0.0
      %3968 = vmatmul.mubr.f32.gmra.mxu0 %v3663
      %v3969 = vpop.f32.mrf.mxu0
      %v3970 = vadd.f32 0.0, %v3969
      %v3971 = vpop.f32.mrf.mxu0
      %3972 = vdwg.mxu0
      %v3973 = vadd.f32 %v3423, %v3735
      %v3974 = vadd.f32 %v3424, %v3740
      %v3975 = vadd.f32 %v3425, %v3745
      %v3976 = vadd.f32 %v3426, %v3750
      %v3977 = vadd.f32 %v3427, %v3755
      %v3978 = vadd.f32 %v3428, %v3760
      %v3979 = vadd.f32 %v3429, %v3765
      %v3980 = vadd.f32 %v3430, %v3770
      %v3981 = vadd.f32 %v3431, %v3775
      %v3982 = vadd.f32 %v3432, %v3780
      %v3983 = vadd.f32 %v3433, %v3785
      %v3984 = vadd.f32 %v3434, %v3790
      %v3985 = vadd.f32 %v3435, %v3795
      %v3986 = vadd.f32 %v3436, %v3800
      %v3987 = vadd.f32 %v3437, %v3805
      %v3988 = vadd.f32 %v3438, %v3810
      %v3989 = vadd.f32 %v3439, %v3815
      %v3990 = vadd.f32 %v3440, %v3820
      %v3991 = vadd.f32 %v3441, %v3825
      %v3992 = vadd.f32 %v3442, %v3830
      %v3993 = vadd.f32 %v3443, %v3835
      %v3994 = vadd.f32 %v3444, %v3840
      %v3995 = vadd.f32 %v3445, %v3845
      %v3996 = vadd.f32 %v3446, %v3850
      %v3997 = vadd.f32 %v3447, %v3855
      %v3998 = vadd.f32 %v3448, %v3860
      %v3999 = vadd.f32 %v3449, %v3865
      %v4000 = vadd.f32 %v3450, %v3870
      %v4001 = vadd.f32 %v3451, %v3875
      %v4002 = vadd.f32 %v3452, %v3880
      %v4003 = vadd.f32 %v3453, %v3885
      %v4004 = vadd.f32 %v3454, %v3890
      %v4005 = vadd.f32 %v3455, %v3895
      %v4006 = vadd.f32 %v3456, %v3900
      %v4007 = vadd.f32 %v3457, %v3905
      %v4008 = vadd.f32 %v3458, %v3910
      %v4009 = vadd.f32 %v3459, %v3915
      %v4010 = vadd.f32 %v3460, %v3920
      %v4011 = vadd.f32 %v3461, %v3925
      %v4012 = vadd.f32 %v3462, %v3930
      %v4013 = vadd.f32 %v3463, %v3935
      %v4014 = vadd.f32 %v3464, %v3940
      %v4015 = vadd.f32 %v3465, %v3945
      %v4016 = vadd.f32 %v3466, %v3950
      %v4017 = vadd.f32 %v3467, %v3955
      %v4018 = vadd.f32 %v3468, %v3960
      %v4019 = vadd.f32 %v3469, %v3965
      %v4020 = vadd.f32 %v3470, %v3970
      %4021 = vst [vmem:[#allocation2] sm:$0xff] %v3973
      %4022 = vst [vmem:[#allocation2 + $0x8] sm:$0xff] %v3974
      %4023 = vst [vmem:[#allocation2 + $0x10] sm:$0xff] %v3975
      %4024 = vst [vmem:[#allocation2 + $0x18] sm:$0xff] %v3976
      %4025 = vst [vmem:[#allocation2 + $0x20] sm:$0xff] %v3977
      %4026 = vst [vmem:[#allocation2 + $0x28] sm:$0xff] %v3978
      %4027 = vst [vmem:[#allocation2 + $0x30] sm:$0xff] %v3979
      %4028 = vst [vmem:[#allocation2 + $0x38] sm:$0xff] %v3980
      %4029 = vst [vmem:[#allocation2 + $0x40] sm:$0xff] %v3981
      %4030 = vst [vmem:[#allocation2 + $0x48] sm:$0xff] %v3982
      %4031 = vst [vmem:[#allocation2 + $0x50] sm:$0xff] %v3983
      %4032 = vst [vmem:[#allocation2 + $0x58] sm:$0xff] %v3984
      %4033 = vst [vmem:[#allocation2 + $0x60] sm:$0xff] %v3985
      %4034 = vst [vmem:[#allocation2 + $0x68] sm:$0xff] %v3986
      %4035 = vst [vmem:[#allocation2 + $0x70] sm:$0xff] %v3987
      %4036 = vst [vmem:[#allocation2 + $0x78] sm:$0xff] %v3988
      %4037 = vst [vmem:[#allocation2 + $0x80] sm:$0xff] %v3989
      %4038 = vst [vmem:[#allocation2 + $0x88] sm:$0xff] %v3990
      %4039 = vst [vmem:[#allocation2 + $0x90] sm:$0xff] %v3991
      %4040 = vst [vmem:[#allocation2 + $0x98] sm:$0xff] %v3992
      %4041 = vst [vmem:[#allocation2 + $0xa0] sm:$0xff] %v3993
      %4042 = vst [vmem:[#allocation2 + $0xa8] sm:$0xff] %v3994
      %4043 = vst [vmem:[#allocation2 + $0xb0] sm:$0xff] %v3995
      %4044 = vst [vmem:[#allocation2 + $0xb8] sm:$0xff] %v3996
      %4045 = vst [vmem:[#allocation2 + $0xc0] sm:$0xff] %v3997
      %4046 = vst [vmem:[#allocation2 + $0xc8] sm:$0xff] %v3998
      %4047 = vst [vmem:[#allocation2 + $0xd0] sm:$0xff] %v3999
      %4048 = vst [vmem:[#allocation2 + $0xd8] sm:$0xff] %v4000
      %4049 = vst [vmem:[#allocation2 + $0xe0] sm:$0xff] %v4001
      %4050 = vst [vmem:[#allocation2 + $0xe8] sm:$0xff] %v4002
      %4051 = vst [vmem:[#allocation2 + $0xf0] sm:$0xff] %v4003
      %4052 = vst [vmem:[#allocation2 + $0xf8] sm:$0xff] %v4004
      %4053 = vst [vmem:[#allocation2 + $0x100] sm:$0xff] %v4005
      %4054 = vst [vmem:[#allocation2 + $0x108] sm:$0xff] %v4006
      %4055 = vst [vmem:[#allocation2 + $0x110] sm:$0xff] %v4007
      %4056 = vst [vmem:[#allocation2 + $0x118] sm:$0xff] %v4008
      %4057 = vst [vmem:[#allocation2 + $0x120] sm:$0xff] %v4009
      %4058 = vst [vmem:[#allocation2 + $0x128] sm:$0xff] %v4010
      %4059 = vst [vmem:[#allocation2 + $0x130] sm:$0xff] %v4011
      %4060 = vst [vmem:[#allocation2 + $0x138] sm:$0xff] %v4012
      %4061 = vst [vmem:[#allocation2 + $0x140] sm:$0xff] %v4013
      %4062 = vst [vmem:[#allocation2 + $0x148] sm:$0xff] %v4014
      %4063 = vst [vmem:[#allocation2 + $0x150] sm:$0xff] %v4015
      %4064 = vst [vmem:[#allocation2 + $0x158] sm:$0xff] %v4016
      %4065 = vst [vmem:[#allocation2 + $0x160] sm:$0xff] %v4017
      %4066 = vst [vmem:[#allocation2 + $0x168] sm:$0xff] %v4018
      %4067 = vst [vmem:[#allocation2 + $0x170] sm:$0xff] %v4019
      %4068 = vst [vmem:[#allocation2 + $0x178] sm:$0xff] %v4020
      %v4069 = vld [vmem:[#allocation2] sm:$0xff]
      %v4070 = vld [vmem:[#allocation2 + $0x8] sm:$0xff]
      %v4071 = vld [vmem:[#allocation2 + $0x10] sm:$0xff]
      %v4072 = vld [vmem:[#allocation2 + $0x18] sm:$0xff]
      %v4073 = vld [vmem:[#allocation2 + $0x20] sm:$0xff]
      %v4074 = vld [vmem:[#allocation2 + $0x28] sm:$0xff]
      %v4075 = vld [vmem:[#allocation2 + $0x30] sm:$0xff]
      %v4076 = vld [vmem:[#allocation2 + $0x38] sm:$0xff]
      %v4077 = vld [vmem:[#allocation2 + $0x40] sm:$0xff]
      %v4078 = vld [vmem:[#allocation2 + $0x48] sm:$0xff]
      %v4079 = vld [vmem:[#allocation2 + $0x50] sm:$0xff]
      %v4080 = vld [vmem:[#allocation2 + $0x58] sm:$0xff]
      %v4081 = vld [vmem:[#allocation2 + $0x60] sm:$0xff]
      %v4082 = vld [vmem:[#allocation2 + $0x68] sm:$0xff]
      %v4083 = vld [vmem:[#allocation2 + $0x70] sm:$0xff]
      %v4084 = vld [vmem:[#allocation2 + $0x78] sm:$0xff]
      %v4085 = vld [vmem:[#allocation2 + $0x80] sm:$0xff]
      %v4086 = vld [vmem:[#allocation2 + $0x88] sm:$0xff]
      %v4087 = vld [vmem:[#allocation2 + $0x90] sm:$0xff]
      %v4088 = vld [vmem:[#allocation2 + $0x98] sm:$0xff]
      %v4089 = vld [vmem:[#allocation2 + $0xa0] sm:$0xff]
      %v4090 = vld [vmem:[#allocation2 + $0xa8] sm:$0xff]
      %v4091 = vld [vmem:[#allocation2 + $0xb0] sm:$0xff]
      %v4092 = vld [vmem:[#allocation2 + $0xb8] sm:$0xff]
      %v4093 = vld [vmem:[#allocation2 + $0xc0] sm:$0xff]
      %v4094 = vld [vmem:[#allocation2 + $0xc8] sm:$0xff]
      %v4095 = vld [vmem:[#allocation2 + $0xd0] sm:$0xff]
      %v4096 = vld [vmem:[#allocation2 + $0xd8] sm:$0xff]
      %v4097 = vld [vmem:[#allocation2 + $0xe0] sm:$0xff]
      %v4098 = vld [vmem:[#allocation2 + $0xe8] sm:$0xff]
      %v4099 = vld [vmem:[#allocation2 + $0xf0] sm:$0xff]
      %v4100 = vld [vmem:[#allocation2 + $0xf8] sm:$0xff]
      %v4101 = vld [vmem:[#allocation2 + $0x100] sm:$0xff]
      %v4102 = vld [vmem:[#allocation2 + $0x108] sm:$0xff]
      %v4103 = vld [vmem:[#allocation2 + $0x110] sm:$0xff]
      %v4104 = vld [vmem:[#allocation2 + $0x118] sm:$0xff]
      %v4105 = vld [vmem:[#allocation2 + $0x120] sm:$0xff]
      %v4106 = vld [vmem:[#allocation2 + $0x128] sm:$0xff]
      %v4107 = vld [vmem:[#allocation2 + $0x130] sm:$0xff]
      %v4108 = vld [vmem:[#allocation2 + $0x138] sm:$0xff]
      %v4109 = vld [vmem:[#allocation2 + $0x140] sm:$0xff]
      %v4110 = vld [vmem:[#allocation2 + $0x148] sm:$0xff]
      %v4111 = vld [vmem:[#allocation2 + $0x150] sm:$0xff]
      %v4112 = vld [vmem:[#allocation2 + $0x158] sm:$0xff]
      %v4113 = vld [vmem:[#allocation2 + $0x160] sm:$0xff]
      %v4114 = vld [vmem:[#allocation2 + $0x168] sm:$0xff]
      %v4115 = vld [vmem:[#allocation2 + $0x170] sm:$0xff]
      %v4116 = vld [vmem:[#allocation2 + $0x178] sm:$0xff]
      %v4117 = vld [vmem:[%s138 + $0x30] sm:$0xff]
      %v4118 = vld [vmem:[%s138 + $0x38] sm:$0xff]
      %v4119 = vld [vmem:[%s138 + $0x40] sm:$0xff]
      %v4120 = vld [vmem:[%s138 + $0x48] sm:$0xff]
      %v4121 = vld [vmem:[%s138 + $0x50] sm:$0xff]
      %v4122 = vld [vmem:[%s138 + $0x58] sm:$0xff]
      %v4123 = vld [vmem:[%s138 + $0x60] sm:$0xff]
      %v4124 = vld [vmem:[%s138 + $0x68] sm:$0xff]
      %v4125 = vld [vmem:[%s138 + $0x70] sm:$0xff]
      %v4126 = vld [vmem:[%s138 + $0x78] sm:$0xff]
      %v4127 = vld [vmem:[%s138 + $0x80] sm:$0xff]
      %v4128 = vld [vmem:[%s138 + $0x88] sm:$0xff]
      %v4129 = vld [vmem:[%s138 + $0x90] sm:$0xff]
      %v4130 = vld [vmem:[%s138 + $0x98] sm:$0xff]
      %v4131 = vld [vmem:[%s138 + $0xa0] sm:$0xff]
      %v4132 = vld [vmem:[%s138 + $0xa8] sm:$0xff]
      %v4133 = vld [vmem:[%s138 + $0xb0] sm:$0xff]
      %v4134 = vld [vmem:[%s138 + $0xb8] sm:$0xff]
      %v4135 = vld [vmem:[%s138 + $0xc0] sm:$0xff]
      %v4136 = vld [vmem:[%s138 + $0xc8] sm:$0xff]
      %v4137 = vld [vmem:[%s138 + $0xd0] sm:$0xff]
      %v4138 = vld [vmem:[%s138 + $0xd8] sm:$0xff]
      %v4139 = vld [vmem:[%s138 + $0xe0] sm:$0xff]
      %v4140 = vld [vmem:[%s138 + $0xe8] sm:$0xff]
      %v4141 = vld [vmem:[%s138 + $0xf0] sm:$0xff]
      %v4142 = vld [vmem:[%s138 + $0xf8] sm:$0xff]
      %v4143 = vld [vmem:[%s138 + $0x100] sm:$0xff]
      %v4144 = vld [vmem:[%s138 + $0x108] sm:$0xff]
      %v4145 = vld [vmem:[%s138 + $0x110] sm:$0xff]
      %v4146 = vld [vmem:[%s138 + $0x118] sm:$0xff]
      %v4147 = vld [vmem:[%s138 + $0x120] sm:$0xff]
      %v4148 = vld [vmem:[%s138 + $0x128] sm:$0xff]
      %v4149 = vld [vmem:[%s138 + $0x130] sm:$0xff]
      %v4150 = vld [vmem:[%s138 + $0x138] sm:$0xff]
      %v4151 = vld [vmem:[%s138 + $0x140] sm:$0xff]
      %v4152 = vld [vmem:[%s138 + $0x148] sm:$0xff]
      %v4153 = vld [vmem:[%s138 + $0x150] sm:$0xff]
      %v4154 = vld [vmem:[%s138 + $0x158] sm:$0xff]
      %v4155 = vld [vmem:[%s138 + $0x160] sm:$0xff]
      %v4156 = vld [vmem:[%s138 + $0x168] sm:$0xff]
      %v4157 = vld [vmem:[%s138 + $0x170] sm:$0xff]
      %v4158 = vld [vmem:[%s138 + $0x178] sm:$0xff]
      %v4159 = vld [vmem:[%s138 + $0x180] sm:$0xff]
      %v4160 = vld [vmem:[%s138 + $0x188] sm:$0xff]
      %v4161 = vld [vmem:[%s138 + $0x190] sm:$0xff]
      %v4162 = vld [vmem:[%s138 + $0x198] sm:$0xff]
      %v4163 = vld [vmem:[%s138 + $0x1a0] sm:$0xff]
      %v4164 = vld [vmem:[%s138 + $0x1a8] sm:$0xff]
      %s4165 = scalar_lea.vmem %s1, 24
      %v4166 = vld [vmem:[%s4165] sm:$0xf]
      %v4168 = vsel %vm289, %v4117, 0
      %v4171 = vsel %vm289, %v4118, 0
      %v4174 = vsel %vm289, %v4119, 0
      %v4177 = vsel %vm289, %v4120, 0
      %v4180 = vsel %vm289, %v4121, 0
      %v4183 = vsel %vm289, %v4122, 0
      %v4186 = vsel %vm289, %v4123, 0
      %v4189 = vsel %vm289, %v4124, 0
      %v4192 = vsel %vm289, %v4125, 0
      %v4195 = vsel %vm289, %v4126, 0
      %v4198 = vsel %vm289, %v4127, 0
      %v4201 = vsel %vm289, %v4128, 0
      %v4204 = vsel %vm289, %v4129, 0
      %v4207 = vsel %vm289, %v4130, 0
      %v4210 = vsel %vm289, %v4131, 0
      %v4213 = vsel %vm289, %v4132, 0
      %v4216 = vsel %vm289, %v4133, 0
      %v4219 = vsel %vm289, %v4134, 0
      %v4222 = vsel %vm289, %v4135, 0
      %v4225 = vsel %vm289, %v4136, 0
      %v4228 = vsel %vm289, %v4137, 0
      %v4231 = vsel %vm289, %v4138, 0
      %v4234 = vsel %vm289, %v4139, 0
      %v4237 = vsel %vm289, %v4140, 0
      %v4240 = vsel %vm289, %v4141, 0
      %v4243 = vsel %vm289, %v4142, 0
      %v4246 = vsel %vm289, %v4143, 0
      %v4249 = vsel %vm289, %v4144, 0
      %v4252 = vsel %vm289, %v4145, 0
      %v4255 = vsel %vm289, %v4146, 0
      %v4258 = vsel %vm289, %v4147, 0
      %v4261 = vsel %vm289, %v4148, 0
      %v4264 = vsel %vm289, %v4149, 0
      %v4267 = vsel %vm289, %v4150, 0
      %v4270 = vsel %vm289, %v4151, 0
      %v4273 = vsel %vm289, %v4152, 0
      %v4276 = vsel %vm289, %v4153, 0
      %v4279 = vsel %vm289, %v4154, 0
      %v4282 = vsel %vm289, %v4155, 0
      %v4285 = vsel %vm289, %v4156, 0
      %v4288 = vsel %vm289, %v4157, 0
      %v4291 = vsel %vm289, %v4158, 0
      %v4294 = vsel %vm289, %v4159, 0
      %v4297 = vsel %vm289, %v4160, 0
      %v4300 = vsel %vm289, %v4161, 0
      %v4303 = vsel %vm289, %v4162, 0
      %v4306 = vsel %vm289, %v4163, 0
      %v4309 = vsel %vm289, %v4164, 0
      %v4312 = vsel %vm434, %v4166, 0
      %4314 = vmatprep.subr.mxu0 0.0
      %4315 = vmatpush1.msra.mxu0 0.0
      %4316 = vmatprep.subr.mxu0 0.0
      %4317 = vmatpush1.msra.mxu0 0.0
      %4318 = vmatprep.subr.mxu0 0.0
      %4319 = vmatpush1.msra.mxu0 0.0
      %4320 = vmatprep.subr.mxu0 0.0
      %4321 = vmatpush1.msra.mxu0 0.0
      %4322 = vmatprep.subr.mxu0 0.0
      %4323 = vmatpush1.msra.mxu0 0.0
      %4324 = vmatprep.subr.mxu0 0.0
      %4325 = vmatpush1.msra.mxu0 0.0
      %4326 = vmatprep.subr.mxu0 0.0
      %4327 = vmatpush1.msra.mxu0 0.0
      %4328 = vmatprep.subr.mxu0 0.0
      %4329 = vmatpush1.msra.mxu0 0.0
      %4330 = vmatprep.subr.mxu0 0.0
      %4331 = vmatpush1.msra.mxu0 0.0
      %4332 = vmatprep.subr.mxu0 0.0
      %4333 = vmatpush1.msra.mxu0 0.0
      %4334 = vmatprep.subr.mxu0 0.0
      %4335 = vmatpush1.msra.mxu0 0.0
      %4336 = vmatprep.subr.mxu0 0.0
      %4337 = vmatpush1.msra.mxu0 0.0
      %4338 = vmatprep.subr.mxu0 0.0
      %4339 = vmatpush1.msra.mxu0 0.0
      %4340 = vmatprep.subr.mxu0 0.0
      %4341 = vmatpush1.msra.mxu0 0.0
      %4342 = vmatprep.subr.mxu0 0.0
      %4343 = vmatpush1.msra.mxu0 0.0
      %4344 = vmatprep.subr.mxu0 0.0
      %4345 = vmatpush1.msra.mxu0 %v4312
      %4346 = vmatprep.subr.mxu0 0.0
      %4347 = vmatpush2.msra.mxu0 0.0
      %4348 = vmatprep.subr.mxu0 0.0
      %4349 = vmatpush2.msra.mxu0 0.0
      %4350 = vmatprep.subr.mxu0 0.0
      %4351 = vmatpush2.msra.mxu0 0.0
      %4352 = vmatprep.subr.mxu0 0.0
      %4353 = vmatpush2.msra.mxu0 0.0
      %4354 = vmatprep.subr.mxu0 0.0
      %4355 = vmatpush2.msra.mxu0 0.0
      %4356 = vmatprep.subr.mxu0 0.0
      %4357 = vmatpush2.msra.mxu0 0.0
      %4358 = vmatprep.subr.mxu0 0.0
      %4359 = vmatpush2.msra.mxu0 0.0
      %4360 = vmatprep.subr.mxu0 0.0
      %4361 = vmatpush2.msra.mxu0 0.0
      %4362 = vmatprep.subr.mxu0 0.0
      %4363 = vmatpush2.msra.mxu0 0.0
      %4364 = vmatprep.subr.mxu0 0.0
      %4365 = vmatpush2.msra.mxu0 0.0
      %4366 = vmatprep.subr.mxu0 0.0
      %4367 = vmatpush2.msra.mxu0 0.0
      %4368 = vmatprep.subr.mxu0 0.0
      %4369 = vmatpush2.msra.mxu0 0.0
      %4370 = vmatprep.subr.mxu0 0.0
      %4371 = vmatpush2.msra.mxu0 0.0
      %4372 = vmatprep.subr.mxu0 0.0
      %4373 = vmatpush2.msra.mxu0 0.0
      %4374 = vmatprep.subr.mxu0 0.0
      %4375 = vmatpush2.msra.mxu0 0.0
      %4376 = vmatprep.subr.mxu0 0.0
      %4377 = vmatpush2.msra.mxu0 0.0
      %4378 = vmatprep.mubr.f32.mxu0 0.0
      %4379 = vmatmul.mubr.f32.gmra.mxu0 %v4168
      %v4380 = vpop.f32.mrf.mxu0
      %v4381 = vadd.f32 0.0, %v4380
      %v4382 = vpop.f32.mrf.mxu0
      %4383 = vmatprep.mubr.f32.mxu0 0.0
      %4384 = vmatmul.mubr.f32.gmra.mxu0 %v4171
      %v4385 = vpop.f32.mrf.mxu0
      %v4386 = vadd.f32 0.0, %v4385
      %v4387 = vpop.f32.mrf.mxu0
      %4388 = vmatprep.mubr.f32.mxu0 0.0
      %4389 = vmatmul.mubr.f32.gmra.mxu0 %v4174
      %v4390 = vpop.f32.mrf.mxu0
      %v4391 = vadd.f32 0.0, %v4390
      %v4392 = vpop.f32.mrf.mxu0
      %4393 = vmatprep.mubr.f32.mxu0 0.0
      %4394 = vmatmul.mubr.f32.gmra.mxu0 %v4177
      %v4395 = vpop.f32.mrf.mxu0
      %v4396 = vadd.f32 0.0, %v4395
      %v4397 = vpop.f32.mrf.mxu0
      %4398 = vmatprep.mubr.f32.mxu0 0.0
      %4399 = vmatmul.mubr.f32.gmra.mxu0 %v4180
      %v4400 = vpop.f32.mrf.mxu0
      %v4401 = vadd.f32 0.0, %v4400
      %v4402 = vpop.f32.mrf.mxu0
      %4403 = vmatprep.mubr.f32.mxu0 0.0
      %4404 = vmatmul.mubr.f32.gmra.mxu0 %v4183
      %v4405 = vpop.f32.mrf.mxu0
      %v4406 = vadd.f32 0.0, %v4405
      %v4407 = vpop.f32.mrf.mxu0
      %4408 = vmatprep.mubr.f32.mxu0 0.0
      %4409 = vmatmul.mubr.f32.gmra.mxu0 %v4186
      %v4410 = vpop.f32.mrf.mxu0
      %v4411 = vadd.f32 0.0, %v4410
      %v4412 = vpop.f32.mrf.mxu0
      %4413 = vmatprep.mubr.f32.mxu0 0.0
      %4414 = vmatmul.mubr.f32.gmra.mxu0 %v4189
      %v4415 = vpop.f32.mrf.mxu0
      %v4416 = vadd.f32 0.0, %v4415
      %v4417 = vpop.f32.mrf.mxu0
      %4418 = vmatprep.mubr.f32.mxu0 0.0
      %4419 = vmatmul.mubr.f32.gmra.mxu0 %v4192
      %v4420 = vpop.f32.mrf.mxu0
      %v4421 = vadd.f32 0.0, %v4420
      %v4422 = vpop.f32.mrf.mxu0
      %4423 = vmatprep.mubr.f32.mxu0 0.0
      %4424 = vmatmul.mubr.f32.gmra.mxu0 %v4195
      %v4425 = vpop.f32.mrf.mxu0
      %v4426 = vadd.f32 0.0, %v4425
      %v4427 = vpop.f32.mrf.mxu0
      %4428 = vmatprep.mubr.f32.mxu0 0.0
      %4429 = vmatmul.mubr.f32.gmra.mxu0 %v4198
      %v4430 = vpop.f32.mrf.mxu0
      %v4431 = vadd.f32 0.0, %v4430
      %v4432 = vpop.f32.mrf.mxu0
      %4433 = vmatprep.mubr.f32.mxu0 0.0
      %4434 = vmatmul.mubr.f32.gmra.mxu0 %v4201
      %v4435 = vpop.f32.mrf.mxu0
      %v4436 = vadd.f32 0.0, %v4435
      %v4437 = vpop.f32.mrf.mxu0
      %4438 = vmatprep.mubr.f32.mxu0 0.0
      %4439 = vmatmul.mubr.f32.gmra.mxu0 %v4204
      %v4440 = vpop.f32.mrf.mxu0
      %v4441 = vadd.f32 0.0, %v4440
      %v4442 = vpop.f32.mrf.mxu0
      %4443 = vmatprep.mubr.f32.mxu0 0.0
      %4444 = vmatmul.mubr.f32.gmra.mxu0 %v4207
      %v4445 = vpop.f32.mrf.mxu0
      %v4446 = vadd.f32 0.0, %v4445
      %v4447 = vpop.f32.mrf.mxu0
      %4448 = vmatprep.mubr.f32.mxu0 0.0
      %4449 = vmatmul.mubr.f32.gmra.mxu0 %v4210
      %v4450 = vpop.f32.mrf.mxu0
      %v4451 = vadd.f32 0.0, %v4450
      %v4452 = vpop.f32.mrf.mxu0
      %4453 = vmatprep.mubr.f32.mxu0 0.0
      %4454 = vmatmul.mubr.f32.gmra.mxu0 %v4213
      %v4455 = vpop.f32.mrf.mxu0
      %v4456 = vadd.f32 0.0, %v4455
      %v4457 = vpop.f32.mrf.mxu0
      %4458 = vmatprep.mubr.f32.mxu0 0.0
      %4459 = vmatmul.mubr.f32.gmra.mxu0 %v4216
      %v4460 = vpop.f32.mrf.mxu0
      %v4461 = vadd.f32 0.0, %v4460
      %v4462 = vpop.f32.mrf.mxu0
      %4463 = vmatprep.mubr.f32.mxu0 0.0
      %4464 = vmatmul.mubr.f32.gmra.mxu0 %v4219
      %v4465 = vpop.f32.mrf.mxu0
      %v4466 = vadd.f32 0.0, %v4465
      %v4467 = vpop.f32.mrf.mxu0
      %4468 = vmatprep.mubr.f32.mxu0 0.0
      %4469 = vmatmul.mubr.f32.gmra.mxu0 %v4222
      %v4470 = vpop.f32.mrf.mxu0
      %v4471 = vadd.f32 0.0, %v4470
      %v4472 = vpop.f32.mrf.mxu0
      %4473 = vmatprep.mubr.f32.mxu0 0.0
      %4474 = vmatmul.mubr.f32.gmra.mxu0 %v4225
      %v4475 = vpop.f32.mrf.mxu0
      %v4476 = vadd.f32 0.0, %v4475
      %v4477 = vpop.f32.mrf.mxu0
      %4478 = vmatprep.mubr.f32.mxu0 0.0
      %4479 = vmatmul.mubr.f32.gmra.mxu0 %v4228
      %v4480 = vpop.f32.mrf.mxu0
      %v4481 = vadd.f32 0.0, %v4480
      %v4482 = vpop.f32.mrf.mxu0
      %4483 = vmatprep.mubr.f32.mxu0 0.0
      %4484 = vmatmul.mubr.f32.gmra.mxu0 %v4231
      %v4485 = vpop.f32.mrf.mxu0
      %v4486 = vadd.f32 0.0, %v4485
      %v4487 = vpop.f32.mrf.mxu0
      %4488 = vmatprep.mubr.f32.mxu0 0.0
      %4489 = vmatmul.mubr.f32.gmra.mxu0 %v4234
      %v4490 = vpop.f32.mrf.mxu0
      %v4491 = vadd.f32 0.0, %v4490
      %v4492 = vpop.f32.mrf.mxu0
      %4493 = vmatprep.mubr.f32.mxu0 0.0
      %4494 = vmatmul.mubr.f32.gmra.mxu0 %v4237
      %v4495 = vpop.f32.mrf.mxu0
      %v4496 = vadd.f32 0.0, %v4495
      %v4497 = vpop.f32.mrf.mxu0
      %4498 = vmatprep.mubr.f32.mxu0 0.0
      %4499 = vmatmul.mubr.f32.gmra.mxu0 %v4240
      %v4500 = vpop.f32.mrf.mxu0
      %v4501 = vadd.f32 0.0, %v4500
      %v4502 = vpop.f32.mrf.mxu0
      %4503 = vmatprep.mubr.f32.mxu0 0.0
      %4504 = vmatmul.mubr.f32.gmra.mxu0 %v4243
      %v4505 = vpop.f32.mrf.mxu0
      %v4506 = vadd.f32 0.0, %v4505
      %v4507 = vpop.f32.mrf.mxu0
      %4508 = vmatprep.mubr.f32.mxu0 0.0
      %4509 = vmatmul.mubr.f32.gmra.mxu0 %v4246
      %v4510 = vpop.f32.mrf.mxu0
      %v4511 = vadd.f32 0.0, %v4510
      %v4512 = vpop.f32.mrf.mxu0
      %4513 = vmatprep.mubr.f32.mxu0 0.0
      %4514 = vmatmul.mubr.f32.gmra.mxu0 %v4249
      %v4515 = vpop.f32.mrf.mxu0
      %v4516 = vadd.f32 0.0, %v4515
      %v4517 = vpop.f32.mrf.mxu0
      %4518 = vmatprep.mubr.f32.mxu0 0.0
      %4519 = vmatmul.mubr.f32.gmra.mxu0 %v4252
      %v4520 = vpop.f32.mrf.mxu0
      %v4521 = vadd.f32 0.0, %v4520
      %v4522 = vpop.f32.mrf.mxu0
      %4523 = vmatprep.mubr.f32.mxu0 0.0
      %4524 = vmatmul.mubr.f32.gmra.mxu0 %v4255
      %v4525 = vpop.f32.mrf.mxu0
      %v4526 = vadd.f32 0.0, %v4525
      %v4527 = vpop.f32.mrf.mxu0
      %4528 = vmatprep.mubr.f32.mxu0 0.0
      %4529 = vmatmul.mubr.f32.gmra.mxu0 %v4258
      %v4530 = vpop.f32.mrf.mxu0
      %v4531 = vadd.f32 0.0, %v4530
      %v4532 = vpop.f32.mrf.mxu0
      %4533 = vmatprep.mubr.f32.mxu0 0.0
      %4534 = vmatmul.mubr.f32.gmra.mxu0 %v4261
      %v4535 = vpop.f32.mrf.mxu0
      %v4536 = vadd.f32 0.0, %v4535
      %v4537 = vpop.f32.mrf.mxu0
      %4538 = vmatprep.mubr.f32.mxu0 0.0
      %4539 = vmatmul.mubr.f32.gmra.mxu0 %v4264
      %v4540 = vpop.f32.mrf.mxu0
      %v4541 = vadd.f32 0.0, %v4540
      %v4542 = vpop.f32.mrf.mxu0
      %4543 = vmatprep.mubr.f32.mxu0 0.0
      %4544 = vmatmul.mubr.f32.gmra.mxu0 %v4267
      %v4545 = vpop.f32.mrf.mxu0
      %v4546 = vadd.f32 0.0, %v4545
      %v4547 = vpop.f32.mrf.mxu0
      %4548 = vmatprep.mubr.f32.mxu0 0.0
      %4549 = vmatmul.mubr.f32.gmra.mxu0 %v4270
      %v4550 = vpop.f32.mrf.mxu0
      %v4551 = vadd.f32 0.0, %v4550
      %v4552 = vpop.f32.mrf.mxu0
      %4553 = vmatprep.mubr.f32.mxu0 0.0
      %4554 = vmatmul.mubr.f32.gmra.mxu0 %v4273
      %v4555 = vpop.f32.mrf.mxu0
      %v4556 = vadd.f32 0.0, %v4555
      %v4557 = vpop.f32.mrf.mxu0
      %4558 = vmatprep.mubr.f32.mxu0 0.0
      %4559 = vmatmul.mubr.f32.gmra.mxu0 %v4276
      %v4560 = vpop.f32.mrf.mxu0
      %v4561 = vadd.f32 0.0, %v4560
      %v4562 = vpop.f32.mrf.mxu0
      %4563 = vmatprep.mubr.f32.mxu0 0.0
      %4564 = vmatmul.mubr.f32.gmra.mxu0 %v4279
      %v4565 = vpop.f32.mrf.mxu0
      %v4566 = vadd.f32 0.0, %v4565
      %v4567 = vpop.f32.mrf.mxu0
      %4568 = vmatprep.mubr.f32.mxu0 0.0
      %4569 = vmatmul.mubr.f32.gmra.mxu0 %v4282
      %v4570 = vpop.f32.mrf.mxu0
      %v4571 = vadd.f32 0.0, %v4570
      %v4572 = vpop.f32.mrf.mxu0
      %4573 = vmatprep.mubr.f32.mxu0 0.0
      %4574 = vmatmul.mubr.f32.gmra.mxu0 %v4285
      %v4575 = vpop.f32.mrf.mxu0
      %v4576 = vadd.f32 0.0, %v4575
      %v4577 = vpop.f32.mrf.mxu0
      %4578 = vmatprep.mubr.f32.mxu0 0.0
      %4579 = vmatmul.mubr.f32.gmra.mxu0 %v4288
      %v4580 = vpop.f32.mrf.mxu0
      %v4581 = vadd.f32 0.0, %v4580
      %v4582 = vpop.f32.mrf.mxu0
      %4583 = vmatprep.mubr.f32.mxu0 0.0
      %4584 = vmatmul.mubr.f32.gmra.mxu0 %v4291
      %v4585 = vpop.f32.mrf.mxu0
      %v4586 = vadd.f32 0.0, %v4585
      %v4587 = vpop.f32.mrf.mxu0
      %4588 = vmatprep.mubr.f32.mxu0 0.0
      %4589 = vmatmul.mubr.f32.gmra.mxu0 %v4294
      %v4590 = vpop.f32.mrf.mxu0
      %v4591 = vadd.f32 0.0, %v4590
      %v4592 = vpop.f32.mrf.mxu0
      %4593 = vmatprep.mubr.f32.mxu0 0.0
      %4594 = vmatmul.mubr.f32.gmra.mxu0 %v4297
      %v4595 = vpop.f32.mrf.mxu0
      %v4596 = vadd.f32 0.0, %v4595
      %v4597 = vpop.f32.mrf.mxu0
      %4598 = vmatprep.mubr.f32.mxu0 0.0
      %4599 = vmatmul.mubr.f32.gmra.mxu0 %v4300
      %v4600 = vpop.f32.mrf.mxu0
      %v4601 = vadd.f32 0.0, %v4600
      %v4602 = vpop.f32.mrf.mxu0
      %4603 = vmatprep.mubr.f32.mxu0 0.0
      %4604 = vmatmul.mubr.f32.gmra.mxu0 %v4303
      %v4605 = vpop.f32.mrf.mxu0
      %v4606 = vadd.f32 0.0, %v4605
      %v4607 = vpop.f32.mrf.mxu0
      %4608 = vmatprep.mubr.f32.mxu0 0.0
      %4609 = vmatmul.mubr.f32.gmra.mxu0 %v4306
      %v4610 = vpop.f32.mrf.mxu0
      %v4611 = vadd.f32 0.0, %v4610
      %v4612 = vpop.f32.mrf.mxu0
      %4613 = vmatprep.mubr.f32.mxu0 0.0
      %4614 = vmatmul.mubr.f32.gmra.mxu0 %v4309
      %v4615 = vpop.f32.mrf.mxu0
      %v4616 = vadd.f32 0.0, %v4615
      %v4617 = vpop.f32.mrf.mxu0
      %4618 = vdwg.mxu0
      %v4619 = vadd.f32 %v4069, %v4381
      %v4620 = vadd.f32 %v4070, %v4386
      %v4621 = vadd.f32 %v4071, %v4391
      %v4622 = vadd.f32 %v4072, %v4396
      %v4623 = vadd.f32 %v4073, %v4401
      %v4624 = vadd.f32 %v4074, %v4406
      %v4625 = vadd.f32 %v4075, %v4411
      %v4626 = vadd.f32 %v4076, %v4416
      %v4627 = vadd.f32 %v4077, %v4421
      %v4628 = vadd.f32 %v4078, %v4426
      %v4629 = vadd.f32 %v4079, %v4431
      %v4630 = vadd.f32 %v4080, %v4436
      %v4631 = vadd.f32 %v4081, %v4441
      %v4632 = vadd.f32 %v4082, %v4446
      %v4633 = vadd.f32 %v4083, %v4451
      %v4634 = vadd.f32 %v4084, %v4456
      %v4635 = vadd.f32 %v4085, %v4461
      %v4636 = vadd.f32 %v4086, %v4466
      %v4637 = vadd.f32 %v4087, %v4471
      %v4638 = vadd.f32 %v4088, %v4476
      %v4639 = vadd.f32 %v4089, %v4481
      %v4640 = vadd.f32 %v4090, %v4486
      %v4641 = vadd.f32 %v4091, %v4491
      %v4642 = vadd.f32 %v4092, %v4496
      %v4643 = vadd.f32 %v4093, %v4501
      %v4644 = vadd.f32 %v4094, %v4506
      %v4645 = vadd.f32 %v4095, %v4511
      %v4646 = vadd.f32 %v4096, %v4516
      %v4647 = vadd.f32 %v4097, %v4521
      %v4648 = vadd.f32 %v4098, %v4526
      %v4649 = vadd.f32 %v4099, %v4531
      %v4650 = vadd.f32 %v4100, %v4536
      %v4651 = vadd.f32 %v4101, %v4541
      %v4652 = vadd.f32 %v4102, %v4546
      %v4653 = vadd.f32 %v4103, %v4551
      %v4654 = vadd.f32 %v4104, %v4556
      %v4655 = vadd.f32 %v4105, %v4561
      %v4656 = vadd.f32 %v4106, %v4566
      %v4657 = vadd.f32 %v4107, %v4571
      %v4658 = vadd.f32 %v4108, %v4576
      %v4659 = vadd.f32 %v4109, %v4581
      %v4660 = vadd.f32 %v4110, %v4586
      %v4661 = vadd.f32 %v4111, %v4591
      %v4662 = vadd.f32 %v4112, %v4596
      %v4663 = vadd.f32 %v4113, %v4601
      %v4664 = vadd.f32 %v4114, %v4606
      %v4665 = vadd.f32 %v4115, %v4611
      %v4666 = vadd.f32 %v4116, %v4616
      %4667 = vst [vmem:[#allocation2] sm:$0xff] %v4619
      %4668 = vst [vmem:[#allocation2 + $0x8] sm:$0xff] %v4620
      %4669 = vst [vmem:[#allocation2 + $0x10] sm:$0xff] %v4621
      %4670 = vst [vmem:[#allocation2 + $0x18] sm:$0xff] %v4622
      %4671 = vst [vmem:[#allocation2 + $0x20] sm:$0xff] %v4623
      %4672 = vst [vmem:[#allocation2 + $0x28] sm:$0xff] %v4624
      %4673 = vst [vmem:[#allocation2 + $0x30] sm:$0xff] %v4625
      %4674 = vst [vmem:[#allocation2 + $0x38] sm:$0xff] %v4626
      %4675 = vst [vmem:[#allocation2 + $0x40] sm:$0xff] %v4627
      %4676 = vst [vmem:[#allocation2 + $0x48] sm:$0xff] %v4628
      %4677 = vst [vmem:[#allocation2 + $0x50] sm:$0xff] %v4629
      %4678 = vst [vmem:[#allocation2 + $0x58] sm:$0xff] %v4630
      %4679 = vst [vmem:[#allocation2 + $0x60] sm:$0xff] %v4631
      %4680 = vst [vmem:[#allocation2 + $0x68] sm:$0xff] %v4632
      %4681 = vst [vmem:[#allocation2 + $0x70] sm:$0xff] %v4633
      %4682 = vst [vmem:[#allocation2 + $0x78] sm:$0xff] %v4634
      %4683 = vst [vmem:[#allocation2 + $0x80] sm:$0xff] %v4635
      %4684 = vst [vmem:[#allocation2 + $0x88] sm:$0xff] %v4636
      %4685 = vst [vmem:[#allocation2 + $0x90] sm:$0xff] %v4637
      %4686 = vst [vmem:[#allocation2 + $0x98] sm:$0xff] %v4638
      %4687 = vst [vmem:[#allocation2 + $0xa0] sm:$0xff] %v4639
      %4688 = vst [vmem:[#allocation2 + $0xa8] sm:$0xff] %v4640
      %4689 = vst [vmem:[#allocation2 + $0xb0] sm:$0xff] %v4641
      %4690 = vst [vmem:[#allocation2 + $0xb8] sm:$0xff] %v4642
      %4691 = vst [vmem:[#allocation2 + $0xc0] sm:$0xff] %v4643
      %4692 = vst [vmem:[#allocation2 + $0xc8] sm:$0xff] %v4644
      %4693 = vst [vmem:[#allocation2 + $0xd0] sm:$0xff] %v4645
      %4694 = vst [vmem:[#allocation2 + $0xd8] sm:$0xff] %v4646
      %4695 = vst [vmem:[#allocation2 + $0xe0] sm:$0xff] %v4647
      %4696 = vst [vmem:[#allocation2 + $0xe8] sm:$0xff] %v4648
      %4697 = vst [vmem:[#allocation2 + $0xf0] sm:$0xff] %v4649
      %4698 = vst [vmem:[#allocation2 + $0xf8] sm:$0xff] %v4650
      %4699 = vst [vmem:[#allocation2 + $0x100] sm:$0xff] %v4651
      %4700 = vst [vmem:[#allocation2 + $0x108] sm:$0xff] %v4652
      %4701 = vst [vmem:[#allocation2 + $0x110] sm:$0xff] %v4653
      %4702 = vst [vmem:[#allocation2 + $0x118] sm:$0xff] %v4654
      %4703 = vst [vmem:[#allocation2 + $0x120] sm:$0xff] %v4655
      %4704 = vst [vmem:[#allocation2 + $0x128] sm:$0xff] %v4656
      %4705 = vst [vmem:[#allocation2 + $0x130] sm:$0xff] %v4657
      %4706 = vst [vmem:[#allocation2 + $0x138] sm:$0xff] %v4658
      %4707 = vst [vmem:[#allocation2 + $0x140] sm:$0xff] %v4659
      %4708 = vst [vmem:[#allocation2 + $0x148] sm:$0xff] %v4660
      %4709 = vst [vmem:[#allocation2 + $0x150] sm:$0xff] %v4661
      %4710 = vst [vmem:[#allocation2 + $0x158] sm:$0xff] %v4662
      %4711 = vst [vmem:[#allocation2 + $0x160] sm:$0xff] %v4663
      %4712 = vst [vmem:[#allocation2 + $0x168] sm:$0xff] %v4664
      %4713 = vst [vmem:[#allocation2 + $0x170] sm:$0xff] %v4665
      %4714 = vst [vmem:[#allocation2 + $0x178] sm:$0xff] %v4666
      %v4715 = vld [vmem:[#allocation2] sm:$0xff]
      %v4716 = vld [vmem:[#allocation2 + $0x8] sm:$0xff]
      %v4717 = vld [vmem:[#allocation2 + $0x10] sm:$0xff]
      %v4718 = vld [vmem:[#allocation2 + $0x18] sm:$0xff]
      %v4719 = vld [vmem:[#allocation2 + $0x20] sm:$0xff]
      %v4720 = vld [vmem:[#allocation2 + $0x28] sm:$0xff]
      %v4721 = vld [vmem:[#allocation2 + $0x30] sm:$0xff]
      %v4722 = vld [vmem:[#allocation2 + $0x38] sm:$0xff]
      %v4723 = vld [vmem:[#allocation2 + $0x40] sm:$0xff]
      %v4724 = vld [vmem:[#allocation2 + $0x48] sm:$0xff]
      %v4725 = vld [vmem:[#allocation2 + $0x50] sm:$0xff]
      %v4726 = vld [vmem:[#allocation2 + $0x58] sm:$0xff]
      %v4727 = vld [vmem:[#allocation2 + $0x60] sm:$0xff]
      %v4728 = vld [vmem:[#allocation2 + $0x68] sm:$0xff]
      %v4729 = vld [vmem:[#allocation2 + $0x70] sm:$0xff]
      %v4730 = vld [vmem:[#allocation2 + $0x78] sm:$0xff]
      %v4731 = vld [vmem:[#allocation2 + $0x80] sm:$0xff]
      %v4732 = vld [vmem:[#allocation2 + $0x88] sm:$0xff]
      %v4733 = vld [vmem:[#allocation2 + $0x90] sm:$0xff]
      %v4734 = vld [vmem:[#allocation2 + $0x98] sm:$0xff]
      %v4735 = vld [vmem:[#allocation2 + $0xa0] sm:$0xff]
      %v4736 = vld [vmem:[#allocation2 + $0xa8] sm:$0xff]
      %v4737 = vld [vmem:[#allocation2 + $0xb0] sm:$0xff]
      %v4738 = vld [vmem:[#allocation2 + $0xb8] sm:$0xff]
      %v4739 = vld [vmem:[#allocation2 + $0xc0] sm:$0xff]
      %v4740 = vld [vmem:[#allocation2 + $0xc8] sm:$0xff]
      %v4741 = vld [vmem:[#allocation2 + $0xd0] sm:$0xff]
      %v4742 = vld [vmem:[#allocation2 + $0xd8] sm:$0xff]
      %v4743 = vld [vmem:[#allocation2 + $0xe0] sm:$0xff]
      %v4744 = vld [vmem:[#allocation2 + $0xe8] sm:$0xff]
      %v4745 = vld [vmem:[#allocation2 + $0xf0] sm:$0xff]
      %v4746 = vld [vmem:[#allocation2 + $0xf8] sm:$0xff]
      %v4747 = vld [vmem:[#allocation2 + $0x100] sm:$0xff]
      %v4748 = vld [vmem:[#allocation2 + $0x108] sm:$0xff]
      %v4749 = vld [vmem:[#allocation2 + $0x110] sm:$0xff]
      %v4750 = vld [vmem:[#allocation2 + $0x118] sm:$0xff]
      %v4751 = vld [vmem:[#allocation2 + $0x120] sm:$0xff]
      %v4752 = vld [vmem:[#allocation2 + $0x128] sm:$0xff]
      %v4753 = vld [vmem:[#allocation2 + $0x130] sm:$0xff]
      %v4754 = vld [vmem:[#allocation2 + $0x138] sm:$0xff]
      %v4755 = vld [vmem:[#allocation2 + $0x140] sm:$0xff]
      %v4756 = vld [vmem:[#allocation2 + $0x148] sm:$0xff]
      %v4757 = vld [vmem:[#allocation2 + $0x150] sm:$0xff]
      %v4758 = vld [vmem:[#allocation2 + $0x158] sm:$0xff]
      %v4759 = vld [vmem:[#allocation2 + $0x160] sm:$0xff]
      %v4760 = vld [vmem:[#allocation2 + $0x168] sm:$0xff]
      %v4761 = vld [vmem:[#allocation2 + $0x170] sm:$0xff]
      %v4762 = vld [vmem:[#allocation2 + $0x178] sm:$0xff]
      %v4763 = vld [vmem:[%s138 + $0x31] sm:$0xff]
      %v4764 = vld [vmem:[%s138 + $0x39] sm:$0xff]
      %v4765 = vld [vmem:[%s138 + $0x41] sm:$0xff]
      %v4766 = vld [vmem:[%s138 + $0x49] sm:$0xff]
      %v4767 = vld [vmem:[%s138 + $0x51] sm:$0xff]
      %v4768 = vld [vmem:[%s138 + $0x59] sm:$0xff]
      %v4769 = vld [vmem:[%s138 + $0x61] sm:$0xff]
      %v4770 = vld [vmem:[%s138 + $0x69] sm:$0xff]
      %v4771 = vld [vmem:[%s138 + $0x71] sm:$0xff]
      %v4772 = vld [vmem:[%s138 + $0x79] sm:$0xff]
      %v4773 = vld [vmem:[%s138 + $0x81] sm:$0xff]
      %v4774 = vld [vmem:[%s138 + $0x89] sm:$0xff]
      %v4775 = vld [vmem:[%s138 + $0x91] sm:$0xff]
      %v4776 = vld [vmem:[%s138 + $0x99] sm:$0xff]
      %v4777 = vld [vmem:[%s138 + $0xa1] sm:$0xff]
      %v4778 = vld [vmem:[%s138 + $0xa9] sm:$0xff]
      %v4779 = vld [vmem:[%s138 + $0xb1] sm:$0xff]
      %v4780 = vld [vmem:[%s138 + $0xb9] sm:$0xff]
      %v4781 = vld [vmem:[%s138 + $0xc1] sm:$0xff]
      %v4782 = vld [vmem:[%s138 + $0xc9] sm:$0xff]
      %v4783 = vld [vmem:[%s138 + $0xd1] sm:$0xff]
      %v4784 = vld [vmem:[%s138 + $0xd9] sm:$0xff]
      %v4785 = vld [vmem:[%s138 + $0xe1] sm:$0xff]
      %v4786 = vld [vmem:[%s138 + $0xe9] sm:$0xff]
      %v4787 = vld [vmem:[%s138 + $0xf1] sm:$0xff]
      %v4788 = vld [vmem:[%s138 + $0xf9] sm:$0xff]
      %v4789 = vld [vmem:[%s138 + $0x101] sm:$0xff]
      %v4790 = vld [vmem:[%s138 + $0x109] sm:$0xff]
      %v4791 = vld [vmem:[%s138 + $0x111] sm:$0xff]
      %v4792 = vld [vmem:[%s138 + $0x119] sm:$0xff]
      %v4793 = vld [vmem:[%s138 + $0x121] sm:$0xff]
      %v4794 = vld [vmem:[%s138 + $0x129] sm:$0xff]
      %v4795 = vld [vmem:[%s138 + $0x131] sm:$0xff]
      %v4796 = vld [vmem:[%s138 + $0x139] sm:$0xff]
      %v4797 = vld [vmem:[%s138 + $0x141] sm:$0xff]
      %v4798 = vld [vmem:[%s138 + $0x149] sm:$0xff]
      %v4799 = vld [vmem:[%s138 + $0x151] sm:$0xff]
      %v4800 = vld [vmem:[%s138 + $0x159] sm:$0xff]
      %v4801 = vld [vmem:[%s138 + $0x161] sm:$0xff]
      %v4802 = vld [vmem:[%s138 + $0x169] sm:$0xff]
      %v4803 = vld [vmem:[%s138 + $0x171] sm:$0xff]
      %v4804 = vld [vmem:[%s138 + $0x179] sm:$0xff]
      %v4805 = vld [vmem:[%s138 + $0x181] sm:$0xff]
      %v4806 = vld [vmem:[%s138 + $0x189] sm:$0xff]
      %v4807 = vld [vmem:[%s138 + $0x191] sm:$0xff]
      %v4808 = vld [vmem:[%s138 + $0x199] sm:$0xff]
      %v4809 = vld [vmem:[%s138 + $0x1a1] sm:$0xff]
      %v4810 = vld [vmem:[%s138 + $0x1a9] sm:$0xff]
      %s4811 = scalar_lea.vmem %s1, 28
      %v4812 = vld [vmem:[%s4811] sm:$0xf]
      %v4814 = vsel %vm289, %v4763, 0
      %v4817 = vsel %vm289, %v4764, 0
      %v4820 = vsel %vm289, %v4765, 0
      %v4823 = vsel %vm289, %v4766, 0
      %v4826 = vsel %vm289, %v4767, 0
      %v4829 = vsel %vm289, %v4768, 0
      %v4832 = vsel %vm289, %v4769, 0
      %v4835 = vsel %vm289, %v4770, 0
      %v4838 = vsel %vm289, %v4771, 0
      %v4841 = vsel %vm289, %v4772, 0
      %v4844 = vsel %vm289, %v4773, 0
      %v4847 = vsel %vm289, %v4774, 0
      %v4850 = vsel %vm289, %v4775, 0
      %v4853 = vsel %vm289, %v4776, 0
      %v4856 = vsel %vm289, %v4777, 0
      %v4859 = vsel %vm289, %v4778, 0
      %v4862 = vsel %vm289, %v4779, 0
      %v4865 = vsel %vm289, %v4780, 0
      %v4868 = vsel %vm289, %v4781, 0
      %v4871 = vsel %vm289, %v4782, 0
      %v4874 = vsel %vm289, %v4783, 0
      %v4877 = vsel %vm289, %v4784, 0
      %v4880 = vsel %vm289, %v4785, 0
      %v4883 = vsel %vm289, %v4786, 0
      %v4886 = vsel %vm289, %v4787, 0
      %v4889 = vsel %vm289, %v4788, 0
      %v4892 = vsel %vm289, %v4789, 0
      %v4895 = vsel %vm289, %v4790, 0
      %v4898 = vsel %vm289, %v4791, 0
      %v4901 = vsel %vm289, %v4792, 0
      %v4904 = vsel %vm289, %v4793, 0
      %v4907 = vsel %vm289, %v4794, 0
      %v4910 = vsel %vm289, %v4795, 0
      %v4913 = vsel %vm289, %v4796, 0
      %v4916 = vsel %vm289, %v4797, 0
      %v4919 = vsel %vm289, %v4798, 0
      %v4922 = vsel %vm289, %v4799, 0
      %v4925 = vsel %vm289, %v4800, 0
      %v4928 = vsel %vm289, %v4801, 0
      %v4931 = vsel %vm289, %v4802, 0
      %v4934 = vsel %vm289, %v4803, 0
      %v4937 = vsel %vm289, %v4804, 0
      %v4940 = vsel %vm289, %v4805, 0
      %v4943 = vsel %vm289, %v4806, 0
      %v4946 = vsel %vm289, %v4807, 0
      %v4949 = vsel %vm289, %v4808, 0
      %v4952 = vsel %vm289, %v4809, 0
      %v4955 = vsel %vm289, %v4810, 0
      %v4958 = vsel %vm434, %v4812, 0
      %4960 = vmatprep.subr.mxu0 0.0
      %4961 = vmatpush1.msra.mxu0 0.0
      %4962 = vmatprep.subr.mxu0 0.0
      %4963 = vmatpush1.msra.mxu0 0.0
      %4964 = vmatprep.subr.mxu0 0.0
      %4965 = vmatpush1.msra.mxu0 0.0
      %4966 = vmatprep.subr.mxu0 0.0
      %4967 = vmatpush1.msra.mxu0 0.0
      %4968 = vmatprep.subr.mxu0 0.0
      %4969 = vmatpush1.msra.mxu0 0.0
      %4970 = vmatprep.subr.mxu0 0.0
      %4971 = vmatpush1.msra.mxu0 0.0
      %4972 = vmatprep.subr.mxu0 0.0
      %4973 = vmatpush1.msra.mxu0 0.0
      %4974 = vmatprep.subr.mxu0 0.0
      %4975 = vmatpush1.msra.mxu0 0.0
      %4976 = vmatprep.subr.mxu0 0.0
      %4977 = vmatpush1.msra.mxu0 0.0
      %4978 = vmatprep.subr.mxu0 0.0
      %4979 = vmatpush1.msra.mxu0 0.0
      %4980 = vmatprep.subr.mxu0 0.0
      %4981 = vmatpush1.msra.mxu0 0.0
      %4982 = vmatprep.subr.mxu0 0.0
      %4983 = vmatpush1.msra.mxu0 0.0
      %4984 = vmatprep.subr.mxu0 0.0
      %4985 = vmatpush1.msra.mxu0 0.0
      %4986 = vmatprep.subr.mxu0 0.0
      %4987 = vmatpush1.msra.mxu0 0.0
      %4988 = vmatprep.subr.mxu0 0.0
      %4989 = vmatpush1.msra.mxu0 0.0
      %4990 = vmatprep.subr.mxu0 0.0
      %4991 = vmatpush1.msra.mxu0 %v4958
      %4992 = vmatprep.subr.mxu0 0.0
      %4993 = vmatpush2.msra.mxu0 0.0
      %4994 = vmatprep.subr.mxu0 0.0
      %4995 = vmatpush2.msra.mxu0 0.0
      %4996 = vmatprep.subr.mxu0 0.0
      %4997 = vmatpush2.msra.mxu0 0.0
      %4998 = vmatprep.subr.mxu0 0.0
      %4999 = vmatpush2.msra.mxu0 0.0
      %5000 = vmatprep.subr.mxu0 0.0
      %5001 = vmatpush2.msra.mxu0 0.0
      %5002 = vmatprep.subr.mxu0 0.0
      %5003 = vmatpush2.msra.mxu0 0.0
      %5004 = vmatprep.subr.mxu0 0.0
      %5005 = vmatpush2.msra.mxu0 0.0
      %5006 = vmatprep.subr.mxu0 0.0
      %5007 = vmatpush2.msra.mxu0 0.0
      %5008 = vmatprep.subr.mxu0 0.0
      %5009 = vmatpush2.msra.mxu0 0.0
      %5010 = vmatprep.subr.mxu0 0.0
      %5011 = vmatpush2.msra.mxu0 0.0
      %5012 = vmatprep.subr.mxu0 0.0
      %5013 = vmatpush2.msra.mxu0 0.0
      %5014 = vmatprep.subr.mxu0 0.0
      %5015 = vmatpush2.msra.mxu0 0.0
      %5016 = vmatprep.subr.mxu0 0.0
      %5017 = vmatpush2.msra.mxu0 0.0
      %5018 = vmatprep.subr.mxu0 0.0
      %5019 = vmatpush2.msra.mxu0 0.0
      %5020 = vmatprep.subr.mxu0 0.0
      %5021 = vmatpush2.msra.mxu0 0.0
      %5022 = vmatprep.subr.mxu0 0.0
      %5023 = vmatpush2.msra.mxu0 0.0
      %5024 = vmatprep.mubr.f32.mxu0 0.0
      %5025 = vmatmul.mubr.f32.gmra.mxu0 %v4814
      %v5026 = vpop.f32.mrf.mxu0
      %v5027 = vadd.f32 0.0, %v5026
      %v5028 = vpop.f32.mrf.mxu0
      %5029 = vmatprep.mubr.f32.mxu0 0.0
      %5030 = vmatmul.mubr.f32.gmra.mxu0 %v4817
      %v5031 = vpop.f32.mrf.mxu0
      %v5032 = vadd.f32 0.0, %v5031
      %v5033 = vpop.f32.mrf.mxu0
      %5034 = vmatprep.mubr.f32.mxu0 0.0
      %5035 = vmatmul.mubr.f32.gmra.mxu0 %v4820
      %v5036 = vpop.f32.mrf.mxu0
      %v5037 = vadd.f32 0.0, %v5036
      %v5038 = vpop.f32.mrf.mxu0
      %5039 = vmatprep.mubr.f32.mxu0 0.0
      %5040 = vmatmul.mubr.f32.gmra.mxu0 %v4823
      %v5041 = vpop.f32.mrf.mxu0
      %v5042 = vadd.f32 0.0, %v5041
      %v5043 = vpop.f32.mrf.mxu0
      %5044 = vmatprep.mubr.f32.mxu0 0.0
      %5045 = vmatmul.mubr.f32.gmra.mxu0 %v4826
      %v5046 = vpop.f32.mrf.mxu0
      %v5047 = vadd.f32 0.0, %v5046
      %v5048 = vpop.f32.mrf.mxu0
      %5049 = vmatprep.mubr.f32.mxu0 0.0
      %5050 = vmatmul.mubr.f32.gmra.mxu0 %v4829
      %v5051 = vpop.f32.mrf.mxu0
      %v5052 = vadd.f32 0.0, %v5051
      %v5053 = vpop.f32.mrf.mxu0
      %5054 = vmatprep.mubr.f32.mxu0 0.0
      %5055 = vmatmul.mubr.f32.gmra.mxu0 %v4832
      %v5056 = vpop.f32.mrf.mxu0
      %v5057 = vadd.f32 0.0, %v5056
      %v5058 = vpop.f32.mrf.mxu0
      %5059 = vmatprep.mubr.f32.mxu0 0.0
      %5060 = vmatmul.mubr.f32.gmra.mxu0 %v4835
      %v5061 = vpop.f32.mrf.mxu0
      %v5062 = vadd.f32 0.0, %v5061
      %v5063 = vpop.f32.mrf.mxu0
      %5064 = vmatprep.mubr.f32.mxu0 0.0
      %5065 = vmatmul.mubr.f32.gmra.mxu0 %v4838
      %v5066 = vpop.f32.mrf.mxu0
      %v5067 = vadd.f32 0.0, %v5066
      %v5068 = vpop.f32.mrf.mxu0
      %5069 = vmatprep.mubr.f32.mxu0 0.0
      %5070 = vmatmul.mubr.f32.gmra.mxu0 %v4841
      %v5071 = vpop.f32.mrf.mxu0
      %v5072 = vadd.f32 0.0, %v5071
      %v5073 = vpop.f32.mrf.mxu0
      %5074 = vmatprep.mubr.f32.mxu0 0.0
      %5075 = vmatmul.mubr.f32.gmra.mxu0 %v4844
      %v5076 = vpop.f32.mrf.mxu0
      %v5077 = vadd.f32 0.0, %v5076
      %v5078 = vpop.f32.mrf.mxu0
      %5079 = vmatprep.mubr.f32.mxu0 0.0
      %5080 = vmatmul.mubr.f32.gmra.mxu0 %v4847
      %v5081 = vpop.f32.mrf.mxu0
      %v5082 = vadd.f32 0.0, %v5081
      %v5083 = vpop.f32.mrf.mxu0
      %5084 = vmatprep.mubr.f32.mxu0 0.0
      %5085 = vmatmul.mubr.f32.gmra.mxu0 %v4850
      %v5086 = vpop.f32.mrf.mxu0
      %v5087 = vadd.f32 0.0, %v5086
      %v5088 = vpop.f32.mrf.mxu0
      %5089 = vmatprep.mubr.f32.mxu0 0.0
      %5090 = vmatmul.mubr.f32.gmra.mxu0 %v4853
      %v5091 = vpop.f32.mrf.mxu0
      %v5092 = vadd.f32 0.0, %v5091
      %v5093 = vpop.f32.mrf.mxu0
      %5094 = vmatprep.mubr.f32.mxu0 0.0
      %5095 = vmatmul.mubr.f32.gmra.mxu0 %v4856
      %v5096 = vpop.f32.mrf.mxu0
      %v5097 = vadd.f32 0.0, %v5096
      %v5098 = vpop.f32.mrf.mxu0
      %5099 = vmatprep.mubr.f32.mxu0 0.0
      %5100 = vmatmul.mubr.f32.gmra.mxu0 %v4859
      %v5101 = vpop.f32.mrf.mxu0
      %v5102 = vadd.f32 0.0, %v5101
      %v5103 = vpop.f32.mrf.mxu0
      %5104 = vmatprep.mubr.f32.mxu0 0.0
      %5105 = vmatmul.mubr.f32.gmra.mxu0 %v4862
      %v5106 = vpop.f32.mrf.mxu0
      %v5107 = vadd.f32 0.0, %v5106
      %v5108 = vpop.f32.mrf.mxu0
      %5109 = vmatprep.mubr.f32.mxu0 0.0
      %5110 = vmatmul.mubr.f32.gmra.mxu0 %v4865
      %v5111 = vpop.f32.mrf.mxu0
      %v5112 = vadd.f32 0.0, %v5111
      %v5113 = vpop.f32.mrf.mxu0
      %5114 = vmatprep.mubr.f32.mxu0 0.0
      %5115 = vmatmul.mubr.f32.gmra.mxu0 %v4868
      %v5116 = vpop.f32.mrf.mxu0
      %v5117 = vadd.f32 0.0, %v5116
      %v5118 = vpop.f32.mrf.mxu0
      %5119 = vmatprep.mubr.f32.mxu0 0.0
      %5120 = vmatmul.mubr.f32.gmra.mxu0 %v4871
      %v5121 = vpop.f32.mrf.mxu0
      %v5122 = vadd.f32 0.0, %v5121
      %v5123 = vpop.f32.mrf.mxu0
      %5124 = vmatprep.mubr.f32.mxu0 0.0
      %5125 = vmatmul.mubr.f32.gmra.mxu0 %v4874
      %v5126 = vpop.f32.mrf.mxu0
      %v5127 = vadd.f32 0.0, %v5126
      %v5128 = vpop.f32.mrf.mxu0
      %5129 = vmatprep.mubr.f32.mxu0 0.0
      %5130 = vmatmul.mubr.f32.gmra.mxu0 %v4877
      %v5131 = vpop.f32.mrf.mxu0
      %v5132 = vadd.f32 0.0, %v5131
      %v5133 = vpop.f32.mrf.mxu0
      %5134 = vmatprep.mubr.f32.mxu0 0.0
      %5135 = vmatmul.mubr.f32.gmra.mxu0 %v4880
      %v5136 = vpop.f32.mrf.mxu0
      %v5137 = vadd.f32 0.0, %v5136
      %v5138 = vpop.f32.mrf.mxu0
      %5139 = vmatprep.mubr.f32.mxu0 0.0
      %5140 = vmatmul.mubr.f32.gmra.mxu0 %v4883
      %v5141 = vpop.f32.mrf.mxu0
      %v5142 = vadd.f32 0.0, %v5141
      %v5143 = vpop.f32.mrf.mxu0
      %5144 = vmatprep.mubr.f32.mxu0 0.0
      %5145 = vmatmul.mubr.f32.gmra.mxu0 %v4886
      %v5146 = vpop.f32.mrf.mxu0
      %v5147 = vadd.f32 0.0, %v5146
      %v5148 = vpop.f32.mrf.mxu0
      %5149 = vmatprep.mubr.f32.mxu0 0.0
      %5150 = vmatmul.mubr.f32.gmra.mxu0 %v4889
      %v5151 = vpop.f32.mrf.mxu0
      %v5152 = vadd.f32 0.0, %v5151
      %v5153 = vpop.f32.mrf.mxu0
      %5154 = vmatprep.mubr.f32.mxu0 0.0
      %5155 = vmatmul.mubr.f32.gmra.mxu0 %v4892
      %v5156 = vpop.f32.mrf.mxu0
      %v5157 = vadd.f32 0.0, %v5156
      %v5158 = vpop.f32.mrf.mxu0
      %5159 = vmatprep.mubr.f32.mxu0 0.0
      %5160 = vmatmul.mubr.f32.gmra.mxu0 %v4895
      %v5161 = vpop.f32.mrf.mxu0
      %v5162 = vadd.f32 0.0, %v5161
      %v5163 = vpop.f32.mrf.mxu0
      %5164 = vmatprep.mubr.f32.mxu0 0.0
      %5165 = vmatmul.mubr.f32.gmra.mxu0 %v4898
      %v5166 = vpop.f32.mrf.mxu0
      %v5167 = vadd.f32 0.0, %v5166
      %v5168 = vpop.f32.mrf.mxu0
      %5169 = vmatprep.mubr.f32.mxu0 0.0
      %5170 = vmatmul.mubr.f32.gmra.mxu0 %v4901
      %v5171 = vpop.f32.mrf.mxu0
      %v5172 = vadd.f32 0.0, %v5171
      %v5173 = vpop.f32.mrf.mxu0
      %5174 = vmatprep.mubr.f32.mxu0 0.0
      %5175 = vmatmul.mubr.f32.gmra.mxu0 %v4904
      %v5176 = vpop.f32.mrf.mxu0
      %v5177 = vadd.f32 0.0, %v5176
      %v5178 = vpop.f32.mrf.mxu0
      %5179 = vmatprep.mubr.f32.mxu0 0.0
      %5180 = vmatmul.mubr.f32.gmra.mxu0 %v4907
      %v5181 = vpop.f32.mrf.mxu0
      %v5182 = vadd.f32 0.0, %v5181
      %v5183 = vpop.f32.mrf.mxu0
      %5184 = vmatprep.mubr.f32.mxu0 0.0
      %5185 = vmatmul.mubr.f32.gmra.mxu0 %v4910
      %v5186 = vpop.f32.mrf.mxu0
      %v5187 = vadd.f32 0.0, %v5186
      %v5188 = vpop.f32.mrf.mxu0
      %5189 = vmatprep.mubr.f32.mxu0 0.0
      %5190 = vmatmul.mubr.f32.gmra.mxu0 %v4913
      %v5191 = vpop.f32.mrf.mxu0
      %v5192 = vadd.f32 0.0, %v5191
      %v5193 = vpop.f32.mrf.mxu0
      %5194 = vmatprep.mubr.f32.mxu0 0.0
      %5195 = vmatmul.mubr.f32.gmra.mxu0 %v4916
      %v5196 = vpop.f32.mrf.mxu0
      %v5197 = vadd.f32 0.0, %v5196
      %v5198 = vpop.f32.mrf.mxu0
      %5199 = vmatprep.mubr.f32.mxu0 0.0
      %5200 = vmatmul.mubr.f32.gmra.mxu0 %v4919
      %v5201 = vpop.f32.mrf.mxu0
      %v5202 = vadd.f32 0.0, %v5201
      %v5203 = vpop.f32.mrf.mxu0
      %5204 = vmatprep.mubr.f32.mxu0 0.0
      %5205 = vmatmul.mubr.f32.gmra.mxu0 %v4922
      %v5206 = vpop.f32.mrf.mxu0
      %v5207 = vadd.f32 0.0, %v5206
      %v5208 = vpop.f32.mrf.mxu0
      %5209 = vmatprep.mubr.f32.mxu0 0.0
      %5210 = vmatmul.mubr.f32.gmra.mxu0 %v4925
      %v5211 = vpop.f32.mrf.mxu0
      %v5212 = vadd.f32 0.0, %v5211
      %v5213 = vpop.f32.mrf.mxu0
      %5214 = vmatprep.mubr.f32.mxu0 0.0
      %5215 = vmatmul.mubr.f32.gmra.mxu0 %v4928
      %v5216 = vpop.f32.mrf.mxu0
      %v5217 = vadd.f32 0.0, %v5216
      %v5218 = vpop.f32.mrf.mxu0
      %5219 = vmatprep.mubr.f32.mxu0 0.0
      %5220 = vmatmul.mubr.f32.gmra.mxu0 %v4931
      %v5221 = vpop.f32.mrf.mxu0
      %v5222 = vadd.f32 0.0, %v5221
      %v5223 = vpop.f32.mrf.mxu0
      %5224 = vmatprep.mubr.f32.mxu0 0.0
      %5225 = vmatmul.mubr.f32.gmra.mxu0 %v4934
      %v5226 = vpop.f32.mrf.mxu0
      %v5227 = vadd.f32 0.0, %v5226
      %v5228 = vpop.f32.mrf.mxu0
      %5229 = vmatprep.mubr.f32.mxu0 0.0
      %5230 = vmatmul.mubr.f32.gmra.mxu0 %v4937
      %v5231 = vpop.f32.mrf.mxu0
      %v5232 = vadd.f32 0.0, %v5231
      %v5233 = vpop.f32.mrf.mxu0
      %5234 = vmatprep.mubr.f32.mxu0 0.0
      %5235 = vmatmul.mubr.f32.gmra.mxu0 %v4940
      %v5236 = vpop.f32.mrf.mxu0
      %v5237 = vadd.f32 0.0, %v5236
      %v5238 = vpop.f32.mrf.mxu0
      %5239 = vmatprep.mubr.f32.mxu0 0.0
      %5240 = vmatmul.mubr.f32.gmra.mxu0 %v4943
      %v5241 = vpop.f32.mrf.mxu0
      %v5242 = vadd.f32 0.0, %v5241
      %v5243 = vpop.f32.mrf.mxu0
      %5244 = vmatprep.mubr.f32.mxu0 0.0
      %5245 = vmatmul.mubr.f32.gmra.mxu0 %v4946
      %v5246 = vpop.f32.mrf.mxu0
      %v5247 = vadd.f32 0.0, %v5246
      %v5248 = vpop.f32.mrf.mxu0
      %5249 = vmatprep.mubr.f32.mxu0 0.0
      %5250 = vmatmul.mubr.f32.gmra.mxu0 %v4949
      %v5251 = vpop.f32.mrf.mxu0
      %v5252 = vadd.f32 0.0, %v5251
      %v5253 = vpop.f32.mrf.mxu0
      %5254 = vmatprep.mubr.f32.mxu0 0.0
      %5255 = vmatmul.mubr.f32.gmra.mxu0 %v4952
      %v5256 = vpop.f32.mrf.mxu0
      %v5257 = vadd.f32 0.0, %v5256
      %v5258 = vpop.f32.mrf.mxu0
      %5259 = vmatprep.mubr.f32.mxu0 0.0
      %5260 = vmatmul.mubr.f32.gmra.mxu0 %v4955
      %v5261 = vpop.f32.mrf.mxu0
      %v5262 = vadd.f32 0.0, %v5261
      %v5263 = vpop.f32.mrf.mxu0
      %5264 = vdwg.mxu0
      %v5265 = vadd.f32 %v4715, %v5027
      %v5266 = vadd.f32 %v4716, %v5032
      %v5267 = vadd.f32 %v4717, %v5037
      %v5268 = vadd.f32 %v4718, %v5042
      %v5269 = vadd.f32 %v4719, %v5047
      %v5270 = vadd.f32 %v4720, %v5052
      %v5271 = vadd.f32 %v4721, %v5057
      %v5272 = vadd.f32 %v4722, %v5062
      %v5273 = vadd.f32 %v4723, %v5067
      %v5274 = vadd.f32 %v4724, %v5072
      %v5275 = vadd.f32 %v4725, %v5077
      %v5276 = vadd.f32 %v4726, %v5082
      %v5277 = vadd.f32 %v4727, %v5087
      %v5278 = vadd.f32 %v4728, %v5092
      %v5279 = vadd.f32 %v4729, %v5097
      %v5280 = vadd.f32 %v4730, %v5102
      %v5281 = vadd.f32 %v4731, %v5107
      %v5282 = vadd.f32 %v4732, %v5112
      %v5283 = vadd.f32 %v4733, %v5117
      %v5284 = vadd.f32 %v4734, %v5122
      %v5285 = vadd.f32 %v4735, %v5127
      %v5286 = vadd.f32 %v4736, %v5132
      %v5287 = vadd.f32 %v4737, %v5137
      %v5288 = vadd.f32 %v4738, %v5142
      %v5289 = vadd.f32 %v4739, %v5147
      %v5290 = vadd.f32 %v4740, %v5152
      %v5291 = vadd.f32 %v4741, %v5157
      %v5292 = vadd.f32 %v4742, %v5162
      %v5293 = vadd.f32 %v4743, %v5167
      %v5294 = vadd.f32 %v4744, %v5172
      %v5295 = vadd.f32 %v4745, %v5177
      %v5296 = vadd.f32 %v4746, %v5182
      %v5297 = vadd.f32 %v4747, %v5187
      %v5298 = vadd.f32 %v4748, %v5192
      %v5299 = vadd.f32 %v4749, %v5197
      %v5300 = vadd.f32 %v4750, %v5202
      %v5301 = vadd.f32 %v4751, %v5207
      %v5302 = vadd.f32 %v4752, %v5212
      %v5303 = vadd.f32 %v4753, %v5217
      %v5304 = vadd.f32 %v4754, %v5222
      %v5305 = vadd.f32 %v4755, %v5227
      %v5306 = vadd.f32 %v4756, %v5232
      %v5307 = vadd.f32 %v4757, %v5237
      %v5308 = vadd.f32 %v4758, %v5242
      %v5309 = vadd.f32 %v4759, %v5247
      %v5310 = vadd.f32 %v4760, %v5252
      %v5311 = vadd.f32 %v4761, %v5257
      %v5312 = vadd.f32 %v4762, %v5262
      %5313 = vst [vmem:[#allocation2] sm:$0xff] %v5265
      %5314 = vst [vmem:[#allocation2 + $0x8] sm:$0xff] %v5266
      %5315 = vst [vmem:[#allocation2 + $0x10] sm:$0xff] %v5267
      %5316 = vst [vmem:[#allocation2 + $0x18] sm:$0xff] %v5268
      %5317 = vst [vmem:[#allocation2 + $0x20] sm:$0xff] %v5269
      %5318 = vst [vmem:[#allocation2 + $0x28] sm:$0xff] %v5270
      %5319 = vst [vmem:[#allocation2 + $0x30] sm:$0xff] %v5271
      %5320 = vst [vmem:[#allocation2 + $0x38] sm:$0xff] %v5272
      %5321 = vst [vmem:[#allocation2 + $0x40] sm:$0xff] %v5273
      %5322 = vst [vmem:[#allocation2 + $0x48] sm:$0xff] %v5274
      %5323 = vst [vmem:[#allocation2 + $0x50] sm:$0xff] %v5275
      %5324 = vst [vmem:[#allocation2 + $0x58] sm:$0xff] %v5276
      %5325 = vst [vmem:[#allocation2 + $0x60] sm:$0xff] %v5277
      %5326 = vst [vmem:[#allocation2 + $0x68] sm:$0xff] %v5278
      %5327 = vst [vmem:[#allocation2 + $0x70] sm:$0xff] %v5279
      %5328 = vst [vmem:[#allocation2 + $0x78] sm:$0xff] %v5280
      %5329 = vst [vmem:[#allocation2 + $0x80] sm:$0xff] %v5281
      %5330 = vst [vmem:[#allocation2 + $0x88] sm:$0xff] %v5282
      %5331 = vst [vmem:[#allocation2 + $0x90] sm:$0xff] %v5283
      %5332 = vst [vmem:[#allocation2 + $0x98] sm:$0xff] %v5284
      %5333 = vst [vmem:[#allocation2 + $0xa0] sm:$0xff] %v5285
      %5334 = vst [vmem:[#allocation2 + $0xa8] sm:$0xff] %v5286
      %5335 = vst [vmem:[#allocation2 + $0xb0] sm:$0xff] %v5287
      %5336 = vst [vmem:[#allocation2 + $0xb8] sm:$0xff] %v5288
      %5337 = vst [vmem:[#allocation2 + $0xc0] sm:$0xff] %v5289
      %5338 = vst [vmem:[#allocation2 + $0xc8] sm:$0xff] %v5290
      %5339 = vst [vmem:[#allocation2 + $0xd0] sm:$0xff] %v5291
      %5340 = vst [vmem:[#allocation2 + $0xd8] sm:$0xff] %v5292
      %5341 = vst [vmem:[#allocation2 + $0xe0] sm:$0xff] %v5293
      %5342 = vst [vmem:[#allocation2 + $0xe8] sm:$0xff] %v5294
      %5343 = vst [vmem:[#allocation2 + $0xf0] sm:$0xff] %v5295
      %5344 = vst [vmem:[#allocation2 + $0xf8] sm:$0xff] %v5296
      %5345 = vst [vmem:[#allocation2 + $0x100] sm:$0xff] %v5297
      %5346 = vst [vmem:[#allocation2 + $0x108] sm:$0xff] %v5298
      %5347 = vst [vmem:[#allocation2 + $0x110] sm:$0xff] %v5299
      %5348 = vst [vmem:[#allocation2 + $0x118] sm:$0xff] %v5300
      %5349 = vst [vmem:[#allocation2 + $0x120] sm:$0xff] %v5301
      %5350 = vst [vmem:[#allocation2 + $0x128] sm:$0xff] %v5302
      %5351 = vst [vmem:[#allocation2 + $0x130] sm:$0xff] %v5303
      %5352 = vst [vmem:[#allocation2 + $0x138] sm:$0xff] %v5304
      %5353 = vst [vmem:[#allocation2 + $0x140] sm:$0xff] %v5305
      %5354 = vst [vmem:[#allocation2 + $0x148] sm:$0xff] %v5306
      %5355 = vst [vmem:[#allocation2 + $0x150] sm:$0xff] %v5307
      %5356 = vst [vmem:[#allocation2 + $0x158] sm:$0xff] %v5308
      %5357 = vst [vmem:[#allocation2 + $0x160] sm:$0xff] %v5309
      %5358 = vst [vmem:[#allocation2 + $0x168] sm:$0xff] %v5310
      %5359 = vst [vmem:[#allocation2 + $0x170] sm:$0xff] %v5311
      %5360 = vst [vmem:[#allocation2 + $0x178] sm:$0xff] %v5312
      %v5361 = vld [vmem:[#allocation2] sm:$0xff]
      %v5362 = vld [vmem:[#allocation2 + $0x8] sm:$0xff]
      %v5363 = vld [vmem:[#allocation2 + $0x10] sm:$0xff]
      %v5364 = vld [vmem:[#allocation2 + $0x18] sm:$0xff]
      %v5365 = vld [vmem:[#allocation2 + $0x20] sm:$0xff]
      %v5366 = vld [vmem:[#allocation2 + $0x28] sm:$0xff]
      %v5367 = vld [vmem:[#allocation2 + $0x30] sm:$0xff]
      %v5368 = vld [vmem:[#allocation2 + $0x38] sm:$0xff]
      %v5369 = vld [vmem:[#allocation2 + $0x40] sm:$0xff]
      %v5370 = vld [vmem:[#allocation2 + $0x48] sm:$0xff]
      %v5371 = vld [vmem:[#allocation2 + $0x50] sm:$0xff]
      %v5372 = vld [vmem:[#allocation2 + $0x58] sm:$0xff]
      %v5373 = vld [vmem:[#allocation2 + $0x60] sm:$0xff]
      %v5374 = vld [vmem:[#allocation2 + $0x68] sm:$0xff]
      %v5375 = vld [vmem:[#allocation2 + $0x70] sm:$0xff]
      %v5376 = vld [vmem:[#allocation2 + $0x78] sm:$0xff]
      %v5377 = vld [vmem:[#allocation2 + $0x80] sm:$0xff]
      %v5378 = vld [vmem:[#allocation2 + $0x88] sm:$0xff]
      %v5379 = vld [vmem:[#allocation2 + $0x90] sm:$0xff]
      %v5380 = vld [vmem:[#allocation2 + $0x98] sm:$0xff]
      %v5381 = vld [vmem:[#allocation2 + $0xa0] sm:$0xff]
      %v5382 = vld [vmem:[#allocation2 + $0xa8] sm:$0xff]
      %v5383 = vld [vmem:[#allocation2 + $0xb0] sm:$0xff]
      %v5384 = vld [vmem:[#allocation2 + $0xb8] sm:$0xff]
      %v5385 = vld [vmem:[#allocation2 + $0xc0] sm:$0xff]
      %v5386 = vld [vmem:[#allocation2 + $0xc8] sm:$0xff]
      %v5387 = vld [vmem:[#allocation2 + $0xd0] sm:$0xff]
      %v5388 = vld [vmem:[#allocation2 + $0xd8] sm:$0xff]
      %v5389 = vld [vmem:[#allocation2 + $0xe0] sm:$0xff]
      %v5390 = vld [vmem:[#allocation2 + $0xe8] sm:$0xff]
      %v5391 = vld [vmem:[#allocation2 + $0xf0] sm:$0xff]
      %v5392 = vld [vmem:[#allocation2 + $0xf8] sm:$0xff]
      %v5393 = vld [vmem:[#allocation2 + $0x100] sm:$0xff]
      %v5394 = vld [vmem:[#allocation2 + $0x108] sm:$0xff]
      %v5395 = vld [vmem:[#allocation2 + $0x110] sm:$0xff]
      %v5396 = vld [vmem:[#allocation2 + $0x118] sm:$0xff]
      %v5397 = vld [vmem:[#allocation2 + $0x120] sm:$0xff]
      %v5398 = vld [vmem:[#allocation2 + $0x128] sm:$0xff]
      %v5399 = vld [vmem:[#allocation2 + $0x130] sm:$0xff]
      %v5400 = vld [vmem:[#allocation2 + $0x138] sm:$0xff]
      %v5401 = vld [vmem:[#allocation2 + $0x140] sm:$0xff]
      %v5402 = vld [vmem:[#allocation2 + $0x148] sm:$0xff]
      %v5403 = vld [vmem:[#allocation2 + $0x150] sm:$0xff]
      %v5404 = vld [vmem:[#allocation2 + $0x158] sm:$0xff]
      %v5405 = vld [vmem:[#allocation2 + $0x160] sm:$0xff]
      %v5406 = vld [vmem:[#allocation2 + $0x168] sm:$0xff]
      %v5407 = vld [vmem:[#allocation2 + $0x170] sm:$0xff]
      %v5408 = vld [vmem:[#allocation2 + $0x178] sm:$0xff]
      %v5409 = vld [vmem:[%s138 + $0x32] sm:$0xff]
      %v5410 = vld [vmem:[%s138 + $0x3a] sm:$0xff]
      %v5411 = vld [vmem:[%s138 + $0x42] sm:$0xff]
      %v5412 = vld [vmem:[%s138 + $0x4a] sm:$0xff]
      %v5413 = vld [vmem:[%s138 + $0x52] sm:$0xff]
      %v5414 = vld [vmem:[%s138 + $0x5a] sm:$0xff]
      %v5415 = vld [vmem:[%s138 + $0x62] sm:$0xff]
      %v5416 = vld [vmem:[%s138 + $0x6a] sm:$0xff]
      %v5417 = vld [vmem:[%s138 + $0x72] sm:$0xff]
      %v5418 = vld [vmem:[%s138 + $0x7a] sm:$0xff]
      %v5419 = vld [vmem:[%s138 + $0x82] sm:$0xff]
      %v5420 = vld [vmem:[%s138 + $0x8a] sm:$0xff]
      %v5421 = vld [vmem:[%s138 + $0x92] sm:$0xff]
      %v5422 = vld [vmem:[%s138 + $0x9a] sm:$0xff]
      %v5423 = vld [vmem:[%s138 + $0xa2] sm:$0xff]
      %v5424 = vld [vmem:[%s138 + $0xaa] sm:$0xff]
      %v5425 = vld [vmem:[%s138 + $0xb2] sm:$0xff]
      %v5426 = vld [vmem:[%s138 + $0xba] sm:$0xff]
      %v5427 = vld [vmem:[%s138 + $0xc2] sm:$0xff]
      %v5428 = vld [vmem:[%s138 + $0xca] sm:$0xff]
      %v5429 = vld [vmem:[%s138 + $0xd2] sm:$0xff]
      %v5430 = vld [vmem:[%s138 + $0xda] sm:$0xff]
      %v5431 = vld [vmem:[%s138 + $0xe2] sm:$0xff]
      %v5432 = vld [vmem:[%s138 + $0xea] sm:$0xff]
      %v5433 = vld [vmem:[%s138 + $0xf2] sm:$0xff]
      %v5434 = vld [vmem:[%s138 + $0xfa] sm:$0xff]
      %v5435 = vld [vmem:[%s138 + $0x102] sm:$0xff]
      %v5436 = vld [vmem:[%s138 + $0x10a] sm:$0xff]
      %v5437 = vld [vmem:[%s138 + $0x112] sm:$0xff]
      %v5438 = vld [vmem:[%s138 + $0x11a] sm:$0xff]
      %v5439 = vld [vmem:[%s138 + $0x122] sm:$0xff]
      %v5440 = vld [vmem:[%s138 + $0x12a] sm:$0xff]
      %v5441 = vld [vmem:[%s138 + $0x132] sm:$0xff]
      %v5442 = vld [vmem:[%s138 + $0x13a] sm:$0xff]
      %v5443 = vld [vmem:[%s138 + $0x142] sm:$0xff]
      %v5444 = vld [vmem:[%s138 + $0x14a] sm:$0xff]
      %v5445 = vld [vmem:[%s138 + $0x152] sm:$0xff]
      %v5446 = vld [vmem:[%s138 + $0x15a] sm:$0xff]
      %v5447 = vld [vmem:[%s138 + $0x162] sm:$0xff]
      %v5448 = vld [vmem:[%s138 + $0x16a] sm:$0xff]
      %v5449 = vld [vmem:[%s138 + $0x172] sm:$0xff]
      %v5450 = vld [vmem:[%s138 + $0x17a] sm:$0xff]
      %v5451 = vld [vmem:[%s138 + $0x182] sm:$0xff]
      %v5452 = vld [vmem:[%s138 + $0x18a] sm:$0xff]
      %v5453 = vld [vmem:[%s138 + $0x192] sm:$0xff]
      %v5454 = vld [vmem:[%s138 + $0x19a] sm:$0xff]
      %v5455 = vld [vmem:[%s138 + $0x1a2] sm:$0xff]
      %v5456 = vld [vmem:[%s138 + $0x1aa] sm:$0xff]
      %s5457 = scalar_lea.vmem %s1, 32
      %v5458 = vld [vmem:[%s5457] sm:$0xf]
      %v5460 = vsel %vm289, %v5409, 0
      %v5463 = vsel %vm289, %v5410, 0
      %v5466 = vsel %vm289, %v5411, 0
      %v5469 = vsel %vm289, %v5412, 0
      %v5472 = vsel %vm289, %v5413, 0
      %v5475 = vsel %vm289, %v5414, 0
      %v5478 = vsel %vm289, %v5415, 0
      %v5481 = vsel %vm289, %v5416, 0
      %v5484 = vsel %vm289, %v5417, 0
      %v5487 = vsel %vm289, %v5418, 0
      %v5490 = vsel %vm289, %v5419, 0
      %v5493 = vsel %vm289, %v5420, 0
      %v5496 = vsel %vm289, %v5421, 0
      %v5499 = vsel %vm289, %v5422, 0
      %v5502 = vsel %vm289, %v5423, 0
      %v5505 = vsel %vm289, %v5424, 0
      %v5508 = vsel %vm289, %v5425, 0
      %v5511 = vsel %vm289, %v5426, 0
      %v5514 = vsel %vm289, %v5427, 0
      %v5517 = vsel %vm289, %v5428, 0
      %v5520 = vsel %vm289, %v5429, 0
      %v5523 = vsel %vm289, %v5430, 0
      %v5526 = vsel %vm289, %v5431, 0
      %v5529 = vsel %vm289, %v5432, 0
      %v5532 = vsel %vm289, %v5433, 0
      %v5535 = vsel %vm289, %v5434, 0
      %v5538 = vsel %vm289, %v5435, 0
      %v5541 = vsel %vm289, %v5436, 0
      %v5544 = vsel %vm289, %v5437, 0
      %v5547 = vsel %vm289, %v5438, 0
      %v5550 = vsel %vm289, %v5439, 0
      %v5553 = vsel %vm289, %v5440, 0
      %v5556 = vsel %vm289, %v5441, 0
      %v5559 = vsel %vm289, %v5442, 0
      %v5562 = vsel %vm289, %v5443, 0
      %v5565 = vsel %vm289, %v5444, 0
      %v5568 = vsel %vm289, %v5445, 0
      %v5571 = vsel %vm289, %v5446, 0
      %v5574 = vsel %vm289, %v5447, 0
      %v5577 = vsel %vm289, %v5448, 0
      %v5580 = vsel %vm289, %v5449, 0
      %v5583 = vsel %vm289, %v5450, 0
      %v5586 = vsel %vm289, %v5451, 0
      %v5589 = vsel %vm289, %v5452, 0
      %v5592 = vsel %vm289, %v5453, 0
      %v5595 = vsel %vm289, %v5454, 0
      %v5598 = vsel %vm289, %v5455, 0
      %v5601 = vsel %vm289, %v5456, 0
      %v5604 = vsel %vm434, %v5458, 0
      %5606 = vmatprep.subr.mxu0 0.0
      %5607 = vmatpush1.msra.mxu0 0.0
      %5608 = vmatprep.subr.mxu0 0.0
      %5609 = vmatpush1.msra.mxu0 0.0
      %5610 = vmatprep.subr.mxu0 0.0
      %5611 = vmatpush1.msra.mxu0 0.0
      %5612 = vmatprep.subr.mxu0 0.0
      %5613 = vmatpush1.msra.mxu0 0.0
      %5614 = vmatprep.subr.mxu0 0.0
      %5615 = vmatpush1.msra.mxu0 0.0
      %5616 = vmatprep.subr.mxu0 0.0
      %5617 = vmatpush1.msra.mxu0 0.0
      %5618 = vmatprep.subr.mxu0 0.0
      %5619 = vmatpush1.msra.mxu0 0.0
      %5620 = vmatprep.subr.mxu0 0.0
      %5621 = vmatpush1.msra.mxu0 0.0
      %5622 = vmatprep.subr.mxu0 0.0
      %5623 = vmatpush1.msra.mxu0 0.0
      %5624 = vmatprep.subr.mxu0 0.0
      %5625 = vmatpush1.msra.mxu0 0.0
      %5626 = vmatprep.subr.mxu0 0.0
      %5627 = vmatpush1.msra.mxu0 0.0
      %5628 = vmatprep.subr.mxu0 0.0
      %5629 = vmatpush1.msra.mxu0 0.0
      %5630 = vmatprep.subr.mxu0 0.0
      %5631 = vmatpush1.msra.mxu0 0.0
      %5632 = vmatprep.subr.mxu0 0.0
      %5633 = vmatpush1.msra.mxu0 0.0
      %5634 = vmatprep.subr.mxu0 0.0
      %5635 = vmatpush1.msra.mxu0 0.0
      %5636 = vmatprep.subr.mxu0 0.0
      %5637 = vmatpush1.msra.mxu0 %v5604
      %5638 = vmatprep.subr.mxu0 0.0
      %5639 = vmatpush2.msra.mxu0 0.0
      %5640 = vmatprep.subr.mxu0 0.0
      %5641 = vmatpush2.msra.mxu0 0.0
      %5642 = vmatprep.subr.mxu0 0.0
      %5643 = vmatpush2.msra.mxu0 0.0
      %5644 = vmatprep.subr.mxu0 0.0
      %5645 = vmatpush2.msra.mxu0 0.0
      %5646 = vmatprep.subr.mxu0 0.0
      %5647 = vmatpush2.msra.mxu0 0.0
      %5648 = vmatprep.subr.mxu0 0.0
      %5649 = vmatpush2.msra.mxu0 0.0
      %5650 = vmatprep.subr.mxu0 0.0
      %5651 = vmatpush2.msra.mxu0 0.0
      %5652 = vmatprep.subr.mxu0 0.0
      %5653 = vmatpush2.msra.mxu0 0.0
      %5654 = vmatprep.subr.mxu0 0.0
      %5655 = vmatpush2.msra.mxu0 0.0
      %5656 = vmatprep.subr.mxu0 0.0
      %5657 = vmatpush2.msra.mxu0 0.0
      %5658 = vmatprep.subr.mxu0 0.0
      %5659 = vmatpush2.msra.mxu0 0.0
      %5660 = vmatprep.subr.mxu0 0.0
      %5661 = vmatpush2.msra.mxu0 0.0
      %5662 = vmatprep.subr.mxu0 0.0
      %5663 = vmatpush2.msra.mxu0 0.0
      %5664 = vmatprep.subr.mxu0 0.0
      %5665 = vmatpush2.msra.mxu0 0.0
      %5666 = vmatprep.subr.mxu0 0.0
      %5667 = vmatpush2.msra.mxu0 0.0
      %5668 = vmatprep.subr.mxu0 0.0
      %5669 = vmatpush2.msra.mxu0 0.0
      %5670 = vmatprep.mubr.f32.mxu0 0.0
      %5671 = vmatmul.mubr.f32.gmra.mxu0 %v5460
      %v5672 = vpop.f32.mrf.mxu0
      %v5673 = vadd.f32 0.0, %v5672
      %v5674 = vpop.f32.mrf.mxu0
      %5675 = vmatprep.mubr.f32.mxu0 0.0
      %5676 = vmatmul.mubr.f32.gmra.mxu0 %v5463
      %v5677 = vpop.f32.mrf.mxu0
      %v5678 = vadd.f32 0.0, %v5677
      %v5679 = vpop.f32.mrf.mxu0
      %5680 = vmatprep.mubr.f32.mxu0 0.0
      %5681 = vmatmul.mubr.f32.gmra.mxu0 %v5466
      %v5682 = vpop.f32.mrf.mxu0
      %v5683 = vadd.f32 0.0, %v5682
      %v5684 = vpop.f32.mrf.mxu0
      %5685 = vmatprep.mubr.f32.mxu0 0.0
      %5686 = vmatmul.mubr.f32.gmra.mxu0 %v5469
      %v5687 = vpop.f32.mrf.mxu0
      %v5688 = vadd.f32 0.0, %v5687
      %v5689 = vpop.f32.mrf.mxu0
      %5690 = vmatprep.mubr.f32.mxu0 0.0
      %5691 = vmatmul.mubr.f32.gmra.mxu0 %v5472
      %v5692 = vpop.f32.mrf.mxu0
      %v5693 = vadd.f32 0.0, %v5692
      %v5694 = vpop.f32.mrf.mxu0
      %5695 = vmatprep.mubr.f32.mxu0 0.0
      %5696 = vmatmul.mubr.f32.gmra.mxu0 %v5475
      %v5697 = vpop.f32.mrf.mxu0
      %v5698 = vadd.f32 0.0, %v5697
      %v5699 = vpop.f32.mrf.mxu0
      %5700 = vmatprep.mubr.f32.mxu0 0.0
      %5701 = vmatmul.mubr.f32.gmra.mxu0 %v5478
      %v5702 = vpop.f32.mrf.mxu0
      %v5703 = vadd.f32 0.0, %v5702
      %v5704 = vpop.f32.mrf.mxu0
      %5705 = vmatprep.mubr.f32.mxu0 0.0
      %5706 = vmatmul.mubr.f32.gmra.mxu0 %v5481
      %v5707 = vpop.f32.mrf.mxu0
      %v5708 = vadd.f32 0.0, %v5707
      %v5709 = vpop.f32.mrf.mxu0
      %5710 = vmatprep.mubr.f32.mxu0 0.0
      %5711 = vmatmul.mubr.f32.gmra.mxu0 %v5484
      %v5712 = vpop.f32.mrf.mxu0
      %v5713 = vadd.f32 0.0, %v5712
      %v5714 = vpop.f32.mrf.mxu0
      %5715 = vmatprep.mubr.f32.mxu0 0.0
      %5716 = vmatmul.mubr.f32.gmra.mxu0 %v5487
      %v5717 = vpop.f32.mrf.mxu0
      %v5718 = vadd.f32 0.0, %v5717
      %v5719 = vpop.f32.mrf.mxu0
      %5720 = vmatprep.mubr.f32.mxu0 0.0
      %5721 = vmatmul.mubr.f32.gmra.mxu0 %v5490
      %v5722 = vpop.f32.mrf.mxu0
      %v5723 = vadd.f32 0.0, %v5722
      %v5724 = vpop.f32.mrf.mxu0
      %5725 = vmatprep.mubr.f32.mxu0 0.0
      %5726 = vmatmul.mubr.f32.gmra.mxu0 %v5493
      %v5727 = vpop.f32.mrf.mxu0
      %v5728 = vadd.f32 0.0, %v5727
      %v5729 = vpop.f32.mrf.mxu0
      %5730 = vmatprep.mubr.f32.mxu0 0.0
      %5731 = vmatmul.mubr.f32.gmra.mxu0 %v5496
      %v5732 = vpop.f32.mrf.mxu0
      %v5733 = vadd.f32 0.0, %v5732
      %v5734 = vpop.f32.mrf.mxu0
      %5735 = vmatprep.mubr.f32.mxu0 0.0
      %5736 = vmatmul.mubr.f32.gmra.mxu0 %v5499
      %v5737 = vpop.f32.mrf.mxu0
      %v5738 = vadd.f32 0.0, %v5737
      %v5739 = vpop.f32.mrf.mxu0
      %5740 = vmatprep.mubr.f32.mxu0 0.0
      %5741 = vmatmul.mubr.f32.gmra.mxu0 %v5502
      %v5742 = vpop.f32.mrf.mxu0
      %v5743 = vadd.f32 0.0, %v5742
      %v5744 = vpop.f32.mrf.mxu0
      %5745 = vmatprep.mubr.f32.mxu0 0.0
      %5746 = vmatmul.mubr.f32.gmra.mxu0 %v5505
      %v5747 = vpop.f32.mrf.mxu0
      %v5748 = vadd.f32 0.0, %v5747
      %v5749 = vpop.f32.mrf.mxu0
      %5750 = vmatprep.mubr.f32.mxu0 0.0
      %5751 = vmatmul.mubr.f32.gmra.mxu0 %v5508
      %v5752 = vpop.f32.mrf.mxu0
      %v5753 = vadd.f32 0.0, %v5752
      %v5754 = vpop.f32.mrf.mxu0
      %5755 = vmatprep.mubr.f32.mxu0 0.0
      %5756 = vmatmul.mubr.f32.gmra.mxu0 %v5511
      %v5757 = vpop.f32.mrf.mxu0
      %v5758 = vadd.f32 0.0, %v5757
      %v5759 = vpop.f32.mrf.mxu0
      %5760 = vmatprep.mubr.f32.mxu0 0.0
      %5761 = vmatmul.mubr.f32.gmra.mxu0 %v5514
      %v5762 = vpop.f32.mrf.mxu0
      %v5763 = vadd.f32 0.0, %v5762
      %v5764 = vpop.f32.mrf.mxu0
      %5765 = vmatprep.mubr.f32.mxu0 0.0
      %5766 = vmatmul.mubr.f32.gmra.mxu0 %v5517
      %v5767 = vpop.f32.mrf.mxu0
      %v5768 = vadd.f32 0.0, %v5767
      %v5769 = vpop.f32.mrf.mxu0
      %5770 = vmatprep.mubr.f32.mxu0 0.0
      %5771 = vmatmul.mubr.f32.gmra.mxu0 %v5520
      %v5772 = vpop.f32.mrf.mxu0
      %v5773 = vadd.f32 0.0, %v5772
      %v5774 = vpop.f32.mrf.mxu0
      %5775 = vmatprep.mubr.f32.mxu0 0.0
      %5776 = vmatmul.mubr.f32.gmra.mxu0 %v5523
      %v5777 = vpop.f32.mrf.mxu0
      %v5778 = vadd.f32 0.0, %v5777
      %v5779 = vpop.f32.mrf.mxu0
      %5780 = vmatprep.mubr.f32.mxu0 0.0
      %5781 = vmatmul.mubr.f32.gmra.mxu0 %v5526
      %v5782 = vpop.f32.mrf.mxu0
      %v5783 = vadd.f32 0.0, %v5782
      %v5784 = vpop.f32.mrf.mxu0
      %5785 = vmatprep.mubr.f32.mxu0 0.0
      %5786 = vmatmul.mubr.f32.gmra.mxu0 %v5529
      %v5787 = vpop.f32.mrf.mxu0
      %v5788 = vadd.f32 0.0, %v5787
      %v5789 = vpop.f32.mrf.mxu0
      %5790 = vmatprep.mubr.f32.mxu0 0.0
      %5791 = vmatmul.mubr.f32.gmra.mxu0 %v5532
      %v5792 = vpop.f32.mrf.mxu0
      %v5793 = vadd.f32 0.0, %v5792
      %v5794 = vpop.f32.mrf.mxu0
      %5795 = vmatprep.mubr.f32.mxu0 0.0
      %5796 = vmatmul.mubr.f32.gmra.mxu0 %v5535
      %v5797 = vpop.f32.mrf.mxu0
      %v5798 = vadd.f32 0.0, %v5797
      %v5799 = vpop.f32.mrf.mxu0
      %5800 = vmatprep.mubr.f32.mxu0 0.0
      %5801 = vmatmul.mubr.f32.gmra.mxu0 %v5538
      %v5802 = vpop.f32.mrf.mxu0
      %v5803 = vadd.f32 0.0, %v5802
      %v5804 = vpop.f32.mrf.mxu0
      %5805 = vmatprep.mubr.f32.mxu0 0.0
      %5806 = vmatmul.mubr.f32.gmra.mxu0 %v5541
      %v5807 = vpop.f32.mrf.mxu0
      %v5808 = vadd.f32 0.0, %v5807
      %v5809 = vpop.f32.mrf.mxu0
      %5810 = vmatprep.mubr.f32.mxu0 0.0
      %5811 = vmatmul.mubr.f32.gmra.mxu0 %v5544
      %v5812 = vpop.f32.mrf.mxu0
      %v5813 = vadd.f32 0.0, %v5812
      %v5814 = vpop.f32.mrf.mxu0
      %5815 = vmatprep.mubr.f32.mxu0 0.0
      %5816 = vmatmul.mubr.f32.gmra.mxu0 %v5547
      %v5817 = vpop.f32.mrf.mxu0
      %v5818 = vadd.f32 0.0, %v5817
      %v5819 = vpop.f32.mrf.mxu0
      %5820 = vmatprep.mubr.f32.mxu0 0.0
      %5821 = vmatmul.mubr.f32.gmra.mxu0 %v5550
      %v5822 = vpop.f32.mrf.mxu0
      %v5823 = vadd.f32 0.0, %v5822
      %v5824 = vpop.f32.mrf.mxu0
      %5825 = vmatprep.mubr.f32.mxu0 0.0
      %5826 = vmatmul.mubr.f32.gmra.mxu0 %v5553
      %v5827 = vpop.f32.mrf.mxu0
      %v5828 = vadd.f32 0.0, %v5827
      %v5829 = vpop.f32.mrf.mxu0
      %5830 = vmatprep.mubr.f32.mxu0 0.0
      %5831 = vmatmul.mubr.f32.gmra.mxu0 %v5556
      %v5832 = vpop.f32.mrf.mxu0
      %v5833 = vadd.f32 0.0, %v5832
      %v5834 = vpop.f32.mrf.mxu0
      %5835 = vmatprep.mubr.f32.mxu0 0.0
      %5836 = vmatmul.mubr.f32.gmra.mxu0 %v5559
      %v5837 = vpop.f32.mrf.mxu0
      %v5838 = vadd.f32 0.0, %v5837
      %v5839 = vpop.f32.mrf.mxu0
      %5840 = vmatprep.mubr.f32.mxu0 0.0
      %5841 = vmatmul.mubr.f32.gmra.mxu0 %v5562
      %v5842 = vpop.f32.mrf.mxu0
      %v5843 = vadd.f32 0.0, %v5842
      %v5844 = vpop.f32.mrf.mxu0
      %5845 = vmatprep.mubr.f32.mxu0 0.0
      %5846 = vmatmul.mubr.f32.gmra.mxu0 %v5565
      %v5847 = vpop.f32.mrf.mxu0
      %v5848 = vadd.f32 0.0, %v5847
      %v5849 = vpop.f32.mrf.mxu0
      %5850 = vmatprep.mubr.f32.mxu0 0.0
      %5851 = vmatmul.mubr.f32.gmra.mxu0 %v5568
      %v5852 = vpop.f32.mrf.mxu0
      %v5853 = vadd.f32 0.0, %v5852
      %v5854 = vpop.f32.mrf.mxu0
      %5855 = vmatprep.mubr.f32.mxu0 0.0
      %5856 = vmatmul.mubr.f32.gmra.mxu0 %v5571
      %v5857 = vpop.f32.mrf.mxu0
      %v5858 = vadd.f32 0.0, %v5857
      %v5859 = vpop.f32.mrf.mxu0
      %5860 = vmatprep.mubr.f32.mxu0 0.0
      %5861 = vmatmul.mubr.f32.gmra.mxu0 %v5574
      %v5862 = vpop.f32.mrf.mxu0
      %v5863 = vadd.f32 0.0, %v5862
      %v5864 = vpop.f32.mrf.mxu0
      %5865 = vmatprep.mubr.f32.mxu0 0.0
      %5866 = vmatmul.mubr.f32.gmra.mxu0 %v5577
      %v5867 = vpop.f32.mrf.mxu0
      %v5868 = vadd.f32 0.0, %v5867
      %v5869 = vpop.f32.mrf.mxu0
      %5870 = vmatprep.mubr.f32.mxu0 0.0
      %5871 = vmatmul.mubr.f32.gmra.mxu0 %v5580
      %v5872 = vpop.f32.mrf.mxu0
      %v5873 = vadd.f32 0.0, %v5872
      %v5874 = vpop.f32.mrf.mxu0
      %5875 = vmatprep.mubr.f32.mxu0 0.0
      %5876 = vmatmul.mubr.f32.gmra.mxu0 %v5583
      %v5877 = vpop.f32.mrf.mxu0
      %v5878 = vadd.f32 0.0, %v5877
      %v5879 = vpop.f32.mrf.mxu0
      %5880 = vmatprep.mubr.f32.mxu0 0.0
      %5881 = vmatmul.mubr.f32.gmra.mxu0 %v5586
      %v5882 = vpop.f32.mrf.mxu0
      %v5883 = vadd.f32 0.0, %v5882
      %v5884 = vpop.f32.mrf.mxu0
      %5885 = vmatprep.mubr.f32.mxu0 0.0
      %5886 = vmatmul.mubr.f32.gmra.mxu0 %v5589
      %v5887 = vpop.f32.mrf.mxu0
      %v5888 = vadd.f32 0.0, %v5887
      %v5889 = vpop.f32.mrf.mxu0
      %5890 = vmatprep.mubr.f32.mxu0 0.0
      %5891 = vmatmul.mubr.f32.gmra.mxu0 %v5592
      %v5892 = vpop.f32.mrf.mxu0
      %v5893 = vadd.f32 0.0, %v5892
      %v5894 = vpop.f32.mrf.mxu0
      %5895 = vmatprep.mubr.f32.mxu0 0.0
      %5896 = vmatmul.mubr.f32.gmra.mxu0 %v5595
      %v5897 = vpop.f32.mrf.mxu0
      %v5898 = vadd.f32 0.0, %v5897
      %v5899 = vpop.f32.mrf.mxu0
      %5900 = vmatprep.mubr.f32.mxu0 0.0
      %5901 = vmatmul.mubr.f32.gmra.mxu0 %v5598
      %v5902 = vpop.f32.mrf.mxu0
      %v5903 = vadd.f32 0.0, %v5902
      %v5904 = vpop.f32.mrf.mxu0
      %5905 = vmatprep.mubr.f32.mxu0 0.0
      %5906 = vmatmul.mubr.f32.gmra.mxu0 %v5601
      %v5907 = vpop.f32.mrf.mxu0
      %v5908 = vadd.f32 0.0, %v5907
      %v5909 = vpop.f32.mrf.mxu0
      %5910 = vdwg.mxu0
      %v5911 = vadd.f32 %v5361, %v5673
      %v5912 = vadd.f32 %v5362, %v5678
      %v5913 = vadd.f32 %v5363, %v5683
      %v5914 = vadd.f32 %v5364, %v5688
      %v5915 = vadd.f32 %v5365, %v5693
      %v5916 = vadd.f32 %v5366, %v5698
      %v5917 = vadd.f32 %v5367, %v5703
      %v5918 = vadd.f32 %v5368, %v5708
      %v5919 = vadd.f32 %v5369, %v5713
      %v5920 = vadd.f32 %v5370, %v5718
      %v5921 = vadd.f32 %v5371, %v5723
      %v5922 = vadd.f32 %v5372, %v5728
      %v5923 = vadd.f32 %v5373, %v5733
      %v5924 = vadd.f32 %v5374, %v5738
      %v5925 = vadd.f32 %v5375, %v5743
      %v5926 = vadd.f32 %v5376, %v5748
      %v5927 = vadd.f32 %v5377, %v5753
      %v5928 = vadd.f32 %v5378, %v5758
      %v5929 = vadd.f32 %v5379, %v5763
      %v5930 = vadd.f32 %v5380, %v5768
      %v5931 = vadd.f32 %v5381, %v5773
      %v5932 = vadd.f32 %v5382, %v5778
      %v5933 = vadd.f32 %v5383, %v5783
      %v5934 = vadd.f32 %v5384, %v5788
      %v5935 = vadd.f32 %v5385, %v5793
      %v5936 = vadd.f32 %v5386, %v5798
      %v5937 = vadd.f32 %v5387, %v5803
      %v5938 = vadd.f32 %v5388, %v5808
      %v5939 = vadd.f32 %v5389, %v5813
      %v5940 = vadd.f32 %v5390, %v5818
      %v5941 = vadd.f32 %v5391, %v5823
      %v5942 = vadd.f32 %v5392, %v5828
      %v5943 = vadd.f32 %v5393, %v5833
      %v5944 = vadd.f32 %v5394, %v5838
      %v5945 = vadd.f32 %v5395, %v5843
      %v5946 = vadd.f32 %v5396, %v5848
      %v5947 = vadd.f32 %v5397, %v5853
      %v5948 = vadd.f32 %v5398, %v5858
      %v5949 = vadd.f32 %v5399, %v5863
      %v5950 = vadd.f32 %v5400, %v5868
      %v5951 = vadd.f32 %v5401, %v5873
      %v5952 = vadd.f32 %v5402, %v5878
      %v5953 = vadd.f32 %v5403, %v5883
      %v5954 = vadd.f32 %v5404, %v5888
      %v5955 = vadd.f32 %v5405, %v5893
      %v5956 = vadd.f32 %v5406, %v5898
      %v5957 = vadd.f32 %v5407, %v5903
      %v5958 = vadd.f32 %v5408, %v5908
      %5959 = vst [vmem:[#allocation2] sm:$0xff] %v5911
      %5960 = vst [vmem:[#allocation2 + $0x8] sm:$0xff] %v5912
      %5961 = vst [vmem:[#allocation2 + $0x10] sm:$0xff] %v5913
      %5962 = vst [vmem:[#allocation2 + $0x18] sm:$0xff] %v5914
      %5963 = vst [vmem:[#allocation2 + $0x20] sm:$0xff] %v5915
      %5964 = vst [vmem:[#allocation2 + $0x28] sm:$0xff] %v5916
      %5965 = vst [vmem:[#allocation2 + $0x30] sm:$0xff] %v5917
      %5966 = vst [vmem:[#allocation2 + $0x38] sm:$0xff] %v5918
      %5967 = vst [vmem:[#allocation2 + $0x40] sm:$0xff] %v5919
      %5968 = vst [vmem:[#allocation2 + $0x48] sm:$0xff] %v5920
      %5969 = vst [vmem:[#allocation2 + $0x50] sm:$0xff] %v5921
      %5970 = vst [vmem:[#allocation2 + $0x58] sm:$0xff] %v5922
      %5971 = vst [vmem:[#allocation2 + $0x60] sm:$0xff] %v5923
      %5972 = vst [vmem:[#allocation2 + $0x68] sm:$0xff] %v5924
      %5973 = vst [vmem:[#allocation2 + $0x70] sm:$0xff] %v5925
      %5974 = vst [vmem:[#allocation2 + $0x78] sm:$0xff] %v5926
      %5975 = vst [vmem:[#allocation2 + $0x80] sm:$0xff] %v5927
      %5976 = vst [vmem:[#allocation2 + $0x88] sm:$0xff] %v5928
      %5977 = vst [vmem:[#allocation2 + $0x90] sm:$0xff] %v5929
      %5978 = vst [vmem:[#allocation2 + $0x98] sm:$0xff] %v5930
      %5979 = vst [vmem:[#allocation2 + $0xa0] sm:$0xff] %v5931
      %5980 = vst [vmem:[#allocation2 + $0xa8] sm:$0xff] %v5932
      %5981 = vst [vmem:[#allocation2 + $0xb0] sm:$0xff] %v5933
      %5982 = vst [vmem:[#allocation2 + $0xb8] sm:$0xff] %v5934
      %5983 = vst [vmem:[#allocation2 + $0xc0] sm:$0xff] %v5935
      %5984 = vst [vmem:[#allocation2 + $0xc8] sm:$0xff] %v5936
      %5985 = vst [vmem:[#allocation2 + $0xd0] sm:$0xff] %v5937
      %5986 = vst [vmem:[#allocation2 + $0xd8] sm:$0xff] %v5938
      %5987 = vst [vmem:[#allocation2 + $0xe0] sm:$0xff] %v5939
      %5988 = vst [vmem:[#allocation2 + $0xe8] sm:$0xff] %v5940
      %5989 = vst [vmem:[#allocation2 + $0xf0] sm:$0xff] %v5941
      %5990 = vst [vmem:[#allocation2 + $0xf8] sm:$0xff] %v5942
      %5991 = vst [vmem:[#allocation2 + $0x100] sm:$0xff] %v5943
      %5992 = vst [vmem:[#allocation2 + $0x108] sm:$0xff] %v5944
      %5993 = vst [vmem:[#allocation2 + $0x110] sm:$0xff] %v5945
      %5994 = vst [vmem:[#allocation2 + $0x118] sm:$0xff] %v5946
      %5995 = vst [vmem:[#allocation2 + $0x120] sm:$0xff] %v5947
      %5996 = vst [vmem:[#allocation2 + $0x128] sm:$0xff] %v5948
      %5997 = vst [vmem:[#allocation2 + $0x130] sm:$0xff] %v5949
      %5998 = vst [vmem:[#allocation2 + $0x138] sm:$0xff] %v5950
      %5999 = vst [vmem:[#allocation2 + $0x140] sm:$0xff] %v5951
      %6000 = vst [vmem:[#allocation2 + $0x148] sm:$0xff] %v5952
      %6001 = vst [vmem:[#allocation2 + $0x150] sm:$0xff] %v5953
      %6002 = vst [vmem:[#allocation2 + $0x158] sm:$0xff] %v5954
      %6003 = vst [vmem:[#allocation2 + $0x160] sm:$0xff] %v5955
      %6004 = vst [vmem:[#allocation2 + $0x168] sm:$0xff] %v5956
      %6005 = vst [vmem:[#allocation2 + $0x170] sm:$0xff] %v5957
      %6006 = vst [vmem:[#allocation2 + $0x178] sm:$0xff] %v5958
      %v6007 = vld [vmem:[#allocation2] sm:$0xff]
      %v6008 = vld [vmem:[#allocation2 + $0x8] sm:$0xff]
      %v6009 = vld [vmem:[#allocation2 + $0x10] sm:$0xff]
      %v6010 = vld [vmem:[#allocation2 + $0x18] sm:$0xff]
      %v6011 = vld [vmem:[#allocation2 + $0x20] sm:$0xff]
      %v6012 = vld [vmem:[#allocation2 + $0x28] sm:$0xff]
      %v6013 = vld [vmem:[#allocation2 + $0x30] sm:$0xff]
      %v6014 = vld [vmem:[#allocation2 + $0x38] sm:$0xff]
      %v6015 = vld [vmem:[#allocation2 + $0x40] sm:$0xff]
      %v6016 = vld [vmem:[#allocation2 + $0x48] sm:$0xff]
      %v6017 = vld [vmem:[#allocation2 + $0x50] sm:$0xff]
      %v6018 = vld [vmem:[#allocation2 + $0x58] sm:$0xff]
      %v6019 = vld [vmem:[#allocation2 + $0x60] sm:$0xff]
      %v6020 = vld [vmem:[#allocation2 + $0x68] sm:$0xff]
      %v6021 = vld [vmem:[#allocation2 + $0x70] sm:$0xff]
      %v6022 = vld [vmem:[#allocation2 + $0x78] sm:$0xff]
      %v6023 = vld [vmem:[#allocation2 + $0x80] sm:$0xff]
      %v6024 = vld [vmem:[#allocation2 + $0x88] sm:$0xff]
      %v6025 = vld [vmem:[#allocation2 + $0x90] sm:$0xff]
      %v6026 = vld [vmem:[#allocation2 + $0x98] sm:$0xff]
      %v6027 = vld [vmem:[#allocation2 + $0xa0] sm:$0xff]
      %v6028 = vld [vmem:[#allocation2 + $0xa8] sm:$0xff]
      %v6029 = vld [vmem:[#allocation2 + $0xb0] sm:$0xff]
      %v6030 = vld [vmem:[#allocation2 + $0xb8] sm:$0xff]
      %v6031 = vld [vmem:[#allocation2 + $0xc0] sm:$0xff]
      %v6032 = vld [vmem:[#allocation2 + $0xc8] sm:$0xff]
      %v6033 = vld [vmem:[#allocation2 + $0xd0] sm:$0xff]
      %v6034 = vld [vmem:[#allocation2 + $0xd8] sm:$0xff]
      %v6035 = vld [vmem:[#allocation2 + $0xe0] sm:$0xff]
      %v6036 = vld [vmem:[#allocation2 + $0xe8] sm:$0xff]
      %v6037 = vld [vmem:[#allocation2 + $0xf0] sm:$0xff]
      %v6038 = vld [vmem:[#allocation2 + $0xf8] sm:$0xff]
      %v6039 = vld [vmem:[#allocation2 + $0x100] sm:$0xff]
      %v6040 = vld [vmem:[#allocation2 + $0x108] sm:$0xff]
      %v6041 = vld [vmem:[#allocation2 + $0x110] sm:$0xff]
      %v6042 = vld [vmem:[#allocation2 + $0x118] sm:$0xff]
      %v6043 = vld [vmem:[#allocation2 + $0x120] sm:$0xff]
      %v6044 = vld [vmem:[#allocation2 + $0x128] sm:$0xff]
      %v6045 = vld [vmem:[#allocation2 + $0x130] sm:$0xff]
      %v6046 = vld [vmem:[#allocation2 + $0x138] sm:$0xff]
      %v6047 = vld [vmem:[#allocation2 + $0x140] sm:$0xff]
      %v6048 = vld [vmem:[#allocation2 + $0x148] sm:$0xff]
      %v6049 = vld [vmem:[#allocation2 + $0x150] sm:$0xff]
      %v6050 = vld [vmem:[#allocation2 + $0x158] sm:$0xff]
      %v6051 = vld [vmem:[#allocation2 + $0x160] sm:$0xff]
      %v6052 = vld [vmem:[#allocation2 + $0x168] sm:$0xff]
      %v6053 = vld [vmem:[#allocation2 + $0x170] sm:$0xff]
      %v6054 = vld [vmem:[#allocation2 + $0x178] sm:$0xff]
      %6055 = vxpose.xlu0.b32.start [1/16] %v6007, 128
      %6056 = vxpose.xlu0.b32.cont [2/16] %v6008, 128
      %6057 = vxpose.xlu0.b32.cont [3/16] %v6009, 128
      %6058 = vxpose.xlu0.b32.cont [4/16] %v6010, 128
      %6059 = vxpose.xlu0.b32.cont [5/16] %v6011, 128
      %6060 = vxpose.xlu0.b32.cont [6/16] %v6012, 128
      %6061 = vxpose.xlu0.b32.cont [7/16] %v6013, 128
      %6062 = vxpose.xlu0.b32.cont [8/16] %v6014, 128
      %6063 = vxpose.xlu0.b32.cont [9/16] %v6015, 128
      %6064 = vxpose.xlu0.b32.cont [10/16] %v6016, 128
      %6065 = vxpose.xlu0.b32.cont [11/16] %v6017, 128
      %6066 = vxpose.xlu0.b32.cont [12/16] %v6018, 128
      %6067 = vxpose.xlu0.b32.cont [13/16] %v6019, 128
      %6068 = vxpose.xlu0.b32.cont [14/16] %v6020, 128
      %6069 = vxpose.xlu0.b32.cont [15/16] %v6021, 128
      %6070 = vxpose.xlu0.b32.end [16/16] %v6022, 128
      %v6071 = vpop.trf.xlu0
      %v6072 = vpop.trf.xlu0
      %v6073 = vpop.trf.xlu0
      %v6074 = vpop.trf.xlu0
      %v6075 = vpop.trf.xlu0
      %v6076 = vpop.trf.xlu0
      %v6077 = vpop.trf.xlu0
      %v6078 = vpop.trf.xlu0
      %v6079 = vpop.trf.xlu0
      %v6080 = vpop.trf.xlu0
      %v6081 = vpop.trf.xlu0
      %v6082 = vpop.trf.xlu0
      %v6083 = vpop.trf.xlu0
      %v6084 = vpop.trf.xlu0
      %v6085 = vpop.trf.xlu0
      %v6086 = vpop.trf.xlu0
      %6087 = vxpose.xlu0.b32.start [1/16] %v6023, 128
      %6088 = vxpose.xlu0.b32.cont [2/16] %v6024, 128
      %6089 = vxpose.xlu0.b32.cont [3/16] %v6025, 128
      %6090 = vxpose.xlu0.b32.cont [4/16] %v6026, 128
      %6091 = vxpose.xlu0.b32.cont [5/16] %v6027, 128
      %6092 = vxpose.xlu0.b32.cont [6/16] %v6028, 128
      %6093 = vxpose.xlu0.b32.cont [7/16] %v6029, 128
      %6094 = vxpose.xlu0.b32.cont [8/16] %v6030, 128
      %6095 = vxpose.xlu0.b32.cont [9/16] %v6031, 128
      %6096 = vxpose.xlu0.b32.cont [10/16] %v6032, 128
      %6097 = vxpose.xlu0.b32.cont [11/16] %v6033, 128
      %6098 = vxpose.xlu0.b32.cont [12/16] %v6034, 128
      %6099 = vxpose.xlu0.b32.cont [13/16] %v6035, 128
      %6100 = vxpose.xlu0.b32.cont [14/16] %v6036, 128
      %6101 = vxpose.xlu0.b32.cont [15/16] %v6037, 128
      %6102 = vxpose.xlu0.b32.end [16/16] %v6038, 128
      %v6103 = vpop.trf.xlu0
      %v6104 = vpop.trf.xlu0
      %v6105 = vpop.trf.xlu0
      %v6106 = vpop.trf.xlu0
      %v6107 = vpop.trf.xlu0
      %v6108 = vpop.trf.xlu0
      %v6109 = vpop.trf.xlu0
      %v6110 = vpop.trf.xlu0
      %v6111 = vpop.trf.xlu0
      %v6112 = vpop.trf.xlu0
      %v6113 = vpop.trf.xlu0
      %v6114 = vpop.trf.xlu0
      %v6115 = vpop.trf.xlu0
      %v6116 = vpop.trf.xlu0
      %v6117 = vpop.trf.xlu0
      %v6118 = vpop.trf.xlu0
      %6119 = vxpose.xlu0.b32.start [1/16] %v6039, 128
      %6120 = vxpose.xlu0.b32.cont [2/16] %v6040, 128
      %6121 = vxpose.xlu0.b32.cont [3/16] %v6041, 128
      %6122 = vxpose.xlu0.b32.cont [4/16] %v6042, 128
      %6123 = vxpose.xlu0.b32.cont [5/16] %v6043, 128
      %6124 = vxpose.xlu0.b32.cont [6/16] %v6044, 128
      %6125 = vxpose.xlu0.b32.cont [7/16] %v6045, 128
      %6126 = vxpose.xlu0.b32.cont [8/16] %v6046, 128
      %6127 = vxpose.xlu0.b32.cont [9/16] %v6047, 128
      %6128 = vxpose.xlu0.b32.cont [10/16] %v6048, 128
      %6129 = vxpose.xlu0.b32.cont [11/16] %v6049, 128
      %6130 = vxpose.xlu0.b32.cont [12/16] %v6050, 128
      %6131 = vxpose.xlu0.b32.cont [13/16] %v6051, 128
      %6132 = vxpose.xlu0.b32.cont [14/16] %v6052, 128
      %6133 = vxpose.xlu0.b32.cont [15/16] %v6053, 128
      %6134 = vxpose.xlu0.b32.end [16/16] %v6054, 128
      %v6135 = vpop.trf.xlu0
      %v6136 = vpop.trf.xlu0
      %v6137 = vpop.trf.xlu0
      %v6138 = vpop.trf.xlu0
      %v6139 = vpop.trf.xlu0
      %v6140 = vpop.trf.xlu0
      %v6141 = vpop.trf.xlu0
      %v6142 = vpop.trf.xlu0
      %v6143 = vpop.trf.xlu0
      %v6144 = vpop.trf.xlu0
      %v6145 = vpop.trf.xlu0
      %v6146 = vpop.trf.xlu0
      %v6147 = vpop.trf.xlu0
      %v6148 = vpop.trf.xlu0
      %v6149 = vpop.trf.xlu0
      %v6150 = vpop.trf.xlu0
      %6151 = vst [vmem:[%s143] sm:$0xff] %v6071
      %6152 = vst [vmem:[%s143 + $0x8] sm:$0xff] %v6103
      %6153 = vst [vmem:[%s143 + $0x10] sm:$0xff] %v6135
      %p6154 = scmp.lt.s32.totalorder %s13, 1
      %s6155 = scalar_select %p6154, %s13, 1
      %s6156 = smul.addr %s6155, 3
      %s6157 = smul.addr %s6156, 8
      %s6158 = scalar_lea.vmem %s2, %s6157
      // Predicated region
      $region29: #{svd_conv2d.3} parent=27 // pred_check
        %p6159 = pneg %p78
      $region30: #{svd_conv2d.3} parent=27 // pred_check_branch
        %6161 = sbr.rel (%p6159) target = $region32
      $region31: #{svd_conv2d.3} parent=27 // pred_region
        _
      $region32: #{svd_conv2d.3} parent=27 // pred_fallthru
        _
    $region28: #{svd_conv2d.3} parent=5 // pred_fallthru
      _
    %p6162 = scmp.le.s32.totalorder 2, %s8
    // Predicated region
    $region33: #{svd_conv2d.3} parent=5 // pred_check
      %p6163 = pneg %p6162
    $region34: #{svd_conv2d.3} parent=5 // pred_check_branch
      %6165 = sbr.rel (%p6163) target = $region36
    $region35: #{svd_conv2d.3} parent=5 // pred_region
      %s6166 = ssub.s32 %s8, 2
      // Predicated region
      $region37: #{svd_conv2d.3} parent=35 // pred_check
        %p6167 = pneg %p84
      $region38: #{svd_conv2d.3} parent=35 // pred_check_branch
        %6169 = sbr.rel (%p6167) target = $region40
      $region39: #{svd_conv2d.3} parent=35 // pred_region
        %p6170 = scmp.lt.s32.totalorder %s14, 1
        %s6171 = scalar_select %p6170, %s14, 1
        %s6172 = smul.addr %s6171, 3
        %s6173 = smul.addr %s6172, 8
        %s6174 = scalar_lea.vmem %s2, %s6173
      $region40: #{svd_conv2d.3} parent=35 // pred_fallthru
        _
    $region36: #{svd_conv2d.3} parent=5 // pred_fallthru
      _
  $region6: #{svd_conv2d.3} parent=0 // loop_footer
    %s12 = sadd.s32 1, %s8
  $region7: #{svd_conv2d.3} parent=0 // loop_footer_branch
    %7 = sbr.rel target = $region3
  $region8: #{svd_conv2d.3} parent=0 // loop_exit
    _

</llo_original>
